<compile_context>
chip_gen: v7x
topology: tpu7x:2x2x1
jax: 0.10.0
libtpu: 0.0.40
codegen_flags: <defaults>
</compile_context>

<pallas_src>
import functools

import jax
import jax.numpy as jnp
from jax.experimental import pallas as pl
from jax.experimental.pallas import tpu as pltpu

_VMEM_LIMIT = 32 * 1024 * 1024   # safe on v5e/v6e (128 MiB) and v7x (64 MiB)
N_ACTIONS = 5
HIDDEN = 256


def _round_up(x, m):
    return (x + m - 1) // m * m


# ----------------------------------------------------------------------------
# Generic tiled matmul + bias (+ReLU) kernel  (used for the 8x8/s8 conv1)
# ----------------------------------------------------------------------------
def _linear_kernel(x_ref, w_ref, b_ref, o_ref, *, relu):
    acc = jnp.dot(x_ref[...], w_ref[...], preferred_element_type=jnp.float32)
    acc = acc + b_ref[...]
    if relu:
        acc = jnp.maximum(acc, 0.0)
    o_ref[...] = acc.astype(o_ref.dtype)


def linear(x, w, b, relu=False, out_dtype=jnp.float32, tm=512):
    """x: (M, K) @ w: (K, N) + b: (1, N) -> (M, N); M-tiled, bf16 in / f32 acc."""
    M, K = x.shape
    N = w.shape[1]
    tm = min(tm, _round_up(M, 8))
    Mp = _round_up(M, tm)
    if Mp != M:
        x = jnp.pad(x, ((0, Mp - M), (0, 0)))
    out = pl.pallas_call(
        functools.partial(_linear_kernel, relu=relu),
        out_shape=jax.ShapeDtypeStruct((Mp, N), out_dtype),
        grid=(Mp // tm,),
        in_specs=[pl.BlockSpec((tm, K), lambda i: (i, 0)),
                  pl.BlockSpec((K, N), lambda i: (0, 0)),
                  pl.BlockSpec((1, N), lambda i: (0, 0))],
        out_specs=pl.BlockSpec((tm, N), lambda i: (i, 0)),
        compiler_params=pltpu.CompilerParams(
            dimension_semantics=("parallel",),
            vmem_limit_bytes=_VMEM_LIMIT),
    )(x, w, b)
    return out[:M]


# ----------------------------------------------------------------------------
# 3x3 stride-1 conv + ReLU: per-tile in-VMEM im2col + one K=1152 MXU matmul
# ----------------------------------------------------------------------------
def _conv3x3_kernel(x_ref, w_ref, b_ref, o_ref):
    tn, _, _, C = x_ref.shape
    _, OH, OW, Cout = o_ref.shape
    # Build the (tn*OH*OW, 9*C) patch matrix once (bf16, ~few MB/tile) so the
    # whole accumulation happens inside the MXU instead of a spilled f32 acc.
    taps = []
    for dy in range(3):
        for dx in range(3):
            taps.append(x_ref[:, dy:dy + OH, dx:dx + OW, :])
    patches = jnp.concatenate(taps, axis=-1).reshape(tn * OH * OW, 9 * C)
    acc = jnp.dot(patches, w_ref[...], preferred_element_type=jnp.float32)
    y = jnp.maximum(acc + b_ref[...], 0.0)
    o_ref[...] = y.reshape(tn, OH, OW, Cout).astype(o_ref.dtype)


def conv3x3(x_nhwc, w_flat, b, tn=32):
    """Valid 3x3/s1 conv + ReLU.  x: (N,H,W,C) bf16, w_flat: (9*Cin, Cout) bf16.

    Width is padded so the in-kernel output width is a multiple of 8 (lane /
    sublane friendly reshapes); extra columns are cropped afterwards.
    """
    N, H, W, C = x_nhwc.shape
    Cout = w_flat.shape[-1]
    OH, OWv = H - 2, W - 2
    OW = _round_up(OWv, 8)
    Wp = OW + 2
    tn = min(tn, N)
    Np = _round_up(N, tn)
    pads = ((0, Np - N), (0, 0), (0, Wp - W), (0, 0))
    if any(p != (0, 0) for p in pads):
        x_nhwc = jnp.pad(x_nhwc, pads)
    out = pl.pallas_call(
        _conv3x3_kernel,
        out_shape=jax.ShapeDtypeStruct((Np, OH, OW, Cout), jnp.bfloat16),
        grid=(Np // tn,),
        in_specs=[pl.BlockSpec((tn, H, Wp, C), lambda i: (i, 0, 0, 0)),
                  pl.BlockSpec((9 * C, Cout), lambda i: (0, 0)),
                  pl.BlockSpec((1, Cout), lambda i: (0, 0))],
        out_specs=pl.BlockSpec((tn, OH, OW, Cout), lambda i: (i, 0, 0, 0)),
        compiler_params=pltpu.CompilerParams(
            dimension_semantics=("parallel",),
            vmem_limit_bytes=_VMEM_LIMIT),
    )(x_nhwc, w_flat, b)
    return out[:N, :, :OWv, :]


# ----------------------------------------------------------------------------
# Fused vision projection (c4 1x1 conv folded in) + LSTM input projection
# ----------------------------------------------------------------------------
def _vision_zx_kernel(x_ref, act_ref, wv_ref, bv_ref, wx_ref, wa_ref, bl_ref,
                      o_ref):
    # vision = x @ W_vis + b_vis   (no ReLU: torch's out_net is a plain Linear)
    vis = jnp.dot(x_ref[...], wv_ref[...], preferred_element_type=jnp.float32)
    vis = vis + bv_ref[...]
    # z_x = vision @ W_ih[:128] + action * W_ih[128] + (b_ih + b_hh)
    zx = jnp.dot(vis.astype(wx_ref.dtype), wx_ref[...],
                 preferred_element_type=jnp.float32)
    zx = zx + act_ref[...] * wa_ref[...] + bl_ref[...]
    o_ref[...] = zx.astype(o_ref.dtype)          # bf16: halves per-step DMA


def vision_lstm_input(flat, act, params, tm=512):
    """flat: (M, 4608) bf16, act: (M, 1) f32 -> z_x: (M, 4*H) bf16."""
    M, K = flat.shape
    G = params['lstm_wx'].shape[1]
    tm = min(tm, _round_up(M, 8))
    Mp = _round_up(M, tm)
    if Mp != M:
        flat = jnp.pad(flat, ((0, Mp - M), (0, 0)))
        act = jnp.pad(act, ((0, Mp - M), (0, 0)))
    out = pl.pallas_call(
        _vision_zx_kernel,
        out_shape=jax.ShapeDtypeStruct((Mp, G), jnp.bfloat16),
        grid=(Mp // tm,),
        in_specs=[pl.BlockSpec((tm, K), lambda i: (i, 0)),
                  pl.BlockSpec((tm, 1), lambda i: (i, 0)),
                  pl.BlockSpec((K, 128), lambda i: (0, 0)),
                  pl.BlockSpec((1, 128), lambda i: (0, 0)),
                  pl.BlockSpec((128, G), lambda i: (0, 0)),
                  pl.BlockSpec((1, G), lambda i: (0, 0)),
                  pl.BlockSpec((1, G), lambda i: (0, 0))],
        out_specs=pl.BlockSpec((tm, G), lambda i: (i, 0)),
        compiler_params=pltpu.CompilerParams(
            dimension_semantics=("parallel",),
            vmem_limit_bytes=_VMEM_LIMIT),
    )(flat, act, params['vis_w'], params['vis_b'],
      params['lstm_wx'], params['lstm_wa'], params['lstm_b'])
    return out[:M]


# ----------------------------------------------------------------------------
# LSTM recurrence: only h @ W_hh on the serial critical path
# ----------------------------------------------------------------------------
def _lstm_cell(zx_ref, whh_ref, h_sc, c_sc):
    H = h_sc.shape[1]
    z = zx_ref[0].astype(jnp.float32) + jnp.dot(
        h_sc[...].astype(whh_ref.dtype), whh_ref[...],
        preferred_element_type=jnp.float32)                       # (B, 4H) f32
    i_g = jax.nn.sigmoid(z[:, 0:H])
    f_g = jax.nn.sigmoid(z[:, H:2 * H])
    g_g = jnp.tanh(z[:, 2 * H:3 * H])
    o_g = jax.nn.sigmoid(z[:, 3 * H:4 * H])
    c_new = f_g * c_sc[...] + i_g * g_g
    h_new = o_g * jnp.tanh(c_new)
    c_sc[...] = c_new
    h_sc[...] = h_new
    return h_new, c_new


def _lstm_train_kernel(zx_ref, whh_ref, out_ref, hN_ref, cN_ref, h_sc, c_sc):
    t = pl.program_id(0)

    @pl.when(t == 0)
    def _():
        h_sc[...] = jnp.zeros_like(h_sc)
        c_sc[...] = jnp.zeros_like(c_sc)

    h_new, c_new = _lstm_cell(zx_ref, whh_ref, h_sc, c_sc)
    out_ref[0] = h_new.astype(out_ref.dtype)

    # Finalize: hN/cN have constant-index out BlockSpecs and are only written
    # on the last step — valid because the time axis is "arbitrary".
    @pl.when(t == pl.num_programs(0) - 1)
    def _():
        hN_ref[...] = h_new
        cN_ref[...] = c_new


def lstm_recurrence_train(zx, whh):
    """zx: (T, B, 4H) bf16 (input proj already applied), whh: (H, 4H) bf16."""
    T, B, G = zx.shape
    H = whh.shape[0]
    return pl.pallas_call(
        _lstm_train_kernel,
        out_shape=(jax.ShapeDtypeStruct((T, B, H), jnp.bfloat16),
                   jax.ShapeDtypeStruct((B, H), jnp.float32),
                   jax.ShapeDtypeStruct((B, H), jnp.float32)),
        grid=(T,),
        in_specs=[pl.BlockSpec((1, B, G), lambda t: (t, 0, 0)),
                  pl.BlockSpec((H, G), lambda t: (0, 0))],
        out_specs=(pl.BlockSpec((1, B, H), lambda t: (t, 0, 0)),
                   pl.BlockSpec((B, H), lambda t: (0, 0)),
                   pl.BlockSpec((B, H), lambda t: (0, 0))),
        scratch_shapes=[pltpu.VMEM((B, H), jnp.float32),
                        pltpu.VMEM((B, H), jnp.float32)],
        compiler_params=pltpu.CompilerParams(
            dimension_semantics=("arbitrary",),
            vmem_limit_bytes=_VMEM_LIMIT),
    )(zx, whh)


def _lstm_rollout_kernel(zx_ref, whh_ref, w1_ref, b1_ref, w2_ref, b2_ref,
                         w3_ref, b3_ref, q_ref, hN_ref, cN_ref, h_sc, c_sc):
    t = pl.program_id(0)

    @pl.when(t == 0)
    def _():
        h_sc[...] = jnp.zeros_like(h_sc)
        c_sc[...] = jnp.zeros_like(c_sc)

    h_new, c_new = _lstm_cell(zx_ref, whh_ref, h_sc, c_sc)

    # Rollout only needs the last step: fuse the three head Linears here and
    # never write rec_out to HBM.
    @pl.when(t == pl.num_programs(0) - 1)
    def _():
        hN_ref[...] = h_new
        cN_ref[...] = c_new
        hh = jnp.dot(h_new.astype(w1_ref.dtype), w1_ref[...],
                     preferred_element_type=jnp.float32)
        hh = jnp.maximum(hh + b1_ref[...], 0.0).astype(w2_ref.dtype)
        hh = jnp.dot(hh, w2_ref[...], preferred_element_type=jnp.float32)
        hh = jnp.maximum(hh + b2_ref[...], 0.0).astype(w3_ref.dtype)
        q = jnp.dot(hh, w3_ref[...],
                    preferred_element_type=jnp.float32) + b3_ref[...]
        q_ref[...] = q


def lstm_rollout_q(zx, params):
    """Run the recurrence and return (q_padded_last, h_n, c_n)."""
    T, B, G = zx.shape
    H = params['lstm_whh'].shape[0]
    NAP = params['d2_w'].shape[1]          # 128 (lane-dense padded head)
    return pl.pallas_call(
        _lstm_rollout_kernel,
        out_shape=(jax.ShapeDtypeStruct((B, NAP), jnp.float32),
                   jax.ShapeDtypeStruct((B, H), jnp.float32),
                   jax.ShapeDtypeStruct((B, H), jnp.float32)),
        grid=(T,),
        in_specs=[pl.BlockSpec((1, B, G), lambda t: (t, 0, 0)),
                  pl.BlockSpec((H, G), lambda t: (0, 0)),
                  pl.BlockSpec((H, 128), lambda t: (0, 0)),
                  pl.BlockSpec((1, 128), lambda t: (0, 0)),
                  pl.BlockSpec((128, 128), lambda t: (0, 0)),
                  pl.BlockSpec((1, 128), lambda t: (0, 0)),
                  pl.BlockSpec((128, NAP), lambda t: (0, 0)),
                  pl.BlockSpec((1, NAP), lambda t: (0, 0))],
        out_specs=(pl.BlockSpec((B, NAP), lambda t: (0, 0)),
                   pl.BlockSpec((B, H), lambda t: (0, 0)),
                   pl.BlockSpec((B, H), lambda t: (0, 0))),
        scratch_shapes=[pltpu.VMEM((B, H), jnp.float32),
                        pltpu.VMEM((B, H), jnp.float32)],
        compiler_params=pltpu.CompilerParams(
            dimension_semantics=("arbitrary",),
            vmem_limit_bytes=_VMEM_LIMIT),
    )(zx, params['lstm_whh'], params['fr_w'], params['fr_b'],
      params['d1_w'], params['d1_b'], params['d2_w'], params['d2_b'])


# ----------------------------------------------------------------------------
# Fused Q-value heads (train mode, all T*B rows): 256->128 ReLU -> 128 ReLU -> 128(pad of 5)
# ----------------------------------------------------------------------------
def _heads_kernel(x_ref, w1_ref, b1_ref, w2_ref, b2_ref, w3_ref, b3_ref, o_ref):
    h = jnp.dot(x_ref[...], w1_ref[...], preferred_element_type=jnp.float32)
    h = jnp.maximum(h + b1_ref[...], 0.0).astype(w2_ref.dtype)
    h = jnp.dot(h, w2_ref[...], preferred_element_type=jnp.float32)
    h = jnp.maximum(h + b2_ref[...], 0.0).astype(w3_ref.dtype)
    q = jnp.dot(h, w3_ref[...], preferred_element_type=jnp.float32) + b3_ref[...]
    o_ref[...] = q


def dqn_heads(x, params, tm=512):
    """x: (M, 256) bf16 -> q: (M, n_actions) f32 (padded-N=128 kernel output)."""
    M, K = x.shape
    NAP = params['d2_w'].shape[1]
    tm = min(tm, _round_up(M, 8))
    Mp = _round_up(M, tm)
    if Mp != M:
        x = jnp.pad(x, ((0, Mp - M), (0, 0)))
    out = pl.pallas_call(
        _heads_kernel,
        out_shape=jax.ShapeDtypeStruct((Mp, NAP), jnp.float32),
        grid=(Mp // tm,),
        in_specs=[pl.BlockSpec((tm, K), lambda i: (i, 0)),
                  pl.BlockSpec((K, 128), lambda i: (0, 0)),
                  pl.BlockSpec((1, 128), lambda i: (0, 0)),
                  pl.BlockSpec((128, 128), lambda i: (0, 0)),
                  pl.BlockSpec((1, 128), lambda i: (0, 0)),
                  pl.BlockSpec((128, NAP), lambda i: (0, 0)),
                  pl.BlockSpec((1, NAP), lambda i: (0, 0))],
        out_specs=pl.BlockSpec((tm, NAP), lambda i: (i, 0)),
        compiler_params=pltpu.CompilerParams(
            dimension_semantics=("parallel",),
            vmem_limit_bytes=_VMEM_LIMIT),
    )(x, params['fr_w'], params['fr_b'], params['d1_w'], params['d1_b'],
      params['d2_w'], params['d2_b'])
    return out[:M, :N_ACTIONS]


# ----------------------------------------------------------------------------
# Parameters: torch-like init, then one-time re-layout / fold / bf16 cast
# ----------------------------------------------------------------------------
def init_params(key):
    ks = jax.random.split(key, 18)

    def u(k, shape, fan_in):
        bound = 1.0 / jnp.sqrt(jnp.float32(fan_in))
        return jax.random.uniform(k, shape, jnp.float32, -bound, bound)

    return {
        'c1_w': u(ks[0], (128, 3, 8, 8), 3 * 64), 'c1_b': u(ks[1], (128,), 3 * 64),
        'c2_w': u(ks[2], (128, 128, 3, 3), 128 * 9), 'c2_b': u(ks[3], (128,), 128 * 9),
        'c3_w': u(ks[4], (128, 128, 3, 3), 128 * 9), 'c3_b': u(ks[5], (128,), 128 * 9),
        'c4_w': u(ks[6], (16, 128, 1, 1), 128), 'c4_b': u(ks[7], (16,), 128),
        'vo_w': u(ks[8], (576, 128), 576), 'vo_b': u(ks[9], (128,), 576),
        # LSTM: input = states_dim + actions_dim = 129, hidden = 256
        'lstm_wih': u(ks[10], (129, 4 * HIDDEN), HIDDEN),
        'lstm_whh': u(ks[11], (HIDDEN, 4 * HIDDEN), HIDDEN),
        'lstm_b': u(ks[12], (4 * HIDDEN,), HIDDEN),    # b_ih + b_hh folded
        'fr_w': u(ks[13], (HIDDEN, 128), HIDDEN), 'fr_b': u(ks[14], (128,), HIDDEN),
        'd1_w': u(ks[15], (128, 128), 128), 'd1_b': u(ks[16], (128,), 128),
        'd2_w': u(ks[17], (128, N_ACTIONS), 128),
        'd2_b': jnp.zeros((N_ACTIONS,), jnp.float32),
    }


def prepare_params(raw):
    """One-time weight re-layout / folding / bf16 cast for the Pallas kernels."""
    p = {}
    # conv1 (8x8 s8) as a matmul: rows ordered (cin, kh, kw) to match patches.
    p['c1_w'] = raw['c1_w'].reshape(128, -1).T.astype(jnp.bfloat16)       # (192,128)
    p['c1_b'] = raw['c1_b'].reshape(1, 128).astype(jnp.float32)
    # conv2/conv3 (3x3 s1) im2col layout: rows ordered (ky, kx, cin) -> (1152, 128)
    p['c2_w'] = raw['c2_w'].transpose(2, 3, 1, 0).reshape(9 * 128, 128).astype(jnp.bfloat16)
    p['c2_b'] = raw['c2_b'].reshape(1, 128).astype(jnp.float32)
    p['c3_w'] = raw['c3_w'].transpose(2, 3, 1, 0).reshape(9 * 128, 128).astype(jnp.bfloat16)
    p['c3_b'] = raw['c3_b'].reshape(1, 128).astype(jnp.float32)
    # Fold the 1x1 conv (128->16) into the 576->128 Linear, permuting rows so an
    # NHWC flatten of the 6x6x128 activation matches torch's NCHW flatten.
    c4 = raw['c4_w'][:, :, 0, 0]                           # (16, 128)  [cout, cin]
    vo = raw['vo_w'].reshape(16, 36, 128)                  # (cout, h*w, out)
    w_eff = jnp.einsum('kc,kpo->pco', c4, vo).reshape(36 * 128, 128)
    b_eff = raw['vo_b'] + jnp.einsum('k,kpo->o', raw['c4_b'], vo)
    p['vis_w'] = w_eff.astype(jnp.bfloat16)                # (4608, 128)
    p['vis_b'] = b_eff.reshape(1, 128).astype(jnp.float32)
    # LSTM input projection split: 128-d vision part (MXU) + single action
    # feature (rank-1 VPU term); biases b_ih+b_hh pre-folded.
    p['lstm_wx'] = raw['lstm_wih'][:128, :].astype(jnp.bfloat16)          # (128,1024)
    p['lstm_wa'] = raw['lstm_wih'][128:129, :].astype(jnp.float32)        # (1,1024)
    p['lstm_b'] = raw['lstm_b'].reshape(1, -1).astype(jnp.float32)
    p['lstm_whh'] = raw['lstm_whh'].astype(jnp.bfloat16)                  # (256,1024)
    # heads; final Linear zero-padded to N=128 for a lane-dense output block.
    p['fr_w'] = raw['fr_w'].astype(jnp.bfloat16)
    p['fr_b'] = raw['fr_b'].reshape(1, -1).astype(jnp.float32)
    p['d1_w'] = raw['d1_w'].astype(jnp.bfloat16)
    p['d1_b'] = raw['d1_b'].reshape(1, -1).astype(jnp.float32)
    na = raw['d2_w'].shape[1]
    d2w = jnp.zeros((128, 128), jnp.float32).at[:, :na].set(raw['d2_w'])
    d2b = jnp.zeros((1, 128), jnp.float32).at[0, :na].set(raw['d2_b'])
    p['d2_w'] = d2w.astype(jnp.bfloat16)
    p['d2_b'] = d2b
    return p


# ----------------------------------------------------------------------------
# Forward pass (fresh zero recurrent state, matching the module's first call)
# ----------------------------------------------------------------------------
def dqn_forward(params, obs, action_taken, mode='rollout'):
    # obs: (T, B, 3, 80, 80), action_taken: (T, B)
    T, B = obs.shape[0], obs.shape[1]
    Hin, Win = obs.shape[3], obs.shape[4]
    TB = T * B
    # Cast to bf16 BEFORE the patch transpose (halves the pre-kernel traffic).
    x = obs.astype(jnp.bfloat16).reshape(TB, 3, Hin, Win)

    # conv1 8x8/s8 + ReLU: non-overlapping patches (no duplication) -> matmul.
    OH1, OW1 = Hin // 8, Win // 8
    patches = (x.reshape(TB, 3, OH1, 8, OW1, 8)
                 .transpose(0, 2, 4, 1, 3, 5)
                 .reshape(TB * OH1 * OW1, 3 * 64))
    y1 = linear(patches, params['c1_w'], params['c1_b'], relu=True,
                out_dtype=jnp.bfloat16)
    x1 = y1.reshape(TB, OH1, OW1, 128)                                   # NHWC

    # conv2 / conv3: 3x3/s1 + ReLU via per-tile im2col, stays NHWC.
    # TODO(synk): for the tiny rollout path (grid==1 everywhere) conv2+conv3+
    # vision_lstm_input could be fused into one pallas_call to remove the
    # remaining launch/DMA latency; left unfused here.
    x2 = conv3x3(x1, params['c2_w'], params['c2_b'])                     # (TB,8,8,128)
    x3 = conv3x3(x2, params['c3_w'], params['c3_b'])                     # (TB,6,6,128)

    # Fused [1x1 conv + vision Linear] + LSTM input projection (bf16 out).
    flat = x3.reshape(TB, -1)                                            # (TB, 4608)
    act = action_taken.astype(jnp.float32).reshape(TB, 1)
    zx = vision_lstm_input(flat, act, params).reshape(T, B, 4 * HIDDEN)

    # TODO(synk): persistent (h, c) caching across calls is carried
    # functionally by the caller; this kernel always starts from zero state.
    if mode == 'rollout':
        q_pad, h_n, c_n = lstm_rollout_q(zx, params)     # heads fused in-kernel
        return q_pad[:, :N_ACTIONS], h_n, c_n

    rec_out, h_n, c_n = lstm_recurrence_train(zx, params['lstm_whh'])
    q = dqn_heads(rec_out.reshape(TB, HIDDEN), params).reshape(T, B, N_ACTIONS)
    return q, h_n[None], c_n[None]


if __name__ == "__main__":
    key = jax.random.PRNGKey(0)
    kp, ko, ka = jax.random.split(key, 3)
    params = prepare_params(init_params(kp))

    # Module structure forces 80x80 inputs (Linear(576,...) => 6x6 post-conv).
    T, B = 2, 2
    obs = jax.random.normal(ko, (T, B, 3, 80, 80), jnp.float32)
    action_taken = jax.random.randint(ka, (T, B), 0, N_ACTIONS).astype(jnp.float32)

    fwd_roll = jax.jit(functools.partial(dqn_forward, mode='rollout'))
    q_values, hidden_state, cell_state = fwd_roll(params, obs, action_taken)
    jax.block_until_ready((q_values, hidden_state, cell_state))
    assert q_values.shape == (B, N_ACTIONS)
    assert hidden_state.shape == (B, HIDDEN)
    assert cell_state.shape == (B, HIDDEN)
    assert bool(jnp.all(jnp.isfinite(q_values)))

    fwd_train = jax.jit(functools.partial(dqn_forward, mode='train'))
    q_tr, h_tr, c_tr = fwd_train(params, obs, action_taken)
    jax.block_until_ready((q_tr, h_tr, c_tr))
    assert q_tr.shape == (T, B, N_ACTIONS)
    assert h_tr.shape == (1, B, HIDDEN)
    assert c_tr.shape == (1, B, HIDDEN)
    assert bool(jnp.all(jnp.isfinite(q_tr)))

    print("KERNEL_OK")
</pallas_src>

<mosaic_0001>
module attributes {stable_mosaic.version = 11 : i64} {
  func.func @_linear_kernel(%arg0: i32, %arg1: memref<400x192xbf16, #tpu.memory_space<vmem>>, %arg2: memref<192x128xbf16, #tpu.memory_space<vmem>>, %arg3: memref<1x128xf32, #tpu.memory_space<vmem>>, %arg4: memref<400x128xbf16, #tpu.memory_space<vmem>>) attributes {dimension_semantics = [#tpu.dimension_semantics<parallel>], iteration_bounds = array<i64: 1>, scalar_prefetch = 0 : i64, scratch_operands = 0 : i64, tpu.core_type = #tpu.core_type<tc>, window_params = [{transform_indices = @transform_0, window_bounds = array<i64: 400, 192>}, {pipeline_mode = #tpu.pipeline_mode<synchronous>, transform_indices = @transform_1, window_bounds = array<i64: 192, 128>}, {pipeline_mode = #tpu.pipeline_mode<synchronous>, transform_indices = @transform_2, window_bounds = array<i64: 1, 128>}, {transform_indices = @transform_3, window_bounds = array<i64: 400, 128>}]} {
    %c0 = arith.constant 0 : index
    %c0_0 = arith.constant 0 : index
    %0 = vector.load %arg1[%c0, %c0_0] : memref<400x192xbf16, #tpu.memory_space<vmem>>, vector<400x192xbf16>
    %c0_1 = arith.constant 0 : index
    %c0_2 = arith.constant 0 : index
    %1 = vector.load %arg2[%c0_1, %c0_2] : memref<192x128xbf16, #tpu.memory_space<vmem>>, vector<192x128xbf16>
    %cst = arith.constant dense<0.000000e+00> : vector<400x128xf32>
    %2 = tpu.matmul %0, %1, %cst {dimension_numbers = #tpu.dot_dimension_numbers<[1], [0], [0], [1], [0, 0, 1, 1], [], []>} : vector<400x192xbf16>, vector<192x128xbf16>, vector<400x128xf32> -> vector<400x128xf32>
    %c0_3 = arith.constant 0 : index
    %c0_4 = arith.constant 0 : index
    %3 = vector.load %arg3[%c0_3, %c0_4] : memref<1x128xf32, #tpu.memory_space<vmem>>, vector<1x128xf32>
    %4 = vector.broadcast %3 : vector<1x128xf32> to vector<400x128xf32>
    %5 = arith.addf %2, %4 : vector<400x128xf32>
    %cst_5 = arith.constant 0.000000e+00 : f32
    %6 = vector.broadcast %cst_5 : f32 to vector<400x128xf32>
    %7 = arith.maximumf %5, %6 : vector<400x128xf32>
    %8 = arith.truncf %7 : vector<400x128xf32> to vector<400x128xbf16>
    %c0_6 = arith.constant 0 : index
    %c0_7 = arith.constant 0 : index
    %9 = vector.load %arg4[%c0_6, %c0_7] : memref<400x128xbf16, #tpu.memory_space<vmem>>, vector<400x128xbf16>
    tpu.vector_store %arg4[%c0_6, %c0_7], %8 {strides = array<i32>} : memref<400x128xbf16, #tpu.memory_space<vmem>>, vector<400x128xbf16>,
    return
  }
  func.func @transform_0(%arg0: i32) -> (i32, i32) {
    %c0_i32 = arith.constant 0 : i32
    %c0_i32_0 = arith.constant 0 : i32
    return %arg0, %c0_i32 : i32, i32
  }
  func.func @transform_1(%arg0: i32) -> (i32, i32) {
    %c0_i32 = arith.constant 0 : i32
    %c0_i32_0 = arith.constant 0 : i32
    %c0_i32_1 = arith.constant 0 : i32
    return %c0_i32, %c0_i32_0 : i32, i32
  }
  func.func @transform_2(%arg0: i32) -> (i32, i32) {
    %c0_i32 = arith.constant 0 : i32
    %c0_i32_0 = arith.constant 0 : i32
    %c0_i32_1 = arith.constant 0 : i32
    return %c0_i32, %c0_i32_0 : i32, i32
  }
  func.func @transform_3(%arg0: i32) -> (i32, i32) {
    %c0_i32 = arith.constant 0 : i32
    %c0_i32_0 = arith.constant 0 : i32
    return %arg0, %c0_i32 : i32, i32
  }
}

module attributes {stable_mosaic.version = 11 : i64} {
  func.func @_conv3x3_kernel(%arg0: i32, %arg1: memref<4x10x10x128xbf16, #tpu.memory_space<vmem>>, %arg2: memref<1152x128xbf16, #tpu.memory_space<vmem>>, %arg3: memref<1x128xf32, #tpu.memory_space<vmem>>, %arg4: memref<4x8x8x128xbf16, #tpu.memory_space<vmem>>) attributes {dimension_semantics = [#tpu.dimension_semantics<parallel>], iteration_bounds = array<i64: 1>, scalar_prefetch = 0 : i64, scratch_operands = 0 : i64, tpu.core_type = #tpu.core_type<tc>, window_params = [{transform_indices = @transform_0, window_bounds = array<i64: 4, 10, 10, 128>}, {pipeline_mode = #tpu.pipeline_mode<synchronous>, transform_indices = @transform_1, window_bounds = array<i64: 1152, 128>}, {pipeline_mode = #tpu.pipeline_mode<synchronous>, transform_indices = @transform_2, window_bounds = array<i64: 1, 128>}, {transform_indices = @transform_3, window_bounds = array<i64: 4, 8, 8, 128>}]} {
    %c0 = arith.constant 0 : index
    %c0_0 = arith.constant 0 : index
    %c0_1 = arith.constant 0 : index
    %c0_2 = arith.constant 0 : index
    %0 = vector.load %arg1[%c0, %c0_0, %c0_1, %c0_2] : memref<4x10x10x128xbf16, #tpu.memory_space<vmem>>, vector<4x8x8x128xbf16>
    %c0_3 = arith.constant 0 : index
    %c0_4 = arith.constant 0 : index
    %c1 = arith.constant 1 : index
    %c0_5 = arith.constant 0 : index
    %1 = vector.load %arg1[%c0_3, %c0_4, %c1, %c0_5] : memref<4x10x10x128xbf16, #tpu.memory_space<vmem>>, vector<4x8x8x128xbf16>
    %c0_6 = arith.constant 0 : index
    %c0_7 = arith.constant 0 : index
    %c2 = arith.constant 2 : index
    %c0_8 = arith.constant 0 : index
    %2 = vector.load %arg1[%c0_6, %c0_7, %c2, %c0_8] : memref<4x10x10x128xbf16, #tpu.memory_space<vmem>>, vector<4x8x8x128xbf16>
    %c0_9 = arith.constant 0 : index
    %c1_10 = arith.constant 1 : index
    %c0_11 = arith.constant 0 : index
    %c0_12 = arith.constant 0 : index
    %3 = vector.load %arg1[%c0_9, %c1_10, %c0_11, %c0_12] : memref<4x10x10x128xbf16, #tpu.memory_space<vmem>>, vector<4x8x8x128xbf16>
    %c0_13 = arith.constant 0 : index
    %c1_14 = arith.constant 1 : index
    %c1_15 = arith.constant 1 : index
    %c0_16 = arith.constant 0 : index
    %4 = vector.load %arg1[%c0_13, %c1_14, %c1_15, %c0_16] : memref<4x10x10x128xbf16, #tpu.memory_space<vmem>>, vector<4x8x8x128xbf16>
    %c0_17 = arith.constant 0 : index
    %c1_18 = arith.constant 1 : index
    %c2_19 = arith.constant 2 : index
    %c0_20 = arith.constant 0 : index
    %5 = vector.load %arg1[%c0_17, %c1_18, %c2_19, %c0_20] : memref<4x10x10x128xbf16, #tpu.memory_space<vmem>>, vector<4x8x8x128xbf16>
    %c0_21 = arith.constant 0 : index
    %c2_22 = arith.constant 2 : index
    %c0_23 = arith.constant 0 : index
    %c0_24 = arith.constant 0 : index
    %6 = vector.load %arg1[%c0_21, %c2_22, %c0_23, %c0_24] : memref<4x10x10x128xbf16, #tpu.memory_space<vmem>>, vector<4x8x8x128xbf16>
    %c0_25 = arith.constant 0 : index
    %c2_26 = arith.constant 2 : index
    %c1_27 = arith.constant 1 : index
    %c0_28 = arith.constant 0 : index
    %7 = vector.load %arg1[%c0_25, %c2_26, %c1_27, %c0_28] : memref<4x10x10x128xbf16, #tpu.memory_space<vmem>>, vector<4x8x8x128xbf16>
    %c0_29 = arith.constant 0 : index
    %c2_30 = arith.constant 2 : index
    %c2_31 = arith.constant 2 : index
    %c0_32 = arith.constant 0 : index
    %8 = vector.load %arg1[%c0_29, %c2_30, %c2_31, %c0_32] : memref<4x10x10x128xbf16, #tpu.memory_space<vmem>>, vector<4x8x8x128xbf16>
    %9 = tpu.concatenate %0, %1, %2, %3, %4, %5, %6, %7, %8 in 3 : vector<4x8x8x128xbf16>, vector<4x8x8x128xbf16>, vector<4x8x8x128xbf16>, vector<4x8x8x128xbf16>, vector<4x8x8x128xbf16>, vector<4x8x8x128xbf16>, vector<4x8x8x128xbf16>, vector<4x8x8x128xbf16>, vector<4x8x8x128xbf16> -> vector<4x8x8x1152xbf16>
    %10 = vector.shape_cast %9 : vector<4x8x8x1152xbf16> to vector<256x1152xbf16>
    %c0_33 = arith.constant 0 : index
    %c0_34 = arith.constant 0 : index
    %11 = vector.load %arg2[%c0_33, %c0_34] : memref<1152x128xbf16, #tpu.memory_space<vmem>>, vector<1152x128xbf16>
    %cst = arith.constant dense<0.000000e+00> : vector<256x128xf32>
    %12 = tpu.matmul %10, %11, %cst {dimension_numbers = #tpu.dot_dimension_numbers<[1], [0], [0], [1], [0, 0, 1, 1], [], []>} : vector<256x1152xbf16>, vector<1152x128xbf16>, vector<256x128xf32> -> vector<256x128xf32>
    %c0_35 = arith.constant 0 : index
    %c0_36 = arith.constant 0 : index
    %13 = vector.load %arg3[%c0_35, %c0_36] : memref<1x128xf32, #tpu.memory_space<vmem>>, vector<1x128xf32>
    %14 = vector.broadcast %13 : vector<1x128xf32> to vector<256x128xf32>
    %15 = arith.addf %12, %14 : vector<256x128xf32>
    %cst_37 = arith.constant 0.000000e+00 : f32
    %16 = vector.broadcast %cst_37 : f32 to vector<256x128xf32>
    %17 = arith.maximumf %15, %16 : vector<256x128xf32>
    %18 = vector.shape_cast %17 : vector<256x128xf32> to vector<4x8x8x128xf32>
    %19 = arith.truncf %18 : vector<4x8x8x128xf32> to vector<4x8x8x128xbf16>
    %c0_38 = arith.constant 0 : index
    %c0_39 = arith.constant 0 : index
    %c0_40 = arith.constant 0 : index
    %c0_41 = arith.constant 0 : index
    %20 = vector.load %arg4[%c0_38, %c0_39, %c0_40, %c0_41] : memref<4x8x8x128xbf16, #tpu.memory_space<vmem>>, vector<4x8x8x128xbf16>
    tpu.vector_store %arg4[%c0_38, %c0_39, %c0_40, %c0_41], %19 {strides = array<i32>} : memref<4x8x8x128xbf16, #tpu.memory_space<vmem>>, vector<4x8x8x128xbf16>,
    return
  }
  func.func @transform_0(%arg0: i32) -> (i32, i32, i32, i32) {
    %c0_i32 = arith.constant 0 : i32
    %c0_i32_0 = arith.constant 0 : i32
    %c0_i32_1 = arith.constant 0 : i32
    %c0_i32_2 = arith.constant 0 : i32
    return %arg0, %c0_i32, %c0_i32_0, %c0_i32_1 : i32, i32, i32, i32
  }
  func.func @transform_1(%arg0: i32) -> (i32, i32) {
    %c0_i32 = arith.constant 0 : i32
    %c0_i32_0 = arith.constant 0 : i32
    %c0_i32_1 = arith.constant 0 : i32
    return %c0_i32, %c0_i32_0 : i32, i32
  }
  func.func @transform_2(%arg0: i32) -> (i32, i32) {
    %c0_i32 = arith.constant 0 : i32
    %c0_i32_0 = arith.constant 0 : i32
    %c0_i32_1 = arith.constant 0 : i32
    return %c0_i32, %c0_i32_0 : i32, i32
  }
  func.func @transform_3(%arg0: i32) -> (i32, i32, i32, i32) {
    %c0_i32 = arith.constant 0 : i32
    %c0_i32_0 = arith.constant 0 : i32
    %c0_i32_1 = arith.constant 0 : i32
    %c0_i32_2 = arith.constant 0 : i32
    return %arg0, %c0_i32, %c0_i32_0, %c0_i32_1 : i32, i32, i32, i32
  }
}

module attributes {stable_mosaic.version = 11 : i64} {
  func.func @_conv3x3_kernel(%arg0: i32, %arg1: memref<4x8x10x128xbf16, #tpu.memory_space<vmem>>, %arg2: memref<1152x128xbf16, #tpu.memory_space<vmem>>, %arg3: memref<1x128xf32, #tpu.memory_space<vmem>>, %arg4: memref<4x6x8x128xbf16, #tpu.memory_space<vmem>>) attributes {dimension_semantics = [#tpu.dimension_semantics<parallel>], iteration_bounds = array<i64: 1>, scalar_prefetch = 0 : i64, scratch_operands = 0 : i64, tpu.core_type = #tpu.core_type<tc>, window_params = [{transform_indices = @transform_0, window_bounds = array<i64: 4, 8, 10, 128>}, {pipeline_mode = #tpu.pipeline_mode<synchronous>, transform_indices = @transform_1, window_bounds = array<i64: 1152, 128>}, {pipeline_mode = #tpu.pipeline_mode<synchronous>, transform_indices = @transform_2, window_bounds = array<i64: 1, 128>}, {transform_indices = @transform_3, window_bounds = array<i64: 4, 6, 8, 128>}]} {
    %c0 = arith.constant 0 : index
    %c0_0 = arith.constant 0 : index
    %c0_1 = arith.constant 0 : index
    %c0_2 = arith.constant 0 : index
    %0 = vector.load %arg1[%c0, %c0_0, %c0_1, %c0_2] : memref<4x8x10x128xbf16, #tpu.memory_space<vmem>>, vector<4x6x8x128xbf16>
    %c0_3 = arith.constant 0 : index
    %c0_4 = arith.constant 0 : index
    %c1 = arith.constant 1 : index
    %c0_5 = arith.constant 0 : index
    %1 = vector.load %arg1[%c0_3, %c0_4, %c1, %c0_5] : memref<4x8x10x128xbf16, #tpu.memory_space<vmem>>, vector<4x6x8x128xbf16>
    %c0_6 = arith.constant 0 : index
    %c0_7 = arith.constant 0 : index
    %c2 = arith.constant 2 : index
    %c0_8 = arith.constant 0 : index
    %2 = vector.load %arg1[%c0_6, %c0_7, %c2, %c0_8] : memref<4x8x10x128xbf16, #tpu.memory_space<vmem>>, vector<4x6x8x128xbf16>
    %c0_9 = arith.constant 0 : index
    %c1_10 = arith.constant 1 : index
    %c0_11 = arith.constant 0 : index
    %c0_12 = arith.constant 0 : index
    %3 = vector.load %arg1[%c0_9, %c1_10, %c0_11, %c0_12] : memref<4x8x10x128xbf16, #tpu.memory_space<vmem>>, vector<4x6x8x128xbf16>
    %c0_13 = arith.constant 0 : index
    %c1_14 = arith.constant 1 : index
    %c1_15 = arith.constant 1 : index
    %c0_16 = arith.constant 0 : index
    %4 = vector.load %arg1[%c0_13, %c1_14, %c1_15, %c0_16] : memref<4x8x10x128xbf16, #tpu.memory_space<vmem>>, vector<4x6x8x128xbf16>
    %c0_17 = arith.constant 0 : index
    %c1_18 = arith.constant 1 : index
    %c2_19 = arith.constant 2 : index
    %c0_20 = arith.constant 0 : index
    %5 = vector.load %arg1[%c0_17, %c1_18, %c2_19, %c0_20] : memref<4x8x10x128xbf16, #tpu.memory_space<vmem>>, vector<4x6x8x128xbf16>
    %c0_21 = arith.constant 0 : index
    %c2_22 = arith.constant 2 : index
    %c0_23 = arith.constant 0 : index
    %c0_24 = arith.constant 0 : index
    %6 = vector.load %arg1[%c0_21, %c2_22, %c0_23, %c0_24] : memref<4x8x10x128xbf16, #tpu.memory_space<vmem>>, vector<4x6x8x128xbf16>
    %c0_25 = arith.constant 0 : index
    %c2_26 = arith.constant 2 : index
    %c1_27 = arith.constant 1 : index
    %c0_28 = arith.constant 0 : index
    %7 = vector.load %arg1[%c0_25, %c2_26, %c1_27, %c0_28] : memref<4x8x10x128xbf16, #tpu.memory_space<vmem>>, vector<4x6x8x128xbf16>
    %c0_29 = arith.constant 0 : index
    %c2_30 = arith.constant 2 : index
    %c2_31 = arith.constant 2 : index
    %c0_32 = arith.constant 0 : index
    %8 = vector.load %arg1[%c0_29, %c2_30, %c2_31, %c0_32] : memref<4x8x10x128xbf16, #tpu.memory_space<vmem>>, vector<4x6x8x128xbf16>
    %9 = tpu.concatenate %0, %1, %2, %3, %4, %5, %6, %7, %8 in 3 : vector<4x6x8x128xbf16>, vector<4x6x8x128xbf16>, vector<4x6x8x128xbf16>, vector<4x6x8x128xbf16>, vector<4x6x8x128xbf16>, vector<4x6x8x128xbf16>, vector<4x6x8x128xbf16>, vector<4x6x8x128xbf16>, vector<4x6x8x128xbf16> -> vector<4x6x8x1152xbf16>
    %10 = vector.shape_cast %9 : vector<4x6x8x1152xbf16> to vector<192x1152xbf16>
    %c0_33 = arith.constant 0 : index
    %c0_34 = arith.constant 0 : index
    %11 = vector.load %arg2[%c0_33, %c0_34] : memref<1152x128xbf16, #tpu.memory_space<vmem>>, vector<1152x128xbf16>
    %cst = arith.constant dense<0.000000e+00> : vector<192x128xf32>
    %12 = tpu.matmul %10, %11, %cst {dimension_numbers = #tpu.dot_dimension_numbers<[1], [0], [0], [1], [0, 0, 1, 1], [], []>} : vector<192x1152xbf16>, vector<1152x128xbf16>, vector<192x128xf32> -> vector<192x128xf32>
    %c0_35 = arith.constant 0 : index
    %c0_36 = arith.constant 0 : index
    %13 = vector.load %arg3[%c0_35, %c0_36] : memref<1x128xf32, #tpu.memory_space<vmem>>, vector<1x128xf32>
    %14 = vector.broadcast %13 : vector<1x128xf32> to vector<192x128xf32>
    %15 = arith.addf %12, %14 : vector<192x128xf32>
    %cst_37 = arith.constant 0.000000e+00 : f32
    %16 = vector.broadcast %cst_37 : f32 to vector<192x128xf32>
    %17 = arith.maximumf %15, %16 : vector<192x128xf32>
    %18 = vector.shape_cast %17 : vector<192x128xf32> to vector<4x6x8x128xf32>
    %19 = arith.truncf %18 : vector<4x6x8x128xf32> to vector<4x6x8x128xbf16>
    %c0_38 = arith.constant 0 : index
    %c0_39 = arith.constant 0 : index
    %c0_40 = arith.constant 0 : index
    %c0_41 = arith.constant 0 : index
    %20 = vector.load %arg4[%c0_38, %c0_39, %c0_40, %c0_41] : memref<4x6x8x128xbf16, #tpu.memory_space<vmem>>, vector<4x6x8x128xbf16>
    tpu.vector_store %arg4[%c0_38, %c0_39, %c0_40, %c0_41], %19 {strides = array<i32>} : memref<4x6x8x128xbf16, #tpu.memory_space<vmem>>, vector<4x6x8x128xbf16>,
    return
  }
  func.func @transform_0(%arg0: i32) -> (i32, i32, i32, i32) {
    %c0_i32 = arith.constant 0 : i32
    %c0_i32_0 = arith.constant 0 : i32
    %c0_i32_1 = arith.constant 0 : i32
    %c0_i32_2 = arith.constant 0 : i32
    return %arg0, %c0_i32, %c0_i32_0, %c0_i32_1 : i32, i32, i32, i32
  }
  func.func @transform_1(%arg0: i32) -> (i32, i32) {
    %c0_i32 = arith.constant 0 : i32
    %c0_i32_0 = arith.constant 0 : i32
    %c0_i32_1 = arith.constant 0 : i32
    return %c0_i32, %c0_i32_0 : i32, i32
  }
  func.func @transform_2(%arg0: i32) -> (i32, i32) {
    %c0_i32 = arith.constant 0 : i32
    %c0_i32_0 = arith.constant 0 : i32
    %c0_i32_1 = arith.constant 0 : i32
    return %c0_i32, %c0_i32_0 : i32, i32
  }
  func.func @transform_3(%arg0: i32) -> (i32, i32, i32, i32) {
    %c0_i32 = arith.constant 0 : i32
    %c0_i32_0 = arith.constant 0 : i32
    %c0_i32_1 = arith.constant 0 : i32
    %c0_i32_2 = arith.constant 0 : i32
    return %arg0, %c0_i32, %c0_i32_0, %c0_i32_1 : i32, i32, i32, i32
  }
}

module attributes {stable_mosaic.version = 11 : i64} {
  func.func @_vision_zx_kernel(%arg0: i32, %arg1: memref<8x4608xbf16, #tpu.memory_space<vmem>>, %arg2: memref<8x1xf32, #tpu.memory_space<vmem>>, %arg3: memref<4608x128xbf16, #tpu.memory_space<vmem>>, %arg4: memref<1x128xf32, #tpu.memory_space<vmem>>, %arg5: memref<128x1024xbf16, #tpu.memory_space<vmem>>, %arg6: memref<1x1024xf32, #tpu.memory_space<vmem>>, %arg7: memref<1x1024xf32, #tpu.memory_space<vmem>>, %arg8: memref<8x1024xbf16, #tpu.memory_space<vmem>>) attributes {dimension_semantics = [#tpu.dimension_semantics<parallel>], iteration_bounds = array<i64: 1>, scalar_prefetch = 0 : i64, scratch_operands = 0 : i64, tpu.core_type = #tpu.core_type<tc>, window_params = [{transform_indices = @transform_0, window_bounds = array<i64: 8, 4608>}, {transform_indices = @transform_1, window_bounds = array<i64: 8, 1>}, {pipeline_mode = #tpu.pipeline_mode<synchronous>, transform_indices = @transform_2, window_bounds = array<i64: 4608, 128>}, {pipeline_mode = #tpu.pipeline_mode<synchronous>, transform_indices = @transform_3, window_bounds = array<i64: 1, 128>}, {pipeline_mode = #tpu.pipeline_mode<synchronous>, transform_indices = @transform_4, window_bounds = array<i64: 128, 1024>}, {pipeline_mode = #tpu.pipeline_mode<synchronous>, transform_indices = @transform_5, window_bounds = array<i64: 1, 1024>}, {pipeline_mode = #tpu.pipeline_mode<synchronous>, transform_indices = @transform_6, window_bounds = array<i64: 1, 1024>}, {transform_indices = @transform_7, window_bounds = array<i64: 8, 1024>}]} {
    %c0 = arith.constant 0 : index
    %c0_0 = arith.constant 0 : index
    %0 = vector.load %arg1[%c0, %c0_0] : memref<8x4608xbf16, #tpu.memory_space<vmem>>, vector<8x4608xbf16>
    %c0_1 = arith.constant 0 : index
    %c0_2 = arith.constant 0 : index
    %1 = vector.load %arg3[%c0_1, %c0_2] : memref<4608x128xbf16, #tpu.memory_space<vmem>>, vector<4608x128xbf16>
    %cst = arith.constant dense<0.000000e+00> : vector<8x128xf32>
    %2 = tpu.matmul %0, %1, %cst {dimension_numbers = #tpu.dot_dimension_numbers<[1], [0], [0], [1], [0, 0, 1, 1], [], []>} : vector<8x4608xbf16>, vector<4608x128xbf16>, vector<8x128xf32> -> vector<8x128xf32>
    %c0_3 = arith.constant 0 : index
    %c0_4 = arith.constant 0 : index
    %3 = vector.load %arg4[%c0_3, %c0_4] : memref<1x128xf32, #tpu.memory_space<vmem>>, vector<1x128xf32>
    %4 = vector.broadcast %3 : vector<1x128xf32> to vector<8x128xf32>
    %5 = arith.addf %2, %4 : vector<8x128xf32>
    %6 = arith.truncf %5 : vector<8x128xf32> to vector<8x128xbf16>
    %c0_5 = arith.constant 0 : index
    %c0_6 = arith.constant 0 : index
    %7 = vector.load %arg5[%c0_5, %c0_6] : memref<128x1024xbf16, #tpu.memory_space<vmem>>, vector<128x1024xbf16>
    %cst_7 = arith.constant dense<0.000000e+00> : vector<8x1024xf32>
    %8 = tpu.matmul %6, %7, %cst_7 {dimension_numbers = #tpu.dot_dimension_numbers<[1], [0], [0], [1], [0, 0, 1, 1], [], []>} : vector<8x128xbf16>, vector<128x1024xbf16>, vector<8x1024xf32> -> vector<8x1024xf32>
    %c0_8 = arith.constant 0 : index
    %c0_9 = arith.constant 0 : index
    %9 = vector.load %arg2[%c0_8, %c0_9] : memref<8x1xf32, #tpu.memory_space<vmem>>, vector<8x1xf32>
    %c0_10 = arith.constant 0 : index
    %c0_11 = arith.constant 0 : index
    %10 = vector.load %arg6[%c0_10, %c0_11] : memref<1x1024xf32, #tpu.memory_space<vmem>>, vector<1x1024xf32>
    %11 = vector.broadcast %9 : vector<8x1xf32> to vector<8x1024xf32>
    %12 = vector.broadcast %10 : vector<1x1024xf32> to vector<8x1024xf32>
    %13 = arith.mulf %11, %12 : vector<8x1024xf32>
    %14 = arith.addf %8, %13 : vector<8x1024xf32>
    %c0_12 = arith.constant 0 : index
    %c0_13 = arith.constant 0 : index
    %15 = vector.load %arg7[%c0_12, %c0_13] : memref<1x1024xf32, #tpu.memory_space<vmem>>, vector<1x1024xf32>
    %16 = vector.broadcast %15 : vector<1x1024xf32> to vector<8x1024xf32>
    %17 = arith.addf %14, %16 : vector<8x1024xf32>
    %18 = arith.truncf %17 : vector<8x1024xf32> to vector<8x1024xbf16>
    %c0_14 = arith.constant 0 : index
    %c0_15 = arith.constant 0 : index
    %19 = vector.load %arg8[%c0_14, %c0_15] : memref<8x1024xbf16, #tpu.memory_space<vmem>>, vector<8x1024xbf16>
    tpu.vector_store %arg8[%c0_14, %c0_15], %18 {strides = array<i32>} : memref<8x1024xbf16, #tpu.memory_space<vmem>>, vector<8x1024xbf16>,
    return
  }
  func.func @transform_0(%arg0: i32) -> (i32, i32) {
    %c0_i32 = arith.constant 0 : i32
    %c0_i32_0 = arith.constant 0 : i32
    return %arg0, %c0_i32 : i32, i32
  }
  func.func @transform_1(%arg0: i32) -> (i32, i32) {
    %c0_i32 = arith.constant 0 : i32
    %c0_i32_0 = arith.constant 0 : i32
    return %arg0, %c0_i32 : i32, i32
  }
  func.func @transform_2(%arg0: i32) -> (i32, i32) {
    %c0_i32 = arith.constant 0 : i32
    %c0_i32_0 = arith.constant 0 : i32
    %c0_i32_1 = arith.constant 0 : i32
    return %c0_i32, %c0_i32_0 : i32, i32
  }
  func.func @transform_3(%arg0: i32) -> (i32, i32) {
    %c0_i32 = arith.constant 0 : i32
    %c0_i32_0 = arith.constant 0 : i32
    %c0_i32_1 = arith.constant 0 : i32
    return %c0_i32, %c0_i32_0 : i32, i32
  }
  func.func @transform_4(%arg0: i32) -> (i32, i32) {
    %c0_i32 = arith.constant 0 : i32
    %c0_i32_0 = arith.constant 0 : i32
    %c0_i32_1 = arith.constant 0 : i32
    return %c0_i32, %c0_i32_0 : i32, i32
  }
  func.func @transform_5(%arg0: i32) -> (i32, i32) {
    %c0_i32 = arith.constant 0 : i32
    %c0_i32_0 = arith.constant 0 : i32
    %c0_i32_1 = arith.constant 0 : i32
    return %c0_i32, %c0_i32_0 : i32, i32
  }
  func.func @transform_6(%arg0: i32) -> (i32, i32) {
    %c0_i32 = arith.constant 0 : i32
    %c0_i32_0 = arith.constant 0 : i32
    %c0_i32_1 = arith.constant 0 : i32
    return %c0_i32, %c0_i32_0 : i32, i32
  }
  func.func @transform_7(%arg0: i32) -> (i32, i32) {
    %c0_i32 = arith.constant 0 : i32
    %c0_i32_0 = arith.constant 0 : i32
    return %arg0, %c0_i32 : i32, i32
  }
}

module attributes {stable_mosaic.version = 11 : i64} {
  func.func @_lstm_rollout_kernel(%arg0: i32, %arg1: memref<1x2x1024xbf16, #tpu.memory_space<vmem>>, %arg2: memref<256x1024xbf16, #tpu.memory_space<vmem>>, %arg3: memref<256x128xbf16, #tpu.memory_space<vmem>>, %arg4: memref<1x128xf32, #tpu.memory_space<vmem>>, %arg5: memref<128x128xbf16, #tpu.memory_space<vmem>>, %arg6: memref<1x128xf32, #tpu.memory_space<vmem>>, %arg7: memref<128x128xbf16, #tpu.memory_space<vmem>>, %arg8: memref<1x128xf32, #tpu.memory_space<vmem>>, %arg9: memref<2x128xf32, #tpu.memory_space<vmem>>, %arg10: memref<2x256xf32, #tpu.memory_space<vmem>>, %arg11: memref<2x256xf32, #tpu.memory_space<vmem>>, %arg12: memref<2x256xf32, #tpu.memory_space<vmem>>, %arg13: memref<2x256xf32, #tpu.memory_space<vmem>>) attributes {dimension_semantics = [#tpu.dimension_semantics<arbitrary>], iteration_bounds = array<i64: 2>, scalar_prefetch = 0 : i64, scratch_operands = 2 : i64, tpu.core_type = #tpu.core_type<tc>, window_params = [{transform_indices = @transform_0, window_bounds = array<i64: 1, 2, 1024>}, {pipeline_mode = #tpu.pipeline_mode<synchronous>, transform_indices = @transform_1, window_bounds = array<i64: 256, 1024>}, {pipeline_mode = #tpu.pipeline_mode<synchronous>, transform_indices = @transform_2, window_bounds = array<i64: 256, 128>}, {pipeline_mode = #tpu.pipeline_mode<synchronous>, transform_indices = @transform_3, window_bounds = array<i64: 1, 128>}, {pipeline_mode = #tpu.pipeline_mode<synchronous>, transform_indices = @transform_4, window_bounds = array<i64: 128, 128>}, {pipeline_mode = #tpu.pipeline_mode<synchronous>, transform_indices = @transform_5, window_bounds = array<i64: 1, 128>}, {pipeline_mode = #tpu.pipeline_mode<synchronous>, transform_indices = @transform_6, window_bounds = array<i64: 128, 128>}, {pipeline_mode = #tpu.pipeline_mode<synchronous>, transform_indices = @transform_7, window_bounds = array<i64: 1, 128>}, {pipeline_mode = #tpu.pipeline_mode<synchronous>, transform_indices = @transform_8, window_bounds = array<i64: 2, 128>}, {pipeline_mode = #tpu.pipeline_mode<synchronous>, transform_indices = @transform_9, window_bounds = array<i64: 2, 256>}, {pipeline_mode = #tpu.pipeline_mode<synchronous>, transform_indices = @transform_10, window_bounds = array<i64: 2, 256>}]} {
    %c0_i32 = arith.constant 0 : i32
    %0 = arith.cmpi eq, %arg0, %c0_i32 : i32
    %1 = arith.extui %0 : i1 to i32
    %c0_i32_0 = arith.constant 0 : i32
    %2 = arith.cmpi ne, %1, %c0_i32_0 : i32
    scf.if %2 {
      %cst_17 = arith.constant 0.000000e+00 : f32
      %42 = vector.broadcast %cst_17 : f32 to vector<2x256xf32>
      %c0_18 = arith.constant 0 : index
      %c0_19 = arith.constant 0 : index
      %43 = vector.load %arg12[%c0_18, %c0_19] : memref<2x256xf32, #tpu.memory_space<vmem>>, vector<2x256xf32>
      tpu.vector_store %arg12[%c0_18, %c0_19], %42 {strides = array<i32>} : memref<2x256xf32, #tpu.memory_space<vmem>>, vector<2x256xf32>,
      %cst_20 = arith.constant 0.000000e+00 : f32
      %44 = vector.broadcast %cst_20 : f32 to vector<2x256xf32>
      %c0_21 = arith.constant 0 : index
      %c0_22 = arith.constant 0 : index
      %45 = vector.load %arg13[%c0_21, %c0_22] : memref<2x256xf32, #tpu.memory_space<vmem>>, vector<2x256xf32>
      tpu.vector_store %arg13[%c0_21, %c0_22], %44 {strides = array<i32>} : memref<2x256xf32, #tpu.memory_space<vmem>>, vector<2x256xf32>,
    } else {
    }
    %c0 = arith.constant 0 : index
    %c0_1 = arith.constant 0 : index
    %c0_2 = arith.constant 0 : index
    %3 = vector.load %arg1[%c0, %c0_1, %c0_2] : memref<1x2x1024xbf16, #tpu.memory_space<vmem>>, vector<1x2x1024xbf16>
    %4 = vector.shape_cast %3 : vector<1x2x1024xbf16> to vector<2x1024xbf16>
    %5 = arith.extf %4 : vector<2x1024xbf16> to vector<2x1024xf32>
    %c0_3 = arith.constant 0 : index
    %c0_4 = arith.constant 0 : index
    %6 = vector.load %arg12[%c0_3, %c0_4] : memref<2x256xf32, #tpu.memory_space<vmem>>, vector<2x256xf32>
    %7 = arith.truncf %6 : vector<2x256xf32> to vector<2x256xbf16>
    %c0_5 = arith.constant 0 : index
    %c0_6 = arith.constant 0 : index
    %8 = vector.load %arg2[%c0_5, %c0_6] : memref<256x1024xbf16, #tpu.memory_space<vmem>>, vector<256x1024xbf16>
    %cst = arith.constant dense<0.000000e+00> : vector<2x1024xf32>
    %9 = tpu.matmul %7, %8, %cst {dimension_numbers = #tpu.dot_dimension_numbers<[1], [0], [0], [1], [0, 0, 1, 1], [], []>} : vector<2x256xbf16>, vector<256x1024xbf16>, vector<2x1024xf32> -> vector<2x1024xf32>
    %10 = arith.addf %5, %9 : vector<2x1024xf32>
    %11 = vector.extract_strided_slice %10 {offsets = [0, 0], sizes = [2, 256], strides = [1, 1]} : vector<2x1024xf32> to vector<2x256xf32>
    %12 = arith.negf %11 : vector<2x256xf32>
    %13 = math.exp %12 : vector<2x256xf32>
    %cst_7 = arith.constant 1.000000e+00 : f32
    %14 = vector.broadcast %cst_7 : f32 to vector<2x256xf32>
    %15 = arith.addf %14, %13 : vector<2x256xf32>
    %16 = arith.divf %14, %15 : vector<2x256xf32>
    %17 = vector.extract_strided_slice %10 {offsets = [0, 256], sizes = [2, 256], strides = [1, 1]} : vector<2x1024xf32> to vector<2x256xf32>
    %18 = arith.negf %17 : vector<2x256xf32>
    %19 = math.exp %18 : vector<2x256xf32>
    %cst_8 = arith.constant 1.000000e+00 : f32
    %20 = vector.broadcast %cst_8 : f32 to vector<2x256xf32>
    %21 = arith.addf %20, %19 : vector<2x256xf32>
    %22 = arith.divf %20, %21 : vector<2x256xf32>
    %23 = vector.extract_strided_slice %10 {offsets = [0, 512], sizes = [2, 256], strides = [1, 1]} : vector<2x1024xf32> to vector<2x256xf32>
    %24 = math.tanh %23 : vector<2x256xf32>
    %25 = vector.extract_strided_slice %10 {offsets = [0, 768], sizes = [2, 256], strides = [1, 1]} : vector<2x1024xf32> to vector<2x256xf32>
    %26 = arith.negf %25 : vector<2x256xf32>
    %27 = math.exp %26 : vector<2x256xf32>
    %cst_9 = arith.constant 1.000000e+00 : f32
    %28 = vector.broadcast %cst_9 : f32 to vector<2x256xf32>
    %29 = arith.addf %28, %27 : vector<2x256xf32>
    %30 = arith.divf %28, %29 : vector<2x256xf32>
    %c0_10 = arith.constant 0 : index
    %c0_11 = arith.constant 0 : index
    %31 = vector.load %arg13[%c0_10, %c0_11] : memref<2x256xf32, #tpu.memory_space<vmem>>, vector<2x256xf32>
    %32 = arith.mulf %22, %31 : vector<2x256xf32>
    %33 = arith.mulf %16, %24 : vector<2x256xf32>
    %34 = arith.addf %32, %33 : vector<2x256xf32>
    %35 = math.tanh %34 : vector<2x256xf32>
    %36 = arith.mulf %30, %35 : vector<2x256xf32>
    %c0_12 = arith.constant 0 : index
    %c0_13 = arith.constant 0 : index
    %37 = vector.load %arg13[%c0_12, %c0_13] : memref<2x256xf32, #tpu.memory_space<vmem>>, vector<2x256xf32>
    tpu.vector_store %arg13[%c0_12, %c0_13], %34 {strides = array<i32>} : memref<2x256xf32, #tpu.memory_space<vmem>>, vector<2x256xf32>,
    %c0_14 = arith.constant 0 : index
    %c0_15 = arith.constant 0 : index
    %38 = vector.load %arg12[%c0_14, %c0_15] : memref<2x256xf32, #tpu.memory_space<vmem>>, vector<2x256xf32>
    tpu.vector_store %arg12[%c0_14, %c0_15], %36 {strides = array<i32>} : memref<2x256xf32, #tpu.memory_space<vmem>>, vector<2x256xf32>,
    %c1_i32 = arith.constant 1 : i32
    %39 = arith.cmpi eq, %arg0, %c1_i32 : i32
    %40 = arith.extui %39 : i1 to i32
    %c0_i32_16 = arith.constant 0 : i32
    %41 = arith.cmpi ne, %40, %c0_i32_16 : i32
    scf.if %41 {
      %c0_17 = arith.constant 0 : index
      %c0_18 = arith.constant 0 : index
      %42 = vector.load %arg10[%c0_17, %c0_18] : memref<2x256xf32, #tpu.memory_space<vmem>>, vector<2x256xf32>
      tpu.vector_store %arg10[%c0_17, %c0_18], %36 {strides = array<i32>} : memref<2x256xf32, #tpu.memory_space<vmem>>, vector<2x256xf32>,
      %c0_19 = arith.constant 0 : index
      %c0_20 = arith.constant 0 : index
      %43 = vector.load %arg11[%c0_19, %c0_20] : memref<2x256xf32, #tpu.memory_space<vmem>>, vector<2x256xf32>
      tpu.vector_store %arg11[%c0_19, %c0_20], %34 {strides = array<i32>} : memref<2x256xf32, #tpu.memory_space<vmem>>, vector<2x256xf32>,
      %44 = arith.truncf %36 : vector<2x256xf32> to vector<2x256xbf16>
      %c0_21 = arith.constant 0 : index
      %c0_22 = arith.constant 0 : index
      %45 = vector.load %arg3[%c0_21, %c0_22] : memref<256x128xbf16, #tpu.memory_space<vmem>>, vector<256x128xbf16>
      %cst_23 = arith.constant dense<0.000000e+00> : vector<2x128xf32>
      %46 = tpu.matmul %44, %45, %cst_23 {dimension_numbers = #tpu.dot_dimension_numbers<[1], [0], [0], [1], [0, 0, 1, 1], [], []>} : vector<2x256xbf16>, vector<256x128xbf16>, vector<2x128xf32> -> vector<2x128xf32>
      %c0_24 = arith.constant 0 : index
      %c0_25 = arith.constant 0 : index
      %47 = vector.load %arg4[%c0_24, %c0_25] : memref<1x128xf32, #tpu.memory_space<vmem>>, vector<1x128xf32>
      %48 = vector.broadcast %47 : vector<1x128xf32> to vector<2x128xf32>
      %49 = arith.addf %46, %48 : vector<2x128xf32>
      %cst_26 = arith.constant 0.000000e+00 : f32
      %50 = vector.broadcast %cst_26 : f32 to vector<2x128xf32>
      %51 = arith.maximumf %49, %50 : vector<2x128xf32>
      %52 = arith.truncf %51 : vector<2x128xf32> to vector<2x128xbf16>
      %c0_27 = arith.constant 0 : index
      %c0_28 = arith.constant 0 : index
      %53 = vector.load %arg5[%c0_27, %c0_28] : memref<128x128xbf16, #tpu.memory_space<vmem>>, vector<128x128xbf16>
      %cst_29 = arith.constant dense<0.000000e+00> : vector<2x128xf32>
      %54 = tpu.matmul %52, %53, %cst_29 {dimension_numbers = #tpu.dot_dimension_numbers<[1], [0], [0], [1], [0, 0, 1, 1], [], []>} : vector<2x128xbf16>, vector<128x128xbf16>, vector<2x128xf32> -> vector<2x128xf32>
      %c0_30 = arith.constant 0 : index
      %c0_31 = arith.constant 0 : index
      %55 = vector.load %arg6[%c0_30, %c0_31] : memref<1x128xf32, #tpu.memory_space<vmem>>, vector<1x128xf32>
      %56 = vector.broadcast %55 : vector<1x128xf32> to vector<2x128xf32>
      %57 = arith.addf %54, %56 : vector<2x128xf32>
      %cst_32 = arith.constant 0.000000e+00 : f32
      %58 = vector.broadcast %cst_32 : f32 to vector<2x128xf32>
      %59 = arith.maximumf %57, %58 : vector<2x128xf32>
      %60 = arith.truncf %59 : vector<2x128xf32> to vector<2x128xbf16>
      %c0_33 = arith.constant 0 : index
      %c0_34 = arith.constant 0 : index
      %61 = vector.load %arg7[%c0_33, %c0_34] : memref<128x128xbf16, #tpu.memory_space<vmem>>, vector<128x128xbf16>
      %cst_35 = arith.constant dense<0.000000e+00> : vector<2x128xf32>
      %62 = tpu.matmul %60, %61, %cst_35 {dimension_numbers = #tpu.dot_dimension_numbers<[1], [0], [0], [1], [0, 0, 1, 1], [], []>} : vector<2x128xbf16>, vector<128x128xbf16>, vector<2x128xf32> -> vector<2x128xf32>
      %c0_36 = arith.constant 0 : index
      %c0_37 = arith.constant 0 : index
      %63 = vector.load %arg8[%c0_36, %c0_37] : memref<1x128xf32, #tpu.memory_space<vmem>>, vector<1x128xf32>
      %64 = vector.broadcast %63 : vector<1x128xf32> to vector<2x128xf32>
      %65 = arith.addf %62, %64 : vector<2x128xf32>
      %c0_38 = arith.constant 0 : index
      %c0_39 = arith.constant 0 : index
      %66 = vector.load %arg9[%c0_38, %c0_39] : memref<2x128xf32, #tpu.memory_space<vmem>>, vector<2x128xf32>
      tpu.vector_store %arg9[%c0_38, %c0_39], %65 {strides = array<i32>} : memref<2x128xf32, #tpu.memory_space<vmem>>, vector<2x128xf32>,
    } else {
    }
    return
  }
  func.func @transform_0(%arg0: i32) -> (i32, i32, i32) {
    %c0_i32 = arith.constant 0 : i32
    %c0_i32_0 = arith.constant 0 : i32
    %c0_i32_1 = arith.constant 0 : i32
    return %arg0, %c0_i32, %c0_i32_0 : i32, i32, i32
  }
  func.func @transform_1(%arg0: i32) -> (i32, i32) {
    %c0_i32 = arith.constant 0 : i32
    %c0_i32_0 = arith.constant 0 : i32
    %c0_i32_1 = arith.constant 0 : i32
    return %c0_i32, %c0_i32_0 : i32, i32
  }
  func.func @transform_2(%arg0: i32) -> (i32, i32) {
    %c0_i32 = arith.constant 0 : i32
    %c0_i32_0 = arith.constant 0 : i32
    %c0_i32_1 = arith.constant 0 : i32
    return %c0_i32, %c0_i32_0 : i32, i32
  }
  func.func @transform_3(%arg0: i32) -> (i32, i32) {
    %c0_i32 = arith.constant 0 : i32
    %c0_i32_0 = arith.constant 0 : i32
    %c0_i32_1 = arith.constant 0 : i32
    return %c0_i32, %c0_i32_0 : i32, i32
  }
  func.func @transform_4(%arg0: i32) -> (i32, i32) {
    %c0_i32 = arith.constant 0 : i32
    %c0_i32_0 = arith.constant 0 : i32
    %c0_i32_1 = arith.constant 0 : i32
    return %c0_i32, %c0_i32_0 : i32, i32
  }
  func.func @transform_5(%arg0: i32) -> (i32, i32) {
    %c0_i32 = arith.constant 0 : i32
    %c0_i32_0 = arith.constant 0 : i32
    %c0_i32_1 = arith.constant 0 : i32
    return %c0_i32, %c0_i32_0 : i32, i32
  }
  func.func @transform_6(%arg0: i32) -> (i32, i32) {
    %c0_i32 = arith.constant 0 : i32
    %c0_i32_0 = arith.constant 0 : i32
    %c0_i32_1 = arith.constant 0 : i32
    return %c0_i32, %c0_i32_0 : i32, i32
  }
  func.func @transform_7(%arg0: i32) -> (i32, i32) {
    %c0_i32 = arith.constant 0 : i32
    %c0_i32_0 = arith.constant 0 : i32
    %c0_i32_1 = arith.constant 0 : i32
    return %c0_i32, %c0_i32_0 : i32, i32
  }
  func.func @transform_8(%arg0: i32) -> (i32, i32) {
    %c0_i32 = arith.constant 0 : i32
    %c0_i32_0 = arith.constant 0 : i32
    %c0_i32_1 = arith.constant 0 : i32
    return %c0_i32, %c0_i32_0 : i32, i32
  }
  func.func @transform_9(%arg0: i32) -> (i32, i32) {
    %c0_i32 = arith.constant 0 : i32
    %c0_i32_0 = arith.constant 0 : i32
    %c0_i32_1 = arith.constant 0 : i32
    return %c0_i32, %c0_i32_0 : i32, i32
  }
  func.func @transform_10(%arg0: i32) -> (i32, i32) {
    %c0_i32 = arith.constant 0 : i32
    %c0_i32_0 = arith.constant 0 : i32
    %c0_i32_1 = arith.constant 0 : i32
    return %c0_i32, %c0_i32_0 : i32, i32
  }
}

</mosaic_0001>

<llo_original>
// kernel: dqn_forward.5
$region0: #{dqn_forward.5}
  #allocation0 [shape = 'u32[]', space=smem, size = 0x4, offset = 0x4, fixed_abs, tag = 'smem constant byte address 0x4 - core index']
  #allocation1 [shape = 'u32[144,128]{1,0:T(1,128)}', space=vmem, size = 0x12000, scoped, tag = 'internal scratch']
  %s0 = inlined_call_operand.vmem [shape: bf16[400,192], index: 0, kind: input, shape index: {}]
  %s1 = inlined_call_operand.vmem [shape: bf16[192,128], index: 1, kind: input, shape index: {}]
  %s2 = inlined_call_operand.vmem [shape: f32[1,128], index: 2, kind: input, shape index: {}]
  %s3 = inlined_call_operand.vmem [shape: bf16[400,128], index: 3, kind: output, shape index: {}]
  %s4 = sld [smem:[#allocation0]]
  $region22: #{dqn_forward.5} parent=0
    _
  %s6 = ssub.s32 1, %s4
  %s7 = scalar_select 0, %s6, %s4
  // Predicated region
  $region2: #{dqn_forward.5} parent=0 // pred_check
    _
  $region3: #{dqn_forward.5} parent=0 // pred_check_branch
    %9 = sbr.rel (0) target = $region5
  $region4: #{dqn_forward.5} parent=0 // pred_region
    _
  $region5: #{dqn_forward.5} parent=0 // pred_fallthru
    _
  // Predicated region
  $region6: #{dqn_forward.5} parent=0 // pred_check
    _
  $region7: #{dqn_forward.5} parent=0 // pred_check_branch
    %11 = sbr.rel (0) target = $region9
  $region8: #{dqn_forward.5} parent=0 // pred_region
    _
  $region9: #{dqn_forward.5} parent=0 // pred_fallthru
    _
  // Predicated region
  $region10: #{dqn_forward.5} parent=0 // pred_check
    _
  $region11: #{dqn_forward.5} parent=0 // pred_check_branch
    %13 = sbr.rel (0) target = $region13
  $region12: #{dqn_forward.5} parent=0 // pred_region
    _
  $region13: #{dqn_forward.5} parent=0 // pred_fallthru
    _
  %v15 = vld [vmem:[%s0] sm:$0xff]
  %v16 = vld [vmem:[%s0 + $0x8] sm:$0xff]
  %v17 = vld [vmem:[%s0 + $0x10] sm:$0xff]
  %v18 = vld [vmem:[%s0 + $0x18] sm:$0xff]
  %v19 = vld [vmem:[%s0 + $0x20] sm:$0xff]
  %v20 = vld [vmem:[%s0 + $0x28] sm:$0xff]
  %v21 = vld [vmem:[%s0 + $0x30] sm:$0xff]
  %v22 = vld [vmem:[%s0 + $0x38] sm:$0xff]
  %v23 = vld [vmem:[%s0 + $0x40] sm:$0xff]
  %v24 = vld [vmem:[%s0 + $0x48] sm:$0xff]
  %v25 = vld [vmem:[%s0 + $0x50] sm:$0xff]
  %v26 = vld [vmem:[%s0 + $0x58] sm:$0xff]
  %v27 = vld [vmem:[%s0 + $0x60] sm:$0xff]
  %v28 = vld [vmem:[%s0 + $0x68] sm:$0xff]
  %v29 = vld [vmem:[%s0 + $0x70] sm:$0xff]
  %v30 = vld [vmem:[%s0 + $0x78] sm:$0xff]
  %v31 = vld [vmem:[%s0 + $0x80] sm:$0xff]
  %v32 = vld [vmem:[%s0 + $0x88] sm:$0xff]
  %v33 = vld [vmem:[%s0 + $0x90] sm:$0xff]
  %v34 = vld [vmem:[%s0 + $0x98] sm:$0xff]
  %v35 = vld [vmem:[%s0 + $0xa0] sm:$0xff]
  %v36 = vld [vmem:[%s0 + $0xa8] sm:$0xff]
  %v37 = vld [vmem:[%s0 + $0xb0] sm:$0xff]
  %v38 = vld [vmem:[%s0 + $0xb8] sm:$0xff]
  %v39 = vld [vmem:[%s0 + $0xc0] sm:$0xff]
  %v40 = vld [vmem:[%s0 + $0xc8] sm:$0xff]
  %v41 = vld [vmem:[%s0 + $0xd0] sm:$0xff]
  %v42 = vld [vmem:[%s0 + $0xd8] sm:$0xff]
  %v43 = vld [vmem:[%s0 + $0xe0] sm:$0xff]
  %v44 = vld [vmem:[%s0 + $0xe8] sm:$0xff]
  %v45 = vld [vmem:[%s0 + $0xf0] sm:$0xff]
  %v46 = vld [vmem:[%s0 + $0xf8] sm:$0xff]
  %v47 = vld [vmem:[%s0 + $0x100] sm:$0xff]
  %v48 = vld [vmem:[%s0 + $0x108] sm:$0xff]
  %v49 = vld [vmem:[%s0 + $0x110] sm:$0xff]
  %v50 = vld [vmem:[%s0 + $0x118] sm:$0xff]
  %v51 = vld [vmem:[%s0 + $0x120] sm:$0xff]
  %v52 = vld [vmem:[%s0 + $0x128] sm:$0xff]
  %v53 = vld [vmem:[%s0 + $0x130] sm:$0xff]
  %v54 = vld [vmem:[%s0 + $0x138] sm:$0xff]
  %v55 = vld [vmem:[%s0 + $0x140] sm:$0xff]
  %v56 = vld [vmem:[%s0 + $0x148] sm:$0xff]
  %v57 = vld [vmem:[%s0 + $0x150] sm:$0xff]
  %v58 = vld [vmem:[%s0 + $0x158] sm:$0xff]
  %v59 = vld [vmem:[%s0 + $0x160] sm:$0xff]
  %v60 = vld [vmem:[%s0 + $0x168] sm:$0xff]
  %v61 = vld [vmem:[%s0 + $0x170] sm:$0xff]
  %v62 = vld [vmem:[%s0 + $0x178] sm:$0xff]
  %v63 = vld [vmem:[%s0 + $0x180] sm:$0xff]
  %v64 = vld [vmem:[%s0 + $0x188] sm:$0xff]
  %v65 = vld [vmem:[%s1] sm:$0xf]
  %v66 = vld [vmem:[%s1 + $0x4] sm:$0xf]
  %v67 = vld [vmem:[%s1 + $0x8] sm:$0xf]
  %v68 = vld [vmem:[%s1 + $0xc] sm:$0xf]
  %v69 = vld [vmem:[%s1 + $0x10] sm:$0xf]
  %v70 = vld [vmem:[%s1 + $0x14] sm:$0xf]
  %v71 = vld [vmem:[%s1 + $0x18] sm:$0xf]
  %v72 = vld [vmem:[%s1 + $0x1c] sm:$0xf]
  %v73 = vld [vmem:[%s1 + $0x20] sm:$0xf]
  %v74 = vld [vmem:[%s1 + $0x24] sm:$0xf]
  %v75 = vld [vmem:[%s1 + $0x28] sm:$0xf]
  %v76 = vld [vmem:[%s1 + $0x2c] sm:$0xf]
  %v77 = vld [vmem:[%s1 + $0x30] sm:$0xf]
  %v78 = vld [vmem:[%s1 + $0x34] sm:$0xf]
  %v79 = vld [vmem:[%s1 + $0x38] sm:$0xf]
  %v80 = vld [vmem:[%s1 + $0x3c] sm:$0xf]
  %v81 = vld [vmem:[%s1 + $0x40] sm:$0xf]
  %v82 = vld [vmem:[%s1 + $0x44] sm:$0xf]
  %v83 = vld [vmem:[%s1 + $0x48] sm:$0xf]
  %v84 = vld [vmem:[%s1 + $0x4c] sm:$0xf]
  %v85 = vld [vmem:[%s1 + $0x50] sm:$0xf]
  %v86 = vld [vmem:[%s1 + $0x54] sm:$0xf]
  %v87 = vld [vmem:[%s1 + $0x58] sm:$0xf]
  %v88 = vld [vmem:[%s1 + $0x5c] sm:$0xf]
  %v89 = vld [vmem:[%s2] sm:$0x1]
  %v91 = vlaneseq
  %v92 = vshrl.u32 %v91, 7
  %v93 = vsub.s32 0, %v92
  %v94 = vrot.slane %v89, %v93
  %v146 = vunpack.c.l.b16 %v15
  %v147 = vunpack.c.h.b16 %v15
  %v148 = vunpack.c.l.b16 %v16
  %v149 = vunpack.c.h.b16 %v16
  %v150 = vunpack.c.l.b16 %v17
  %v151 = vunpack.c.h.b16 %v17
  %v152 = vunpack.c.l.b16 %v18
  %v153 = vunpack.c.h.b16 %v18
  %v154 = vunpack.c.l.b16 %v19
  %v155 = vunpack.c.h.b16 %v19
  %v156 = vunpack.c.l.b16 %v20
  %v157 = vunpack.c.h.b16 %v20
  %v158 = vunpack.c.l.b16 %v21
  %v159 = vunpack.c.h.b16 %v21
  %v160 = vunpack.c.l.b16 %v22
  %v161 = vunpack.c.h.b16 %v22
  %v162 = vunpack.c.l.b16 %v23
  %v163 = vunpack.c.h.b16 %v23
  %v164 = vunpack.c.l.b16 %v24
  %v165 = vunpack.c.h.b16 %v24
  %v166 = vunpack.c.l.b16 %v25
  %v167 = vunpack.c.h.b16 %v25
  %v168 = vunpack.c.l.b16 %v26
  %v169 = vunpack.c.h.b16 %v26
  %v170 = vunpack.c.l.b16 %v27
  %v171 = vunpack.c.h.b16 %v27
  %v172 = vunpack.c.l.b16 %v28
  %v173 = vunpack.c.h.b16 %v28
  %v174 = vunpack.c.l.b16 %v29
  %v175 = vunpack.c.h.b16 %v29
  %v176 = vunpack.c.l.b16 %v30
  %v177 = vunpack.c.h.b16 %v30
  %v178 = vunpack.c.l.b16 %v31
  %v179 = vunpack.c.h.b16 %v31
  %v180 = vunpack.c.l.b16 %v32
  %v181 = vunpack.c.h.b16 %v32
  %v182 = vunpack.c.l.b16 %v33
  %v183 = vunpack.c.h.b16 %v33
  %v184 = vunpack.c.l.b16 %v34
  %v185 = vunpack.c.h.b16 %v34
  %v186 = vunpack.c.l.b16 %v35
  %v187 = vunpack.c.h.b16 %v35
  %v188 = vunpack.c.l.b16 %v36
  %v189 = vunpack.c.h.b16 %v36
  %v190 = vunpack.c.l.b16 %v37
  %v191 = vunpack.c.h.b16 %v37
  %v192 = vunpack.c.l.b16 %v38
  %v193 = vunpack.c.h.b16 %v38
  %v194 = vunpack.c.l.b16 %v39
  %v195 = vunpack.c.h.b16 %v39
  %v196 = vunpack.c.l.b16 %v40
  %v197 = vunpack.c.h.b16 %v40
  %v198 = vunpack.c.l.b16 %v41
  %v199 = vunpack.c.h.b16 %v41
  %v200 = vunpack.c.l.b16 %v42
  %v201 = vunpack.c.h.b16 %v42
  %v202 = vunpack.c.l.b16 %v43
  %v203 = vunpack.c.h.b16 %v43
  %v204 = vunpack.c.l.b16 %v44
  %v205 = vunpack.c.h.b16 %v44
  %v206 = vunpack.c.l.b16 %v45
  %v207 = vunpack.c.h.b16 %v45
  %v208 = vunpack.c.l.b16 %v46
  %v209 = vunpack.c.h.b16 %v46
  %v210 = vunpack.c.l.b16 %v47
  %v211 = vunpack.c.h.b16 %v47
  %v212 = vunpack.c.l.b16 %v48
  %v213 = vunpack.c.h.b16 %v48
  %v214 = vunpack.c.l.b16 %v49
  %v215 = vunpack.c.h.b16 %v49
  %v216 = vunpack.c.l.b16 %v50
  %v217 = vunpack.c.h.b16 %v50
  %v218 = vunpack.c.l.b16 %v51
  %v219 = vunpack.c.h.b16 %v51
  %v220 = vunpack.c.l.b16 %v52
  %v221 = vunpack.c.h.b16 %v52
  %v222 = vunpack.c.l.b16 %v53
  %v223 = vunpack.c.h.b16 %v53
  %v224 = vunpack.c.l.b16 %v54
  %v225 = vunpack.c.h.b16 %v54
  %v226 = vunpack.c.l.b16 %v55
  %v227 = vunpack.c.h.b16 %v55
  %v228 = vunpack.c.l.b16 %v56
  %v229 = vunpack.c.h.b16 %v56
  %v230 = vunpack.c.l.b16 %v57
  %v231 = vunpack.c.h.b16 %v57
  %v232 = vunpack.c.l.b16 %v58
  %v233 = vunpack.c.h.b16 %v58
  %v234 = vunpack.c.l.b16 %v59
  %v235 = vunpack.c.h.b16 %v59
  %v236 = vunpack.c.l.b16 %v60
  %v237 = vunpack.c.h.b16 %v60
  %v238 = vunpack.c.l.b16 %v61
  %v239 = vunpack.c.h.b16 %v61
  %v240 = vunpack.c.l.b16 %v62
  %v241 = vunpack.c.h.b16 %v62
  %v242 = vunpack.c.l.b16 %v63
  %v243 = vunpack.c.h.b16 %v63
  %v244 = vunpack.c.l.b16 %v64
  %v245 = vunpack.c.h.b16 %v64
  %v246 = vpack.c.b16 %v148, %v146
  %v247 = vpack.c.b16 %v149, %v147
  %v248 = vpack.c.b16 %v152, %v150
  %v249 = vpack.c.b16 %v153, %v151
  %v250 = vpack.c.b16 %v156, %v154
  %v251 = vpack.c.b16 %v157, %v155
  %v252 = vpack.c.b16 %v160, %v158
  %v253 = vpack.c.b16 %v161, %v159
  %v254 = vpack.c.b16 %v164, %v162
  %v255 = vpack.c.b16 %v165, %v163
  %v256 = vpack.c.b16 %v168, %v166
  %v257 = vpack.c.b16 %v169, %v167
  %v258 = vpack.c.b16 %v172, %v170
  %v259 = vpack.c.b16 %v173, %v171
  %v260 = vpack.c.b16 %v176, %v174
  %v261 = vpack.c.b16 %v177, %v175
  %v262 = vpack.c.b16 %v180, %v178
  %v263 = vpack.c.b16 %v181, %v179
  %v264 = vpack.c.b16 %v184, %v182
  %v265 = vpack.c.b16 %v185, %v183
  %v266 = vpack.c.b16 %v188, %v186
  %v267 = vpack.c.b16 %v189, %v187
  %v268 = vpack.c.b16 %v192, %v190
  %v269 = vpack.c.b16 %v193, %v191
  %v270 = vpack.c.b16 %v196, %v194
  %v271 = vpack.c.b16 %v197, %v195
  %v272 = vpack.c.b16 %v200, %v198
  %v273 = vpack.c.b16 %v201, %v199
  %v274 = vpack.c.b16 %v204, %v202
  %v275 = vpack.c.b16 %v205, %v203
  %v276 = vpack.c.b16 %v208, %v206
  %v277 = vpack.c.b16 %v209, %v207
  %v278 = vpack.c.b16 %v212, %v210
  %v279 = vpack.c.b16 %v213, %v211
  %v280 = vpack.c.b16 %v216, %v214
  %v281 = vpack.c.b16 %v217, %v215
  %v282 = vpack.c.b16 %v220, %v218
  %v283 = vpack.c.b16 %v221, %v219
  %v284 = vpack.c.b16 %v224, %v222
  %v285 = vpack.c.b16 %v225, %v223
  %v286 = vpack.c.b16 %v228, %v226
  %v287 = vpack.c.b16 %v229, %v227
  %v288 = vpack.c.b16 %v232, %v230
  %v289 = vpack.c.b16 %v233, %v231
  %v290 = vpack.c.b16 %v236, %v234
  %v291 = vpack.c.b16 %v237, %v235
  %v292 = vpack.c.b16 %v240, %v238
  %v293 = vpack.c.b16 %v241, %v239
  %v294 = vpack.c.b16 %v244, %v242
  %v295 = vpack.c.b16 %v245, %v243
  %v345 = vunpack.c.l.b16 %v65
  %v346 = vunpack.c.l.b16 %v66
  %v347 = vunpack.c.l.b16 %v67
  %v348 = vunpack.c.l.b16 %v68
  %v349 = vunpack.c.l.b16 %v69
  %v350 = vunpack.c.l.b16 %v70
  %v351 = vunpack.c.l.b16 %v71
  %v352 = vunpack.c.l.b16 %v72
  %v353 = vunpack.c.l.b16 %v73
  %v354 = vunpack.c.l.b16 %v74
  %v355 = vunpack.c.l.b16 %v75
  %v356 = vunpack.c.l.b16 %v76
  %v357 = vunpack.c.l.b16 %v77
  %v358 = vunpack.c.l.b16 %v78
  %v359 = vunpack.c.l.b16 %v79
  %v360 = vunpack.c.l.b16 %v80
  %v361 = vunpack.c.l.b16 %v81
  %v362 = vunpack.c.l.b16 %v82
  %v363 = vunpack.c.l.b16 %v83
  %v364 = vunpack.c.l.b16 %v84
  %v365 = vunpack.c.l.b16 %v85
  %v366 = vunpack.c.l.b16 %v86
  %v367 = vunpack.c.l.b16 %v87
  %v368 = vunpack.c.l.b16 %v88
  %v369 = vpack.c.b16 %v346, %v345
  %v370 = vpack.c.b16 %v348, %v347
  %v371 = vpack.c.b16 %v350, %v349
  %v372 = vpack.c.b16 %v352, %v351
  %v373 = vpack.c.b16 %v354, %v353
  %v374 = vpack.c.b16 %v356, %v355
  %v375 = vpack.c.b16 %v358, %v357
  %v376 = vpack.c.b16 %v360, %v359
  %v377 = vpack.c.b16 %v362, %v361
  %v378 = vpack.c.b16 %v364, %v363
  %v379 = vpack.c.b16 %v366, %v365
  %v380 = vpack.c.b16 %v368, %v367
  %vm393 = vcmask 523264
  %v395 = vsel %vm393, %v247, 0
  %v398 = vsel %vm393, %v249, 0
  %v401 = vsel %vm393, %v251, 0
  %v404 = vsel %vm393, %v253, 0
  %v407 = vsel %vm393, %v255, 0
  %v410 = vsel %vm393, %v257, 0
  %v413 = vsel %vm393, %v259, 0
  %v416 = vsel %vm393, %v261, 0
  %v419 = vsel %vm393, %v263, 0
  %v422 = vsel %vm393, %v265, 0
  %v425 = vsel %vm393, %v267, 0
  %v428 = vsel %vm393, %v269, 0
  %v431 = vsel %vm393, %v271, 0
  %v434 = vsel %vm393, %v273, 0
  %v437 = vsel %vm393, %v275, 0
  %v440 = vsel %vm393, %v277, 0
  %v443 = vsel %vm393, %v279, 0
  %v446 = vsel %vm393, %v281, 0
  %v449 = vsel %vm393, %v283, 0
  %v452 = vsel %vm393, %v285, 0
  %v455 = vsel %vm393, %v287, 0
  %v458 = vsel %vm393, %v289, 0
  %v461 = vsel %vm393, %v291, 0
  %v464 = vsel %vm393, %v293, 0
  %v467 = vsel %vm393, %v295, 0
  %469 = vmatprep.subr.bf16.mxu0 0
  %470 = vmatpush1.bf16.msra.mxu0 %v369
  %471 = vmatprep.subr.bf16.mxu0 0
  %472 = vmatpush1.bf16.msra.mxu0 %v370
  %473 = vmatprep.subr.bf16.mxu0 0
  %474 = vmatpush1.bf16.msra.mxu0 %v371
  %475 = vmatprep.subr.bf16.mxu0 0
  %476 = vmatpush1.bf16.msra.mxu0 %v372
  %477 = vmatprep.subr.bf16.mxu0 0
  %478 = vmatpush1.bf16.msra.mxu0 %v373
  %479 = vmatprep.subr.bf16.mxu0 0
  %480 = vmatpush1.bf16.msra.mxu0 %v374
  %481 = vmatprep.subr.bf16.mxu0 0
  %482 = vmatpush1.bf16.msra.mxu0 %v375
  %483 = vmatprep.subr.bf16.mxu0 0
  %484 = vmatpush1.bf16.msra.mxu0 %v376
  %485 = vmatprep.subr.bf16.mxu0 0
  %486 = vmatpush1.bf16.msra.mxu0 %v377
  %487 = vmatprep.subr.bf16.mxu0 0
  %488 = vmatpush1.bf16.msra.mxu0 %v378
  %489 = vmatprep.subr.bf16.mxu0 0
  %490 = vmatpush1.bf16.msra.mxu0 %v379
  %491 = vmatprep.subr.bf16.mxu0 0
  %492 = vmatpush1.bf16.msra.mxu0 %v380
  %493 = vmatprep.subr.bf16.mxu0 0
  %494 = vmatpush1.bf16.msra.mxu0 0
  %495 = vmatprep.subr.bf16.mxu0 0
  %496 = vmatpush1.bf16.msra.mxu0 0
  %497 = vmatprep.subr.bf16.mxu0 0
  %498 = vmatpush1.bf16.msra.mxu0 0
  %499 = vmatprep.subr.bf16.mxu0 0
  %500 = vmatpush1.bf16.msra.mxu0 0
  %501 = vmatprep.mubr.bf16.mxu0 %v395
  %502 = vmatmul.mubr.bf16.gmra.mrb[0].mxu0 %v246
  %v503 = vpop.f32.mrb[0].mxu0
  %v504 = vadd.f32 %v94, %v503
  %v505 = vpop.f32.mrb[0].mxu0
  %v506 = vpop.f32.mrb[0].mxu0
  %v507 = vadd.f32 %v94, %v506
  %v508 = vpop.f32.mrb[0].mxu0
  %509 = vmatprep.mubr.bf16.mxu0 %v398
  %510 = vmatmul.mubr.bf16.gmra.mrb[0].mxu0 %v248
  %v511 = vpop.f32.mrb[0].mxu0
  %v512 = vadd.f32 %v94, %v511
  %v513 = vpop.f32.mrb[0].mxu0
  %v514 = vpop.f32.mrb[0].mxu0
  %v515 = vadd.f32 %v94, %v514
  %v516 = vpop.f32.mrb[0].mxu0
  %517 = vmatprep.mubr.bf16.mxu0 %v401
  %518 = vmatmul.mubr.bf16.gmra.mrb[0].mxu0 %v250
  %v519 = vpop.f32.mrb[0].mxu0
  %v520 = vadd.f32 %v94, %v519
  %v521 = vpop.f32.mrb[0].mxu0
  %v522 = vpop.f32.mrb[0].mxu0
  %v523 = vadd.f32 %v94, %v522
  %v524 = vpop.f32.mrb[0].mxu0
  %525 = vmatprep.mubr.bf16.mxu0 %v404
  %526 = vmatmul.mubr.bf16.gmra.mrb[0].mxu0 %v252
  %v527 = vpop.f32.mrb[0].mxu0
  %v528 = vadd.f32 %v94, %v527
  %v529 = vpop.f32.mrb[0].mxu0
  %v530 = vpop.f32.mrb[0].mxu0
  %v531 = vadd.f32 %v94, %v530
  %v532 = vpop.f32.mrb[0].mxu0
  %533 = vmatprep.mubr.bf16.mxu0 %v407
  %534 = vmatmul.mubr.bf16.gmra.mrb[0].mxu0 %v254
  %v535 = vpop.f32.mrb[0].mxu0
  %v536 = vadd.f32 %v94, %v535
  %v537 = vpop.f32.mrb[0].mxu0
  %v538 = vpop.f32.mrb[0].mxu0
  %v539 = vadd.f32 %v94, %v538
  %v540 = vpop.f32.mrb[0].mxu0
  %541 = vmatprep.mubr.bf16.mxu0 %v410
  %542 = vmatmul.mubr.bf16.gmra.mrb[0].mxu0 %v256
  %v543 = vpop.f32.mrb[0].mxu0
  %v544 = vadd.f32 %v94, %v543
  %v545 = vpop.f32.mrb[0].mxu0
  %v546 = vpop.f32.mrb[0].mxu0
  %v547 = vadd.f32 %v94, %v546
  %v548 = vpop.f32.mrb[0].mxu0
  %549 = vmatprep.mubr.bf16.mxu0 %v413
  %550 = vmatmul.mubr.bf16.gmra.mrb[0].mxu0 %v258
  %v551 = vpop.f32.mrb[0].mxu0
  %v552 = vadd.f32 %v94, %v551
  %v553 = vpop.f32.mrb[0].mxu0
  %v554 = vpop.f32.mrb[0].mxu0
  %v555 = vadd.f32 %v94, %v554
  %v556 = vpop.f32.mrb[0].mxu0
  %557 = vmatprep.mubr.bf16.mxu0 %v416
  %558 = vmatmul.mubr.bf16.gmra.mrb[0].mxu0 %v260
  %v559 = vpop.f32.mrb[0].mxu0
  %v560 = vadd.f32 %v94, %v559
  %v561 = vpop.f32.mrb[0].mxu0
  %v562 = vpop.f32.mrb[0].mxu0
  %v563 = vadd.f32 %v94, %v562
  %v564 = vpop.f32.mrb[0].mxu0
  %565 = vmatprep.mubr.bf16.mxu0 %v419
  %566 = vmatmul.mubr.bf16.gmra.mrb[0].mxu0 %v262
  %v567 = vpop.f32.mrb[0].mxu0
  %v568 = vadd.f32 %v94, %v567
  %v569 = vpop.f32.mrb[0].mxu0
  %v570 = vpop.f32.mrb[0].mxu0
  %v571 = vadd.f32 %v94, %v570
  %v572 = vpop.f32.mrb[0].mxu0
  %573 = vmatprep.mubr.bf16.mxu0 %v422
  %574 = vmatmul.mubr.bf16.gmra.mrb[0].mxu0 %v264
  %v575 = vpop.f32.mrb[0].mxu0
  %v576 = vadd.f32 %v94, %v575
  %v577 = vpop.f32.mrb[0].mxu0
  %v578 = vpop.f32.mrb[0].mxu0
  %v579 = vadd.f32 %v94, %v578
  %v580 = vpop.f32.mrb[0].mxu0
  %581 = vmatprep.mubr.bf16.mxu0 %v425
  %582 = vmatmul.mubr.bf16.gmra.mrb[0].mxu0 %v266
  %v583 = vpop.f32.mrb[0].mxu0
  %v584 = vadd.f32 %v94, %v583
  %v585 = vpop.f32.mrb[0].mxu0
  %v586 = vpop.f32.mrb[0].mxu0
  %v587 = vadd.f32 %v94, %v586
  %v588 = vpop.f32.mrb[0].mxu0
  %589 = vmatprep.mubr.bf16.mxu0 %v428
  %590 = vmatmul.mubr.bf16.gmra.mrb[0].mxu0 %v268
  %v591 = vpop.f32.mrb[0].mxu0
  %v592 = vadd.f32 %v94, %v591
  %v593 = vpop.f32.mrb[0].mxu0
  %v594 = vpop.f32.mrb[0].mxu0
  %v595 = vadd.f32 %v94, %v594
  %v596 = vpop.f32.mrb[0].mxu0
  %597 = vmatprep.mubr.bf16.mxu0 %v431
  %598 = vmatmul.mubr.bf16.gmra.mrb[0].mxu0 %v270
  %v599 = vpop.f32.mrb[0].mxu0
  %v600 = vadd.f32 %v94, %v599
  %v601 = vpop.f32.mrb[0].mxu0
  %v602 = vpop.f32.mrb[0].mxu0
  %v603 = vadd.f32 %v94, %v602
  %v604 = vpop.f32.mrb[0].mxu0
  %605 = vmatprep.mubr.bf16.mxu0 %v434
  %606 = vmatmul.mubr.bf16.gmra.mrb[0].mxu0 %v272
  %v607 = vpop.f32.mrb[0].mxu0
  %v608 = vadd.f32 %v94, %v607
  %v609 = vpop.f32.mrb[0].mxu0
  %v610 = vpop.f32.mrb[0].mxu0
  %v611 = vadd.f32 %v94, %v610
  %v612 = vpop.f32.mrb[0].mxu0
  %613 = vmatprep.mubr.bf16.mxu0 %v437
  %614 = vmatmul.mubr.bf16.gmra.mrb[0].mxu0 %v274
  %v615 = vpop.f32.mrb[0].mxu0
  %v616 = vadd.f32 %v94, %v615
  %v617 = vpop.f32.mrb[0].mxu0
  %v618 = vpop.f32.mrb[0].mxu0
  %v619 = vadd.f32 %v94, %v618
  %v620 = vpop.f32.mrb[0].mxu0
  %621 = vmatprep.mubr.bf16.mxu0 %v440
  %622 = vmatmul.mubr.bf16.gmra.mrb[0].mxu0 %v276
  %v623 = vpop.f32.mrb[0].mxu0
  %v624 = vadd.f32 %v94, %v623
  %v625 = vpop.f32.mrb[0].mxu0
  %v626 = vpop.f32.mrb[0].mxu0
  %v627 = vadd.f32 %v94, %v626
  %v628 = vpop.f32.mrb[0].mxu0
  %629 = vmatprep.mubr.bf16.mxu0 %v443
  %630 = vmatmul.mubr.bf16.gmra.mrb[0].mxu0 %v278
  %v631 = vpop.f32.mrb[0].mxu0
  %v632 = vadd.f32 %v94, %v631
  %v633 = vpop.f32.mrb[0].mxu0
  %v634 = vpop.f32.mrb[0].mxu0
  %v635 = vadd.f32 %v94, %v634
  %v636 = vpop.f32.mrb[0].mxu0
  %637 = vmatprep.mubr.bf16.mxu0 %v446
  %638 = vmatmul.mubr.bf16.gmra.mrb[0].mxu0 %v280
  %v639 = vpop.f32.mrb[0].mxu0
  %v640 = vadd.f32 %v94, %v639
  %v641 = vpop.f32.mrb[0].mxu0
  %v642 = vpop.f32.mrb[0].mxu0
  %v643 = vadd.f32 %v94, %v642
  %v644 = vpop.f32.mrb[0].mxu0
  %645 = vmatprep.mubr.bf16.mxu0 %v449
  %646 = vmatmul.mubr.bf16.gmra.mrb[0].mxu0 %v282
  %v647 = vpop.f32.mrb[0].mxu0
  %v648 = vadd.f32 %v94, %v647
  %v649 = vpop.f32.mrb[0].mxu0
  %v650 = vpop.f32.mrb[0].mxu0
  %v651 = vadd.f32 %v94, %v650
  %v652 = vpop.f32.mrb[0].mxu0
  %653 = vmatprep.mubr.bf16.mxu0 %v452
  %654 = vmatmul.mubr.bf16.gmra.mrb[0].mxu0 %v284
  %v655 = vpop.f32.mrb[0].mxu0
  %v656 = vadd.f32 %v94, %v655
  %v657 = vpop.f32.mrb[0].mxu0
  %v658 = vpop.f32.mrb[0].mxu0
  %v659 = vadd.f32 %v94, %v658
  %v660 = vpop.f32.mrb[0].mxu0
  %661 = vmatprep.mubr.bf16.mxu0 %v455
  %662 = vmatmul.mubr.bf16.gmra.mrb[0].mxu0 %v286
  %v663 = vpop.f32.mrb[0].mxu0
  %v664 = vadd.f32 %v94, %v663
  %v665 = vpop.f32.mrb[0].mxu0
  %v666 = vpop.f32.mrb[0].mxu0
  %v667 = vadd.f32 %v94, %v666
  %v668 = vpop.f32.mrb[0].mxu0
  %669 = vmatprep.mubr.bf16.mxu0 %v458
  %670 = vmatmul.mubr.bf16.gmra.mrb[0].mxu0 %v288
  %v671 = vpop.f32.mrb[0].mxu0
  %v672 = vadd.f32 %v94, %v671
  %v673 = vpop.f32.mrb[0].mxu0
  %v674 = vpop.f32.mrb[0].mxu0
  %v675 = vadd.f32 %v94, %v674
  %v676 = vpop.f32.mrb[0].mxu0
  %677 = vmatprep.mubr.bf16.mxu0 %v461
  %678 = vmatmul.mubr.bf16.gmra.mrb[0].mxu0 %v290
  %v679 = vpop.f32.mrb[0].mxu0
  %v680 = vadd.f32 %v94, %v679
  %v681 = vpop.f32.mrb[0].mxu0
  %v682 = vpop.f32.mrb[0].mxu0
  %v683 = vadd.f32 %v94, %v682
  %v684 = vpop.f32.mrb[0].mxu0
  %685 = vmatprep.mubr.bf16.mxu0 %v464
  %686 = vmatmul.mubr.bf16.gmra.mrb[0].mxu0 %v292
  %v687 = vpop.f32.mrb[0].mxu0
  %v688 = vadd.f32 %v94, %v687
  %v689 = vpop.f32.mrb[0].mxu0
  %v690 = vpop.f32.mrb[0].mxu0
  %v691 = vadd.f32 %v94, %v690
  %v692 = vpop.f32.mrb[0].mxu0
  %693 = vmatprep.mubr.bf16.mxu0 %v467
  %694 = vmatmul.mubr.bf16.gmra.mrb[0].mxu0 %v294
  %v695 = vpop.f32.mrb[0].mxu0
  %v696 = vadd.f32 %v94, %v695
  %v697 = vpop.f32.mrb[0].mxu0
  %v698 = vpop.f32.mrb[0].mxu0
  %v699 = vadd.f32 %v94, %v698
  %v700 = vpop.f32.mrb[0].mxu0
  %701 = vdwg.mxu0
  %v702 = vmax.f32 %v504, 0.0
  %v703 = vmax.f32 %v507, 0.0
  %v704 = vmax.f32 %v512, 0.0
  %v705 = vmax.f32 %v515, 0.0
  %v706 = vmax.f32 %v520, 0.0
  %v707 = vmax.f32 %v523, 0.0
  %v708 = vmax.f32 %v528, 0.0
  %v709 = vmax.f32 %v531, 0.0
  %v710 = vmax.f32 %v536, 0.0
  %v711 = vmax.f32 %v539, 0.0
  %v712 = vmax.f32 %v544, 0.0
  %v713 = vmax.f32 %v547, 0.0
  %v714 = vmax.f32 %v552, 0.0
  %v715 = vmax.f32 %v555, 0.0
  %v716 = vmax.f32 %v560, 0.0
  %v717 = vmax.f32 %v563, 0.0
  %v718 = vmax.f32 %v568, 0.0
  %v719 = vmax.f32 %v571, 0.0
  %v720 = vmax.f32 %v576, 0.0
  %v721 = vmax.f32 %v579, 0.0
  %v722 = vmax.f32 %v584, 0.0
  %v723 = vmax.f32 %v587, 0.0
  %v724 = vmax.f32 %v592, 0.0
  %v725 = vmax.f32 %v595, 0.0
  %v726 = vmax.f32 %v600, 0.0
  %v727 = vmax.f32 %v603, 0.0
  %v728 = vmax.f32 %v608, 0.0
  %v729 = vmax.f32 %v611, 0.0
  %v730 = vmax.f32 %v616, 0.0
  %v731 = vmax.f32 %v619, 0.0
  %v732 = vmax.f32 %v624, 0.0
  %v733 = vmax.f32 %v627, 0.0
  %v734 = vmax.f32 %v632, 0.0
  %v735 = vmax.f32 %v635, 0.0
  %v736 = vmax.f32 %v640, 0.0
  %v737 = vmax.f32 %v643, 0.0
  %v738 = vmax.f32 %v648, 0.0
  %v739 = vmax.f32 %v651, 0.0
  %v740 = vmax.f32 %v656, 0.0
  %v741 = vmax.f32 %v659, 0.0
  %v742 = vmax.f32 %v664, 0.0
  %v743 = vmax.f32 %v667, 0.0
  %v744 = vmax.f32 %v672, 0.0
  %v745 = vmax.f32 %v675, 0.0
  %v746 = vmax.f32 %v680, 0.0
  %v747 = vmax.f32 %v683, 0.0
  %v748 = vmax.f32 %v688, 0.0
  %v749 = vmax.f32 %v691, 0.0
  %v750 = vmax.f32 %v696, 0.0
  %v751 = vmax.f32 %v699, 0.0
  %v752 = vpack.c.bf16 %v703, %v702
  %v753 = vpack.c.bf16 %v705, %v704
  %v754 = vpack.c.bf16 %v707, %v706
  %v755 = vpack.c.bf16 %v709, %v708
  %v756 = vpack.c.bf16 %v711, %v710
  %v757 = vpack.c.bf16 %v713, %v712
  %v758 = vpack.c.bf16 %v715, %v714
  %v759 = vpack.c.bf16 %v717, %v716
  %v760 = vpack.c.bf16 %v719, %v718
  %v761 = vpack.c.bf16 %v721, %v720
  %v762 = vpack.c.bf16 %v723, %v722
  %v763 = vpack.c.bf16 %v725, %v724
  %v764 = vpack.c.bf16 %v727, %v726
  %v765 = vpack.c.bf16 %v729, %v728
  %v766 = vpack.c.bf16 %v731, %v730
  %v767 = vpack.c.bf16 %v733, %v732
  %v768 = vpack.c.bf16 %v735, %v734
  %v769 = vpack.c.bf16 %v737, %v736
  %v770 = vpack.c.bf16 %v739, %v738
  %v771 = vpack.c.bf16 %v741, %v740
  %v772 = vpack.c.bf16 %v743, %v742
  %v773 = vpack.c.bf16 %v745, %v744
  %v774 = vpack.c.bf16 %v747, %v746
  %v775 = vpack.c.bf16 %v749, %v748
  %v776 = vpack.c.bf16 %v751, %v750
  %v802 = vunpack.c.l.b16 %v752
  %v803 = vunpack.c.h.b16 %v752
  %v804 = vunpack.c.l.b16 %v753
  %v805 = vunpack.c.h.b16 %v753
  %v806 = vunpack.c.l.b16 %v754
  %v807 = vunpack.c.h.b16 %v754
  %v808 = vunpack.c.l.b16 %v755
  %v809 = vunpack.c.h.b16 %v755
  %v810 = vunpack.c.l.b16 %v756
  %v811 = vunpack.c.h.b16 %v756
  %v812 = vunpack.c.l.b16 %v757
  %v813 = vunpack.c.h.b16 %v757
  %v814 = vunpack.c.l.b16 %v758
  %v815 = vunpack.c.h.b16 %v758
  %v816 = vunpack.c.l.b16 %v759
  %v817 = vunpack.c.h.b16 %v759
  %v818 = vunpack.c.l.b16 %v760
  %v819 = vunpack.c.h.b16 %v760
  %v820 = vunpack.c.l.b16 %v761
  %v821 = vunpack.c.h.b16 %v761
  %v822 = vunpack.c.l.b16 %v762
  %v823 = vunpack.c.h.b16 %v762
  %v824 = vunpack.c.l.b16 %v763
  %v825 = vunpack.c.h.b16 %v763
  %v826 = vunpack.c.l.b16 %v764
  %v827 = vunpack.c.h.b16 %v764
  %v828 = vunpack.c.l.b16 %v765
  %v829 = vunpack.c.h.b16 %v765
  %v830 = vunpack.c.l.b16 %v766
  %v831 = vunpack.c.h.b16 %v766
  %v832 = vunpack.c.l.b16 %v767
  %v833 = vunpack.c.h.b16 %v767
  %v834 = vunpack.c.l.b16 %v768
  %v835 = vunpack.c.h.b16 %v768
  %v836 = vunpack.c.l.b16 %v769
  %v837 = vunpack.c.h.b16 %v769
  %v838 = vunpack.c.l.b16 %v770
  %v839 = vunpack.c.h.b16 %v770
  %v840 = vunpack.c.l.b16 %v771
  %v841 = vunpack.c.h.b16 %v771
  %v842 = vunpack.c.l.b16 %v772
  %v843 = vunpack.c.h.b16 %v772
  %v844 = vunpack.c.l.b16 %v773
  %v845 = vunpack.c.h.b16 %v773
  %v846 = vunpack.c.l.b16 %v774
  %v847 = vunpack.c.h.b16 %v774
  %v848 = vunpack.c.l.b16 %v775
  %v849 = vunpack.c.h.b16 %v775
  %v850 = vunpack.c.l.b16 %v776
  %v851 = vunpack.c.h.b16 %v776
  %v852 = vpack.c.b16 %v802, %v802
  %v853 = vpack.c.b16 %v803, %v803
  %v854 = vpack.c.b16 %v804, %v804
  %v855 = vpack.c.b16 %v805, %v805
  %v856 = vpack.c.b16 %v806, %v806
  %v857 = vpack.c.b16 %v807, %v807
  %v858 = vpack.c.b16 %v808, %v808
  %v859 = vpack.c.b16 %v809, %v809
  %v860 = vpack.c.b16 %v810, %v810
  %v861 = vpack.c.b16 %v811, %v811
  %v862 = vpack.c.b16 %v812, %v812
  %v863 = vpack.c.b16 %v813, %v813
  %v864 = vpack.c.b16 %v814, %v814
  %v865 = vpack.c.b16 %v815, %v815
  %v866 = vpack.c.b16 %v816, %v816
  %v867 = vpack.c.b16 %v817, %v817
  %v868 = vpack.c.b16 %v818, %v818
  %v869 = vpack.c.b16 %v819, %v819
  %v870 = vpack.c.b16 %v820, %v820
  %v871 = vpack.c.b16 %v821, %v821
  %v872 = vpack.c.b16 %v822, %v822
  %v873 = vpack.c.b16 %v823, %v823
  %v874 = vpack.c.b16 %v824, %v824
  %v875 = vpack.c.b16 %v825, %v825
  %v876 = vpack.c.b16 %v826, %v826
  %v877 = vpack.c.b16 %v827, %v827
  %v878 = vpack.c.b16 %v828, %v828
  %v879 = vpack.c.b16 %v829, %v829
  %v880 = vpack.c.b16 %v830, %v830
  %v881 = vpack.c.b16 %v831, %v831
  %v882 = vpack.c.b16 %v832, %v832
  %v883 = vpack.c.b16 %v833, %v833
  %v884 = vpack.c.b16 %v834, %v834
  %v885 = vpack.c.b16 %v835, %v835
  %v886 = vpack.c.b16 %v836, %v836
  %v887 = vpack.c.b16 %v837, %v837
  %v888 = vpack.c.b16 %v838, %v838
  %v889 = vpack.c.b16 %v839, %v839
  %v890 = vpack.c.b16 %v840, %v840
  %v891 = vpack.c.b16 %v841, %v841
  %v892 = vpack.c.b16 %v842, %v842
  %v893 = vpack.c.b16 %v843, %v843
  %v894 = vpack.c.b16 %v844, %v844
  %v895 = vpack.c.b16 %v845, %v845
  %v896 = vpack.c.b16 %v846, %v846
  %v897 = vpack.c.b16 %v847, %v847
  %v898 = vpack.c.b16 %v848, %v848
  %v899 = vpack.c.b16 %v849, %v849
  %v900 = vpack.c.b16 %v850, %v850
  %v901 = vpack.c.b16 %v851, %v851
  %952 = vst [vmem:[%s3] sm:$0xf] %v852
  %953 = vst [vmem:[%s3 + $0x4] sm:$0xf] %v853
  %954 = vst [vmem:[%s3 + $0x8] sm:$0xf] %v854
  %955 = vst [vmem:[%s3 + $0xc] sm:$0xf] %v855
  %956 = vst [vmem:[%s3 + $0x10] sm:$0xf] %v856
  %957 = vst [vmem:[%s3 + $0x14] sm:$0xf] %v857
  %958 = vst [vmem:[%s3 + $0x18] sm:$0xf] %v858
  %959 = vst [vmem:[%s3 + $0x1c] sm:$0xf] %v859
  %960 = vst [vmem:[%s3 + $0x20] sm:$0xf] %v860
  %961 = vst [vmem:[%s3 + $0x24] sm:$0xf] %v861
  %962 = vst [vmem:[%s3 + $0x28] sm:$0xf] %v862
  %963 = vst [vmem:[%s3 + $0x2c] sm:$0xf] %v863
  %964 = vst [vmem:[%s3 + $0x30] sm:$0xf] %v864
  %965 = vst [vmem:[%s3 + $0x34] sm:$0xf] %v865
  %966 = vst [vmem:[%s3 + $0x38] sm:$0xf] %v866
  %967 = vst [vmem:[%s3 + $0x3c] sm:$0xf] %v867
  %968 = vst [vmem:[%s3 + $0x40] sm:$0xf] %v868
  %969 = vst [vmem:[%s3 + $0x44] sm:$0xf] %v869
  %970 = vst [vmem:[%s3 + $0x48] sm:$0xf] %v870
  %971 = vst [vmem:[%s3 + $0x4c] sm:$0xf] %v871
  %972 = vst [vmem:[%s3 + $0x50] sm:$0xf] %v872
  %973 = vst [vmem:[%s3 + $0x54] sm:$0xf] %v873
  %974 = vst [vmem:[%s3 + $0x58] sm:$0xf] %v874
  %975 = vst [vmem:[%s3 + $0x5c] sm:$0xf] %v875
  %976 = vst [vmem:[%s3 + $0x60] sm:$0xf] %v876
  %977 = vst [vmem:[%s3 + $0x64] sm:$0xf] %v877
  %978 = vst [vmem:[%s3 + $0x68] sm:$0xf] %v878
  %979 = vst [vmem:[%s3 + $0x6c] sm:$0xf] %v879
  %980 = vst [vmem:[%s3 + $0x70] sm:$0xf] %v880
  %981 = vst [vmem:[%s3 + $0x74] sm:$0xf] %v881
  %982 = vst [vmem:[%s3 + $0x78] sm:$0xf] %v882
  %983 = vst [vmem:[%s3 + $0x7c] sm:$0xf] %v883
  %984 = vst [vmem:[%s3 + $0x80] sm:$0xf] %v884
  %985 = vst [vmem:[%s3 + $0x84] sm:$0xf] %v885
  %986 = vst [vmem:[%s3 + $0x88] sm:$0xf] %v886
  %987 = vst [vmem:[%s3 + $0x8c] sm:$0xf] %v887
  %988 = vst [vmem:[%s3 + $0x90] sm:$0xf] %v888
  %989 = vst [vmem:[%s3 + $0x94] sm:$0xf] %v889
  %990 = vst [vmem:[%s3 + $0x98] sm:$0xf] %v890
  %991 = vst [vmem:[%s3 + $0x9c] sm:$0xf] %v891
  %992 = vst [vmem:[%s3 + $0xa0] sm:$0xf] %v892
  %993 = vst [vmem:[%s3 + $0xa4] sm:$0xf] %v893
  %994 = vst [vmem:[%s3 + $0xa8] sm:$0xf] %v894
  %995 = vst [vmem:[%s3 + $0xac] sm:$0xf] %v895
  %996 = vst [vmem:[%s3 + $0xb0] sm:$0xf] %v896
  %997 = vst [vmem:[%s3 + $0xb4] sm:$0xf] %v897
  %998 = vst [vmem:[%s3 + $0xb8] sm:$0xf] %v898
  %999 = vst [vmem:[%s3 + $0xbc] sm:$0xf] %v899
  %1000 = vst [vmem:[%s3 + $0xc0] sm:$0xf] %v900
  %1001 = vst [vmem:[%s3 + $0xc4] sm:$0xf] %v901
  // Predicated region
  $region14: #{dqn_forward.5} parent=0 // pred_check
    _
  $region15: #{dqn_forward.5} parent=0 // pred_check_branch
    %1003 = sbr.rel (0) target = $region17
  $region16: #{dqn_forward.5} parent=0 // pred_region
    _
  $region17: #{dqn_forward.5} parent=0 // pred_fallthru
    _
  // Predicated region
  $region18: #{dqn_forward.5} parent=0 // pred_check
    _
  $region19: #{dqn_forward.5} parent=0 // pred_check_branch
    %1005 = sbr.rel (0) target = $region21
  $region20: #{dqn_forward.5} parent=0 // pred_region
    _
  $region21: #{dqn_forward.5} parent=0 // pred_fallthru
    _

// kernel: dqn_forward.6
$region0: #{dqn_forward.6}
  #allocation0 [shape = 'u32[]', space=smem, size = 0x4, offset = 0x4, fixed_abs, tag = 'smem constant byte address 0x4 - core index']
  #allocation1 [shape = 'u32[144,128]{1,0:T(1,128)}', space=vmem, size = 0x12000, scoped, tag = 'internal scratch']
  %s0 = inlined_call_operand.vmem [shape: bf16[4,10,10,128], index: 0, kind: input, shape index: {}]
  %s1 = inlined_call_operand.vmem [shape: bf16[1152,128], index: 1, kind: input, shape index: {}]
  %s2 = inlined_call_operand.vmem [shape: f32[1,128], index: 2, kind: input, shape index: {}]
  %s3 = inlined_call_operand.vmem [shape: bf16[4,8,8,128], index: 3, kind: output, shape index: {}]
  %s4 = sld [smem:[#allocation0]]
  $region22: #{dqn_forward.6} parent=0
    _
  %s6 = ssub.s32 1, %s4
  %s7 = scalar_select 0, %s6, %s4
  // Predicated region
  $region2: #{dqn_forward.6} parent=0 // pred_check
    _
  $region3: #{dqn_forward.6} parent=0 // pred_check_branch
    %9 = sbr.rel (0) target = $region5
  $region4: #{dqn_forward.6} parent=0 // pred_region
    _
  $region5: #{dqn_forward.6} parent=0 // pred_fallthru
    _
  // Predicated region
  $region6: #{dqn_forward.6} parent=0 // pred_check
    _
  $region7: #{dqn_forward.6} parent=0 // pred_check_branch
    %11 = sbr.rel (0) target = $region9
  $region8: #{dqn_forward.6} parent=0 // pred_region
    _
  $region9: #{dqn_forward.6} parent=0 // pred_fallthru
    _
  // Predicated region
  $region10: #{dqn_forward.6} parent=0 // pred_check
    _
  $region11: #{dqn_forward.6} parent=0 // pred_check_branch
    %13 = sbr.rel (0) target = $region13
  $region12: #{dqn_forward.6} parent=0 // pred_region
    _
  $region13: #{dqn_forward.6} parent=0 // pred_fallthru
    _
  %v15 = vld [vmem:[%s0] sm:$0xf]
  %v16 = vld [vmem:[%s0 + $0x8] sm:$0xf]
  %v17 = vld [vmem:[%s0 + $0x10] sm:$0xf]
  %v18 = vld [vmem:[%s0 + $0x18] sm:$0xf]
  %v19 = vld [vmem:[%s0 + $0x20] sm:$0xf]
  %v20 = vld [vmem:[%s0 + $0x28] sm:$0xf]
  %v21 = vld [vmem:[%s0 + $0x30] sm:$0xf]
  %v22 = vld [vmem:[%s0 + $0x38] sm:$0xf]
  %v23 = vld [vmem:[%s0 + $0x50] sm:$0xf]
  %v24 = vld [vmem:[%s0 + $0x58] sm:$0xf]
  %v25 = vld [vmem:[%s0 + $0x60] sm:$0xf]
  %v26 = vld [vmem:[%s0 + $0x68] sm:$0xf]
  %v27 = vld [vmem:[%s0 + $0x70] sm:$0xf]
  %v28 = vld [vmem:[%s0 + $0x78] sm:$0xf]
  %v29 = vld [vmem:[%s0 + $0x80] sm:$0xf]
  %v30 = vld [vmem:[%s0 + $0x88] sm:$0xf]
  %v31 = vld [vmem:[%s0 + $0xa0] sm:$0xf]
  %v32 = vld [vmem:[%s0 + $0xa8] sm:$0xf]
  %v33 = vld [vmem:[%s0 + $0xb0] sm:$0xf]
  %v34 = vld [vmem:[%s0 + $0xb8] sm:$0xf]
  %v35 = vld [vmem:[%s0 + $0xc0] sm:$0xf]
  %v36 = vld [vmem:[%s0 + $0xc8] sm:$0xf]
  %v37 = vld [vmem:[%s0 + $0xd0] sm:$0xf]
  %v38 = vld [vmem:[%s0 + $0xd8] sm:$0xf]
  %v39 = vld [vmem:[%s0 + $0xf0] sm:$0xf]
  %v40 = vld [vmem:[%s0 + $0xf8] sm:$0xf]
  %v41 = vld [vmem:[%s0 + $0x100] sm:$0xf]
  %v42 = vld [vmem:[%s0 + $0x108] sm:$0xf]
  %v43 = vld [vmem:[%s0 + $0x110] sm:$0xf]
  %v44 = vld [vmem:[%s0 + $0x118] sm:$0xf]
  %v45 = vld [vmem:[%s0 + $0x120] sm:$0xf]
  %v46 = vld [vmem:[%s0 + $0x128] sm:$0xf]
  %v47 = vld [vmem:[%s0 + $0x4] sm:$0x1]
  %v48 = vld [vmem:[%s0 + $0xc] sm:$0x1]
  %v49 = vld [vmem:[%s0 + $0x14] sm:$0x1]
  %v50 = vld [vmem:[%s0 + $0x1c] sm:$0x1]
  %v51 = vld [vmem:[%s0 + $0x24] sm:$0x1]
  %v52 = vld [vmem:[%s0 + $0x2c] sm:$0x1]
  %v53 = vld [vmem:[%s0 + $0x34] sm:$0x1]
  %v54 = vld [vmem:[%s0 + $0x3c] sm:$0x1]
  %v55 = vld [vmem:[%s0 + $0x54] sm:$0x1]
  %v56 = vld [vmem:[%s0 + $0x5c] sm:$0x1]
  %v57 = vld [vmem:[%s0 + $0x64] sm:$0x1]
  %v58 = vld [vmem:[%s0 + $0x6c] sm:$0x1]
  %v59 = vld [vmem:[%s0 + $0x74] sm:$0x1]
  %v60 = vld [vmem:[%s0 + $0x7c] sm:$0x1]
  %v61 = vld [vmem:[%s0 + $0x84] sm:$0x1]
  %v62 = vld [vmem:[%s0 + $0x8c] sm:$0x1]
  %v63 = vld [vmem:[%s0 + $0xa4] sm:$0x1]
  %v64 = vld [vmem:[%s0 + $0xac] sm:$0x1]
  %v65 = vld [vmem:[%s0 + $0xb4] sm:$0x1]
  %v66 = vld [vmem:[%s0 + $0xbc] sm:$0x1]
  %v67 = vld [vmem:[%s0 + $0xc4] sm:$0x1]
  %v68 = vld [vmem:[%s0 + $0xcc] sm:$0x1]
  %v69 = vld [vmem:[%s0 + $0xd4] sm:$0x1]
  %v70 = vld [vmem:[%s0 + $0xdc] sm:$0x1]
  %v71 = vld [vmem:[%s0 + $0xf4] sm:$0x1]
  %v72 = vld [vmem:[%s0 + $0xfc] sm:$0x1]
  %v73 = vld [vmem:[%s0 + $0x104] sm:$0x1]
  %v74 = vld [vmem:[%s0 + $0x10c] sm:$0x1]
  %v75 = vld [vmem:[%s0 + $0x114] sm:$0x1]
  %v76 = vld [vmem:[%s0 + $0x11c] sm:$0x1]
  %v77 = vld [vmem:[%s0 + $0x124] sm:$0x1]
  %v78 = vld [vmem:[%s0 + $0x12c] sm:$0x1]
  %v79 = vld [vmem:[%s0] sm:$0xe]
  %v80 = vld [vmem:[%s0 + $0x8] sm:$0xe]
  %v81 = vld [vmem:[%s0 + $0x10] sm:$0xe]
  %v82 = vld [vmem:[%s0 + $0x18] sm:$0xe]
  %v83 = vld [vmem:[%s0 + $0x20] sm:$0xe]
  %v84 = vld [vmem:[%s0 + $0x28] sm:$0xe]
  %v85 = vld [vmem:[%s0 + $0x30] sm:$0xe]
  %v86 = vld [vmem:[%s0 + $0x38] sm:$0xe]
  %v87 = vld [vmem:[%s0 + $0x50] sm:$0xe]
  %v88 = vld [vmem:[%s0 + $0x58] sm:$0xe]
  %v89 = vld [vmem:[%s0 + $0x60] sm:$0xe]
  %v90 = vld [vmem:[%s0 + $0x68] sm:$0xe]
  %v91 = vld [vmem:[%s0 + $0x70] sm:$0xe]
  %v92 = vld [vmem:[%s0 + $0x78] sm:$0xe]
  %v93 = vld [vmem:[%s0 + $0x80] sm:$0xe]
  %v94 = vld [vmem:[%s0 + $0x88] sm:$0xe]
  %v95 = vld [vmem:[%s0 + $0xa0] sm:$0xe]
  %v96 = vld [vmem:[%s0 + $0xa8] sm:$0xe]
  %v97 = vld [vmem:[%s0 + $0xb0] sm:$0xe]
  %v98 = vld [vmem:[%s0 + $0xb8] sm:$0xe]
  %v99 = vld [vmem:[%s0 + $0xc0] sm:$0xe]
  %v100 = vld [vmem:[%s0 + $0xc8] sm:$0xe]
  %v101 = vld [vmem:[%s0 + $0xd0] sm:$0xe]
  %v102 = vld [vmem:[%s0 + $0xd8] sm:$0xe]
  %v103 = vld [vmem:[%s0 + $0xf0] sm:$0xe]
  %v104 = vld [vmem:[%s0 + $0xf8] sm:$0xe]
  %v105 = vld [vmem:[%s0 + $0x100] sm:$0xe]
  %v106 = vld [vmem:[%s0 + $0x108] sm:$0xe]
  %v107 = vld [vmem:[%s0 + $0x110] sm:$0xe]
  %v108 = vld [vmem:[%s0 + $0x118] sm:$0xe]
  %v109 = vld [vmem:[%s0 + $0x120] sm:$0xe]
  %v110 = vld [vmem:[%s0 + $0x128] sm:$0xe]
  %s111 = scalar_lea.vmem %s0, 8
  %v112 = vld [vmem:[%s111] sm:$0xf]
  %v113 = vld [vmem:[%s111 + $0x8] sm:$0xf]
  %v114 = vld [vmem:[%s111 + $0x10] sm:$0xf]
  %v115 = vld [vmem:[%s111 + $0x18] sm:$0xf]
  %v116 = vld [vmem:[%s111 + $0x20] sm:$0xf]
  %v117 = vld [vmem:[%s111 + $0x28] sm:$0xf]
  %v118 = vld [vmem:[%s111 + $0x30] sm:$0xf]
  %v119 = vld [vmem:[%s111 + $0x38] sm:$0xf]
  %v120 = vld [vmem:[%s111 + $0x50] sm:$0xf]
  %v121 = vld [vmem:[%s111 + $0x58] sm:$0xf]
  %v122 = vld [vmem:[%s111 + $0x60] sm:$0xf]
  %v123 = vld [vmem:[%s111 + $0x68] sm:$0xf]
  %v124 = vld [vmem:[%s111 + $0x70] sm:$0xf]
  %v125 = vld [vmem:[%s111 + $0x78] sm:$0xf]
  %v126 = vld [vmem:[%s111 + $0x80] sm:$0xf]
  %v127 = vld [vmem:[%s111 + $0x88] sm:$0xf]
  %v128 = vld [vmem:[%s111 + $0xa0] sm:$0xf]
  %v129 = vld [vmem:[%s111 + $0xa8] sm:$0xf]
  %v130 = vld [vmem:[%s111 + $0xb0] sm:$0xf]
  %v131 = vld [vmem:[%s111 + $0xb8] sm:$0xf]
  %v132 = vld [vmem:[%s111 + $0xc0] sm:$0xf]
  %v133 = vld [vmem:[%s111 + $0xc8] sm:$0xf]
  %v134 = vld [vmem:[%s111 + $0xd0] sm:$0xf]
  %v135 = vld [vmem:[%s111 + $0xd8] sm:$0xf]
  %v136 = vld [vmem:[%s111 + $0xf0] sm:$0xf]
  %v137 = vld [vmem:[%s111 + $0xf8] sm:$0xf]
  %v138 = vld [vmem:[%s111 + $0x100] sm:$0xf]
  %v139 = vld [vmem:[%s111 + $0x108] sm:$0xf]
  %v140 = vld [vmem:[%s111 + $0x110] sm:$0xf]
  %v141 = vld [vmem:[%s111 + $0x118] sm:$0xf]
  %v142 = vld [vmem:[%s111 + $0x120] sm:$0xf]
  %v143 = vld [vmem:[%s111 + $0x128] sm:$0xf]
  %v144 = vld [vmem:[%s111 + $0x4] sm:$0x1]
  %v145 = vld [vmem:[%s111 + $0xc] sm:$0x1]
  %v146 = vld [vmem:[%s111 + $0x14] sm:$0x1]
  %v147 = vld [vmem:[%s111 + $0x1c] sm:$0x1]
  %v148 = vld [vmem:[%s111 + $0x24] sm:$0x1]
  %v149 = vld [vmem:[%s111 + $0x2c] sm:$0x1]
  %v150 = vld [vmem:[%s111 + $0x34] sm:$0x1]
  %v151 = vld [vmem:[%s111 + $0x3c] sm:$0x1]
  %v152 = vld [vmem:[%s111 + $0x54] sm:$0x1]
  %v153 = vld [vmem:[%s111 + $0x5c] sm:$0x1]
  %v154 = vld [vmem:[%s111 + $0x64] sm:$0x1]
  %v155 = vld [vmem:[%s111 + $0x6c] sm:$0x1]
  %v156 = vld [vmem:[%s111 + $0x74] sm:$0x1]
  %v157 = vld [vmem:[%s111 + $0x7c] sm:$0x1]
  %v158 = vld [vmem:[%s111 + $0x84] sm:$0x1]
  %v159 = vld [vmem:[%s111 + $0x8c] sm:$0x1]
  %v160 = vld [vmem:[%s111 + $0xa4] sm:$0x1]
  %v161 = vld [vmem:[%s111 + $0xac] sm:$0x1]
  %v162 = vld [vmem:[%s111 + $0xb4] sm:$0x1]
  %v163 = vld [vmem:[%s111 + $0xbc] sm:$0x1]
  %v164 = vld [vmem:[%s111 + $0xc4] sm:$0x1]
  %v165 = vld [vmem:[%s111 + $0xcc] sm:$0x1]
  %v166 = vld [vmem:[%s111 + $0xd4] sm:$0x1]
  %v167 = vld [vmem:[%s111 + $0xdc] sm:$0x1]
  %v168 = vld [vmem:[%s111 + $0xf4] sm:$0x1]
  %v169 = vld [vmem:[%s111 + $0xfc] sm:$0x1]
  %v170 = vld [vmem:[%s111 + $0x104] sm:$0x1]
  %v171 = vld [vmem:[%s111 + $0x10c] sm:$0x1]
  %v172 = vld [vmem:[%s111 + $0x114] sm:$0x1]
  %v173 = vld [vmem:[%s111 + $0x11c] sm:$0x1]
  %v174 = vld [vmem:[%s111 + $0x124] sm:$0x1]
  %v175 = vld [vmem:[%s111 + $0x12c] sm:$0x1]
  %v176 = vld [vmem:[%s111] sm:$0xe]
  %v177 = vld [vmem:[%s111 + $0x8] sm:$0xe]
  %v178 = vld [vmem:[%s111 + $0x10] sm:$0xe]
  %v179 = vld [vmem:[%s111 + $0x18] sm:$0xe]
  %v180 = vld [vmem:[%s111 + $0x20] sm:$0xe]
  %v181 = vld [vmem:[%s111 + $0x28] sm:$0xe]
  %v182 = vld [vmem:[%s111 + $0x30] sm:$0xe]
  %v183 = vld [vmem:[%s111 + $0x38] sm:$0xe]
  %v184 = vld [vmem:[%s111 + $0x50] sm:$0xe]
  %v185 = vld [vmem:[%s111 + $0x58] sm:$0xe]
  %v186 = vld [vmem:[%s111 + $0x60] sm:$0xe]
  %v187 = vld [vmem:[%s111 + $0x68] sm:$0xe]
  %v188 = vld [vmem:[%s111 + $0x70] sm:$0xe]
  %v189 = vld [vmem:[%s111 + $0x78] sm:$0xe]
  %v190 = vld [vmem:[%s111 + $0x80] sm:$0xe]
  %v191 = vld [vmem:[%s111 + $0x88] sm:$0xe]
  %v192 = vld [vmem:[%s111 + $0xa0] sm:$0xe]
  %v193 = vld [vmem:[%s111 + $0xa8] sm:$0xe]
  %v194 = vld [vmem:[%s111 + $0xb0] sm:$0xe]
  %v195 = vld [vmem:[%s111 + $0xb8] sm:$0xe]
  %v196 = vld [vmem:[%s111 + $0xc0] sm:$0xe]
  %v197 = vld [vmem:[%s111 + $0xc8] sm:$0xe]
  %v198 = vld [vmem:[%s111 + $0xd0] sm:$0xe]
  %v199 = vld [vmem:[%s111 + $0xd8] sm:$0xe]
  %v200 = vld [vmem:[%s111 + $0xf0] sm:$0xe]
  %v201 = vld [vmem:[%s111 + $0xf8] sm:$0xe]
  %v202 = vld [vmem:[%s111 + $0x100] sm:$0xe]
  %v203 = vld [vmem:[%s111 + $0x108] sm:$0xe]
  %v204 = vld [vmem:[%s111 + $0x110] sm:$0xe]
  %v205 = vld [vmem:[%s111 + $0x118] sm:$0xe]
  %v206 = vld [vmem:[%s111 + $0x120] sm:$0xe]
  %v207 = vld [vmem:[%s111 + $0x128] sm:$0xe]
  %s208 = scalar_lea.vmem %s0, 16
  %v209 = vld [vmem:[%s208] sm:$0xf]
  %v210 = vld [vmem:[%s208 + $0x8] sm:$0xf]
  %v211 = vld [vmem:[%s208 + $0x10] sm:$0xf]
  %v212 = vld [vmem:[%s208 + $0x18] sm:$0xf]
  %v213 = vld [vmem:[%s208 + $0x20] sm:$0xf]
  %v214 = vld [vmem:[%s208 + $0x28] sm:$0xf]
  %v215 = vld [vmem:[%s208 + $0x30] sm:$0xf]
  %v216 = vld [vmem:[%s208 + $0x38] sm:$0xf]
  %v217 = vld [vmem:[%s208 + $0x50] sm:$0xf]
  %v218 = vld [vmem:[%s208 + $0x58] sm:$0xf]
  %v219 = vld [vmem:[%s208 + $0x60] sm:$0xf]
  %v220 = vld [vmem:[%s208 + $0x68] sm:$0xf]
  %v221 = vld [vmem:[%s208 + $0x70] sm:$0xf]
  %v222 = vld [vmem:[%s208 + $0x78] sm:$0xf]
  %v223 = vld [vmem:[%s208 + $0x80] sm:$0xf]
  %v224 = vld [vmem:[%s208 + $0x88] sm:$0xf]
  %v225 = vld [vmem:[%s208 + $0xa0] sm:$0xf]
  %v226 = vld [vmem:[%s208 + $0xa8] sm:$0xf]
  %v227 = vld [vmem:[%s208 + $0xb0] sm:$0xf]
  %v228 = vld [vmem:[%s208 + $0xb8] sm:$0xf]
  %v229 = vld [vmem:[%s208 + $0xc0] sm:$0xf]
  %v230 = vld [vmem:[%s208 + $0xc8] sm:$0xf]
  %v231 = vld [vmem:[%s208 + $0xd0] sm:$0xf]
  %v232 = vld [vmem:[%s208 + $0xd8] sm:$0xf]
  %v233 = vld [vmem:[%s208 + $0xf0] sm:$0xf]
  %v234 = vld [vmem:[%s208 + $0xf8] sm:$0xf]
  %v235 = vld [vmem:[%s208 + $0x100] sm:$0xf]
  %v236 = vld [vmem:[%s208 + $0x108] sm:$0xf]
  %v237 = vld [vmem:[%s208 + $0x110] sm:$0xf]
  %v238 = vld [vmem:[%s208 + $0x118] sm:$0xf]
  %v239 = vld [vmem:[%s208 + $0x120] sm:$0xf]
  %v240 = vld [vmem:[%s208 + $0x128] sm:$0xf]
  %v241 = vld [vmem:[%s208 + $0x4] sm:$0x1]
  %v242 = vld [vmem:[%s208 + $0xc] sm:$0x1]
  %v243 = vld [vmem:[%s208 + $0x14] sm:$0x1]
  %v244 = vld [vmem:[%s208 + $0x1c] sm:$0x1]
  %v245 = vld [vmem:[%s208 + $0x24] sm:$0x1]
  %v246 = vld [vmem:[%s208 + $0x2c] sm:$0x1]
  %v247 = vld [vmem:[%s208 + $0x34] sm:$0x1]
  %v248 = vld [vmem:[%s208 + $0x3c] sm:$0x1]
  %v249 = vld [vmem:[%s208 + $0x54] sm:$0x1]
  %v250 = vld [vmem:[%s208 + $0x5c] sm:$0x1]
  %v251 = vld [vmem:[%s208 + $0x64] sm:$0x1]
  %v252 = vld [vmem:[%s208 + $0x6c] sm:$0x1]
  %v253 = vld [vmem:[%s208 + $0x74] sm:$0x1]
  %v254 = vld [vmem:[%s208 + $0x7c] sm:$0x1]
  %v255 = vld [vmem:[%s208 + $0x84] sm:$0x1]
  %v256 = vld [vmem:[%s208 + $0x8c] sm:$0x1]
  %v257 = vld [vmem:[%s208 + $0xa4] sm:$0x1]
  %v258 = vld [vmem:[%s208 + $0xac] sm:$0x1]
  %v259 = vld [vmem:[%s208 + $0xb4] sm:$0x1]
  %v260 = vld [vmem:[%s208 + $0xbc] sm:$0x1]
  %v261 = vld [vmem:[%s208 + $0xc4] sm:$0x1]
  %v262 = vld [vmem:[%s208 + $0xcc] sm:$0x1]
  %v263 = vld [vmem:[%s208 + $0xd4] sm:$0x1]
  %v264 = vld [vmem:[%s208 + $0xdc] sm:$0x1]
  %v265 = vld [vmem:[%s208 + $0xf4] sm:$0x1]
  %v266 = vld [vmem:[%s208 + $0xfc] sm:$0x1]
  %v267 = vld [vmem:[%s208 + $0x104] sm:$0x1]
  %v268 = vld [vmem:[%s208 + $0x10c] sm:$0x1]
  %v269 = vld [vmem:[%s208 + $0x114] sm:$0x1]
  %v270 = vld [vmem:[%s208 + $0x11c] sm:$0x1]
  %v271 = vld [vmem:[%s208 + $0x124] sm:$0x1]
  %v272 = vld [vmem:[%s208 + $0x12c] sm:$0x1]
  %v273 = vld [vmem:[%s208] sm:$0xe]
  %v274 = vld [vmem:[%s208 + $0x8] sm:$0xe]
  %v275 = vld [vmem:[%s208 + $0x10] sm:$0xe]
  %v276 = vld [vmem:[%s208 + $0x18] sm:$0xe]
  %v277 = vld [vmem:[%s208 + $0x20] sm:$0xe]
  %v278 = vld [vmem:[%s208 + $0x28] sm:$0xe]
  %v279 = vld [vmem:[%s208 + $0x30] sm:$0xe]
  %v280 = vld [vmem:[%s208 + $0x38] sm:$0xe]
  %v281 = vld [vmem:[%s208 + $0x50] sm:$0xe]
  %v282 = vld [vmem:[%s208 + $0x58] sm:$0xe]
  %v283 = vld [vmem:[%s208 + $0x60] sm:$0xe]
  %v284 = vld [vmem:[%s208 + $0x68] sm:$0xe]
  %v285 = vld [vmem:[%s208 + $0x70] sm:$0xe]
  %v286 = vld [vmem:[%s208 + $0x78] sm:$0xe]
  %v287 = vld [vmem:[%s208 + $0x80] sm:$0xe]
  %v288 = vld [vmem:[%s208 + $0x88] sm:$0xe]
  %v289 = vld [vmem:[%s208 + $0xa0] sm:$0xe]
  %v290 = vld [vmem:[%s208 + $0xa8] sm:$0xe]
  %v291 = vld [vmem:[%s208 + $0xb0] sm:$0xe]
  %v292 = vld [vmem:[%s208 + $0xb8] sm:$0xe]
  %v293 = vld [vmem:[%s208 + $0xc0] sm:$0xe]
  %v294 = vld [vmem:[%s208 + $0xc8] sm:$0xe]
  %v295 = vld [vmem:[%s208 + $0xd0] sm:$0xe]
  %v296 = vld [vmem:[%s208 + $0xd8] sm:$0xe]
  %v297 = vld [vmem:[%s208 + $0xf0] sm:$0xe]
  %v298 = vld [vmem:[%s208 + $0xf8] sm:$0xe]
  %v299 = vld [vmem:[%s208 + $0x100] sm:$0xe]
  %v300 = vld [vmem:[%s208 + $0x108] sm:$0xe]
  %v301 = vld [vmem:[%s208 + $0x110] sm:$0xe]
  %v302 = vld [vmem:[%s208 + $0x118] sm:$0xe]
  %v303 = vld [vmem:[%s208 + $0x120] sm:$0xe]
  %v304 = vld [vmem:[%s208 + $0x128] sm:$0xe]
  %v369 = vunpack.c.l.b16 %v15
  %v370 = vunpack.c.l.b16 %v47
  %v371 = vunpack.c.l.b16 %v16
  %v372 = vunpack.c.l.b16 %v48
  %v373 = vunpack.c.l.b16 %v17
  %v374 = vunpack.c.l.b16 %v49
  %v375 = vunpack.c.l.b16 %v18
  %v376 = vunpack.c.l.b16 %v50
  %v377 = vunpack.c.l.b16 %v19
  %v378 = vunpack.c.l.b16 %v51
  %v379 = vunpack.c.l.b16 %v20
  %v380 = vunpack.c.l.b16 %v52
  %v381 = vunpack.c.l.b16 %v21
  %v382 = vunpack.c.l.b16 %v53
  %v383 = vunpack.c.l.b16 %v22
  %v384 = vunpack.c.l.b16 %v54
  %v385 = vunpack.c.l.b16 %v23
  %v386 = vunpack.c.l.b16 %v55
  %v387 = vunpack.c.l.b16 %v24
  %v388 = vunpack.c.l.b16 %v56
  %v389 = vunpack.c.l.b16 %v25
  %v390 = vunpack.c.l.b16 %v57
  %v391 = vunpack.c.l.b16 %v26
  %v392 = vunpack.c.l.b16 %v58
  %v393 = vunpack.c.l.b16 %v27
  %v394 = vunpack.c.l.b16 %v59
  %v395 = vunpack.c.l.b16 %v28
  %v396 = vunpack.c.l.b16 %v60
  %v397 = vunpack.c.l.b16 %v29
  %v398 = vunpack.c.l.b16 %v61
  %v399 = vunpack.c.l.b16 %v30
  %v400 = vunpack.c.l.b16 %v62
  %v401 = vunpack.c.l.b16 %v31
  %v402 = vunpack.c.l.b16 %v63
  %v403 = vunpack.c.l.b16 %v32
  %v404 = vunpack.c.l.b16 %v64
  %v405 = vunpack.c.l.b16 %v33
  %v406 = vunpack.c.l.b16 %v65
  %v407 = vunpack.c.l.b16 %v34
  %v408 = vunpack.c.l.b16 %v66
  %v409 = vunpack.c.l.b16 %v35
  %v410 = vunpack.c.l.b16 %v67
  %v411 = vunpack.c.l.b16 %v36
  %v412 = vunpack.c.l.b16 %v68
  %v413 = vunpack.c.l.b16 %v37
  %v414 = vunpack.c.l.b16 %v69
  %v415 = vunpack.c.l.b16 %v38
  %v416 = vunpack.c.l.b16 %v70
  %v417 = vunpack.c.l.b16 %v39
  %v418 = vunpack.c.l.b16 %v71
  %v419 = vunpack.c.l.b16 %v40
  %v420 = vunpack.c.l.b16 %v72
  %v421 = vunpack.c.l.b16 %v41
  %v422 = vunpack.c.l.b16 %v73
  %v423 = vunpack.c.l.b16 %v42
  %v424 = vunpack.c.l.b16 %v74
  %v425 = vunpack.c.l.b16 %v43
  %v426 = vunpack.c.l.b16 %v75
  %v427 = vunpack.c.l.b16 %v44
  %v428 = vunpack.c.l.b16 %v76
  %v429 = vunpack.c.l.b16 %v45
  %v430 = vunpack.c.l.b16 %v77
  %v431 = vunpack.c.l.b16 %v46
  %v432 = vunpack.c.l.b16 %v78
  %v433 = vpack.c.b16 %v370, %v369
  %v434 = vpack.c.b16 %v372, %v371
  %v435 = vpack.c.b16 %v374, %v373
  %v436 = vpack.c.b16 %v376, %v375
  %v437 = vpack.c.b16 %v378, %v377
  %v438 = vpack.c.b16 %v380, %v379
  %v439 = vpack.c.b16 %v382, %v381
  %v440 = vpack.c.b16 %v384, %v383
  %v441 = vpack.c.b16 %v386, %v385
  %v442 = vpack.c.b16 %v388, %v387
  %v443 = vpack.c.b16 %v390, %v389
  %v444 = vpack.c.b16 %v392, %v391
  %v445 = vpack.c.b16 %v394, %v393
  %v446 = vpack.c.b16 %v396, %v395
  %v447 = vpack.c.b16 %v398, %v397
  %v448 = vpack.c.b16 %v400, %v399
  %v449 = vpack.c.b16 %v402, %v401
  %v450 = vpack.c.b16 %v404, %v403
  %v451 = vpack.c.b16 %v406, %v405
  %v452 = vpack.c.b16 %v408, %v407
  %v453 = vpack.c.b16 %v410, %v409
  %v454 = vpack.c.b16 %v412, %v411
  %v455 = vpack.c.b16 %v414, %v413
  %v456 = vpack.c.b16 %v416, %v415
  %v457 = vpack.c.b16 %v418, %v417
  %v458 = vpack.c.b16 %v420, %v419
  %v459 = vpack.c.b16 %v422, %v421
  %v460 = vpack.c.b16 %v424, %v423
  %v461 = vpack.c.b16 %v426, %v425
  %v462 = vpack.c.b16 %v428, %v427
  %v463 = vpack.c.b16 %v430, %v429
  %v464 = vpack.c.b16 %v432, %v431
  %v466 = vshrl.u32 %v433, 16
  %v468 = vshll.u32 %v433, 16
  %v470 = vrot.slane %v468, 1
  %v471 = vor.u32 %v466, %v470
  %v473 = vshrl.u32 %v434, 16
  %v475 = vshll.u32 %v434, 16
  %v477 = vrot.slane %v475, 1
  %v478 = vor.u32 %v473, %v477
  %v480 = vshrl.u32 %v435, 16
  %v482 = vshll.u32 %v435, 16
  %v484 = vrot.slane %v482, 1
  %v485 = vor.u32 %v480, %v484
  %v487 = vshrl.u32 %v436, 16
  %v489 = vshll.u32 %v436, 16
  %v491 = vrot.slane %v489, 1
  %v492 = vor.u32 %v487, %v491
  %v494 = vshrl.u32 %v437, 16
  %v496 = vshll.u32 %v437, 16
  %v498 = vrot.slane %v496, 1
  %v499 = vor.u32 %v494, %v498
  %v501 = vshrl.u32 %v438, 16
  %v503 = vshll.u32 %v438, 16
  %v505 = vrot.slane %v503, 1
  %v506 = vor.u32 %v501, %v505
  %v508 = vshrl.u32 %v439, 16
  %v510 = vshll.u32 %v439, 16
  %v512 = vrot.slane %v510, 1
  %v513 = vor.u32 %v508, %v512
  %v515 = vshrl.u32 %v440, 16
  %v517 = vshll.u32 %v440, 16
  %v519 = vrot.slane %v517, 1
  %v520 = vor.u32 %v515, %v519
  %v522 = vshrl.u32 %v441, 16
  %v524 = vshll.u32 %v441, 16
  %v526 = vrot.slane %v524, 1
  %v527 = vor.u32 %v522, %v526
  %v529 = vshrl.u32 %v442, 16
  %v531 = vshll.u32 %v442, 16
  %v533 = vrot.slane %v531, 1
  %v534 = vor.u32 %v529, %v533
  %v536 = vshrl.u32 %v443, 16
  %v538 = vshll.u32 %v443, 16
  %v540 = vrot.slane %v538, 1
  %v541 = vor.u32 %v536, %v540
  %v543 = vshrl.u32 %v444, 16
  %v545 = vshll.u32 %v444, 16
  %v547 = vrot.slane %v545, 1
  %v548 = vor.u32 %v543, %v547
  %v550 = vshrl.u32 %v445, 16
  %v552 = vshll.u32 %v445, 16
  %v554 = vrot.slane %v552, 1
  %v555 = vor.u32 %v550, %v554
  %v557 = vshrl.u32 %v446, 16
  %v559 = vshll.u32 %v446, 16
  %v561 = vrot.slane %v559, 1
  %v562 = vor.u32 %v557, %v561
  %v564 = vshrl.u32 %v447, 16
  %v566 = vshll.u32 %v447, 16
  %v568 = vrot.slane %v566, 1
  %v569 = vor.u32 %v564, %v568
  %v571 = vshrl.u32 %v448, 16
  %v573 = vshll.u32 %v448, 16
  %v575 = vrot.slane %v573, 1
  %v576 = vor.u32 %v571, %v575
  %v578 = vshrl.u32 %v449, 16
  %v580 = vshll.u32 %v449, 16
  %v582 = vrot.slane %v580, 1
  %v583 = vor.u32 %v578, %v582
  %v585 = vshrl.u32 %v450, 16
  %v587 = vshll.u32 %v450, 16
  %v589 = vrot.slane %v587, 1
  %v590 = vor.u32 %v585, %v589
  %v592 = vshrl.u32 %v451, 16
  %v594 = vshll.u32 %v451, 16
  %v596 = vrot.slane %v594, 1
  %v597 = vor.u32 %v592, %v596
  %v599 = vshrl.u32 %v452, 16
  %v601 = vshll.u32 %v452, 16
  %v603 = vrot.slane %v601, 1
  %v604 = vor.u32 %v599, %v603
  %v606 = vshrl.u32 %v453, 16
  %v608 = vshll.u32 %v453, 16
  %v610 = vrot.slane %v608, 1
  %v611 = vor.u32 %v606, %v610
  %v613 = vshrl.u32 %v454, 16
  %v615 = vshll.u32 %v454, 16
  %v617 = vrot.slane %v615, 1
  %v618 = vor.u32 %v613, %v617
  %v620 = vshrl.u32 %v455, 16
  %v622 = vshll.u32 %v455, 16
  %v624 = vrot.slane %v622, 1
  %v625 = vor.u32 %v620, %v624
  %v627 = vshrl.u32 %v456, 16
  %v629 = vshll.u32 %v456, 16
  %v631 = vrot.slane %v629, 1
  %v632 = vor.u32 %v627, %v631
  %v634 = vshrl.u32 %v457, 16
  %v636 = vshll.u32 %v457, 16
  %v638 = vrot.slane %v636, 1
  %v639 = vor.u32 %v634, %v638
  %v641 = vshrl.u32 %v458, 16
  %v643 = vshll.u32 %v458, 16
  %v645 = vrot.slane %v643, 1
  %v646 = vor.u32 %v641, %v645
  %v648 = vshrl.u32 %v459, 16
  %v650 = vshll.u32 %v459, 16
  %v652 = vrot.slane %v650, 1
  %v653 = vor.u32 %v648, %v652
  %v655 = vshrl.u32 %v460, 16
  %v657 = vshll.u32 %v460, 16
  %v659 = vrot.slane %v657, 1
  %v660 = vor.u32 %v655, %v659
  %v662 = vshrl.u32 %v461, 16
  %v664 = vshll.u32 %v461, 16
  %v666 = vrot.slane %v664, 1
  %v667 = vor.u32 %v662, %v666
  %v669 = vshrl.u32 %v462, 16
  %v671 = vshll.u32 %v462, 16
  %v673 = vrot.slane %v671, 1
  %v674 = vor.u32 %v669, %v673
  %v676 = vshrl.u32 %v463, 16
  %v678 = vshll.u32 %v463, 16
  %v680 = vrot.slane %v678, 1
  %v681 = vor.u32 %v676, %v680
  %v683 = vshrl.u32 %v464, 16
  %v685 = vshll.u32 %v464, 16
  %v687 = vrot.slane %v685, 1
  %v688 = vor.u32 %v683, %v687
  %v721 = vunpack.c.l.b16 %v79
  %v722 = vunpack.c.l.b16 %v80
  %v723 = vunpack.c.l.b16 %v81
  %v724 = vunpack.c.l.b16 %v82
  %v725 = vunpack.c.l.b16 %v83
  %v726 = vunpack.c.l.b16 %v84
  %v727 = vunpack.c.l.b16 %v85
  %v728 = vunpack.c.l.b16 %v86
  %v729 = vunpack.c.l.b16 %v87
  %v730 = vunpack.c.l.b16 %v88
  %v731 = vunpack.c.l.b16 %v89
  %v732 = vunpack.c.l.b16 %v90
  %v733 = vunpack.c.l.b16 %v91
  %v734 = vunpack.c.l.b16 %v92
  %v735 = vunpack.c.l.b16 %v93
  %v736 = vunpack.c.l.b16 %v94
  %v737 = vunpack.c.l.b16 %v95
  %v738 = vunpack.c.l.b16 %v96
  %v739 = vunpack.c.l.b16 %v97
  %v740 = vunpack.c.l.b16 %v98
  %v741 = vunpack.c.l.b16 %v99
  %v742 = vunpack.c.l.b16 %v100
  %v743 = vunpack.c.l.b16 %v101
  %v744 = vunpack.c.l.b16 %v102
  %v745 = vunpack.c.l.b16 %v103
  %v746 = vunpack.c.l.b16 %v104
  %v747 = vunpack.c.l.b16 %v105
  %v748 = vunpack.c.l.b16 %v106
  %v749 = vunpack.c.l.b16 %v107
  %v750 = vunpack.c.l.b16 %v108
  %v751 = vunpack.c.l.b16 %v109
  %v752 = vunpack.c.l.b16 %v110
  %v753 = vpack.c.b16 %v370, %v721
  %v754 = vpack.c.b16 %v372, %v722
  %v755 = vpack.c.b16 %v374, %v723
  %v756 = vpack.c.b16 %v376, %v724
  %v757 = vpack.c.b16 %v378, %v725
  %v758 = vpack.c.b16 %v380, %v726
  %v759 = vpack.c.b16 %v382, %v727
  %v760 = vpack.c.b16 %v384, %v728
  %v761 = vpack.c.b16 %v386, %v729
  %v762 = vpack.c.b16 %v388, %v730
  %v763 = vpack.c.b16 %v390, %v731
  %v764 = vpack.c.b16 %v392, %v732
  %v765 = vpack.c.b16 %v394, %v733
  %v766 = vpack.c.b16 %v396, %v734
  %v767 = vpack.c.b16 %v398, %v735
  %v768 = vpack.c.b16 %v400, %v736
  %v769 = vpack.c.b16 %v402, %v737
  %v770 = vpack.c.b16 %v404, %v738
  %v771 = vpack.c.b16 %v406, %v739
  %v772 = vpack.c.b16 %v408, %v740
  %v773 = vpack.c.b16 %v410, %v741
  %v774 = vpack.c.b16 %v412, %v742
  %v775 = vpack.c.b16 %v414, %v743
  %v776 = vpack.c.b16 %v416, %v744
  %v777 = vpack.c.b16 %v418, %v745
  %v778 = vpack.c.b16 %v420, %v746
  %v779 = vpack.c.b16 %v422, %v747
  %v780 = vpack.c.b16 %v424, %v748
  %v781 = vpack.c.b16 %v426, %v749
  %v782 = vpack.c.b16 %v428, %v750
  %v783 = vpack.c.b16 %v430, %v751
  %v784 = vpack.c.b16 %v432, %v752
  %v785 = vrot.slane %v753, 1
  %v786 = vrot.slane %v754, 1
  %v787 = vrot.slane %v755, 1
  %v788 = vrot.slane %v756, 1
  %v789 = vrot.slane %v757, 1
  %v790 = vrot.slane %v758, 1
  %v791 = vrot.slane %v759, 1
  %v792 = vrot.slane %v760, 1
  %v793 = vrot.slane %v761, 1
  %v794 = vrot.slane %v762, 1
  %v795 = vrot.slane %v763, 1
  %v796 = vrot.slane %v764, 1
  %v797 = vrot.slane %v765, 1
  %v798 = vrot.slane %v766, 1
  %v799 = vrot.slane %v767, 1
  %v800 = vrot.slane %v768, 1
  %v801 = vrot.slane %v769, 1
  %v802 = vrot.slane %v770, 1
  %v803 = vrot.slane %v771, 1
  %v804 = vrot.slane %v772, 1
  %v805 = vrot.slane %v773, 1
  %v806 = vrot.slane %v774, 1
  %v807 = vrot.slane %v775, 1
  %v808 = vrot.slane %v776, 1
  %v809 = vrot.slane %v777, 1
  %v810 = vrot.slane %v778, 1
  %v811 = vrot.slane %v779, 1
  %v812 = vrot.slane %v780, 1
  %v813 = vrot.slane %v781, 1
  %v814 = vrot.slane %v782, 1
  %v815 = vrot.slane %v783, 1
  %v816 = vrot.slane %v784, 1
  %v881 = vunpack.c.l.b16 %v112
  %v882 = vunpack.c.l.b16 %v144
  %v883 = vunpack.c.l.b16 %v113
  %v884 = vunpack.c.l.b16 %v145
  %v885 = vunpack.c.l.b16 %v114
  %v886 = vunpack.c.l.b16 %v146
  %v887 = vunpack.c.l.b16 %v115
  %v888 = vunpack.c.l.b16 %v147
  %v889 = vunpack.c.l.b16 %v116
  %v890 = vunpack.c.l.b16 %v148
  %v891 = vunpack.c.l.b16 %v117
  %v892 = vunpack.c.l.b16 %v149
  %v893 = vunpack.c.l.b16 %v118
  %v894 = vunpack.c.l.b16 %v150
  %v895 = vunpack.c.l.b16 %v119
  %v896 = vunpack.c.l.b16 %v151
  %v897 = vunpack.c.l.b16 %v120
  %v898 = vunpack.c.l.b16 %v152
  %v899 = vunpack.c.l.b16 %v121
  %v900 = vunpack.c.l.b16 %v153
  %v901 = vunpack.c.l.b16 %v122
  %v902 = vunpack.c.l.b16 %v154
  %v903 = vunpack.c.l.b16 %v123
  %v904 = vunpack.c.l.b16 %v155
  %v905 = vunpack.c.l.b16 %v124
  %v906 = vunpack.c.l.b16 %v156
  %v907 = vunpack.c.l.b16 %v125
  %v908 = vunpack.c.l.b16 %v157
  %v909 = vunpack.c.l.b16 %v126
  %v910 = vunpack.c.l.b16 %v158
  %v911 = vunpack.c.l.b16 %v127
  %v912 = vunpack.c.l.b16 %v159
  %v913 = vunpack.c.l.b16 %v128
  %v914 = vunpack.c.l.b16 %v160
  %v915 = vunpack.c.l.b16 %v129
  %v916 = vunpack.c.l.b16 %v161
  %v917 = vunpack.c.l.b16 %v130
  %v918 = vunpack.c.l.b16 %v162
  %v919 = vunpack.c.l.b16 %v131
  %v920 = vunpack.c.l.b16 %v163
  %v921 = vunpack.c.l.b16 %v132
  %v922 = vunpack.c.l.b16 %v164
  %v923 = vunpack.c.l.b16 %v133
  %v924 = vunpack.c.l.b16 %v165
  %v925 = vunpack.c.l.b16 %v134
  %v926 = vunpack.c.l.b16 %v166
  %v927 = vunpack.c.l.b16 %v135
  %v928 = vunpack.c.l.b16 %v167
  %v929 = vunpack.c.l.b16 %v136
  %v930 = vunpack.c.l.b16 %v168
  %v931 = vunpack.c.l.b16 %v137
  %v932 = vunpack.c.l.b16 %v169
  %v933 = vunpack.c.l.b16 %v138
  %v934 = vunpack.c.l.b16 %v170
  %v935 = vunpack.c.l.b16 %v139
  %v936 = vunpack.c.l.b16 %v171
  %v937 = vunpack.c.l.b16 %v140
  %v938 = vunpack.c.l.b16 %v172
  %v939 = vunpack.c.l.b16 %v141
  %v940 = vunpack.c.l.b16 %v173
  %v941 = vunpack.c.l.b16 %v142
  %v942 = vunpack.c.l.b16 %v174
  %v943 = vunpack.c.l.b16 %v143
  %v944 = vunpack.c.l.b16 %v175
  %v945 = vpack.c.b16 %v882, %v881
  %v946 = vpack.c.b16 %v884, %v883
  %v947 = vpack.c.b16 %v886, %v885
  %v948 = vpack.c.b16 %v888, %v887
  %v949 = vpack.c.b16 %v890, %v889
  %v950 = vpack.c.b16 %v892, %v891
  %v951 = vpack.c.b16 %v894, %v893
  %v952 = vpack.c.b16 %v896, %v895
  %v953 = vpack.c.b16 %v898, %v897
  %v954 = vpack.c.b16 %v900, %v899
  %v955 = vpack.c.b16 %v902, %v901
  %v956 = vpack.c.b16 %v904, %v903
  %v957 = vpack.c.b16 %v906, %v905
  %v958 = vpack.c.b16 %v908, %v907
  %v959 = vpack.c.b16 %v910, %v909
  %v960 = vpack.c.b16 %v912, %v911
  %v961 = vpack.c.b16 %v914, %v913
  %v962 = vpack.c.b16 %v916, %v915
  %v963 = vpack.c.b16 %v918, %v917
  %v964 = vpack.c.b16 %v920, %v919
  %v965 = vpack.c.b16 %v922, %v921
  %v966 = vpack.c.b16 %v924, %v923
  %v967 = vpack.c.b16 %v926, %v925
  %v968 = vpack.c.b16 %v928, %v927
  %v969 = vpack.c.b16 %v930, %v929
  %v970 = vpack.c.b16 %v932, %v931
  %v971 = vpack.c.b16 %v934, %v933
  %v972 = vpack.c.b16 %v936, %v935
  %v973 = vpack.c.b16 %v938, %v937
  %v974 = vpack.c.b16 %v940, %v939
  %v975 = vpack.c.b16 %v942, %v941
  %v976 = vpack.c.b16 %v944, %v943
  %v978 = vshrl.u32 %v945, 16
  %v980 = vshll.u32 %v945, 16
  %v982 = vrot.slane %v980, 1
  %v983 = vor.u32 %v978, %v982
  %v985 = vshrl.u32 %v946, 16
  %v987 = vshll.u32 %v946, 16
  %v989 = vrot.slane %v987, 1
  %v990 = vor.u32 %v985, %v989
  %v992 = vshrl.u32 %v947, 16
  %v994 = vshll.u32 %v947, 16
  %v996 = vrot.slane %v994, 1
  %v997 = vor.u32 %v992, %v996
  %v999 = vshrl.u32 %v948, 16
  %v1001 = vshll.u32 %v948, 16
  %v1003 = vrot.slane %v1001, 1
  %v1004 = vor.u32 %v999, %v1003
  %v1006 = vshrl.u32 %v949, 16
  %v1008 = vshll.u32 %v949, 16
  %v1010 = vrot.slane %v1008, 1
  %v1011 = vor.u32 %v1006, %v1010
  %v1013 = vshrl.u32 %v950, 16
  %v1015 = vshll.u32 %v950, 16
  %v1017 = vrot.slane %v1015, 1
  %v1018 = vor.u32 %v1013, %v1017
  %v1020 = vshrl.u32 %v951, 16
  %v1022 = vshll.u32 %v951, 16
  %v1024 = vrot.slane %v1022, 1
  %v1025 = vor.u32 %v1020, %v1024
  %v1027 = vshrl.u32 %v952, 16
  %v1029 = vshll.u32 %v952, 16
  %v1031 = vrot.slane %v1029, 1
  %v1032 = vor.u32 %v1027, %v1031
  %v1034 = vshrl.u32 %v953, 16
  %v1036 = vshll.u32 %v953, 16
  %v1038 = vrot.slane %v1036, 1
  %v1039 = vor.u32 %v1034, %v1038
  %v1041 = vshrl.u32 %v954, 16
  %v1043 = vshll.u32 %v954, 16
  %v1045 = vrot.slane %v1043, 1
  %v1046 = vor.u32 %v1041, %v1045
  %v1048 = vshrl.u32 %v955, 16
  %v1050 = vshll.u32 %v955, 16
  %v1052 = vrot.slane %v1050, 1
  %v1053 = vor.u32 %v1048, %v1052
  %v1055 = vshrl.u32 %v956, 16
  %v1057 = vshll.u32 %v956, 16
  %v1059 = vrot.slane %v1057, 1
  %v1060 = vor.u32 %v1055, %v1059
  %v1062 = vshrl.u32 %v957, 16
  %v1064 = vshll.u32 %v957, 16
  %v1066 = vrot.slane %v1064, 1
  %v1067 = vor.u32 %v1062, %v1066
  %v1069 = vshrl.u32 %v958, 16
  %v1071 = vshll.u32 %v958, 16
  %v1073 = vrot.slane %v1071, 1
  %v1074 = vor.u32 %v1069, %v1073
  %v1076 = vshrl.u32 %v959, 16
  %v1078 = vshll.u32 %v959, 16
  %v1080 = vrot.slane %v1078, 1
  %v1081 = vor.u32 %v1076, %v1080
  %v1083 = vshrl.u32 %v960, 16
  %v1085 = vshll.u32 %v960, 16
  %v1087 = vrot.slane %v1085, 1
  %v1088 = vor.u32 %v1083, %v1087
  %v1090 = vshrl.u32 %v961, 16
  %v1092 = vshll.u32 %v961, 16
  %v1094 = vrot.slane %v1092, 1
  %v1095 = vor.u32 %v1090, %v1094
  %v1097 = vshrl.u32 %v962, 16
  %v1099 = vshll.u32 %v962, 16
  %v1101 = vrot.slane %v1099, 1
  %v1102 = vor.u32 %v1097, %v1101
  %v1104 = vshrl.u32 %v963, 16
  %v1106 = vshll.u32 %v963, 16
  %v1108 = vrot.slane %v1106, 1
  %v1109 = vor.u32 %v1104, %v1108
  %v1111 = vshrl.u32 %v964, 16
  %v1113 = vshll.u32 %v964, 16
  %v1115 = vrot.slane %v1113, 1
  %v1116 = vor.u32 %v1111, %v1115
  %v1118 = vshrl.u32 %v965, 16
  %v1120 = vshll.u32 %v965, 16
  %v1122 = vrot.slane %v1120, 1
  %v1123 = vor.u32 %v1118, %v1122
  %v1125 = vshrl.u32 %v966, 16
  %v1127 = vshll.u32 %v966, 16
  %v1129 = vrot.slane %v1127, 1
  %v1130 = vor.u32 %v1125, %v1129
  %v1132 = vshrl.u32 %v967, 16
  %v1134 = vshll.u32 %v967, 16
  %v1136 = vrot.slane %v1134, 1
  %v1137 = vor.u32 %v1132, %v1136
  %v1139 = vshrl.u32 %v968, 16
  %v1141 = vshll.u32 %v968, 16
  %v1143 = vrot.slane %v1141, 1
  %v1144 = vor.u32 %v1139, %v1143
  %v1146 = vshrl.u32 %v969, 16
  %v1148 = vshll.u32 %v969, 16
  %v1150 = vrot.slane %v1148, 1
  %v1151 = vor.u32 %v1146, %v1150
  %v1153 = vshrl.u32 %v970, 16
  %v1155 = vshll.u32 %v970, 16
  %v1157 = vrot.slane %v1155, 1
  %v1158 = vor.u32 %v1153, %v1157
  %v1160 = vshrl.u32 %v971, 16
  %v1162 = vshll.u32 %v971, 16
  %v1164 = vrot.slane %v1162, 1
  %v1165 = vor.u32 %v1160, %v1164
  %v1167 = vshrl.u32 %v972, 16
  %v1169 = vshll.u32 %v972, 16
  %v1171 = vrot.slane %v1169, 1
  %v1172 = vor.u32 %v1167, %v1171
  %v1174 = vshrl.u32 %v973, 16
  %v1176 = vshll.u32 %v973, 16
  %v1178 = vrot.slane %v1176, 1
  %v1179 = vor.u32 %v1174, %v1178
  %v1181 = vshrl.u32 %v974, 16
  %v1183 = vshll.u32 %v974, 16
  %v1185 = vrot.slane %v1183, 1
  %v1186 = vor.u32 %v1181, %v1185
  %v1188 = vshrl.u32 %v975, 16
  %v1190 = vshll.u32 %v975, 16
  %v1192 = vrot.slane %v1190, 1
  %v1193 = vor.u32 %v1188, %v1192
  %v1195 = vshrl.u32 %v976, 16
  %v1197 = vshll.u32 %v976, 16
  %v1199 = vrot.slane %v1197, 1
  %v1200 = vor.u32 %v1195, %v1199
  %v1233 = vunpack.c.l.b16 %v176
  %v1234 = vunpack.c.l.b16 %v177
  %v1235 = vunpack.c.l.b16 %v178
  %v1236 = vunpack.c.l.b16 %v179
  %v1237 = vunpack.c.l.b16 %v180
  %v1238 = vunpack.c.l.b16 %v181
  %v1239 = vunpack.c.l.b16 %v182
  %v1240 = vunpack.c.l.b16 %v183
  %v1241 = vunpack.c.l.b16 %v184
  %v1242 = vunpack.c.l.b16 %v185
  %v1243 = vunpack.c.l.b16 %v186
  %v1244 = vunpack.c.l.b16 %v187
  %v1245 = vunpack.c.l.b16 %v188
  %v1246 = vunpack.c.l.b16 %v189
  %v1247 = vunpack.c.l.b16 %v190
  %v1248 = vunpack.c.l.b16 %v191
  %v1249 = vunpack.c.l.b16 %v192
  %v1250 = vunpack.c.l.b16 %v193
  %v1251 = vunpack.c.l.b16 %v194
  %v1252 = vunpack.c.l.b16 %v195
  %v1253 = vunpack.c.l.b16 %v196
  %v1254 = vunpack.c.l.b16 %v197
  %v1255 = vunpack.c.l.b16 %v198
  %v1256 = vunpack.c.l.b16 %v199
  %v1257 = vunpack.c.l.b16 %v200
  %v1258 = vunpack.c.l.b16 %v201
  %v1259 = vunpack.c.l.b16 %v202
  %v1260 = vunpack.c.l.b16 %v203
  %v1261 = vunpack.c.l.b16 %v204
  %v1262 = vunpack.c.l.b16 %v205
  %v1263 = vunpack.c.l.b16 %v206
  %v1264 = vunpack.c.l.b16 %v207
  %v1265 = vpack.c.b16 %v882, %v1233
  %v1266 = vpack.c.b16 %v884, %v1234
  %v1267 = vpack.c.b16 %v886, %v1235
  %v1268 = vpack.c.b16 %v888, %v1236
  %v1269 = vpack.c.b16 %v890, %v1237
  %v1270 = vpack.c.b16 %v892, %v1238
  %v1271 = vpack.c.b16 %v894, %v1239
  %v1272 = vpack.c.b16 %v896, %v1240
  %v1273 = vpack.c.b16 %v898, %v1241
  %v1274 = vpack.c.b16 %v900, %v1242
  %v1275 = vpack.c.b16 %v902, %v1243
  %v1276 = vpack.c.b16 %v904, %v1244
  %v1277 = vpack.c.b16 %v906, %v1245
  %v1278 = vpack.c.b16 %v908, %v1246
  %v1279 = vpack.c.b16 %v910, %v1247
  %v1280 = vpack.c.b16 %v912, %v1248
  %v1281 = vpack.c.b16 %v914, %v1249
  %v1282 = vpack.c.b16 %v916, %v1250
  %v1283 = vpack.c.b16 %v918, %v1251
  %v1284 = vpack.c.b16 %v920, %v1252
  %v1285 = vpack.c.b16 %v922, %v1253
  %v1286 = vpack.c.b16 %v924, %v1254
  %v1287 = vpack.c.b16 %v926, %v1255
  %v1288 = vpack.c.b16 %v928, %v1256
  %v1289 = vpack.c.b16 %v930, %v1257
  %v1290 = vpack.c.b16 %v932, %v1258
  %v1291 = vpack.c.b16 %v934, %v1259
  %v1292 = vpack.c.b16 %v936, %v1260
  %v1293 = vpack.c.b16 %v938, %v1261
  %v1294 = vpack.c.b16 %v940, %v1262
  %v1295 = vpack.c.b16 %v942, %v1263
  %v1296 = vpack.c.b16 %v944, %v1264
  %v1297 = vrot.slane %v1265, 1
  %v1298 = vrot.slane %v1266, 1
  %v1299 = vrot.slane %v1267, 1
  %v1300 = vrot.slane %v1268, 1
  %v1301 = vrot.slane %v1269, 1
  %v1302 = vrot.slane %v1270, 1
  %v1303 = vrot.slane %v1271, 1
  %v1304 = vrot.slane %v1272, 1
  %v1305 = vrot.slane %v1273, 1
  %v1306 = vrot.slane %v1274, 1
  %v1307 = vrot.slane %v1275, 1
  %v1308 = vrot.slane %v1276, 1
  %v1309 = vrot.slane %v1277, 1
  %v1310 = vrot.slane %v1278, 1
  %v1311 = vrot.slane %v1279, 1
  %v1312 = vrot.slane %v1280, 1
  %v1313 = vrot.slane %v1281, 1
  %v1314 = vrot.slane %v1282, 1
  %v1315 = vrot.slane %v1283, 1
  %v1316 = vrot.slane %v1284, 1
  %v1317 = vrot.slane %v1285, 1
  %v1318 = vrot.slane %v1286, 1
  %v1319 = vrot.slane %v1287, 1
  %v1320 = vrot.slane %v1288, 1
  %v1321 = vrot.slane %v1289, 1
  %v1322 = vrot.slane %v1290, 1
  %v1323 = vrot.slane %v1291, 1
  %v1324 = vrot.slane %v1292, 1
  %v1325 = vrot.slane %v1293, 1
  %v1326 = vrot.slane %v1294, 1
  %v1327 = vrot.slane %v1295, 1
  %v1328 = vrot.slane %v1296, 1
  %v1393 = vunpack.c.l.b16 %v209
  %v1394 = vunpack.c.l.b16 %v241
  %v1395 = vunpack.c.l.b16 %v210
  %v1396 = vunpack.c.l.b16 %v242
  %v1397 = vunpack.c.l.b16 %v211
  %v1398 = vunpack.c.l.b16 %v243
  %v1399 = vunpack.c.l.b16 %v212
  %v1400 = vunpack.c.l.b16 %v244
  %v1401 = vunpack.c.l.b16 %v213
  %v1402 = vunpack.c.l.b16 %v245
  %v1403 = vunpack.c.l.b16 %v214
  %v1404 = vunpack.c.l.b16 %v246
  %v1405 = vunpack.c.l.b16 %v215
  %v1406 = vunpack.c.l.b16 %v247
  %v1407 = vunpack.c.l.b16 %v216
  %v1408 = vunpack.c.l.b16 %v248
  %v1409 = vunpack.c.l.b16 %v217
  %v1410 = vunpack.c.l.b16 %v249
  %v1411 = vunpack.c.l.b16 %v218
  %v1412 = vunpack.c.l.b16 %v250
  %v1413 = vunpack.c.l.b16 %v219
  %v1414 = vunpack.c.l.b16 %v251
  %v1415 = vunpack.c.l.b16 %v220
  %v1416 = vunpack.c.l.b16 %v252
  %v1417 = vunpack.c.l.b16 %v221
  %v1418 = vunpack.c.l.b16 %v253
  %v1419 = vunpack.c.l.b16 %v222
  %v1420 = vunpack.c.l.b16 %v254
  %v1421 = vunpack.c.l.b16 %v223
  %v1422 = vunpack.c.l.b16 %v255
  %v1423 = vunpack.c.l.b16 %v224
  %v1424 = vunpack.c.l.b16 %v256
  %v1425 = vunpack.c.l.b16 %v225
  %v1426 = vunpack.c.l.b16 %v257
  %v1427 = vunpack.c.l.b16 %v226
  %v1428 = vunpack.c.l.b16 %v258
  %v1429 = vunpack.c.l.b16 %v227
  %v1430 = vunpack.c.l.b16 %v259
  %v1431 = vunpack.c.l.b16 %v228
  %v1432 = vunpack.c.l.b16 %v260
  %v1433 = vunpack.c.l.b16 %v229
  %v1434 = vunpack.c.l.b16 %v261
  %v1435 = vunpack.c.l.b16 %v230
  %v1436 = vunpack.c.l.b16 %v262
  %v1437 = vunpack.c.l.b16 %v231
  %v1438 = vunpack.c.l.b16 %v263
  %v1439 = vunpack.c.l.b16 %v232
  %v1440 = vunpack.c.l.b16 %v264
  %v1441 = vunpack.c.l.b16 %v233
  %v1442 = vunpack.c.l.b16 %v265
  %v1443 = vunpack.c.l.b16 %v234
  %v1444 = vunpack.c.l.b16 %v266
  %v1445 = vunpack.c.l.b16 %v235
  %v1446 = vunpack.c.l.b16 %v267
  %v1447 = vunpack.c.l.b16 %v236
  %v1448 = vunpack.c.l.b16 %v268
  %v1449 = vunpack.c.l.b16 %v237
  %v1450 = vunpack.c.l.b16 %v269
  %v1451 = vunpack.c.l.b16 %v238
  %v1452 = vunpack.c.l.b16 %v270
  %v1453 = vunpack.c.l.b16 %v239
  %v1454 = vunpack.c.l.b16 %v271
  %v1455 = vunpack.c.l.b16 %v240
  %v1456 = vunpack.c.l.b16 %v272
  %v1457 = vpack.c.b16 %v1394, %v1393
  %v1458 = vpack.c.b16 %v1396, %v1395
  %v1459 = vpack.c.b16 %v1398, %v1397
  %v1460 = vpack.c.b16 %v1400, %v1399
  %v1461 = vpack.c.b16 %v1402, %v1401
  %v1462 = vpack.c.b16 %v1404, %v1403
  %v1463 = vpack.c.b16 %v1406, %v1405
  %v1464 = vpack.c.b16 %v1408, %v1407
  %v1465 = vpack.c.b16 %v1410, %v1409
  %v1466 = vpack.c.b16 %v1412, %v1411
  %v1467 = vpack.c.b16 %v1414, %v1413
  %v1468 = vpack.c.b16 %v1416, %v1415
  %v1469 = vpack.c.b16 %v1418, %v1417
  %v1470 = vpack.c.b16 %v1420, %v1419
  %v1471 = vpack.c.b16 %v1422, %v1421
  %v1472 = vpack.c.b16 %v1424, %v1423
  %v1473 = vpack.c.b16 %v1426, %v1425
  %v1474 = vpack.c.b16 %v1428, %v1427
  %v1475 = vpack.c.b16 %v1430, %v1429
  %v1476 = vpack.c.b16 %v1432, %v1431
  %v1477 = vpack.c.b16 %v1434, %v1433
  %v1478 = vpack.c.b16 %v1436, %v1435
  %v1479 = vpack.c.b16 %v1438, %v1437
  %v1480 = vpack.c.b16 %v1440, %v1439
  %v1481 = vpack.c.b16 %v1442, %v1441
  %v1482 = vpack.c.b16 %v1444, %v1443
  %v1483 = vpack.c.b16 %v1446, %v1445
  %v1484 = vpack.c.b16 %v1448, %v1447
  %v1485 = vpack.c.b16 %v1450, %v1449
  %v1486 = vpack.c.b16 %v1452, %v1451
  %v1487 = vpack.c.b16 %v1454, %v1453
  %v1488 = vpack.c.b16 %v1456, %v1455
  %v1490 = vshrl.u32 %v1457, 16
  %v1492 = vshll.u32 %v1457, 16
  %v1494 = vrot.slane %v1492, 1
  %v1495 = vor.u32 %v1490, %v1494
  %v1497 = vshrl.u32 %v1458, 16
  %v1499 = vshll.u32 %v1458, 16
  %v1501 = vrot.slane %v1499, 1
  %v1502 = vor.u32 %v1497, %v1501
  %v1504 = vshrl.u32 %v1459, 16
  %v1506 = vshll.u32 %v1459, 16
  %v1508 = vrot.slane %v1506, 1
  %v1509 = vor.u32 %v1504, %v1508
  %v1511 = vshrl.u32 %v1460, 16
  %v1513 = vshll.u32 %v1460, 16
  %v1515 = vrot.slane %v1513, 1
  %v1516 = vor.u32 %v1511, %v1515
  %v1518 = vshrl.u32 %v1461, 16
  %v1520 = vshll.u32 %v1461, 16
  %v1522 = vrot.slane %v1520, 1
  %v1523 = vor.u32 %v1518, %v1522
  %v1525 = vshrl.u32 %v1462, 16
  %v1527 = vshll.u32 %v1462, 16
  %v1529 = vrot.slane %v1527, 1
  %v1530 = vor.u32 %v1525, %v1529
  %v1532 = vshrl.u32 %v1463, 16
  %v1534 = vshll.u32 %v1463, 16
  %v1536 = vrot.slane %v1534, 1
  %v1537 = vor.u32 %v1532, %v1536
  %v1539 = vshrl.u32 %v1464, 16
  %v1541 = vshll.u32 %v1464, 16
  %v1543 = vrot.slane %v1541, 1
  %v1544 = vor.u32 %v1539, %v1543
  %v1546 = vshrl.u32 %v1465, 16
  %v1548 = vshll.u32 %v1465, 16
  %v1550 = vrot.slane %v1548, 1
  %v1551 = vor.u32 %v1546, %v1550
  %v1553 = vshrl.u32 %v1466, 16
  %v1555 = vshll.u32 %v1466, 16
  %v1557 = vrot.slane %v1555, 1
  %v1558 = vor.u32 %v1553, %v1557
  %v1560 = vshrl.u32 %v1467, 16
  %v1562 = vshll.u32 %v1467, 16
  %v1564 = vrot.slane %v1562, 1
  %v1565 = vor.u32 %v1560, %v1564
  %v1567 = vshrl.u32 %v1468, 16
  %v1569 = vshll.u32 %v1468, 16
  %v1571 = vrot.slane %v1569, 1
  %v1572 = vor.u32 %v1567, %v1571
  %v1574 = vshrl.u32 %v1469, 16
  %v1576 = vshll.u32 %v1469, 16
  %v1578 = vrot.slane %v1576, 1
  %v1579 = vor.u32 %v1574, %v1578
  %v1581 = vshrl.u32 %v1470, 16
  %v1583 = vshll.u32 %v1470, 16
  %v1585 = vrot.slane %v1583, 1
  %v1586 = vor.u32 %v1581, %v1585
  %v1588 = vshrl.u32 %v1471, 16
  %v1590 = vshll.u32 %v1471, 16
  %v1592 = vrot.slane %v1590, 1
  %v1593 = vor.u32 %v1588, %v1592
  %v1595 = vshrl.u32 %v1472, 16
  %v1597 = vshll.u32 %v1472, 16
  %v1599 = vrot.slane %v1597, 1
  %v1600 = vor.u32 %v1595, %v1599
  %v1602 = vshrl.u32 %v1473, 16
  %v1604 = vshll.u32 %v1473, 16
  %v1606 = vrot.slane %v1604, 1
  %v1607 = vor.u32 %v1602, %v1606
  %v1609 = vshrl.u32 %v1474, 16
  %v1611 = vshll.u32 %v1474, 16
  %v1613 = vrot.slane %v1611, 1
  %v1614 = vor.u32 %v1609, %v1613
  %v1616 = vshrl.u32 %v1475, 16
  %v1618 = vshll.u32 %v1475, 16
  %v1620 = vrot.slane %v1618, 1
  %v1621 = vor.u32 %v1616, %v1620
  %v1623 = vshrl.u32 %v1476, 16
  %v1625 = vshll.u32 %v1476, 16
  %v1627 = vrot.slane %v1625, 1
  %v1628 = vor.u32 %v1623, %v1627
  %v1630 = vshrl.u32 %v1477, 16
  %v1632 = vshll.u32 %v1477, 16
  %v1634 = vrot.slane %v1632, 1
  %v1635 = vor.u32 %v1630, %v1634
  %v1637 = vshrl.u32 %v1478, 16
  %v1639 = vshll.u32 %v1478, 16
  %v1641 = vrot.slane %v1639, 1
  %v1642 = vor.u32 %v1637, %v1641
  %v1644 = vshrl.u32 %v1479, 16
  %v1646 = vshll.u32 %v1479, 16
  %v1648 = vrot.slane %v1646, 1
  %v1649 = vor.u32 %v1644, %v1648
  %v1651 = vshrl.u32 %v1480, 16
  %v1653 = vshll.u32 %v1480, 16
  %v1655 = vrot.slane %v1653, 1
  %v1656 = vor.u32 %v1651, %v1655
  %v1658 = vshrl.u32 %v1481, 16
  %v1660 = vshll.u32 %v1481, 16
  %v1662 = vrot.slane %v1660, 1
  %v1663 = vor.u32 %v1658, %v1662
  %v1665 = vshrl.u32 %v1482, 16
  %v1667 = vshll.u32 %v1482, 16
  %v1669 = vrot.slane %v1667, 1
  %v1670 = vor.u32 %v1665, %v1669
  %v1672 = vshrl.u32 %v1483, 16
  %v1674 = vshll.u32 %v1483, 16
  %v1676 = vrot.slane %v1674, 1
  %v1677 = vor.u32 %v1672, %v1676
  %v1679 = vshrl.u32 %v1484, 16
  %v1681 = vshll.u32 %v1484, 16
  %v1683 = vrot.slane %v1681, 1
  %v1684 = vor.u32 %v1679, %v1683
  %v1686 = vshrl.u32 %v1485, 16
  %v1688 = vshll.u32 %v1485, 16
  %v1690 = vrot.slane %v1688, 1
  %v1691 = vor.u32 %v1686, %v1690
  %v1693 = vshrl.u32 %v1486, 16
  %v1695 = vshll.u32 %v1486, 16
  %v1697 = vrot.slane %v1695, 1
  %v1698 = vor.u32 %v1693, %v1697
  %v1700 = vshrl.u32 %v1487, 16
  %v1702 = vshll.u32 %v1487, 16
  %v1704 = vrot.slane %v1702, 1
  %v1705 = vor.u32 %v1700, %v1704
  %v1707 = vshrl.u32 %v1488, 16
  %v1709 = vshll.u32 %v1488, 16
  %v1711 = vrot.slane %v1709, 1
  %v1712 = vor.u32 %v1707, %v1711
  %v1745 = vunpack.c.l.b16 %v273
  %v1746 = vunpack.c.l.b16 %v274
  %v1747 = vunpack.c.l.b16 %v275
  %v1748 = vunpack.c.l.b16 %v276
  %v1749 = vunpack.c.l.b16 %v277
  %v1750 = vunpack.c.l.b16 %v278
  %v1751 = vunpack.c.l.b16 %v279
  %v1752 = vunpack.c.l.b16 %v280
  %v1753 = vunpack.c.l.b16 %v281
  %v1754 = vunpack.c.l.b16 %v282
  %v1755 = vunpack.c.l.b16 %v283
  %v1756 = vunpack.c.l.b16 %v284
  %v1757 = vunpack.c.l.b16 %v285
  %v1758 = vunpack.c.l.b16 %v286
  %v1759 = vunpack.c.l.b16 %v287
  %v1760 = vunpack.c.l.b16 %v288
  %v1761 = vunpack.c.l.b16 %v289
  %v1762 = vunpack.c.l.b16 %v290
  %v1763 = vunpack.c.l.b16 %v291
  %v1764 = vunpack.c.l.b16 %v292
  %v1765 = vunpack.c.l.b16 %v293
  %v1766 = vunpack.c.l.b16 %v294
  %v1767 = vunpack.c.l.b16 %v295
  %v1768 = vunpack.c.l.b16 %v296
  %v1769 = vunpack.c.l.b16 %v297
  %v1770 = vunpack.c.l.b16 %v298
  %v1771 = vunpack.c.l.b16 %v299
  %v1772 = vunpack.c.l.b16 %v300
  %v1773 = vunpack.c.l.b16 %v301
  %v1774 = vunpack.c.l.b16 %v302
  %v1775 = vunpack.c.l.b16 %v303
  %v1776 = vunpack.c.l.b16 %v304
  %v1777 = vpack.c.b16 %v1394, %v1745
  %v1778 = vpack.c.b16 %v1396, %v1746
  %v1779 = vpack.c.b16 %v1398, %v1747
  %v1780 = vpack.c.b16 %v1400, %v1748
  %v1781 = vpack.c.b16 %v1402, %v1749
  %v1782 = vpack.c.b16 %v1404, %v1750
  %v1783 = vpack.c.b16 %v1406, %v1751
  %v1784 = vpack.c.b16 %v1408, %v1752
  %v1785 = vpack.c.b16 %v1410, %v1753
  %v1786 = vpack.c.b16 %v1412, %v1754
  %v1787 = vpack.c.b16 %v1414, %v1755
  %v1788 = vpack.c.b16 %v1416, %v1756
  %v1789 = vpack.c.b16 %v1418, %v1757
  %v1790 = vpack.c.b16 %v1420, %v1758
  %v1791 = vpack.c.b16 %v1422, %v1759
  %v1792 = vpack.c.b16 %v1424, %v1760
  %v1793 = vpack.c.b16 %v1426, %v1761
  %v1794 = vpack.c.b16 %v1428, %v1762
  %v1795 = vpack.c.b16 %v1430, %v1763
  %v1796 = vpack.c.b16 %v1432, %v1764
  %v1797 = vpack.c.b16 %v1434, %v1765
  %v1798 = vpack.c.b16 %v1436, %v1766
  %v1799 = vpack.c.b16 %v1438, %v1767
  %v1800 = vpack.c.b16 %v1440, %v1768
  %v1801 = vpack.c.b16 %v1442, %v1769
  %v1802 = vpack.c.b16 %v1444, %v1770
  %v1803 = vpack.c.b16 %v1446, %v1771
  %v1804 = vpack.c.b16 %v1448, %v1772
  %v1805 = vpack.c.b16 %v1450, %v1773
  %v1806 = vpack.c.b16 %v1452, %v1774
  %v1807 = vpack.c.b16 %v1454, %v1775
  %v1808 = vpack.c.b16 %v1456, %v1776
  %v1809 = vrot.slane %v1777, 1
  %v1810 = vrot.slane %v1778, 1
  %v1811 = vrot.slane %v1779, 1
  %v1812 = vrot.slane %v1780, 1
  %v1813 = vrot.slane %v1781, 1
  %v1814 = vrot.slane %v1782, 1
  %v1815 = vrot.slane %v1783, 1
  %v1816 = vrot.slane %v1784, 1
  %v1817 = vrot.slane %v1785, 1
  %v1818 = vrot.slane %v1786, 1
  %v1819 = vrot.slane %v1787, 1
  %v1820 = vrot.slane %v1788, 1
  %v1821 = vrot.slane %v1789, 1
  %v1822 = vrot.slane %v1790, 1
  %v1823 = vrot.slane %v1791, 1
  %v1824 = vrot.slane %v1792, 1
  %v1825 = vrot.slane %v1793, 1
  %v1826 = vrot.slane %v1794, 1
  %v1827 = vrot.slane %v1795, 1
  %v1828 = vrot.slane %v1796, 1
  %v1829 = vrot.slane %v1797, 1
  %v1830 = vrot.slane %v1798, 1
  %v1831 = vrot.slane %v1799, 1
  %v1832 = vrot.slane %v1800, 1
  %v1833 = vrot.slane %v1801, 1
  %v1834 = vrot.slane %v1802, 1
  %v1835 = vrot.slane %v1803, 1
  %v1836 = vrot.slane %v1804, 1
  %v1837 = vrot.slane %v1805, 1
  %v1838 = vrot.slane %v1806, 1
  %v1839 = vrot.slane %v1807, 1
  %v1840 = vrot.slane %v1808, 1
  %v1841 = vunpack.c.l.b16 %v471
  %v1842 = vunpack.c.l.b16 %v785
  %v1843 = vunpack.c.l.b16 %v983
  %v1844 = vunpack.c.l.b16 %v1297
  %v1845 = vunpack.c.l.b16 %v1495
  %v1846 = vunpack.c.l.b16 %v1809
  %v1847 = vunpack.c.l.b16 %v478
  %v1848 = vunpack.c.l.b16 %v786
  %v1849 = vunpack.c.l.b16 %v990
  %v1850 = vunpack.c.l.b16 %v1298
  %v1851 = vunpack.c.l.b16 %v1502
  %v1852 = vunpack.c.l.b16 %v1810
  %v1853 = vunpack.c.l.b16 %v485
  %v1854 = vunpack.c.l.b16 %v787
  %v1855 = vunpack.c.l.b16 %v997
  %v1856 = vunpack.c.l.b16 %v1299
  %v1857 = vunpack.c.l.b16 %v1509
  %v1858 = vunpack.c.l.b16 %v1811
  %v1859 = vunpack.c.l.b16 %v492
  %v1860 = vunpack.c.l.b16 %v788
  %v1861 = vunpack.c.l.b16 %v1004
  %v1862 = vunpack.c.l.b16 %v1300
  %v1863 = vunpack.c.l.b16 %v1516
  %v1864 = vunpack.c.l.b16 %v1812
  %v1865 = vunpack.c.l.b16 %v499
  %v1866 = vunpack.c.l.b16 %v789
  %v1867 = vunpack.c.l.b16 %v1011
  %v1868 = vunpack.c.l.b16 %v1301
  %v1869 = vunpack.c.l.b16 %v1523
  %v1870 = vunpack.c.l.b16 %v1813
  %v1871 = vunpack.c.l.b16 %v506
  %v1872 = vunpack.c.l.b16 %v790
  %v1873 = vunpack.c.l.b16 %v1018
  %v1874 = vunpack.c.l.b16 %v1302
  %v1875 = vunpack.c.l.b16 %v1530
  %v1876 = vunpack.c.l.b16 %v1814
  %v1877 = vunpack.c.l.b16 %v513
  %v1878 = vunpack.c.l.b16 %v791
  %v1879 = vunpack.c.l.b16 %v1025
  %v1880 = vunpack.c.l.b16 %v1303
  %v1881 = vunpack.c.l.b16 %v1537
  %v1882 = vunpack.c.l.b16 %v1815
  %v1883 = vunpack.c.l.b16 %v520
  %v1884 = vunpack.c.l.b16 %v792
  %v1885 = vunpack.c.l.b16 %v1032
  %v1886 = vunpack.c.l.b16 %v1304
  %v1887 = vunpack.c.l.b16 %v1544
  %v1888 = vunpack.c.l.b16 %v1816
  %v1889 = vunpack.c.l.b16 %v527
  %v1890 = vunpack.c.l.b16 %v793
  %v1891 = vunpack.c.l.b16 %v1039
  %v1892 = vunpack.c.l.b16 %v1305
  %v1893 = vunpack.c.l.b16 %v1551
  %v1894 = vunpack.c.l.b16 %v1817
  %v1895 = vunpack.c.l.b16 %v534
  %v1896 = vunpack.c.l.b16 %v794
  %v1897 = vunpack.c.l.b16 %v1046
  %v1898 = vunpack.c.l.b16 %v1306
  %v1899 = vunpack.c.l.b16 %v1558
  %v1900 = vunpack.c.l.b16 %v1818
  %v1901 = vunpack.c.l.b16 %v541
  %v1902 = vunpack.c.l.b16 %v795
  %v1903 = vunpack.c.l.b16 %v1053
  %v1904 = vunpack.c.l.b16 %v1307
  %v1905 = vunpack.c.l.b16 %v1565
  %v1906 = vunpack.c.l.b16 %v1819
  %v1907 = vunpack.c.l.b16 %v548
  %v1908 = vunpack.c.l.b16 %v796
  %v1909 = vunpack.c.l.b16 %v1060
  %v1910 = vunpack.c.l.b16 %v1308
  %v1911 = vunpack.c.l.b16 %v1572
  %v1912 = vunpack.c.l.b16 %v1820
  %v1913 = vunpack.c.l.b16 %v555
  %v1914 = vunpack.c.l.b16 %v797
  %v1915 = vunpack.c.l.b16 %v1067
  %v1916 = vunpack.c.l.b16 %v1309
  %v1917 = vunpack.c.l.b16 %v1579
  %v1918 = vunpack.c.l.b16 %v1821
  %v1919 = vunpack.c.l.b16 %v562
  %v1920 = vunpack.c.l.b16 %v798
  %v1921 = vunpack.c.l.b16 %v1074
  %v1922 = vunpack.c.l.b16 %v1310
  %v1923 = vunpack.c.l.b16 %v1586
  %v1924 = vunpack.c.l.b16 %v1822
  %v1925 = vunpack.c.l.b16 %v569
  %v1926 = vunpack.c.l.b16 %v799
  %v1927 = vunpack.c.l.b16 %v1081
  %v1928 = vunpack.c.l.b16 %v1311
  %v1929 = vunpack.c.l.b16 %v1593
  %v1930 = vunpack.c.l.b16 %v1823
  %v1931 = vunpack.c.l.b16 %v576
  %v1932 = vunpack.c.l.b16 %v800
  %v1933 = vunpack.c.l.b16 %v1088
  %v1934 = vunpack.c.l.b16 %v1312
  %v1935 = vunpack.c.l.b16 %v1600
  %v1936 = vunpack.c.l.b16 %v1824
  %v1937 = vunpack.c.l.b16 %v583
  %v1938 = vunpack.c.l.b16 %v801
  %v1939 = vunpack.c.l.b16 %v1095
  %v1940 = vunpack.c.l.b16 %v1313
  %v1941 = vunpack.c.l.b16 %v1607
  %v1942 = vunpack.c.l.b16 %v1825
  %v1943 = vunpack.c.l.b16 %v590
  %v1944 = vunpack.c.l.b16 %v802
  %v1945 = vunpack.c.l.b16 %v1102
  %v1946 = vunpack.c.l.b16 %v1314
  %v1947 = vunpack.c.l.b16 %v1614
  %v1948 = vunpack.c.l.b16 %v1826
  %v1949 = vunpack.c.l.b16 %v597
  %v1950 = vunpack.c.l.b16 %v803
  %v1951 = vunpack.c.l.b16 %v1109
  %v1952 = vunpack.c.l.b16 %v1315
  %v1953 = vunpack.c.l.b16 %v1621
  %v1954 = vunpack.c.l.b16 %v1827
  %v1955 = vunpack.c.l.b16 %v604
  %v1956 = vunpack.c.l.b16 %v804
  %v1957 = vunpack.c.l.b16 %v1116
  %v1958 = vunpack.c.l.b16 %v1316
  %v1959 = vunpack.c.l.b16 %v1628
  %v1960 = vunpack.c.l.b16 %v1828
  %v1961 = vunpack.c.l.b16 %v611
  %v1962 = vunpack.c.l.b16 %v805
  %v1963 = vunpack.c.l.b16 %v1123
  %v1964 = vunpack.c.l.b16 %v1317
  %v1965 = vunpack.c.l.b16 %v1635
  %v1966 = vunpack.c.l.b16 %v1829
  %v1967 = vunpack.c.l.b16 %v618
  %v1968 = vunpack.c.l.b16 %v806
  %v1969 = vunpack.c.l.b16 %v1130
  %v1970 = vunpack.c.l.b16 %v1318
  %v1971 = vunpack.c.l.b16 %v1642
  %v1972 = vunpack.c.l.b16 %v1830
  %v1973 = vunpack.c.l.b16 %v625
  %v1974 = vunpack.c.l.b16 %v807
  %v1975 = vunpack.c.l.b16 %v1137
  %v1976 = vunpack.c.l.b16 %v1319
  %v1977 = vunpack.c.l.b16 %v1649
  %v1978 = vunpack.c.l.b16 %v1831
  %v1979 = vunpack.c.l.b16 %v632
  %v1980 = vunpack.c.l.b16 %v808
  %v1981 = vunpack.c.l.b16 %v1144
  %v1982 = vunpack.c.l.b16 %v1320
  %v1983 = vunpack.c.l.b16 %v1656
  %v1984 = vunpack.c.l.b16 %v1832
  %v1985 = vunpack.c.l.b16 %v639
  %v1986 = vunpack.c.l.b16 %v809
  %v1987 = vunpack.c.l.b16 %v1151
  %v1988 = vunpack.c.l.b16 %v1321
  %v1989 = vunpack.c.l.b16 %v1663
  %v1990 = vunpack.c.l.b16 %v1833
  %v1991 = vunpack.c.l.b16 %v646
  %v1992 = vunpack.c.l.b16 %v810
  %v1993 = vunpack.c.l.b16 %v1158
  %v1994 = vunpack.c.l.b16 %v1322
  %v1995 = vunpack.c.l.b16 %v1670
  %v1996 = vunpack.c.l.b16 %v1834
  %v1997 = vunpack.c.l.b16 %v653
  %v1998 = vunpack.c.l.b16 %v811
  %v1999 = vunpack.c.l.b16 %v1165
  %v2000 = vunpack.c.l.b16 %v1323
  %v2001 = vunpack.c.l.b16 %v1677
  %v2002 = vunpack.c.l.b16 %v1835
  %v2003 = vunpack.c.l.b16 %v660
  %v2004 = vunpack.c.l.b16 %v812
  %v2005 = vunpack.c.l.b16 %v1172
  %v2006 = vunpack.c.l.b16 %v1324
  %v2007 = vunpack.c.l.b16 %v1684
  %v2008 = vunpack.c.l.b16 %v1836
  %v2009 = vunpack.c.l.b16 %v667
  %v2010 = vunpack.c.l.b16 %v813
  %v2011 = vunpack.c.l.b16 %v1179
  %v2012 = vunpack.c.l.b16 %v1325
  %v2013 = vunpack.c.l.b16 %v1691
  %v2014 = vunpack.c.l.b16 %v1837
  %v2015 = vunpack.c.l.b16 %v674
  %v2016 = vunpack.c.l.b16 %v814
  %v2017 = vunpack.c.l.b16 %v1186
  %v2018 = vunpack.c.l.b16 %v1326
  %v2019 = vunpack.c.l.b16 %v1698
  %v2020 = vunpack.c.l.b16 %v1838
  %v2021 = vunpack.c.l.b16 %v681
  %v2022 = vunpack.c.l.b16 %v815
  %v2023 = vunpack.c.l.b16 %v1193
  %v2024 = vunpack.c.l.b16 %v1327
  %v2025 = vunpack.c.l.b16 %v1705
  %v2026 = vunpack.c.l.b16 %v1839
  %v2027 = vunpack.c.l.b16 %v688
  %v2028 = vunpack.c.l.b16 %v816
  %v2029 = vunpack.c.l.b16 %v1200
  %v2030 = vunpack.c.l.b16 %v1328
  %v2031 = vunpack.c.l.b16 %v1712
  %v2032 = vunpack.c.l.b16 %v1840
  %v2033 = vld [vmem:[%s1] sm:$0xf]
  %v2034 = vld [vmem:[%s1 + $0x4] sm:$0xf]
  %v2035 = vld [vmem:[%s1 + $0x8] sm:$0xf]
  %v2036 = vld [vmem:[%s1 + $0xc] sm:$0xf]
  %v2037 = vld [vmem:[%s1 + $0x10] sm:$0xf]
  %v2038 = vld [vmem:[%s1 + $0x14] sm:$0xf]
  %v2039 = vld [vmem:[%s1 + $0x18] sm:$0xf]
  %v2040 = vld [vmem:[%s1 + $0x1c] sm:$0xf]
  %v2041 = vld [vmem:[%s1 + $0x20] sm:$0xf]
  %v2042 = vld [vmem:[%s1 + $0x24] sm:$0xf]
  %v2043 = vld [vmem:[%s1 + $0x28] sm:$0xf]
  %v2044 = vld [vmem:[%s1 + $0x2c] sm:$0xf]
  %v2045 = vld [vmem:[%s1 + $0x30] sm:$0xf]
  %v2046 = vld [vmem:[%s1 + $0x34] sm:$0xf]
  %v2047 = vld [vmem:[%s1 + $0x38] sm:$0xf]
  %v2048 = vld [vmem:[%s1 + $0x3c] sm:$0xf]
  %v2049 = vld [vmem:[%s1 + $0x40] sm:$0xf]
  %v2050 = vld [vmem:[%s1 + $0x44] sm:$0xf]
  %v2051 = vld [vmem:[%s1 + $0x48] sm:$0xf]
  %v2052 = vld [vmem:[%s1 + $0x4c] sm:$0xf]
  %v2053 = vld [vmem:[%s1 + $0x50] sm:$0xf]
  %v2054 = vld [vmem:[%s1 + $0x54] sm:$0xf]
  %v2055 = vld [vmem:[%s1 + $0x58] sm:$0xf]
  %v2056 = vld [vmem:[%s1 + $0x5c] sm:$0xf]
  %v2057 = vld [vmem:[%s1 + $0x60] sm:$0xf]
  %v2058 = vld [vmem:[%s1 + $0x64] sm:$0xf]
  %v2059 = vld [vmem:[%s1 + $0x68] sm:$0xf]
  %v2060 = vld [vmem:[%s1 + $0x6c] sm:$0xf]
  %v2061 = vld [vmem:[%s1 + $0x70] sm:$0xf]
  %v2062 = vld [vmem:[%s1 + $0x74] sm:$0xf]
  %v2063 = vld [vmem:[%s1 + $0x78] sm:$0xf]
  %v2064 = vld [vmem:[%s1 + $0x7c] sm:$0xf]
  %v2065 = vld [vmem:[%s1 + $0x80] sm:$0xf]
  %v2066 = vld [vmem:[%s1 + $0x84] sm:$0xf]
  %v2067 = vld [vmem:[%s1 + $0x88] sm:$0xf]
  %v2068 = vld [vmem:[%s1 + $0x8c] sm:$0xf]
  %v2069 = vld [vmem:[%s1 + $0x90] sm:$0xf]
  %v2070 = vld [vmem:[%s1 + $0x94] sm:$0xf]
  %v2071 = vld [vmem:[%s1 + $0x98] sm:$0xf]
  %v2072 = vld [vmem:[%s1 + $0x9c] sm:$0xf]
  %v2073 = vld [vmem:[%s1 + $0xa0] sm:$0xf]
  %v2074 = vld [vmem:[%s1 + $0xa4] sm:$0xf]
  %v2075 = vld [vmem:[%s1 + $0xa8] sm:$0xf]
  %v2076 = vld [vmem:[%s1 + $0xac] sm:$0xf]
  %v2077 = vld [vmem:[%s1 + $0xb0] sm:$0xf]
  %v2078 = vld [vmem:[%s1 + $0xb4] sm:$0xf]
  %v2079 = vld [vmem:[%s1 + $0xb8] sm:$0xf]
  %v2080 = vld [vmem:[%s1 + $0xbc] sm:$0xf]
  %v2081 = vld [vmem:[%s1 + $0xc0] sm:$0xf]
  %v2082 = vld [vmem:[%s1 + $0xc4] sm:$0xf]
  %v2083 = vld [vmem:[%s1 + $0xc8] sm:$0xf]
  %v2084 = vld [vmem:[%s1 + $0xcc] sm:$0xf]
  %v2085 = vld [vmem:[%s1 + $0xd0] sm:$0xf]
  %v2086 = vld [vmem:[%s1 + $0xd4] sm:$0xf]
  %v2087 = vld [vmem:[%s1 + $0xd8] sm:$0xf]
  %v2088 = vld [vmem:[%s1 + $0xdc] sm:$0xf]
  %v2089 = vld [vmem:[%s1 + $0xe0] sm:$0xf]
  %v2090 = vld [vmem:[%s1 + $0xe4] sm:$0xf]
  %v2091 = vld [vmem:[%s1 + $0xe8] sm:$0xf]
  %v2092 = vld [vmem:[%s1 + $0xec] sm:$0xf]
  %v2093 = vld [vmem:[%s1 + $0xf0] sm:$0xf]
  %v2094 = vld [vmem:[%s1 + $0xf4] sm:$0xf]
  %v2095 = vld [vmem:[%s1 + $0xf8] sm:$0xf]
  %v2096 = vld [vmem:[%s1 + $0xfc] sm:$0xf]
  %v2097 = vld [vmem:[%s1 + $0x100] sm:$0xf]
  %v2098 = vld [vmem:[%s1 + $0x104] sm:$0xf]
  %v2099 = vld [vmem:[%s1 + $0x108] sm:$0xf]
  %v2100 = vld [vmem:[%s1 + $0x10c] sm:$0xf]
  %v2101 = vld [vmem:[%s1 + $0x110] sm:$0xf]
  %v2102 = vld [vmem:[%s1 + $0x114] sm:$0xf]
  %v2103 = vld [vmem:[%s1 + $0x118] sm:$0xf]
  %v2104 = vld [vmem:[%s1 + $0x11c] sm:$0xf]
  %v2105 = vld [vmem:[%s1 + $0x120] sm:$0xf]
  %v2106 = vld [vmem:[%s1 + $0x124] sm:$0xf]
  %v2107 = vld [vmem:[%s1 + $0x128] sm:$0xf]
  %v2108 = vld [vmem:[%s1 + $0x12c] sm:$0xf]
  %v2109 = vld [vmem:[%s1 + $0x130] sm:$0xf]
  %v2110 = vld [vmem:[%s1 + $0x134] sm:$0xf]
  %v2111 = vld [vmem:[%s1 + $0x138] sm:$0xf]
  %v2112 = vld [vmem:[%s1 + $0x13c] sm:$0xf]
  %v2113 = vld [vmem:[%s1 + $0x140] sm:$0xf]
  %v2114 = vld [vmem:[%s1 + $0x144] sm:$0xf]
  %v2115 = vld [vmem:[%s1 + $0x148] sm:$0xf]
  %v2116 = vld [vmem:[%s1 + $0x14c] sm:$0xf]
  %v2117 = vld [vmem:[%s1 + $0x150] sm:$0xf]
  %v2118 = vld [vmem:[%s1 + $0x154] sm:$0xf]
  %v2119 = vld [vmem:[%s1 + $0x158] sm:$0xf]
  %v2120 = vld [vmem:[%s1 + $0x15c] sm:$0xf]
  %v2121 = vld [vmem:[%s1 + $0x160] sm:$0xf]
  %v2122 = vld [vmem:[%s1 + $0x164] sm:$0xf]
  %v2123 = vld [vmem:[%s1 + $0x168] sm:$0xf]
  %v2124 = vld [vmem:[%s1 + $0x16c] sm:$0xf]
  %v2125 = vld [vmem:[%s1 + $0x170] sm:$0xf]
  %v2126 = vld [vmem:[%s1 + $0x174] sm:$0xf]
  %v2127 = vld [vmem:[%s1 + $0x178] sm:$0xf]
  %v2128 = vld [vmem:[%s1 + $0x17c] sm:$0xf]
  %v2129 = vld [vmem:[%s1 + $0x180] sm:$0xf]
  %v2130 = vld [vmem:[%s1 + $0x184] sm:$0xf]
  %v2131 = vld [vmem:[%s1 + $0x188] sm:$0xf]
  %v2132 = vld [vmem:[%s1 + $0x18c] sm:$0xf]
  %v2133 = vld [vmem:[%s1 + $0x190] sm:$0xf]
  %v2134 = vld [vmem:[%s1 + $0x194] sm:$0xf]
  %v2135 = vld [vmem:[%s1 + $0x198] sm:$0xf]
  %v2136 = vld [vmem:[%s1 + $0x19c] sm:$0xf]
  %v2137 = vld [vmem:[%s1 + $0x1a0] sm:$0xf]
  %v2138 = vld [vmem:[%s1 + $0x1a4] sm:$0xf]
  %v2139 = vld [vmem:[%s1 + $0x1a8] sm:$0xf]
  %v2140 = vld [vmem:[%s1 + $0x1ac] sm:$0xf]
  %v2141 = vld [vmem:[%s1 + $0x1b0] sm:$0xf]
  %v2142 = vld [vmem:[%s1 + $0x1b4] sm:$0xf]
  %v2143 = vld [vmem:[%s1 + $0x1b8] sm:$0xf]
  %v2144 = vld [vmem:[%s1 + $0x1bc] sm:$0xf]
  %v2145 = vld [vmem:[%s1 + $0x1c0] sm:$0xf]
  %v2146 = vld [vmem:[%s1 + $0x1c4] sm:$0xf]
  %v2147 = vld [vmem:[%s1 + $0x1c8] sm:$0xf]
  %v2148 = vld [vmem:[%s1 + $0x1cc] sm:$0xf]
  %v2149 = vld [vmem:[%s1 + $0x1d0] sm:$0xf]
  %v2150 = vld [vmem:[%s1 + $0x1d4] sm:$0xf]
  %v2151 = vld [vmem:[%s1 + $0x1d8] sm:$0xf]
  %v2152 = vld [vmem:[%s1 + $0x1dc] sm:$0xf]
  %v2153 = vld [vmem:[%s1 + $0x1e0] sm:$0xf]
  %v2154 = vld [vmem:[%s1 + $0x1e4] sm:$0xf]
  %v2155 = vld [vmem:[%s1 + $0x1e8] sm:$0xf]
  %v2156 = vld [vmem:[%s1 + $0x1ec] sm:$0xf]
  %v2157 = vld [vmem:[%s1 + $0x1f0] sm:$0xf]
  %v2158 = vld [vmem:[%s1 + $0x1f4] sm:$0xf]
  %v2159 = vld [vmem:[%s1 + $0x1f8] sm:$0xf]
  %v2160 = vld [vmem:[%s1 + $0x1fc] sm:$0xf]
  %v2161 = vld [vmem:[%s1 + $0x200] sm:$0xf]
  %v2162 = vld [vmem:[%s1 + $0x204] sm:$0xf]
  %v2163 = vld [vmem:[%s1 + $0x208] sm:$0xf]
  %v2164 = vld [vmem:[%s1 + $0x20c] sm:$0xf]
  %v2165 = vld [vmem:[%s1 + $0x210] sm:$0xf]
  %v2166 = vld [vmem:[%s1 + $0x214] sm:$0xf]
  %v2167 = vld [vmem:[%s1 + $0x218] sm:$0xf]
  %v2168 = vld [vmem:[%s1 + $0x21c] sm:$0xf]
  %v2169 = vld [vmem:[%s1 + $0x220] sm:$0xf]
  %v2170 = vld [vmem:[%s1 + $0x224] sm:$0xf]
  %v2171 = vld [vmem:[%s1 + $0x228] sm:$0xf]
  %v2172 = vld [vmem:[%s1 + $0x22c] sm:$0xf]
  %v2173 = vld [vmem:[%s1 + $0x230] sm:$0xf]
  %v2174 = vld [vmem:[%s1 + $0x234] sm:$0xf]
  %v2175 = vld [vmem:[%s1 + $0x238] sm:$0xf]
  %v2176 = vld [vmem:[%s1 + $0x23c] sm:$0xf]
  %v2177 = vld [vmem:[%s2] sm:$0x1]
  %v2179 = vlaneseq
  %v2180 = vshrl.u32 %v2179, 7
  %v2181 = vsub.s32 0, %v2180
  %v2182 = vrot.slane %v2177, %v2181
  %v2184 = vpack.c.b16 %v371, %v369
  %v2185 = vpack.c.b16 %v1847, %v1841
  %v2186 = vpack.c.b16 %v1848, %v1842
  %v2187 = vpack.c.b16 %v883, %v881
  %v2188 = vpack.c.b16 %v1849, %v1843
  %v2189 = vpack.c.b16 %v1850, %v1844
  %v2190 = vpack.c.b16 %v1395, %v1393
  %v2191 = vpack.c.b16 %v1851, %v1845
  %v2192 = vpack.c.b16 %v1852, %v1846
  %v2193 = vpack.c.b16 %v375, %v373
  %v2194 = vpack.c.b16 %v1859, %v1853
  %v2195 = vpack.c.b16 %v1860, %v1854
  %v2196 = vpack.c.b16 %v887, %v885
  %v2197 = vpack.c.b16 %v1861, %v1855
  %v2198 = vpack.c.b16 %v1862, %v1856
  %v2199 = vpack.c.b16 %v1399, %v1397
  %v2200 = vpack.c.b16 %v1863, %v1857
  %v2201 = vpack.c.b16 %v1864, %v1858
  %v2202 = vpack.c.b16 %v379, %v377
  %v2203 = vpack.c.b16 %v1871, %v1865
  %v2204 = vpack.c.b16 %v1872, %v1866
  %v2205 = vpack.c.b16 %v891, %v889
  %v2206 = vpack.c.b16 %v1873, %v1867
  %v2207 = vpack.c.b16 %v1874, %v1868
  %v2208 = vpack.c.b16 %v1403, %v1401
  %v2209 = vpack.c.b16 %v1875, %v1869
  %v2210 = vpack.c.b16 %v1876, %v1870
  %v2211 = vpack.c.b16 %v383, %v381
  %v2212 = vpack.c.b16 %v1883, %v1877
  %v2213 = vpack.c.b16 %v1884, %v1878
  %v2214 = vpack.c.b16 %v895, %v893
  %v2215 = vpack.c.b16 %v1885, %v1879
  %v2216 = vpack.c.b16 %v1886, %v1880
  %v2217 = vpack.c.b16 %v1407, %v1405
  %v2218 = vpack.c.b16 %v1887, %v1881
  %v2219 = vpack.c.b16 %v1888, %v1882
  %v2220 = vpack.c.b16 %v387, %v385
  %v2221 = vpack.c.b16 %v1895, %v1889
  %v2222 = vpack.c.b16 %v1896, %v1890
  %v2223 = vpack.c.b16 %v899, %v897
  %v2224 = vpack.c.b16 %v1897, %v1891
  %v2225 = vpack.c.b16 %v1898, %v1892
  %v2226 = vpack.c.b16 %v1411, %v1409
  %v2227 = vpack.c.b16 %v1899, %v1893
  %v2228 = vpack.c.b16 %v1900, %v1894
  %v2229 = vpack.c.b16 %v391, %v389
  %v2230 = vpack.c.b16 %v1907, %v1901
  %v2231 = vpack.c.b16 %v1908, %v1902
  %v2232 = vpack.c.b16 %v903, %v901
  %v2233 = vpack.c.b16 %v1909, %v1903
  %v2234 = vpack.c.b16 %v1910, %v1904
  %v2235 = vpack.c.b16 %v1415, %v1413
  %v2236 = vpack.c.b16 %v1911, %v1905
  %v2237 = vpack.c.b16 %v1912, %v1906
  %v2238 = vpack.c.b16 %v395, %v393
  %v2239 = vpack.c.b16 %v1919, %v1913
  %v2240 = vpack.c.b16 %v1920, %v1914
  %v2241 = vpack.c.b16 %v907, %v905
  %v2242 = vpack.c.b16 %v1921, %v1915
  %v2243 = vpack.c.b16 %v1922, %v1916
  %v2244 = vpack.c.b16 %v1419, %v1417
  %v2245 = vpack.c.b16 %v1923, %v1917
  %v2246 = vpack.c.b16 %v1924, %v1918
  %v2247 = vpack.c.b16 %v399, %v397
  %v2248 = vpack.c.b16 %v1931, %v1925
  %v2249 = vpack.c.b16 %v1932, %v1926
  %v2250 = vpack.c.b16 %v911, %v909
  %v2251 = vpack.c.b16 %v1933, %v1927
  %v2252 = vpack.c.b16 %v1934, %v1928
  %v2253 = vpack.c.b16 %v1423, %v1421
  %v2254 = vpack.c.b16 %v1935, %v1929
  %v2255 = vpack.c.b16 %v1936, %v1930
  %v2256 = vpack.c.b16 %v403, %v401
  %v2257 = vpack.c.b16 %v1943, %v1937
  %v2258 = vpack.c.b16 %v1944, %v1938
  %v2259 = vpack.c.b16 %v915, %v913
  %v2260 = vpack.c.b16 %v1945, %v1939
  %v2261 = vpack.c.b16 %v1946, %v1940
  %v2262 = vpack.c.b16 %v1427, %v1425
  %v2263 = vpack.c.b16 %v1947, %v1941
  %v2264 = vpack.c.b16 %v1948, %v1942
  %v2265 = vpack.c.b16 %v407, %v405
  %v2266 = vpack.c.b16 %v1955, %v1949
  %v2267 = vpack.c.b16 %v1956, %v1950
  %v2268 = vpack.c.b16 %v919, %v917
  %v2269 = vpack.c.b16 %v1957, %v1951
  %v2270 = vpack.c.b16 %v1958, %v1952
  %v2271 = vpack.c.b16 %v1431, %v1429
  %v2272 = vpack.c.b16 %v1959, %v1953
  %v2273 = vpack.c.b16 %v1960, %v1954
  %v2274 = vpack.c.b16 %v411, %v409
  %v2275 = vpack.c.b16 %v1967, %v1961
  %v2276 = vpack.c.b16 %v1968, %v1962
  %v2277 = vpack.c.b16 %v923, %v921
  %v2278 = vpack.c.b16 %v1969, %v1963
  %v2279 = vpack.c.b16 %v1970, %v1964
  %v2280 = vpack.c.b16 %v1435, %v1433
  %v2281 = vpack.c.b16 %v1971, %v1965
  %v2282 = vpack.c.b16 %v1972, %v1966
  %v2283 = vpack.c.b16 %v415, %v413
  %v2284 = vpack.c.b16 %v1979, %v1973
  %v2285 = vpack.c.b16 %v1980, %v1974
  %v2286 = vpack.c.b16 %v927, %v925
  %v2287 = vpack.c.b16 %v1981, %v1975
  %v2288 = vpack.c.b16 %v1982, %v1976
  %v2289 = vpack.c.b16 %v1439, %v1437
  %v2290 = vpack.c.b16 %v1983, %v1977
  %v2291 = vpack.c.b16 %v1984, %v1978
  %v2292 = vpack.c.b16 %v419, %v417
  %v2293 = vpack.c.b16 %v1991, %v1985
  %v2294 = vpack.c.b16 %v1992, %v1986
  %v2295 = vpack.c.b16 %v931, %v929
  %v2296 = vpack.c.b16 %v1993, %v1987
  %v2297 = vpack.c.b16 %v1994, %v1988
  %v2298 = vpack.c.b16 %v1443, %v1441
  %v2299 = vpack.c.b16 %v1995, %v1989
  %v2300 = vpack.c.b16 %v1996, %v1990
  %v2301 = vpack.c.b16 %v423, %v421
  %v2302 = vpack.c.b16 %v2003, %v1997
  %v2303 = vpack.c.b16 %v2004, %v1998
  %v2304 = vpack.c.b16 %v935, %v933
  %v2305 = vpack.c.b16 %v2005, %v1999
  %v2306 = vpack.c.b16 %v2006, %v2000
  %v2307 = vpack.c.b16 %v1447, %v1445
  %v2308 = vpack.c.b16 %v2007, %v2001
  %v2309 = vpack.c.b16 %v2008, %v2002
  %v2310 = vpack.c.b16 %v427, %v425
  %v2311 = vpack.c.b16 %v2015, %v2009
  %v2312 = vpack.c.b16 %v2016, %v2010
  %v2313 = vpack.c.b16 %v939, %v937
  %v2314 = vpack.c.b16 %v2017, %v2011
  %v2315 = vpack.c.b16 %v2018, %v2012
  %v2316 = vpack.c.b16 %v1451, %v1449
  %v2317 = vpack.c.b16 %v2019, %v2013
  %v2318 = vpack.c.b16 %v2020, %v2014
  %v2319 = vpack.c.b16 %v431, %v429
  %v2320 = vpack.c.b16 %v2027, %v2021
  %v2321 = vpack.c.b16 %v2028, %v2022
  %v2322 = vpack.c.b16 %v943, %v941
  %v2323 = vpack.c.b16 %v2029, %v2023
  %v2324 = vpack.c.b16 %v2030, %v2024
  %v2325 = vpack.c.b16 %v1455, %v1453
  %v2326 = vpack.c.b16 %v2031, %v2025
  %v2327 = vpack.c.b16 %v2032, %v2026
  %v2616 = vunpack.c.l.b16 %v2033
  %v2617 = vunpack.c.l.b16 %v2034
  %v2618 = vunpack.c.l.b16 %v2035
  %v2619 = vunpack.c.l.b16 %v2036
  %v2620 = vunpack.c.l.b16 %v2037
  %v2621 = vunpack.c.l.b16 %v2038
  %v2622 = vunpack.c.l.b16 %v2039
  %v2623 = vunpack.c.l.b16 %v2040
  %v2624 = vunpack.c.l.b16 %v2041
  %v2625 = vunpack.c.l.b16 %v2042
  %v2626 = vunpack.c.l.b16 %v2043
  %v2627 = vunpack.c.l.b16 %v2044
  %v2628 = vunpack.c.l.b16 %v2045
  %v2629 = vunpack.c.l.b16 %v2046
  %v2630 = vunpack.c.l.b16 %v2047
  %v2631 = vunpack.c.l.b16 %v2048
  %v2632 = vunpack.c.l.b16 %v2049
  %v2633 = vunpack.c.l.b16 %v2050
  %v2634 = vunpack.c.l.b16 %v2051
  %v2635 = vunpack.c.l.b16 %v2052
  %v2636 = vunpack.c.l.b16 %v2053
  %v2637 = vunpack.c.l.b16 %v2054
  %v2638 = vunpack.c.l.b16 %v2055
  %v2639 = vunpack.c.l.b16 %v2056
  %v2640 = vunpack.c.l.b16 %v2057
  %v2641 = vunpack.c.l.b16 %v2058
  %v2642 = vunpack.c.l.b16 %v2059
  %v2643 = vunpack.c.l.b16 %v2060
  %v2644 = vunpack.c.l.b16 %v2061
  %v2645 = vunpack.c.l.b16 %v2062
  %v2646 = vunpack.c.l.b16 %v2063
  %v2647 = vunpack.c.l.b16 %v2064
  %v2648 = vunpack.c.l.b16 %v2065
  %v2649 = vunpack.c.l.b16 %v2066
  %v2650 = vunpack.c.l.b16 %v2067
  %v2651 = vunpack.c.l.b16 %v2068
  %v2652 = vunpack.c.l.b16 %v2069
  %v2653 = vunpack.c.l.b16 %v2070
  %v2654 = vunpack.c.l.b16 %v2071
  %v2655 = vunpack.c.l.b16 %v2072
  %v2656 = vunpack.c.l.b16 %v2073
  %v2657 = vunpack.c.l.b16 %v2074
  %v2658 = vunpack.c.l.b16 %v2075
  %v2659 = vunpack.c.l.b16 %v2076
  %v2660 = vunpack.c.l.b16 %v2077
  %v2661 = vunpack.c.l.b16 %v2078
  %v2662 = vunpack.c.l.b16 %v2079
  %v2663 = vunpack.c.l.b16 %v2080
  %v2664 = vunpack.c.l.b16 %v2081
  %v2665 = vunpack.c.l.b16 %v2082
  %v2666 = vunpack.c.l.b16 %v2083
  %v2667 = vunpack.c.l.b16 %v2084
  %v2668 = vunpack.c.l.b16 %v2085
  %v2669 = vunpack.c.l.b16 %v2086
  %v2670 = vunpack.c.l.b16 %v2087
  %v2671 = vunpack.c.l.b16 %v2088
  %v2672 = vunpack.c.l.b16 %v2089
  %v2673 = vunpack.c.l.b16 %v2090
  %v2674 = vunpack.c.l.b16 %v2091
  %v2675 = vunpack.c.l.b16 %v2092
  %v2676 = vunpack.c.l.b16 %v2093
  %v2677 = vunpack.c.l.b16 %v2094
  %v2678 = vunpack.c.l.b16 %v2095
  %v2679 = vunpack.c.l.b16 %v2096
  %v2680 = vunpack.c.l.b16 %v2097
  %v2681 = vunpack.c.l.b16 %v2098
  %v2682 = vunpack.c.l.b16 %v2099
  %v2683 = vunpack.c.l.b16 %v2100
  %v2684 = vunpack.c.l.b16 %v2101
  %v2685 = vunpack.c.l.b16 %v2102
  %v2686 = vunpack.c.l.b16 %v2103
  %v2687 = vunpack.c.l.b16 %v2104
  %v2688 = vunpack.c.l.b16 %v2105
  %v2689 = vunpack.c.l.b16 %v2106
  %v2690 = vunpack.c.l.b16 %v2107
  %v2691 = vunpack.c.l.b16 %v2108
  %v2692 = vunpack.c.l.b16 %v2109
  %v2693 = vunpack.c.l.b16 %v2110
  %v2694 = vunpack.c.l.b16 %v2111
  %v2695 = vunpack.c.l.b16 %v2112
  %v2696 = vunpack.c.l.b16 %v2113
  %v2697 = vunpack.c.l.b16 %v2114
  %v2698 = vunpack.c.l.b16 %v2115
  %v2699 = vunpack.c.l.b16 %v2116
  %v2700 = vunpack.c.l.b16 %v2117
  %v2701 = vunpack.c.l.b16 %v2118
  %v2702 = vunpack.c.l.b16 %v2119
  %v2703 = vunpack.c.l.b16 %v2120
  %v2704 = vunpack.c.l.b16 %v2121
  %v2705 = vunpack.c.l.b16 %v2122
  %v2706 = vunpack.c.l.b16 %v2123
  %v2707 = vunpack.c.l.b16 %v2124
  %v2708 = vunpack.c.l.b16 %v2125
  %v2709 = vunpack.c.l.b16 %v2126
  %v2710 = vunpack.c.l.b16 %v2127
  %v2711 = vunpack.c.l.b16 %v2128
  %v2712 = vunpack.c.l.b16 %v2129
  %v2713 = vunpack.c.l.b16 %v2130
  %v2714 = vunpack.c.l.b16 %v2131
  %v2715 = vunpack.c.l.b16 %v2132
  %v2716 = vunpack.c.l.b16 %v2133
  %v2717 = vunpack.c.l.b16 %v2134
  %v2718 = vunpack.c.l.b16 %v2135
  %v2719 = vunpack.c.l.b16 %v2136
  %v2720 = vunpack.c.l.b16 %v2137
  %v2721 = vunpack.c.l.b16 %v2138
  %v2722 = vunpack.c.l.b16 %v2139
  %v2723 = vunpack.c.l.b16 %v2140
  %v2724 = vunpack.c.l.b16 %v2141
  %v2725 = vunpack.c.l.b16 %v2142
  %v2726 = vunpack.c.l.b16 %v2143
  %v2727 = vunpack.c.l.b16 %v2144
  %v2728 = vunpack.c.l.b16 %v2145
  %v2729 = vunpack.c.l.b16 %v2146
  %v2730 = vunpack.c.l.b16 %v2147
  %v2731 = vunpack.c.l.b16 %v2148
  %v2732 = vunpack.c.l.b16 %v2149
  %v2733 = vunpack.c.l.b16 %v2150
  %v2734 = vunpack.c.l.b16 %v2151
  %v2735 = vunpack.c.l.b16 %v2152
  %v2736 = vunpack.c.l.b16 %v2153
  %v2737 = vunpack.c.l.b16 %v2154
  %v2738 = vunpack.c.l.b16 %v2155
  %v2739 = vunpack.c.l.b16 %v2156
  %v2740 = vunpack.c.l.b16 %v2157
  %v2741 = vunpack.c.l.b16 %v2158
  %v2742 = vunpack.c.l.b16 %v2159
  %v2743 = vunpack.c.l.b16 %v2160
  %v2744 = vunpack.c.l.b16 %v2161
  %v2745 = vunpack.c.l.b16 %v2162
  %v2746 = vunpack.c.l.b16 %v2163
  %v2747 = vunpack.c.l.b16 %v2164
  %v2748 = vunpack.c.l.b16 %v2165
  %v2749 = vunpack.c.l.b16 %v2166
  %v2750 = vunpack.c.l.b16 %v2167
  %v2751 = vunpack.c.l.b16 %v2168
  %v2752 = vunpack.c.l.b16 %v2169
  %v2753 = vunpack.c.l.b16 %v2170
  %v2754 = vunpack.c.l.b16 %v2171
  %v2755 = vunpack.c.l.b16 %v2172
  %v2756 = vunpack.c.l.b16 %v2173
  %v2757 = vunpack.c.l.b16 %v2174
  %v2758 = vunpack.c.l.b16 %v2175
  %v2759 = vunpack.c.l.b16 %v2176
  %v2760 = vpack.c.b16 %v2617, %v2616
  %v2761 = vpack.c.b16 %v2619, %v2618
  %v2762 = vpack.c.b16 %v2621, %v2620
  %v2763 = vpack.c.b16 %v2623, %v2622
  %v2764 = vpack.c.b16 %v2625, %v2624
  %v2765 = vpack.c.b16 %v2627, %v2626
  %v2766 = vpack.c.b16 %v2629, %v2628
  %v2767 = vpack.c.b16 %v2631, %v2630
  %v2768 = vpack.c.b16 %v2633, %v2632
  %v2769 = vpack.c.b16 %v2635, %v2634
  %v2770 = vpack.c.b16 %v2637, %v2636
  %v2771 = vpack.c.b16 %v2639, %v2638
  %v2772 = vpack.c.b16 %v2641, %v2640
  %v2773 = vpack.c.b16 %v2643, %v2642
  %v2774 = vpack.c.b16 %v2645, %v2644
  %v2775 = vpack.c.b16 %v2647, %v2646
  %v2776 = vpack.c.b16 %v2649, %v2648
  %v2777 = vpack.c.b16 %v2651, %v2650
  %v2778 = vpack.c.b16 %v2653, %v2652
  %v2779 = vpack.c.b16 %v2655, %v2654
  %v2780 = vpack.c.b16 %v2657, %v2656
  %v2781 = vpack.c.b16 %v2659, %v2658
  %v2782 = vpack.c.b16 %v2661, %v2660
  %v2783 = vpack.c.b16 %v2663, %v2662
  %v2784 = vpack.c.b16 %v2665, %v2664
  %v2785 = vpack.c.b16 %v2667, %v2666
  %v2786 = vpack.c.b16 %v2669, %v2668
  %v2787 = vpack.c.b16 %v2671, %v2670
  %v2788 = vpack.c.b16 %v2673, %v2672
  %v2789 = vpack.c.b16 %v2675, %v2674
  %v2790 = vpack.c.b16 %v2677, %v2676
  %v2791 = vpack.c.b16 %v2679, %v2678
  %v2792 = vpack.c.b16 %v2681, %v2680
  %v2793 = vpack.c.b16 %v2683, %v2682
  %v2794 = vpack.c.b16 %v2685, %v2684
  %v2795 = vpack.c.b16 %v2687, %v2686
  %v2796 = vpack.c.b16 %v2689, %v2688
  %v2797 = vpack.c.b16 %v2691, %v2690
  %v2798 = vpack.c.b16 %v2693, %v2692
  %v2799 = vpack.c.b16 %v2695, %v2694
  %v2800 = vpack.c.b16 %v2697, %v2696
  %v2801 = vpack.c.b16 %v2699, %v2698
  %v2802 = vpack.c.b16 %v2701, %v2700
  %v2803 = vpack.c.b16 %v2703, %v2702
  %v2804 = vpack.c.b16 %v2705, %v2704
  %v2805 = vpack.c.b16 %v2707, %v2706
  %v2806 = vpack.c.b16 %v2709, %v2708
  %v2807 = vpack.c.b16 %v2711, %v2710
  %v2808 = vpack.c.b16 %v2713, %v2712
  %v2809 = vpack.c.b16 %v2715, %v2714
  %v2810 = vpack.c.b16 %v2717, %v2716
  %v2811 = vpack.c.b16 %v2719, %v2718
  %v2812 = vpack.c.b16 %v2721, %v2720
  %v2813 = vpack.c.b16 %v2723, %v2722
  %v2814 = vpack.c.b16 %v2725, %v2724
  %v2815 = vpack.c.b16 %v2727, %v2726
  %v2816 = vpack.c.b16 %v2729, %v2728
  %v2817 = vpack.c.b16 %v2731, %v2730
  %v2818 = vpack.c.b16 %v2733, %v2732
  %v2819 = vpack.c.b16 %v2735, %v2734
  %v2820 = vpack.c.b16 %v2737, %v2736
  %v2821 = vpack.c.b16 %v2739, %v2738
  %v2822 = vpack.c.b16 %v2741, %v2740
  %v2823 = vpack.c.b16 %v2743, %v2742
  %v2824 = vpack.c.b16 %v2745, %v2744
  %v2825 = vpack.c.b16 %v2747, %v2746
  %v2826 = vpack.c.b16 %v2749, %v2748
  %v2827 = vpack.c.b16 %v2751, %v2750
  %v2828 = vpack.c.b16 %v2753, %v2752
  %v2829 = vpack.c.b16 %v2755, %v2754
  %v2830 = vpack.c.b16 %v2757, %v2756
  %v2831 = vpack.c.b16 %v2759, %v2758
  %2904 = vmatprep.subr.bf16.mxu0 0
  %2905 = vmatpush1.bf16.msra.mxu0 %v2760
  %2906 = vmatprep.subr.bf16.mxu0 0
  %2907 = vmatpush1.bf16.msra.mxu0 %v2761
  %2908 = vmatprep.subr.bf16.mxu0 0
  %2909 = vmatpush1.bf16.msra.mxu0 %v2762
  %2910 = vmatprep.subr.bf16.mxu0 0
  %2911 = vmatpush1.bf16.msra.mxu0 %v2763
  %2912 = vmatprep.subr.bf16.mxu0 0
  %2913 = vmatpush1.bf16.msra.mxu0 %v2764
  %2914 = vmatprep.subr.bf16.mxu0 0
  %2915 = vmatpush1.bf16.msra.mxu0 %v2765
  %2916 = vmatprep.subr.bf16.mxu0 0
  %2917 = vmatpush1.bf16.msra.mxu0 %v2766
  %2918 = vmatprep.subr.bf16.mxu0 0
  %2919 = vmatpush1.bf16.msra.mxu0 %v2767
  %2920 = vmatprep.subr.bf16.mxu0 0
  %2921 = vmatpush1.bf16.msra.mxu0 %v2768
  %2922 = vmatprep.subr.bf16.mxu0 0
  %2923 = vmatpush1.bf16.msra.mxu0 %v2769
  %2924 = vmatprep.subr.bf16.mxu0 0
  %2925 = vmatpush1.bf16.msra.mxu0 %v2770
  %2926 = vmatprep.subr.bf16.mxu0 0
  %2927 = vmatpush1.bf16.msra.mxu0 %v2771
  %2928 = vmatprep.subr.bf16.mxu0 0
  %2929 = vmatpush1.bf16.msra.mxu0 %v2772
  %2930 = vmatprep.subr.bf16.mxu0 0
  %2931 = vmatpush1.bf16.msra.mxu0 %v2773
  %2932 = vmatprep.subr.bf16.mxu0 0
  %2933 = vmatpush1.bf16.msra.mxu0 %v2774
  %2934 = vmatprep.subr.bf16.mxu0 0
  %2935 = vmatpush1.bf16.msra.mxu0 %v2775
  %2936 = vmatprep.mubr.bf16.mxu0 %v2185
  %2937 = vmatmul.mubr.bf16.gmra.mrb[0].mxu0 %v2184
  %v2938 = vpop.f32.mrb[0].mxu0
  %v2939 = vadd.f32 %v2182, %v2938
  %v2940 = vpop.f32.mrb[0].mxu0
  %v2941 = vpop.f32.mrb[0].mxu0
  %v2942 = vadd.f32 %v2182, %v2941
  %v2943 = vpop.f32.mrb[0].mxu0
  %2944 = vmatprep.mubr.bf16.mxu0 %v2194
  %2945 = vmatmul.mubr.bf16.gmra.mrb[0].mxu0 %v2193
  %v2946 = vpop.f32.mrb[0].mxu0
  %v2947 = vadd.f32 %v2182, %v2946
  %v2948 = vpop.f32.mrb[0].mxu0
  %v2949 = vpop.f32.mrb[0].mxu0
  %v2950 = vadd.f32 %v2182, %v2949
  %v2951 = vpop.f32.mrb[0].mxu0
  %2952 = vmatprep.mubr.bf16.mxu0 %v2203
  %2953 = vmatmul.mubr.bf16.gmra.mrb[0].mxu0 %v2202
  %v2954 = vpop.f32.mrb[0].mxu0
  %v2955 = vadd.f32 %v2182, %v2954
  %v2956 = vpop.f32.mrb[0].mxu0
  %v2957 = vpop.f32.mrb[0].mxu0
  %v2958 = vadd.f32 %v2182, %v2957
  %v2959 = vpop.f32.mrb[0].mxu0
  %2960 = vmatprep.mubr.bf16.mxu0 %v2212
  %2961 = vmatmul.mubr.bf16.gmra.mrb[0].mxu0 %v2211
  %v2962 = vpop.f32.mrb[0].mxu0
  %v2963 = vadd.f32 %v2182, %v2962
  %v2964 = vpop.f32.mrb[0].mxu0
  %v2965 = vpop.f32.mrb[0].mxu0
  %v2966 = vadd.f32 %v2182, %v2965
  %v2967 = vpop.f32.mrb[0].mxu0
  %2968 = vmatprep.mubr.bf16.mxu0 %v2221
  %2969 = vmatmul.mubr.bf16.gmra.mrb[0].mxu0 %v2220
  %v2970 = vpop.f32.mrb[0].mxu0
  %v2971 = vadd.f32 %v2182, %v2970
  %v2972 = vpop.f32.mrb[0].mxu0
  %v2973 = vpop.f32.mrb[0].mxu0
  %v2974 = vadd.f32 %v2182, %v2973
  %v2975 = vpop.f32.mrb[0].mxu0
  %2976 = vmatprep.mubr.bf16.mxu0 %v2230
  %2977 = vmatmul.mubr.bf16.gmra.mrb[0].mxu0 %v2229
  %v2978 = vpop.f32.mrb[0].mxu0
  %v2979 = vadd.f32 %v2182, %v2978
  %v2980 = vpop.f32.mrb[0].mxu0
  %v2981 = vpop.f32.mrb[0].mxu0
  %v2982 = vadd.f32 %v2182, %v2981
  %v2983 = vpop.f32.mrb[0].mxu0
  %2984 = vmatprep.mubr.bf16.mxu0 %v2239
  %2985 = vmatmul.mubr.bf16.gmra.mrb[0].mxu0 %v2238
  %v2986 = vpop.f32.mrb[0].mxu0
  %v2987 = vadd.f32 %v2182, %v2986
  %v2988 = vpop.f32.mrb[0].mxu0
  %v2989 = vpop.f32.mrb[0].mxu0
  %v2990 = vadd.f32 %v2182, %v2989
  %v2991 = vpop.f32.mrb[0].mxu0
  %2992 = vmatprep.mubr.bf16.mxu0 %v2248
  %2993 = vmatmul.mubr.bf16.gmra.mrb[0].mxu0 %v2247
  %v2994 = vpop.f32.mrb[0].mxu0
  %v2995 = vadd.f32 %v2182, %v2994
  %v2996 = vpop.f32.mrb[0].mxu0
  %v2997 = vpop.f32.mrb[0].mxu0
  %v2998 = vadd.f32 %v2182, %v2997
  %v2999 = vpop.f32.mrb[0].mxu0
  %3000 = vmatprep.mubr.bf16.mxu0 %v2257
  %3001 = vmatmul.mubr.bf16.gmra.mrb[0].mxu0 %v2256
  %v3002 = vpop.f32.mrb[0].mxu0
  %v3003 = vadd.f32 %v2182, %v3002
  %v3004 = vpop.f32.mrb[0].mxu0
  %v3005 = vpop.f32.mrb[0].mxu0
  %v3006 = vadd.f32 %v2182, %v3005
  %v3007 = vpop.f32.mrb[0].mxu0
  %3008 = vmatprep.mubr.bf16.mxu0 %v2266
  %3009 = vmatmul.mubr.bf16.gmra.mrb[0].mxu0 %v2265
  %v3010 = vpop.f32.mrb[0].mxu0
  %v3011 = vadd.f32 %v2182, %v3010
  %v3012 = vpop.f32.mrb[0].mxu0
  %v3013 = vpop.f32.mrb[0].mxu0
  %v3014 = vadd.f32 %v2182, %v3013
  %v3015 = vpop.f32.mrb[0].mxu0
  %3016 = vmatprep.mubr.bf16.mxu0 %v2275
  %3017 = vmatmul.mubr.bf16.gmra.mrb[0].mxu0 %v2274
  %v3018 = vpop.f32.mrb[0].mxu0
  %v3019 = vadd.f32 %v2182, %v3018
  %v3020 = vpop.f32.mrb[0].mxu0
  %v3021 = vpop.f32.mrb[0].mxu0
  %v3022 = vadd.f32 %v2182, %v3021
  %v3023 = vpop.f32.mrb[0].mxu0
  %3024 = vmatprep.mubr.bf16.mxu0 %v2284
  %3025 = vmatmul.mubr.bf16.gmra.mrb[0].mxu0 %v2283
  %v3026 = vpop.f32.mrb[0].mxu0
  %v3027 = vadd.f32 %v2182, %v3026
  %v3028 = vpop.f32.mrb[0].mxu0
  %v3029 = vpop.f32.mrb[0].mxu0
  %v3030 = vadd.f32 %v2182, %v3029
  %v3031 = vpop.f32.mrb[0].mxu0
  %3032 = vmatprep.mubr.bf16.mxu0 %v2293
  %3033 = vmatmul.mubr.bf16.gmra.mrb[0].mxu0 %v2292
  %v3034 = vpop.f32.mrb[0].mxu0
  %v3035 = vadd.f32 %v2182, %v3034
  %v3036 = vpop.f32.mrb[0].mxu0
  %v3037 = vpop.f32.mrb[0].mxu0
  %v3038 = vadd.f32 %v2182, %v3037
  %v3039 = vpop.f32.mrb[0].mxu0
  %3040 = vmatprep.mubr.bf16.mxu0 %v2302
  %3041 = vmatmul.mubr.bf16.gmra.mrb[0].mxu0 %v2301
  %v3042 = vpop.f32.mrb[0].mxu0
  %v3043 = vadd.f32 %v2182, %v3042
  %v3044 = vpop.f32.mrb[0].mxu0
  %v3045 = vpop.f32.mrb[0].mxu0
  %v3046 = vadd.f32 %v2182, %v3045
  %v3047 = vpop.f32.mrb[0].mxu0
  %3048 = vmatprep.mubr.bf16.mxu0 %v2311
  %3049 = vmatmul.mubr.bf16.gmra.mrb[0].mxu0 %v2310
  %v3050 = vpop.f32.mrb[0].mxu0
  %v3051 = vadd.f32 %v2182, %v3050
  %v3052 = vpop.f32.mrb[0].mxu0
  %v3053 = vpop.f32.mrb[0].mxu0
  %v3054 = vadd.f32 %v2182, %v3053
  %v3055 = vpop.f32.mrb[0].mxu0
  %3056 = vmatprep.mubr.bf16.mxu0 %v2320
  %3057 = vmatmul.mubr.bf16.gmra.mrb[0].mxu0 %v2319
  %v3058 = vpop.f32.mrb[0].mxu0
  %v3059 = vadd.f32 %v2182, %v3058
  %v3060 = vpop.f32.mrb[0].mxu0
  %v3061 = vpop.f32.mrb[0].mxu0
  %v3062 = vadd.f32 %v2182, %v3061
  %v3063 = vpop.f32.mrb[0].mxu0
  %3064 = vdwg.mxu0
  %3065 = vmatprep.subr.bf16.mxu0 0
  %3066 = vmatpush1.bf16.msra.mxu0 %v2776
  %3067 = vmatprep.subr.bf16.mxu0 0
  %3068 = vmatpush1.bf16.msra.mxu0 %v2777
  %3069 = vmatprep.subr.bf16.mxu0 0
  %3070 = vmatpush1.bf16.msra.mxu0 %v2778
  %3071 = vmatprep.subr.bf16.mxu0 0
  %3072 = vmatpush1.bf16.msra.mxu0 %v2779
  %3073 = vmatprep.subr.bf16.mxu0 0
  %3074 = vmatpush1.bf16.msra.mxu0 %v2780
  %3075 = vmatprep.subr.bf16.mxu0 0
  %3076 = vmatpush1.bf16.msra.mxu0 %v2781
  %3077 = vmatprep.subr.bf16.mxu0 0
  %3078 = vmatpush1.bf16.msra.mxu0 %v2782
  %3079 = vmatprep.subr.bf16.mxu0 0
  %3080 = vmatpush1.bf16.msra.mxu0 %v2783
  %3081 = vmatprep.subr.bf16.mxu0 0
  %3082 = vmatpush1.bf16.msra.mxu0 %v2784
  %3083 = vmatprep.subr.bf16.mxu0 0
  %3084 = vmatpush1.bf16.msra.mxu0 %v2785
  %3085 = vmatprep.subr.bf16.mxu0 0
  %3086 = vmatpush1.bf16.msra.mxu0 %v2786
  %3087 = vmatprep.subr.bf16.mxu0 0
  %3088 = vmatpush1.bf16.msra.mxu0 %v2787
  %3089 = vmatprep.subr.bf16.mxu0 0
  %3090 = vmatpush1.bf16.msra.mxu0 %v2788
  %3091 = vmatprep.subr.bf16.mxu0 0
  %3092 = vmatpush1.bf16.msra.mxu0 %v2789
  %3093 = vmatprep.subr.bf16.mxu0 0
  %3094 = vmatpush1.bf16.msra.mxu0 %v2790
  %3095 = vmatprep.subr.bf16.mxu0 0
  %3096 = vmatpush1.bf16.msra.mxu0 %v2791
  %3097 = vmatprep.mubr.bf16.mxu0 %v2187
  %3098 = vmatmul.mubr.bf16.gmra.mrb[0].mxu0 %v2186
  %v3099 = vpop.f32.mrb[0].mxu0
  %v3100 = vadd.f32 %v2939, %v3099
  %v3101 = vpop.f32.mrb[0].mxu0
  %v3102 = vpop.f32.mrb[0].mxu0
  %v3103 = vadd.f32 %v2942, %v3102
  %v3104 = vpop.f32.mrb[0].mxu0
  %3105 = vmatprep.mubr.bf16.mxu0 %v2196
  %3106 = vmatmul.mubr.bf16.gmra.mrb[0].mxu0 %v2195
  %v3107 = vpop.f32.mrb[0].mxu0
  %v3108 = vadd.f32 %v2947, %v3107
  %v3109 = vpop.f32.mrb[0].mxu0
  %v3110 = vpop.f32.mrb[0].mxu0
  %v3111 = vadd.f32 %v2950, %v3110
  %v3112 = vpop.f32.mrb[0].mxu0
  %3113 = vmatprep.mubr.bf16.mxu0 %v2205
  %3114 = vmatmul.mubr.bf16.gmra.mrb[0].mxu0 %v2204
  %v3115 = vpop.f32.mrb[0].mxu0
  %v3116 = vadd.f32 %v2955, %v3115
  %v3117 = vpop.f32.mrb[0].mxu0
  %v3118 = vpop.f32.mrb[0].mxu0
  %v3119 = vadd.f32 %v2958, %v3118
  %v3120 = vpop.f32.mrb[0].mxu0
  %3121 = vmatprep.mubr.bf16.mxu0 %v2214
  %3122 = vmatmul.mubr.bf16.gmra.mrb[0].mxu0 %v2213
  %v3123 = vpop.f32.mrb[0].mxu0
  %v3124 = vadd.f32 %v2963, %v3123
  %v3125 = vpop.f32.mrb[0].mxu0
  %v3126 = vpop.f32.mrb[0].mxu0
  %v3127 = vadd.f32 %v2966, %v3126
  %v3128 = vpop.f32.mrb[0].mxu0
  %3129 = vmatprep.mubr.bf16.mxu0 %v2223
  %3130 = vmatmul.mubr.bf16.gmra.mrb[0].mxu0 %v2222
  %v3131 = vpop.f32.mrb[0].mxu0
  %v3132 = vadd.f32 %v2971, %v3131
  %v3133 = vpop.f32.mrb[0].mxu0
  %v3134 = vpop.f32.mrb[0].mxu0
  %v3135 = vadd.f32 %v2974, %v3134
  %v3136 = vpop.f32.mrb[0].mxu0
  %3137 = vmatprep.mubr.bf16.mxu0 %v2232
  %3138 = vmatmul.mubr.bf16.gmra.mrb[0].mxu0 %v2231
  %v3139 = vpop.f32.mrb[0].mxu0
  %v3140 = vadd.f32 %v2979, %v3139
  %v3141 = vpop.f32.mrb[0].mxu0
  %v3142 = vpop.f32.mrb[0].mxu0
  %v3143 = vadd.f32 %v2982, %v3142
  %v3144 = vpop.f32.mrb[0].mxu0
  %3145 = vmatprep.mubr.bf16.mxu0 %v2241
  %3146 = vmatmul.mubr.bf16.gmra.mrb[0].mxu0 %v2240
  %v3147 = vpop.f32.mrb[0].mxu0
  %v3148 = vadd.f32 %v2987, %v3147
  %v3149 = vpop.f32.mrb[0].mxu0
  %v3150 = vpop.f32.mrb[0].mxu0
  %v3151 = vadd.f32 %v2990, %v3150
  %v3152 = vpop.f32.mrb[0].mxu0
  %3153 = vmatprep.mubr.bf16.mxu0 %v2250
  %3154 = vmatmul.mubr.bf16.gmra.mrb[0].mxu0 %v2249
  %v3155 = vpop.f32.mrb[0].mxu0
  %v3156 = vadd.f32 %v2995, %v3155
  %v3157 = vpop.f32.mrb[0].mxu0
  %v3158 = vpop.f32.mrb[0].mxu0
  %v3159 = vadd.f32 %v2998, %v3158
  %v3160 = vpop.f32.mrb[0].mxu0
  %3161 = vmatprep.mubr.bf16.mxu0 %v2259
  %3162 = vmatmul.mubr.bf16.gmra.mrb[0].mxu0 %v2258
  %v3163 = vpop.f32.mrb[0].mxu0
  %v3164 = vadd.f32 %v3003, %v3163
  %v3165 = vpop.f32.mrb[0].mxu0
  %v3166 = vpop.f32.mrb[0].mxu0
  %v3167 = vadd.f32 %v3006, %v3166
  %v3168 = vpop.f32.mrb[0].mxu0
  %3169 = vmatprep.mubr.bf16.mxu0 %v2268
  %3170 = vmatmul.mubr.bf16.gmra.mrb[0].mxu0 %v2267
  %v3171 = vpop.f32.mrb[0].mxu0
  %v3172 = vadd.f32 %v3011, %v3171
  %v3173 = vpop.f32.mrb[0].mxu0
  %v3174 = vpop.f32.mrb[0].mxu0
  %v3175 = vadd.f32 %v3014, %v3174
  %v3176 = vpop.f32.mrb[0].mxu0
  %3177 = vmatprep.mubr.bf16.mxu0 %v2277
  %3178 = vmatmul.mubr.bf16.gmra.mrb[0].mxu0 %v2276
  %v3179 = vpop.f32.mrb[0].mxu0
  %v3180 = vadd.f32 %v3019, %v3179
  %v3181 = vpop.f32.mrb[0].mxu0
  %v3182 = vpop.f32.mrb[0].mxu0
  %v3183 = vadd.f32 %v3022, %v3182
  %v3184 = vpop.f32.mrb[0].mxu0
  %3185 = vmatprep.mubr.bf16.mxu0 %v2286
  %3186 = vmatmul.mubr.bf16.gmra.mrb[0].mxu0 %v2285
  %v3187 = vpop.f32.mrb[0].mxu0
  %v3188 = vadd.f32 %v3027, %v3187
  %v3189 = vpop.f32.mrb[0].mxu0
  %v3190 = vpop.f32.mrb[0].mxu0
  %v3191 = vadd.f32 %v3030, %v3190
  %v3192 = vpop.f32.mrb[0].mxu0
  %3193 = vmatprep.mubr.bf16.mxu0 %v2295
  %3194 = vmatmul.mubr.bf16.gmra.mrb[0].mxu0 %v2294
  %v3195 = vpop.f32.mrb[0].mxu0
  %v3196 = vadd.f32 %v3035, %v3195
  %v3197 = vpop.f32.mrb[0].mxu0
  %v3198 = vpop.f32.mrb[0].mxu0
  %v3199 = vadd.f32 %v3038, %v3198
  %v3200 = vpop.f32.mrb[0].mxu0
  %3201 = vmatprep.mubr.bf16.mxu0 %v2304
  %3202 = vmatmul.mubr.bf16.gmra.mrb[0].mxu0 %v2303
  %v3203 = vpop.f32.mrb[0].mxu0
  %v3204 = vadd.f32 %v3043, %v3203
  %v3205 = vpop.f32.mrb[0].mxu0
  %v3206 = vpop.f32.mrb[0].mxu0
  %v3207 = vadd.f32 %v3046, %v3206
  %v3208 = vpop.f32.mrb[0].mxu0
  %3209 = vmatprep.mubr.bf16.mxu0 %v2313
  %3210 = vmatmul.mubr.bf16.gmra.mrb[0].mxu0 %v2312
  %v3211 = vpop.f32.mrb[0].mxu0
  %v3212 = vadd.f32 %v3051, %v3211
  %v3213 = vpop.f32.mrb[0].mxu0
  %v3214 = vpop.f32.mrb[0].mxu0
  %v3215 = vadd.f32 %v3054, %v3214
  %v3216 = vpop.f32.mrb[0].mxu0
  %3217 = vmatprep.mubr.bf16.mxu0 %v2322
  %3218 = vmatmul.mubr.bf16.gmra.mrb[0].mxu0 %v2321
  %v3219 = vpop.f32.mrb[0].mxu0
  %v3220 = vadd.f32 %v3059, %v3219
  %v3221 = vpop.f32.mrb[0].mxu0
  %v3222 = vpop.f32.mrb[0].mxu0
  %v3223 = vadd.f32 %v3062, %v3222
  %v3224 = vpop.f32.mrb[0].mxu0
  %3225 = vdwg.mxu0
  %3226 = vmatprep.subr.bf16.mxu0 0
  %3227 = vmatpush1.bf16.msra.mxu0 %v2792
  %3228 = vmatprep.subr.bf16.mxu0 0
  %3229 = vmatpush1.bf16.msra.mxu0 %v2793
  %3230 = vmatprep.subr.bf16.mxu0 0
  %3231 = vmatpush1.bf16.msra.mxu0 %v2794
  %3232 = vmatprep.subr.bf16.mxu0 0
  %3233 = vmatpush1.bf16.msra.mxu0 %v2795
  %3234 = vmatprep.subr.bf16.mxu0 0
  %3235 = vmatpush1.bf16.msra.mxu0 %v2796
  %3236 = vmatprep.subr.bf16.mxu0 0
  %3237 = vmatpush1.bf16.msra.mxu0 %v2797
  %3238 = vmatprep.subr.bf16.mxu0 0
  %3239 = vmatpush1.bf16.msra.mxu0 %v2798
  %3240 = vmatprep.subr.bf16.mxu0 0
  %3241 = vmatpush1.bf16.msra.mxu0 %v2799
  %3242 = vmatprep.subr.bf16.mxu0 0
  %3243 = vmatpush1.bf16.msra.mxu0 %v2800
  %3244 = vmatprep.subr.bf16.mxu0 0
  %3245 = vmatpush1.bf16.msra.mxu0 %v2801
  %3246 = vmatprep.subr.bf16.mxu0 0
  %3247 = vmatpush1.bf16.msra.mxu0 %v2802
  %3248 = vmatprep.subr.bf16.mxu0 0
  %3249 = vmatpush1.bf16.msra.mxu0 %v2803
  %3250 = vmatprep.subr.bf16.mxu0 0
  %3251 = vmatpush1.bf16.msra.mxu0 %v2804
  %3252 = vmatprep.subr.bf16.mxu0 0
  %3253 = vmatpush1.bf16.msra.mxu0 %v2805
  %3254 = vmatprep.subr.bf16.mxu0 0
  %3255 = vmatpush1.bf16.msra.mxu0 %v2806
  %3256 = vmatprep.subr.bf16.mxu0 0
  %3257 = vmatpush1.bf16.msra.mxu0 %v2807
  %3258 = vmatprep.mubr.bf16.mxu0 %v2189
  %3259 = vmatmul.mubr.bf16.gmra.mrb[0].mxu0 %v2188
  %v3260 = vpop.f32.mrb[0].mxu0
  %v3261 = vadd.f32 %v3100, %v3260
  %v3262 = vpop.f32.mrb[0].mxu0
  %v3263 = vpop.f32.mrb[0].mxu0
  %v3264 = vadd.f32 %v3103, %v3263
  %v3265 = vpop.f32.mrb[0].mxu0
  %3266 = vmatprep.mubr.bf16.mxu0 %v2198
  %3267 = vmatmul.mubr.bf16.gmra.mrb[0].mxu0 %v2197
  %v3268 = vpop.f32.mrb[0].mxu0
  %v3269 = vadd.f32 %v3108, %v3268
  %v3270 = vpop.f32.mrb[0].mxu0
  %v3271 = vpop.f32.mrb[0].mxu0
  %v3272 = vadd.f32 %v3111, %v3271
  %v3273 = vpop.f32.mrb[0].mxu0
  %3274 = vmatprep.mubr.bf16.mxu0 %v2207
  %3275 = vmatmul.mubr.bf16.gmra.mrb[0].mxu0 %v2206
  %v3276 = vpop.f32.mrb[0].mxu0
  %v3277 = vadd.f32 %v3116, %v3276
  %v3278 = vpop.f32.mrb[0].mxu0
  %v3279 = vpop.f32.mrb[0].mxu0
  %v3280 = vadd.f32 %v3119, %v3279
  %v3281 = vpop.f32.mrb[0].mxu0
  %3282 = vmatprep.mubr.bf16.mxu0 %v2216
  %3283 = vmatmul.mubr.bf16.gmra.mrb[0].mxu0 %v2215
  %v3284 = vpop.f32.mrb[0].mxu0
  %v3285 = vadd.f32 %v3124, %v3284
  %v3286 = vpop.f32.mrb[0].mxu0
  %v3287 = vpop.f32.mrb[0].mxu0
  %v3288 = vadd.f32 %v3127, %v3287
  %v3289 = vpop.f32.mrb[0].mxu0
  %3290 = vmatprep.mubr.bf16.mxu0 %v2225
  %3291 = vmatmul.mubr.bf16.gmra.mrb[0].mxu0 %v2224
  %v3292 = vpop.f32.mrb[0].mxu0
  %v3293 = vadd.f32 %v3132, %v3292
  %v3294 = vpop.f32.mrb[0].mxu0
  %v3295 = vpop.f32.mrb[0].mxu0
  %v3296 = vadd.f32 %v3135, %v3295
  %v3297 = vpop.f32.mrb[0].mxu0
  %3298 = vmatprep.mubr.bf16.mxu0 %v2234
  %3299 = vmatmul.mubr.bf16.gmra.mrb[0].mxu0 %v2233
  %v3300 = vpop.f32.mrb[0].mxu0
  %v3301 = vadd.f32 %v3140, %v3300
  %v3302 = vpop.f32.mrb[0].mxu0
  %v3303 = vpop.f32.mrb[0].mxu0
  %v3304 = vadd.f32 %v3143, %v3303
  %v3305 = vpop.f32.mrb[0].mxu0
  %3306 = vmatprep.mubr.bf16.mxu0 %v2243
  %3307 = vmatmul.mubr.bf16.gmra.mrb[0].mxu0 %v2242
  %v3308 = vpop.f32.mrb[0].mxu0
  %v3309 = vadd.f32 %v3148, %v3308
  %v3310 = vpop.f32.mrb[0].mxu0
  %v3311 = vpop.f32.mrb[0].mxu0
  %v3312 = vadd.f32 %v3151, %v3311
  %v3313 = vpop.f32.mrb[0].mxu0
  %3314 = vmatprep.mubr.bf16.mxu0 %v2252
  %3315 = vmatmul.mubr.bf16.gmra.mrb[0].mxu0 %v2251
  %v3316 = vpop.f32.mrb[0].mxu0
  %v3317 = vadd.f32 %v3156, %v3316
  %v3318 = vpop.f32.mrb[0].mxu0
  %v3319 = vpop.f32.mrb[0].mxu0
  %v3320 = vadd.f32 %v3159, %v3319
  %v3321 = vpop.f32.mrb[0].mxu0
  %3322 = vmatprep.mubr.bf16.mxu0 %v2261
  %3323 = vmatmul.mubr.bf16.gmra.mrb[0].mxu0 %v2260
  %v3324 = vpop.f32.mrb[0].mxu0
  %v3325 = vadd.f32 %v3164, %v3324
  %v3326 = vpop.f32.mrb[0].mxu0
  %v3327 = vpop.f32.mrb[0].mxu0
  %v3328 = vadd.f32 %v3167, %v3327
  %v3329 = vpop.f32.mrb[0].mxu0
  %3330 = vmatprep.mubr.bf16.mxu0 %v2270
  %3331 = vmatmul.mubr.bf16.gmra.mrb[0].mxu0 %v2269
  %v3332 = vpop.f32.mrb[0].mxu0
  %v3333 = vadd.f32 %v3172, %v3332
  %v3334 = vpop.f32.mrb[0].mxu0
  %v3335 = vpop.f32.mrb[0].mxu0
  %v3336 = vadd.f32 %v3175, %v3335
  %v3337 = vpop.f32.mrb[0].mxu0
  %3338 = vmatprep.mubr.bf16.mxu0 %v2279
  %3339 = vmatmul.mubr.bf16.gmra.mrb[0].mxu0 %v2278
  %v3340 = vpop.f32.mrb[0].mxu0
  %v3341 = vadd.f32 %v3180, %v3340
  %v3342 = vpop.f32.mrb[0].mxu0
  %v3343 = vpop.f32.mrb[0].mxu0
  %v3344 = vadd.f32 %v3183, %v3343
  %v3345 = vpop.f32.mrb[0].mxu0
  %3346 = vmatprep.mubr.bf16.mxu0 %v2288
  %3347 = vmatmul.mubr.bf16.gmra.mrb[0].mxu0 %v2287
  %v3348 = vpop.f32.mrb[0].mxu0
  %v3349 = vadd.f32 %v3188, %v3348
  %v3350 = vpop.f32.mrb[0].mxu0
  %v3351 = vpop.f32.mrb[0].mxu0
  %v3352 = vadd.f32 %v3191, %v3351
  %v3353 = vpop.f32.mrb[0].mxu0
  %3354 = vmatprep.mubr.bf16.mxu0 %v2297
  %3355 = vmatmul.mubr.bf16.gmra.mrb[0].mxu0 %v2296
  %v3356 = vpop.f32.mrb[0].mxu0
  %v3357 = vadd.f32 %v3196, %v3356
  %v3358 = vpop.f32.mrb[0].mxu0
  %v3359 = vpop.f32.mrb[0].mxu0
  %v3360 = vadd.f32 %v3199, %v3359
  %v3361 = vpop.f32.mrb[0].mxu0
  %3362 = vmatprep.mubr.bf16.mxu0 %v2306
  %3363 = vmatmul.mubr.bf16.gmra.mrb[0].mxu0 %v2305
  %v3364 = vpop.f32.mrb[0].mxu0
  %v3365 = vadd.f32 %v3204, %v3364
  %v3366 = vpop.f32.mrb[0].mxu0
  %v3367 = vpop.f32.mrb[0].mxu0
  %v3368 = vadd.f32 %v3207, %v3367
  %v3369 = vpop.f32.mrb[0].mxu0
  %3370 = vmatprep.mubr.bf16.mxu0 %v2315
  %3371 = vmatmul.mubr.bf16.gmra.mrb[0].mxu0 %v2314
  %v3372 = vpop.f32.mrb[0].mxu0
  %v3373 = vadd.f32 %v3212, %v3372
  %v3374 = vpop.f32.mrb[0].mxu0
  %v3375 = vpop.f32.mrb[0].mxu0
  %v3376 = vadd.f32 %v3215, %v3375
  %v3377 = vpop.f32.mrb[0].mxu0
  %3378 = vmatprep.mubr.bf16.mxu0 %v2324
  %3379 = vmatmul.mubr.bf16.gmra.mrb[0].mxu0 %v2323
  %v3380 = vpop.f32.mrb[0].mxu0
  %v3381 = vadd.f32 %v3220, %v3380
  %v3382 = vpop.f32.mrb[0].mxu0
  %v3383 = vpop.f32.mrb[0].mxu0
  %v3384 = vadd.f32 %v3223, %v3383
  %v3385 = vpop.f32.mrb[0].mxu0
  %3386 = vdwg.mxu0
  %3387 = vmatprep.subr.bf16.mxu0 0
  %3388 = vmatpush1.bf16.msra.mxu0 %v2808
  %3389 = vmatprep.subr.bf16.mxu0 0
  %3390 = vmatpush1.bf16.msra.mxu0 %v2809
  %3391 = vmatprep.subr.bf16.mxu0 0
  %3392 = vmatpush1.bf16.msra.mxu0 %v2810
  %3393 = vmatprep.subr.bf16.mxu0 0
  %3394 = vmatpush1.bf16.msra.mxu0 %v2811
  %3395 = vmatprep.subr.bf16.mxu0 0
  %3396 = vmatpush1.bf16.msra.mxu0 %v2812
  %3397 = vmatprep.subr.bf16.mxu0 0
  %3398 = vmatpush1.bf16.msra.mxu0 %v2813
  %3399 = vmatprep.subr.bf16.mxu0 0
  %3400 = vmatpush1.bf16.msra.mxu0 %v2814
  %3401 = vmatprep.subr.bf16.mxu0 0
  %3402 = vmatpush1.bf16.msra.mxu0 %v2815
  %3403 = vmatprep.subr.bf16.mxu0 0
  %3404 = vmatpush1.bf16.msra.mxu0 %v2816
  %3405 = vmatprep.subr.bf16.mxu0 0
  %3406 = vmatpush1.bf16.msra.mxu0 %v2817
  %3407 = vmatprep.subr.bf16.mxu0 0
  %3408 = vmatpush1.bf16.msra.mxu0 %v2818
  %3409 = vmatprep.subr.bf16.mxu0 0
  %3410 = vmatpush1.bf16.msra.mxu0 %v2819
  %3411 = vmatprep.subr.bf16.mxu0 0
  %3412 = vmatpush1.bf16.msra.mxu0 %v2820
  %3413 = vmatprep.subr.bf16.mxu0 0
  %3414 = vmatpush1.bf16.msra.mxu0 %v2821
  %3415 = vmatprep.subr.bf16.mxu0 0
  %3416 = vmatpush1.bf16.msra.mxu0 %v2822
  %3417 = vmatprep.subr.bf16.mxu0 0
  %3418 = vmatpush1.bf16.msra.mxu0 %v2823
  %3419 = vmatprep.mubr.bf16.mxu0 %v2191
  %3420 = vmatmul.mubr.bf16.gmra.mrb[0].mxu0 %v2190
  %v3421 = vpop.f32.mrb[0].mxu0
  %v3422 = vadd.f32 %v3261, %v3421
  %v3423 = vpop.f32.mrb[0].mxu0
  %v3424 = vpop.f32.mrb[0].mxu0
  %v3425 = vadd.f32 %v3264, %v3424
  %v3426 = vpop.f32.mrb[0].mxu0
  %3427 = vmatprep.mubr.bf16.mxu0 %v2200
  %3428 = vmatmul.mubr.bf16.gmra.mrb[0].mxu0 %v2199
  %v3429 = vpop.f32.mrb[0].mxu0
  %v3430 = vadd.f32 %v3269, %v3429
  %v3431 = vpop.f32.mrb[0].mxu0
  %v3432 = vpop.f32.mrb[0].mxu0
  %v3433 = vadd.f32 %v3272, %v3432
  %v3434 = vpop.f32.mrb[0].mxu0
  %3435 = vmatprep.mubr.bf16.mxu0 %v2209
  %3436 = vmatmul.mubr.bf16.gmra.mrb[0].mxu0 %v2208
  %v3437 = vpop.f32.mrb[0].mxu0
  %v3438 = vadd.f32 %v3277, %v3437
  %v3439 = vpop.f32.mrb[0].mxu0
  %v3440 = vpop.f32.mrb[0].mxu0
  %v3441 = vadd.f32 %v3280, %v3440
  %v3442 = vpop.f32.mrb[0].mxu0
  %3443 = vmatprep.mubr.bf16.mxu0 %v2218
  %3444 = vmatmul.mubr.bf16.gmra.mrb[0].mxu0 %v2217
  %v3445 = vpop.f32.mrb[0].mxu0
  %v3446 = vadd.f32 %v3285, %v3445
  %v3447 = vpop.f32.mrb[0].mxu0
  %v3448 = vpop.f32.mrb[0].mxu0
  %v3449 = vadd.f32 %v3288, %v3448
  %v3450 = vpop.f32.mrb[0].mxu0
  %3451 = vmatprep.mubr.bf16.mxu0 %v2227
  %3452 = vmatmul.mubr.bf16.gmra.mrb[0].mxu0 %v2226
  %v3453 = vpop.f32.mrb[0].mxu0
  %v3454 = vadd.f32 %v3293, %v3453
  %v3455 = vpop.f32.mrb[0].mxu0
  %v3456 = vpop.f32.mrb[0].mxu0
  %v3457 = vadd.f32 %v3296, %v3456
  %v3458 = vpop.f32.mrb[0].mxu0
  %3459 = vmatprep.mubr.bf16.mxu0 %v2236
  %3460 = vmatmul.mubr.bf16.gmra.mrb[0].mxu0 %v2235
  %v3461 = vpop.f32.mrb[0].mxu0
  %v3462 = vadd.f32 %v3301, %v3461
  %v3463 = vpop.f32.mrb[0].mxu0
  %v3464 = vpop.f32.mrb[0].mxu0
  %v3465 = vadd.f32 %v3304, %v3464
  %v3466 = vpop.f32.mrb[0].mxu0
  %3467 = vmatprep.mubr.bf16.mxu0 %v2245
  %3468 = vmatmul.mubr.bf16.gmra.mrb[0].mxu0 %v2244
  %v3469 = vpop.f32.mrb[0].mxu0
  %v3470 = vadd.f32 %v3309, %v3469
  %v3471 = vpop.f32.mrb[0].mxu0
  %v3472 = vpop.f32.mrb[0].mxu0
  %v3473 = vadd.f32 %v3312, %v3472
  %v3474 = vpop.f32.mrb[0].mxu0
  %3475 = vmatprep.mubr.bf16.mxu0 %v2254
  %3476 = vmatmul.mubr.bf16.gmra.mrb[0].mxu0 %v2253
  %v3477 = vpop.f32.mrb[0].mxu0
  %v3478 = vadd.f32 %v3317, %v3477
  %v3479 = vpop.f32.mrb[0].mxu0
  %v3480 = vpop.f32.mrb[0].mxu0
  %v3481 = vadd.f32 %v3320, %v3480
  %v3482 = vpop.f32.mrb[0].mxu0
  %3483 = vmatprep.mubr.bf16.mxu0 %v2263
  %3484 = vmatmul.mubr.bf16.gmra.mrb[0].mxu0 %v2262
  %v3485 = vpop.f32.mrb[0].mxu0
  %v3486 = vadd.f32 %v3325, %v3485
  %v3487 = vpop.f32.mrb[0].mxu0
  %v3488 = vpop.f32.mrb[0].mxu0
  %v3489 = vadd.f32 %v3328, %v3488
  %v3490 = vpop.f32.mrb[0].mxu0
  %3491 = vmatprep.mubr.bf16.mxu0 %v2272
  %3492 = vmatmul.mubr.bf16.gmra.mrb[0].mxu0 %v2271
  %v3493 = vpop.f32.mrb[0].mxu0
  %v3494 = vadd.f32 %v3333, %v3493
  %v3495 = vpop.f32.mrb[0].mxu0
  %v3496 = vpop.f32.mrb[0].mxu0
  %v3497 = vadd.f32 %v3336, %v3496
  %v3498 = vpop.f32.mrb[0].mxu0
  %3499 = vmatprep.mubr.bf16.mxu0 %v2281
  %3500 = vmatmul.mubr.bf16.gmra.mrb[0].mxu0 %v2280
  %v3501 = vpop.f32.mrb[0].mxu0
  %v3502 = vadd.f32 %v3341, %v3501
  %v3503 = vpop.f32.mrb[0].mxu0
  %v3504 = vpop.f32.mrb[0].mxu0
  %v3505 = vadd.f32 %v3344, %v3504
  %v3506 = vpop.f32.mrb[0].mxu0
  %3507 = vmatprep.mubr.bf16.mxu0 %v2290
  %3508 = vmatmul.mubr.bf16.gmra.mrb[0].mxu0 %v2289
  %v3509 = vpop.f32.mrb[0].mxu0
  %v3510 = vadd.f32 %v3349, %v3509
  %v3511 = vpop.f32.mrb[0].mxu0
  %v3512 = vpop.f32.mrb[0].mxu0
  %v3513 = vadd.f32 %v3352, %v3512
  %v3514 = vpop.f32.mrb[0].mxu0
  %3515 = vmatprep.mubr.bf16.mxu0 %v2299
  %3516 = vmatmul.mubr.bf16.gmra.mrb[0].mxu0 %v2298
  %v3517 = vpop.f32.mrb[0].mxu0
  %v3518 = vadd.f32 %v3357, %v3517
  %v3519 = vpop.f32.mrb[0].mxu0
  %v3520 = vpop.f32.mrb[0].mxu0
  %v3521 = vadd.f32 %v3360, %v3520
  %v3522 = vpop.f32.mrb[0].mxu0
  %3523 = vmatprep.mubr.bf16.mxu0 %v2308
  %3524 = vmatmul.mubr.bf16.gmra.mrb[0].mxu0 %v2307
  %v3525 = vpop.f32.mrb[0].mxu0
  %v3526 = vadd.f32 %v3365, %v3525
  %v3527 = vpop.f32.mrb[0].mxu0
  %v3528 = vpop.f32.mrb[0].mxu0
  %v3529 = vadd.f32 %v3368, %v3528
  %v3530 = vpop.f32.mrb[0].mxu0
  %3531 = vmatprep.mubr.bf16.mxu0 %v2317
  %3532 = vmatmul.mubr.bf16.gmra.mrb[0].mxu0 %v2316
  %v3533 = vpop.f32.mrb[0].mxu0
  %v3534 = vadd.f32 %v3373, %v3533
  %v3535 = vpop.f32.mrb[0].mxu0
  %v3536 = vpop.f32.mrb[0].mxu0
  %v3537 = vadd.f32 %v3376, %v3536
  %v3538 = vpop.f32.mrb[0].mxu0
  %3539 = vmatprep.mubr.bf16.mxu0 %v2326
  %3540 = vmatmul.mubr.bf16.gmra.mrb[0].mxu0 %v2325
  %v3541 = vpop.f32.mrb[0].mxu0
  %v3542 = vadd.f32 %v3381, %v3541
  %v3543 = vpop.f32.mrb[0].mxu0
  %v3544 = vpop.f32.mrb[0].mxu0
  %v3545 = vadd.f32 %v3384, %v3544
  %v3546 = vpop.f32.mrb[0].mxu0
  %3547 = vdwg.mxu0
  %3548 = vmatprep.subr.bf16.mxu0 0
  %3549 = vmatpush1.bf16.msra.mxu0 %v2824
  %3550 = vmatprep.subr.bf16.mxu0 0
  %3551 = vmatpush1.bf16.msra.mxu0 %v2825
  %3552 = vmatprep.subr.bf16.mxu0 0
  %3553 = vmatpush1.bf16.msra.mxu0 %v2826
  %3554 = vmatprep.subr.bf16.mxu0 0
  %3555 = vmatpush1.bf16.msra.mxu0 %v2827
  %3556 = vmatprep.subr.bf16.mxu0 0
  %3557 = vmatpush1.bf16.msra.mxu0 %v2828
  %3558 = vmatprep.subr.bf16.mxu0 0
  %3559 = vmatpush1.bf16.msra.mxu0 %v2829
  %3560 = vmatprep.subr.bf16.mxu0 0
  %3561 = vmatpush1.bf16.msra.mxu0 %v2830
  %3562 = vmatprep.subr.bf16.mxu0 0
  %3563 = vmatpush1.bf16.msra.mxu0 %v2831
  %3564 = vmatprep.subr.bf16.mxu0 0
  %3565 = vmatpush1.bf16.msra.mxu0 0
  %3566 = vmatprep.subr.bf16.mxu0 0
  %3567 = vmatpush1.bf16.msra.mxu0 0
  %3568 = vmatprep.subr.bf16.mxu0 0
  %3569 = vmatpush1.bf16.msra.mxu0 0
  %3570 = vmatprep.subr.bf16.mxu0 0
  %3571 = vmatpush1.bf16.msra.mxu0 0
  %3572 = vmatprep.subr.bf16.mxu0 0
  %3573 = vmatpush1.bf16.msra.mxu0 0
  %3574 = vmatprep.subr.bf16.mxu0 0
  %3575 = vmatpush1.bf16.msra.mxu0 0
  %3576 = vmatprep.subr.bf16.mxu0 0
  %3577 = vmatpush1.bf16.msra.mxu0 0
  %3578 = vmatprep.subr.bf16.mxu0 0
  %3579 = vmatpush1.bf16.msra.mxu0 0
  %3580 = vmatprep.mubr.bf16.mxu0 0
  %3581 = vmatmul.mubr.bf16.gmra.mrb[0].mxu0 %v2192
  %v3582 = vpop.f32.mrb[0].mxu0
  %v3583 = vadd.f32 %v3422, %v3582
  %v3584 = vpop.f32.mrb[0].mxu0
  %v3585 = vpop.f32.mrb[0].mxu0
  %v3586 = vadd.f32 %v3425, %v3585
  %v3587 = vpop.f32.mrb[0].mxu0
  %3588 = vmatprep.mubr.bf16.mxu0 0
  %3589 = vmatmul.mubr.bf16.gmra.mrb[0].mxu0 %v2201
  %v3590 = vpop.f32.mrb[0].mxu0
  %v3591 = vadd.f32 %v3430, %v3590
  %v3592 = vpop.f32.mrb[0].mxu0
  %v3593 = vpop.f32.mrb[0].mxu0
  %v3594 = vadd.f32 %v3433, %v3593
  %v3595 = vpop.f32.mrb[0].mxu0
  %3596 = vmatprep.mubr.bf16.mxu0 0
  %3597 = vmatmul.mubr.bf16.gmra.mrb[0].mxu0 %v2210
  %v3598 = vpop.f32.mrb[0].mxu0
  %v3599 = vadd.f32 %v3438, %v3598
  %v3600 = vpop.f32.mrb[0].mxu0
  %v3601 = vpop.f32.mrb[0].mxu0
  %v3602 = vadd.f32 %v3441, %v3601
  %v3603 = vpop.f32.mrb[0].mxu0
  %3604 = vmatprep.mubr.bf16.mxu0 0
  %3605 = vmatmul.mubr.bf16.gmra.mrb[0].mxu0 %v2219
  %v3606 = vpop.f32.mrb[0].mxu0
  %v3607 = vadd.f32 %v3446, %v3606
  %v3608 = vpop.f32.mrb[0].mxu0
  %v3609 = vpop.f32.mrb[0].mxu0
  %v3610 = vadd.f32 %v3449, %v3609
  %v3611 = vpop.f32.mrb[0].mxu0
  %3612 = vmatprep.mubr.bf16.mxu0 0
  %3613 = vmatmul.mubr.bf16.gmra.mrb[0].mxu0 %v2228
  %v3614 = vpop.f32.mrb[0].mxu0
  %v3615 = vadd.f32 %v3454, %v3614
  %v3616 = vpop.f32.mrb[0].mxu0
  %v3617 = vpop.f32.mrb[0].mxu0
  %v3618 = vadd.f32 %v3457, %v3617
  %v3619 = vpop.f32.mrb[0].mxu0
  %3620 = vmatprep.mubr.bf16.mxu0 0
  %3621 = vmatmul.mubr.bf16.gmra.mrb[0].mxu0 %v2237
  %v3622 = vpop.f32.mrb[0].mxu0
  %v3623 = vadd.f32 %v3462, %v3622
  %v3624 = vpop.f32.mrb[0].mxu0
  %v3625 = vpop.f32.mrb[0].mxu0
  %v3626 = vadd.f32 %v3465, %v3625
  %v3627 = vpop.f32.mrb[0].mxu0
  %3628 = vmatprep.mubr.bf16.mxu0 0
  %3629 = vmatmul.mubr.bf16.gmra.mrb[0].mxu0 %v2246
  %v3630 = vpop.f32.mrb[0].mxu0
  %v3631 = vadd.f32 %v3470, %v3630
  %v3632 = vpop.f32.mrb[0].mxu0
  %v3633 = vpop.f32.mrb[0].mxu0
  %v3634 = vadd.f32 %v3473, %v3633
  %v3635 = vpop.f32.mrb[0].mxu0
  %3636 = vmatprep.mubr.bf16.mxu0 0
  %3637 = vmatmul.mubr.bf16.gmra.mrb[0].mxu0 %v2255
  %v3638 = vpop.f32.mrb[0].mxu0
  %v3639 = vadd.f32 %v3478, %v3638
  %v3640 = vpop.f32.mrb[0].mxu0
  %v3641 = vpop.f32.mrb[0].mxu0
  %v3642 = vadd.f32 %v3481, %v3641
  %v3643 = vpop.f32.mrb[0].mxu0
  %3644 = vmatprep.mubr.bf16.mxu0 0
  %3645 = vmatmul.mubr.bf16.gmra.mrb[0].mxu0 %v2264
  %v3646 = vpop.f32.mrb[0].mxu0
  %v3647 = vadd.f32 %v3486, %v3646
  %v3648 = vpop.f32.mrb[0].mxu0
  %v3649 = vpop.f32.mrb[0].mxu0
  %v3650 = vadd.f32 %v3489, %v3649
  %v3651 = vpop.f32.mrb[0].mxu0
  %3652 = vmatprep.mubr.bf16.mxu0 0
  %3653 = vmatmul.mubr.bf16.gmra.mrb[0].mxu0 %v2273
  %v3654 = vpop.f32.mrb[0].mxu0
  %v3655 = vadd.f32 %v3494, %v3654
  %v3656 = vpop.f32.mrb[0].mxu0
  %v3657 = vpop.f32.mrb[0].mxu0
  %v3658 = vadd.f32 %v3497, %v3657
  %v3659 = vpop.f32.mrb[0].mxu0
  %3660 = vmatprep.mubr.bf16.mxu0 0
  %3661 = vmatmul.mubr.bf16.gmra.mrb[0].mxu0 %v2282
  %v3662 = vpop.f32.mrb[0].mxu0
  %v3663 = vadd.f32 %v3502, %v3662
  %v3664 = vpop.f32.mrb[0].mxu0
  %v3665 = vpop.f32.mrb[0].mxu0
  %v3666 = vadd.f32 %v3505, %v3665
  %v3667 = vpop.f32.mrb[0].mxu0
  %3668 = vmatprep.mubr.bf16.mxu0 0
  %3669 = vmatmul.mubr.bf16.gmra.mrb[0].mxu0 %v2291
  %v3670 = vpop.f32.mrb[0].mxu0
  %v3671 = vadd.f32 %v3510, %v3670
  %v3672 = vpop.f32.mrb[0].mxu0
  %v3673 = vpop.f32.mrb[0].mxu0
  %v3674 = vadd.f32 %v3513, %v3673
  %v3675 = vpop.f32.mrb[0].mxu0
  %3676 = vmatprep.mubr.bf16.mxu0 0
  %3677 = vmatmul.mubr.bf16.gmra.mrb[0].mxu0 %v2300
  %v3678 = vpop.f32.mrb[0].mxu0
  %v3679 = vadd.f32 %v3518, %v3678
  %v3680 = vpop.f32.mrb[0].mxu0
  %v3681 = vpop.f32.mrb[0].mxu0
  %v3682 = vadd.f32 %v3521, %v3681
  %v3683 = vpop.f32.mrb[0].mxu0
  %3684 = vmatprep.mubr.bf16.mxu0 0
  %3685 = vmatmul.mubr.bf16.gmra.mrb[0].mxu0 %v2309
  %v3686 = vpop.f32.mrb[0].mxu0
  %v3687 = vadd.f32 %v3526, %v3686
  %v3688 = vpop.f32.mrb[0].mxu0
  %v3689 = vpop.f32.mrb[0].mxu0
  %v3690 = vadd.f32 %v3529, %v3689
  %v3691 = vpop.f32.mrb[0].mxu0
  %3692 = vmatprep.mubr.bf16.mxu0 0
  %3693 = vmatmul.mubr.bf16.gmra.mrb[0].mxu0 %v2318
  %v3694 = vpop.f32.mrb[0].mxu0
  %v3695 = vadd.f32 %v3534, %v3694
  %v3696 = vpop.f32.mrb[0].mxu0
  %v3697 = vpop.f32.mrb[0].mxu0
  %v3698 = vadd.f32 %v3537, %v3697
  %v3699 = vpop.f32.mrb[0].mxu0
  %3700 = vmatprep.mubr.bf16.mxu0 0
  %3701 = vmatmul.mubr.bf16.gmra.mrb[0].mxu0 %v2327
  %v3702 = vpop.f32.mrb[0].mxu0
  %v3703 = vadd.f32 %v3542, %v3702
  %v3704 = vpop.f32.mrb[0].mxu0
  %v3705 = vpop.f32.mrb[0].mxu0
  %v3706 = vadd.f32 %v3545, %v3705
  %v3707 = vpop.f32.mrb[0].mxu0
  %3708 = vdwg.mxu0
  %v3709 = vmax.f32 %v3583, 0.0
  %v3710 = vmax.f32 %v3586, 0.0
  %v3711 = vmax.f32 %v3591, 0.0
  %v3712 = vmax.f32 %v3594, 0.0
  %v3713 = vmax.f32 %v3599, 0.0
  %v3714 = vmax.f32 %v3602, 0.0
  %v3715 = vmax.f32 %v3607, 0.0
  %v3716 = vmax.f32 %v3610, 0.0
  %v3717 = vmax.f32 %v3615, 0.0
  %v3718 = vmax.f32 %v3618, 0.0
  %v3719 = vmax.f32 %v3623, 0.0
  %v3720 = vmax.f32 %v3626, 0.0
  %v3721 = vmax.f32 %v3631, 0.0
  %v3722 = vmax.f32 %v3634, 0.0
  %v3723 = vmax.f32 %v3639, 0.0
  %v3724 = vmax.f32 %v3642, 0.0
  %v3725 = vmax.f32 %v3647, 0.0
  %v3726 = vmax.f32 %v3650, 0.0
  %v3727 = vmax.f32 %v3655, 0.0
  %v3728 = vmax.f32 %v3658, 0.0
  %v3729 = vmax.f32 %v3663, 0.0
  %v3730 = vmax.f32 %v3666, 0.0
  %v3731 = vmax.f32 %v3671, 0.0
  %v3732 = vmax.f32 %v3674, 0.0
  %v3733 = vmax.f32 %v3679, 0.0
  %v3734 = vmax.f32 %v3682, 0.0
  %v3735 = vmax.f32 %v3687, 0.0
  %v3736 = vmax.f32 %v3690, 0.0
  %v3737 = vmax.f32 %v3695, 0.0
  %v3738 = vmax.f32 %v3698, 0.0
  %v3739 = vmax.f32 %v3703, 0.0
  %v3740 = vmax.f32 %v3706, 0.0
  %v3741 = vpack.c.bf16 %v3709, %v3709
  %v3742 = vpack.c.bf16 %v3710, %v3710
  %v3743 = vpack.c.bf16 %v3711, %v3711
  %v3744 = vpack.c.bf16 %v3712, %v3712
  %v3745 = vpack.c.bf16 %v3713, %v3713
  %v3746 = vpack.c.bf16 %v3714, %v3714
  %v3747 = vpack.c.bf16 %v3715, %v3715
  %v3748 = vpack.c.bf16 %v3716, %v3716
  %v3749 = vpack.c.bf16 %v3717, %v3717
  %v3750 = vpack.c.bf16 %v3718, %v3718
  %v3751 = vpack.c.bf16 %v3719, %v3719
  %v3752 = vpack.c.bf16 %v3720, %v3720
  %v3753 = vpack.c.bf16 %v3721, %v3721
  %v3754 = vpack.c.bf16 %v3722, %v3722
  %v3755 = vpack.c.bf16 %v3723, %v3723
  %v3756 = vpack.c.bf16 %v3724, %v3724
  %v3757 = vpack.c.bf16 %v3725, %v3725
  %v3758 = vpack.c.bf16 %v3726, %v3726
  %v3759 = vpack.c.bf16 %v3727, %v3727
  %v3760 = vpack.c.bf16 %v3728, %v3728
  %v3761 = vpack.c.bf16 %v3729, %v3729
  %v3762 = vpack.c.bf16 %v3730, %v3730
  %v3763 = vpack.c.bf16 %v3731, %v3731
  %v3764 = vpack.c.bf16 %v3732, %v3732
  %v3765 = vpack.c.bf16 %v3733, %v3733
  %v3766 = vpack.c.bf16 %v3734, %v3734
  %v3767 = vpack.c.bf16 %v3735, %v3735
  %v3768 = vpack.c.bf16 %v3736, %v3736
  %v3769 = vpack.c.bf16 %v3737, %v3737
  %v3770 = vpack.c.bf16 %v3738, %v3738
  %v3771 = vpack.c.bf16 %v3739, %v3739
  %v3772 = vpack.c.bf16 %v3740, %v3740
  %3773 = vst [vmem:[%s3] sm:$0xf] %v3741
  %3774 = vst [vmem:[%s3 + $0x4] sm:$0xf] %v3742
  %3775 = vst [vmem:[%s3 + $0x8] sm:$0xf] %v3743
  %3776 = vst [vmem:[%s3 + $0xc] sm:$0xf] %v3744
  %3777 = vst [vmem:[%s3 + $0x10] sm:$0xf] %v3745
  %3778 = vst [vmem:[%s3 + $0x14] sm:$0xf] %v3746
  %3779 = vst [vmem:[%s3 + $0x18] sm:$0xf] %v3747
  %3780 = vst [vmem:[%s3 + $0x1c] sm:$0xf] %v3748
  %3781 = vst [vmem:[%s3 + $0x20] sm:$0xf] %v3749
  %3782 = vst [vmem:[%s3 + $0x24] sm:$0xf] %v3750
  %3783 = vst [vmem:[%s3 + $0x28] sm:$0xf] %v3751
  %3784 = vst [vmem:[%s3 + $0x2c] sm:$0xf] %v3752
  %3785 = vst [vmem:[%s3 + $0x30] sm:$0xf] %v3753
  %3786 = vst [vmem:[%s3 + $0x34] sm:$0xf] %v3754
  %3787 = vst [vmem:[%s3 + $0x38] sm:$0xf] %v3755
  %3788 = vst [vmem:[%s3 + $0x3c] sm:$0xf] %v3756
  %3789 = vst [vmem:[%s3 + $0x40] sm:$0xf] %v3757
  %3790 = vst [vmem:[%s3 + $0x44] sm:$0xf] %v3758
  %3791 = vst [vmem:[%s3 + $0x48] sm:$0xf] %v3759
  %3792 = vst [vmem:[%s3 + $0x4c] sm:$0xf] %v3760
  %3793 = vst [vmem:[%s3 + $0x50] sm:$0xf] %v3761
  %3794 = vst [vmem:[%s3 + $0x54] sm:$0xf] %v3762
  %3795 = vst [vmem:[%s3 + $0x58] sm:$0xf] %v3763
  %3796 = vst [vmem:[%s3 + $0x5c] sm:$0xf] %v3764
  %3797 = vst [vmem:[%s3 + $0x60] sm:$0xf] %v3765
  %3798 = vst [vmem:[%s3 + $0x64] sm:$0xf] %v3766
  %3799 = vst [vmem:[%s3 + $0x68] sm:$0xf] %v3767
  %3800 = vst [vmem:[%s3 + $0x6c] sm:$0xf] %v3768
  %3801 = vst [vmem:[%s3 + $0x70] sm:$0xf] %v3769
  %3802 = vst [vmem:[%s3 + $0x74] sm:$0xf] %v3770
  %3803 = vst [vmem:[%s3 + $0x78] sm:$0xf] %v3771
  %3804 = vst [vmem:[%s3 + $0x7c] sm:$0xf] %v3772
  // Predicated region
  $region14: #{dqn_forward.6} parent=0 // pred_check
    _
  $region15: #{dqn_forward.6} parent=0 // pred_check_branch
    %3806 = sbr.rel (0) target = $region17
  $region16: #{dqn_forward.6} parent=0 // pred_region
    _
  $region17: #{dqn_forward.6} parent=0 // pred_fallthru
    _
  // Predicated region
  $region18: #{dqn_forward.6} parent=0 // pred_check
    _
  $region19: #{dqn_forward.6} parent=0 // pred_check_branch
    %3808 = sbr.rel (0) target = $region21
  $region20: #{dqn_forward.6} parent=0 // pred_region
    _
  $region21: #{dqn_forward.6} parent=0 // pred_fallthru
    _

// kernel: dqn_forward.7
$region0: #{dqn_forward.7}
  #allocation0 [shape = 'u32[]', space=smem, size = 0x4, offset = 0x4, fixed_abs, tag = 'smem constant byte address 0x4 - core index']
  #allocation1 [shape = 'u32[144,128]{1,0:T(1,128)}', space=vmem, size = 0x12000, scoped, tag = 'internal scratch']
  %s0 = inlined_call_operand.vmem [shape: bf16[4,8,10,128], index: 0, kind: input, shape index: {}]
  %s1 = inlined_call_operand.vmem [shape: bf16[1152,128], index: 1, kind: input, shape index: {}]
  %s2 = inlined_call_operand.vmem [shape: f32[1,128], index: 2, kind: input, shape index: {}]
  %s3 = inlined_call_operand.vmem [shape: bf16[4,6,8,128], index: 3, kind: output, shape index: {}]
  %s4 = sld [smem:[#allocation0]]
  $region22: #{dqn_forward.7} parent=0
    _
  %s6 = ssub.s32 1, %s4
  %s7 = scalar_select 0, %s6, %s4
  // Predicated region
  $region2: #{dqn_forward.7} parent=0 // pred_check
    _
  $region3: #{dqn_forward.7} parent=0 // pred_check_branch
    %9 = sbr.rel (0) target = $region5
  $region4: #{dqn_forward.7} parent=0 // pred_region
    _
  $region5: #{dqn_forward.7} parent=0 // pred_fallthru
    _
  // Predicated region
  $region6: #{dqn_forward.7} parent=0 // pred_check
    _
  $region7: #{dqn_forward.7} parent=0 // pred_check_branch
    %11 = sbr.rel (0) target = $region9
  $region8: #{dqn_forward.7} parent=0 // pred_region
    _
  $region9: #{dqn_forward.7} parent=0 // pred_fallthru
    _
  // Predicated region
  $region10: #{dqn_forward.7} parent=0 // pred_check
    _
  $region11: #{dqn_forward.7} parent=0 // pred_check_branch
    %13 = sbr.rel (0) target = $region13
  $region12: #{dqn_forward.7} parent=0 // pred_region
    _
  $region13: #{dqn_forward.7} parent=0 // pred_fallthru
    _
  %v15 = vld [vmem:[%s0] sm:$0xf]
  %v16 = vld [vmem:[%s0 + $0x8] sm:$0xf]
  %v17 = vld [vmem:[%s0 + $0x10] sm:$0xf]
  %v18 = vld [vmem:[%s0 + $0x18] sm:$0xf]
  %v19 = vld [vmem:[%s0 + $0x20] sm:$0xf]
  %v20 = vld [vmem:[%s0 + $0x28] sm:$0xf]
  %v21 = vld [vmem:[%s0 + $0x40] sm:$0xf]
  %v22 = vld [vmem:[%s0 + $0x48] sm:$0xf]
  %v23 = vld [vmem:[%s0 + $0x50] sm:$0xf]
  %v24 = vld [vmem:[%s0 + $0x58] sm:$0xf]
  %v25 = vld [vmem:[%s0 + $0x60] sm:$0xf]
  %v26 = vld [vmem:[%s0 + $0x68] sm:$0xf]
  %v27 = vld [vmem:[%s0 + $0x80] sm:$0xf]
  %v28 = vld [vmem:[%s0 + $0x88] sm:$0xf]
  %v29 = vld [vmem:[%s0 + $0x90] sm:$0xf]
  %v30 = vld [vmem:[%s0 + $0x98] sm:$0xf]
  %v31 = vld [vmem:[%s0 + $0xa0] sm:$0xf]
  %v32 = vld [vmem:[%s0 + $0xa8] sm:$0xf]
  %v33 = vld [vmem:[%s0 + $0xc0] sm:$0xf]
  %v34 = vld [vmem:[%s0 + $0xc8] sm:$0xf]
  %v35 = vld [vmem:[%s0 + $0xd0] sm:$0xf]
  %v36 = vld [vmem:[%s0 + $0xd8] sm:$0xf]
  %v37 = vld [vmem:[%s0 + $0xe0] sm:$0xf]
  %v38 = vld [vmem:[%s0 + $0xe8] sm:$0xf]
  %v39 = vld [vmem:[%s0 + $0x4] sm:$0x1]
  %v40 = vld [vmem:[%s0 + $0xc] sm:$0x1]
  %v41 = vld [vmem:[%s0 + $0x14] sm:$0x1]
  %v42 = vld [vmem:[%s0 + $0x1c] sm:$0x1]
  %v43 = vld [vmem:[%s0 + $0x24] sm:$0x1]
  %v44 = vld [vmem:[%s0 + $0x2c] sm:$0x1]
  %v45 = vld [vmem:[%s0 + $0x44] sm:$0x1]
  %v46 = vld [vmem:[%s0 + $0x4c] sm:$0x1]
  %v47 = vld [vmem:[%s0 + $0x54] sm:$0x1]
  %v48 = vld [vmem:[%s0 + $0x5c] sm:$0x1]
  %v49 = vld [vmem:[%s0 + $0x64] sm:$0x1]
  %v50 = vld [vmem:[%s0 + $0x6c] sm:$0x1]
  %v51 = vld [vmem:[%s0 + $0x84] sm:$0x1]
  %v52 = vld [vmem:[%s0 + $0x8c] sm:$0x1]
  %v53 = vld [vmem:[%s0 + $0x94] sm:$0x1]
  %v54 = vld [vmem:[%s0 + $0x9c] sm:$0x1]
  %v55 = vld [vmem:[%s0 + $0xa4] sm:$0x1]
  %v56 = vld [vmem:[%s0 + $0xac] sm:$0x1]
  %v57 = vld [vmem:[%s0 + $0xc4] sm:$0x1]
  %v58 = vld [vmem:[%s0 + $0xcc] sm:$0x1]
  %v59 = vld [vmem:[%s0 + $0xd4] sm:$0x1]
  %v60 = vld [vmem:[%s0 + $0xdc] sm:$0x1]
  %v61 = vld [vmem:[%s0 + $0xe4] sm:$0x1]
  %v62 = vld [vmem:[%s0 + $0xec] sm:$0x1]
  %v63 = vld [vmem:[%s0] sm:$0xe]
  %v64 = vld [vmem:[%s0 + $0x8] sm:$0xe]
  %v65 = vld [vmem:[%s0 + $0x10] sm:$0xe]
  %v66 = vld [vmem:[%s0 + $0x18] sm:$0xe]
  %v67 = vld [vmem:[%s0 + $0x20] sm:$0xe]
  %v68 = vld [vmem:[%s0 + $0x28] sm:$0xe]
  %v69 = vld [vmem:[%s0 + $0x40] sm:$0xe]
  %v70 = vld [vmem:[%s0 + $0x48] sm:$0xe]
  %v71 = vld [vmem:[%s0 + $0x50] sm:$0xe]
  %v72 = vld [vmem:[%s0 + $0x58] sm:$0xe]
  %v73 = vld [vmem:[%s0 + $0x60] sm:$0xe]
  %v74 = vld [vmem:[%s0 + $0x68] sm:$0xe]
  %v75 = vld [vmem:[%s0 + $0x80] sm:$0xe]
  %v76 = vld [vmem:[%s0 + $0x88] sm:$0xe]
  %v77 = vld [vmem:[%s0 + $0x90] sm:$0xe]
  %v78 = vld [vmem:[%s0 + $0x98] sm:$0xe]
  %v79 = vld [vmem:[%s0 + $0xa0] sm:$0xe]
  %v80 = vld [vmem:[%s0 + $0xa8] sm:$0xe]
  %v81 = vld [vmem:[%s0 + $0xc0] sm:$0xe]
  %v82 = vld [vmem:[%s0 + $0xc8] sm:$0xe]
  %v83 = vld [vmem:[%s0 + $0xd0] sm:$0xe]
  %v84 = vld [vmem:[%s0 + $0xd8] sm:$0xe]
  %v85 = vld [vmem:[%s0 + $0xe0] sm:$0xe]
  %v86 = vld [vmem:[%s0 + $0xe8] sm:$0xe]
  %s87 = scalar_lea.vmem %s0, 8
  %v88 = vld [vmem:[%s87] sm:$0xf]
  %v89 = vld [vmem:[%s87 + $0x8] sm:$0xf]
  %v90 = vld [vmem:[%s87 + $0x10] sm:$0xf]
  %v91 = vld [vmem:[%s87 + $0x18] sm:$0xf]
  %v92 = vld [vmem:[%s87 + $0x20] sm:$0xf]
  %v93 = vld [vmem:[%s87 + $0x28] sm:$0xf]
  %v94 = vld [vmem:[%s87 + $0x40] sm:$0xf]
  %v95 = vld [vmem:[%s87 + $0x48] sm:$0xf]
  %v96 = vld [vmem:[%s87 + $0x50] sm:$0xf]
  %v97 = vld [vmem:[%s87 + $0x58] sm:$0xf]
  %v98 = vld [vmem:[%s87 + $0x60] sm:$0xf]
  %v99 = vld [vmem:[%s87 + $0x68] sm:$0xf]
  %v100 = vld [vmem:[%s87 + $0x80] sm:$0xf]
  %v101 = vld [vmem:[%s87 + $0x88] sm:$0xf]
  %v102 = vld [vmem:[%s87 + $0x90] sm:$0xf]
  %v103 = vld [vmem:[%s87 + $0x98] sm:$0xf]
  %v104 = vld [vmem:[%s87 + $0xa0] sm:$0xf]
  %v105 = vld [vmem:[%s87 + $0xa8] sm:$0xf]
  %v106 = vld [vmem:[%s87 + $0xc0] sm:$0xf]
  %v107 = vld [vmem:[%s87 + $0xc8] sm:$0xf]
  %v108 = vld [vmem:[%s87 + $0xd0] sm:$0xf]
  %v109 = vld [vmem:[%s87 + $0xd8] sm:$0xf]
  %v110 = vld [vmem:[%s87 + $0xe0] sm:$0xf]
  %v111 = vld [vmem:[%s87 + $0xe8] sm:$0xf]
  %v112 = vld [vmem:[%s87 + $0x4] sm:$0x1]
  %v113 = vld [vmem:[%s87 + $0xc] sm:$0x1]
  %v114 = vld [vmem:[%s87 + $0x14] sm:$0x1]
  %v115 = vld [vmem:[%s87 + $0x1c] sm:$0x1]
  %v116 = vld [vmem:[%s87 + $0x24] sm:$0x1]
  %v117 = vld [vmem:[%s87 + $0x2c] sm:$0x1]
  %v118 = vld [vmem:[%s87 + $0x44] sm:$0x1]
  %v119 = vld [vmem:[%s87 + $0x4c] sm:$0x1]
  %v120 = vld [vmem:[%s87 + $0x54] sm:$0x1]
  %v121 = vld [vmem:[%s87 + $0x5c] sm:$0x1]
  %v122 = vld [vmem:[%s87 + $0x64] sm:$0x1]
  %v123 = vld [vmem:[%s87 + $0x6c] sm:$0x1]
  %v124 = vld [vmem:[%s87 + $0x84] sm:$0x1]
  %v125 = vld [vmem:[%s87 + $0x8c] sm:$0x1]
  %v126 = vld [vmem:[%s87 + $0x94] sm:$0x1]
  %v127 = vld [vmem:[%s87 + $0x9c] sm:$0x1]
  %v128 = vld [vmem:[%s87 + $0xa4] sm:$0x1]
  %v129 = vld [vmem:[%s87 + $0xac] sm:$0x1]
  %v130 = vld [vmem:[%s87 + $0xc4] sm:$0x1]
  %v131 = vld [vmem:[%s87 + $0xcc] sm:$0x1]
  %v132 = vld [vmem:[%s87 + $0xd4] sm:$0x1]
  %v133 = vld [vmem:[%s87 + $0xdc] sm:$0x1]
  %v134 = vld [vmem:[%s87 + $0xe4] sm:$0x1]
  %v135 = vld [vmem:[%s87 + $0xec] sm:$0x1]
  %v136 = vld [vmem:[%s87] sm:$0xe]
  %v137 = vld [vmem:[%s87 + $0x8] sm:$0xe]
  %v138 = vld [vmem:[%s87 + $0x10] sm:$0xe]
  %v139 = vld [vmem:[%s87 + $0x18] sm:$0xe]
  %v140 = vld [vmem:[%s87 + $0x20] sm:$0xe]
  %v141 = vld [vmem:[%s87 + $0x28] sm:$0xe]
  %v142 = vld [vmem:[%s87 + $0x40] sm:$0xe]
  %v143 = vld [vmem:[%s87 + $0x48] sm:$0xe]
  %v144 = vld [vmem:[%s87 + $0x50] sm:$0xe]
  %v145 = vld [vmem:[%s87 + $0x58] sm:$0xe]
  %v146 = vld [vmem:[%s87 + $0x60] sm:$0xe]
  %v147 = vld [vmem:[%s87 + $0x68] sm:$0xe]
  %v148 = vld [vmem:[%s87 + $0x80] sm:$0xe]
  %v149 = vld [vmem:[%s87 + $0x88] sm:$0xe]
  %v150 = vld [vmem:[%s87 + $0x90] sm:$0xe]
  %v151 = vld [vmem:[%s87 + $0x98] sm:$0xe]
  %v152 = vld [vmem:[%s87 + $0xa0] sm:$0xe]
  %v153 = vld [vmem:[%s87 + $0xa8] sm:$0xe]
  %v154 = vld [vmem:[%s87 + $0xc0] sm:$0xe]
  %v155 = vld [vmem:[%s87 + $0xc8] sm:$0xe]
  %v156 = vld [vmem:[%s87 + $0xd0] sm:$0xe]
  %v157 = vld [vmem:[%s87 + $0xd8] sm:$0xe]
  %v158 = vld [vmem:[%s87 + $0xe0] sm:$0xe]
  %v159 = vld [vmem:[%s87 + $0xe8] sm:$0xe]
  %s160 = scalar_lea.vmem %s0, 16
  %v161 = vld [vmem:[%s160] sm:$0xf]
  %v162 = vld [vmem:[%s160 + $0x8] sm:$0xf]
  %v163 = vld [vmem:[%s160 + $0x10] sm:$0xf]
  %v164 = vld [vmem:[%s160 + $0x18] sm:$0xf]
  %v165 = vld [vmem:[%s160 + $0x20] sm:$0xf]
  %v166 = vld [vmem:[%s160 + $0x28] sm:$0xf]
  %v167 = vld [vmem:[%s160 + $0x40] sm:$0xf]
  %v168 = vld [vmem:[%s160 + $0x48] sm:$0xf]
  %v169 = vld [vmem:[%s160 + $0x50] sm:$0xf]
  %v170 = vld [vmem:[%s160 + $0x58] sm:$0xf]
  %v171 = vld [vmem:[%s160 + $0x60] sm:$0xf]
  %v172 = vld [vmem:[%s160 + $0x68] sm:$0xf]
  %v173 = vld [vmem:[%s160 + $0x80] sm:$0xf]
  %v174 = vld [vmem:[%s160 + $0x88] sm:$0xf]
  %v175 = vld [vmem:[%s160 + $0x90] sm:$0xf]
  %v176 = vld [vmem:[%s160 + $0x98] sm:$0xf]
  %v177 = vld [vmem:[%s160 + $0xa0] sm:$0xf]
  %v178 = vld [vmem:[%s160 + $0xa8] sm:$0xf]
  %v179 = vld [vmem:[%s160 + $0xc0] sm:$0xf]
  %v180 = vld [vmem:[%s160 + $0xc8] sm:$0xf]
  %v181 = vld [vmem:[%s160 + $0xd0] sm:$0xf]
  %v182 = vld [vmem:[%s160 + $0xd8] sm:$0xf]
  %v183 = vld [vmem:[%s160 + $0xe0] sm:$0xf]
  %v184 = vld [vmem:[%s160 + $0xe8] sm:$0xf]
  %v185 = vld [vmem:[%s160 + $0x4] sm:$0x1]
  %v186 = vld [vmem:[%s160 + $0xc] sm:$0x1]
  %v187 = vld [vmem:[%s160 + $0x14] sm:$0x1]
  %v188 = vld [vmem:[%s160 + $0x1c] sm:$0x1]
  %v189 = vld [vmem:[%s160 + $0x24] sm:$0x1]
  %v190 = vld [vmem:[%s160 + $0x2c] sm:$0x1]
  %v191 = vld [vmem:[%s160 + $0x44] sm:$0x1]
  %v192 = vld [vmem:[%s160 + $0x4c] sm:$0x1]
  %v193 = vld [vmem:[%s160 + $0x54] sm:$0x1]
  %v194 = vld [vmem:[%s160 + $0x5c] sm:$0x1]
  %v195 = vld [vmem:[%s160 + $0x64] sm:$0x1]
  %v196 = vld [vmem:[%s160 + $0x6c] sm:$0x1]
  %v197 = vld [vmem:[%s160 + $0x84] sm:$0x1]
  %v198 = vld [vmem:[%s160 + $0x8c] sm:$0x1]
  %v199 = vld [vmem:[%s160 + $0x94] sm:$0x1]
  %v200 = vld [vmem:[%s160 + $0x9c] sm:$0x1]
  %v201 = vld [vmem:[%s160 + $0xa4] sm:$0x1]
  %v202 = vld [vmem:[%s160 + $0xac] sm:$0x1]
  %v203 = vld [vmem:[%s160 + $0xc4] sm:$0x1]
  %v204 = vld [vmem:[%s160 + $0xcc] sm:$0x1]
  %v205 = vld [vmem:[%s160 + $0xd4] sm:$0x1]
  %v206 = vld [vmem:[%s160 + $0xdc] sm:$0x1]
  %v207 = vld [vmem:[%s160 + $0xe4] sm:$0x1]
  %v208 = vld [vmem:[%s160 + $0xec] sm:$0x1]
  %v209 = vld [vmem:[%s160] sm:$0xe]
  %v210 = vld [vmem:[%s160 + $0x8] sm:$0xe]
  %v211 = vld [vmem:[%s160 + $0x10] sm:$0xe]
  %v212 = vld [vmem:[%s160 + $0x18] sm:$0xe]
  %v213 = vld [vmem:[%s160 + $0x20] sm:$0xe]
  %v214 = vld [vmem:[%s160 + $0x28] sm:$0xe]
  %v215 = vld [vmem:[%s160 + $0x40] sm:$0xe]
  %v216 = vld [vmem:[%s160 + $0x48] sm:$0xe]
  %v217 = vld [vmem:[%s160 + $0x50] sm:$0xe]
  %v218 = vld [vmem:[%s160 + $0x58] sm:$0xe]
  %v219 = vld [vmem:[%s160 + $0x60] sm:$0xe]
  %v220 = vld [vmem:[%s160 + $0x68] sm:$0xe]
  %v221 = vld [vmem:[%s160 + $0x80] sm:$0xe]
  %v222 = vld [vmem:[%s160 + $0x88] sm:$0xe]
  %v223 = vld [vmem:[%s160 + $0x90] sm:$0xe]
  %v224 = vld [vmem:[%s160 + $0x98] sm:$0xe]
  %v225 = vld [vmem:[%s160 + $0xa0] sm:$0xe]
  %v226 = vld [vmem:[%s160 + $0xa8] sm:$0xe]
  %v227 = vld [vmem:[%s160 + $0xc0] sm:$0xe]
  %v228 = vld [vmem:[%s160 + $0xc8] sm:$0xe]
  %v229 = vld [vmem:[%s160 + $0xd0] sm:$0xe]
  %v230 = vld [vmem:[%s160 + $0xd8] sm:$0xe]
  %v231 = vld [vmem:[%s160 + $0xe0] sm:$0xe]
  %v232 = vld [vmem:[%s160 + $0xe8] sm:$0xe]
  %v281 = vunpack.c.l.b16 %v15
  %v282 = vunpack.c.l.b16 %v39
  %v283 = vunpack.c.l.b16 %v16
  %v284 = vunpack.c.l.b16 %v40
  %v285 = vunpack.c.l.b16 %v17
  %v286 = vunpack.c.l.b16 %v41
  %v287 = vunpack.c.l.b16 %v18
  %v288 = vunpack.c.l.b16 %v42
  %v289 = vunpack.c.l.b16 %v19
  %v290 = vunpack.c.l.b16 %v43
  %v291 = vunpack.c.l.b16 %v20
  %v292 = vunpack.c.l.b16 %v44
  %v293 = vunpack.c.l.b16 %v21
  %v294 = vunpack.c.l.b16 %v45
  %v295 = vunpack.c.l.b16 %v22
  %v296 = vunpack.c.l.b16 %v46
  %v297 = vunpack.c.l.b16 %v23
  %v298 = vunpack.c.l.b16 %v47
  %v299 = vunpack.c.l.b16 %v24
  %v300 = vunpack.c.l.b16 %v48
  %v301 = vunpack.c.l.b16 %v25
  %v302 = vunpack.c.l.b16 %v49
  %v303 = vunpack.c.l.b16 %v26
  %v304 = vunpack.c.l.b16 %v50
  %v305 = vunpack.c.l.b16 %v27
  %v306 = vunpack.c.l.b16 %v51
  %v307 = vunpack.c.l.b16 %v28
  %v308 = vunpack.c.l.b16 %v52
  %v309 = vunpack.c.l.b16 %v29
  %v310 = vunpack.c.l.b16 %v53
  %v311 = vunpack.c.l.b16 %v30
  %v312 = vunpack.c.l.b16 %v54
  %v313 = vunpack.c.l.b16 %v31
  %v314 = vunpack.c.l.b16 %v55
  %v315 = vunpack.c.l.b16 %v32
  %v316 = vunpack.c.l.b16 %v56
  %v317 = vunpack.c.l.b16 %v33
  %v318 = vunpack.c.l.b16 %v57
  %v319 = vunpack.c.l.b16 %v34
  %v320 = vunpack.c.l.b16 %v58
  %v321 = vunpack.c.l.b16 %v35
  %v322 = vunpack.c.l.b16 %v59
  %v323 = vunpack.c.l.b16 %v36
  %v324 = vunpack.c.l.b16 %v60
  %v325 = vunpack.c.l.b16 %v37
  %v326 = vunpack.c.l.b16 %v61
  %v327 = vunpack.c.l.b16 %v38
  %v328 = vunpack.c.l.b16 %v62
  %v329 = vpack.c.b16 %v282, %v281
  %v330 = vpack.c.b16 %v284, %v283
  %v331 = vpack.c.b16 %v286, %v285
  %v332 = vpack.c.b16 %v288, %v287
  %v333 = vpack.c.b16 %v290, %v289
  %v334 = vpack.c.b16 %v292, %v291
  %v335 = vpack.c.b16 %v294, %v293
  %v336 = vpack.c.b16 %v296, %v295
  %v337 = vpack.c.b16 %v298, %v297
  %v338 = vpack.c.b16 %v300, %v299
  %v339 = vpack.c.b16 %v302, %v301
  %v340 = vpack.c.b16 %v304, %v303
  %v341 = vpack.c.b16 %v306, %v305
  %v342 = vpack.c.b16 %v308, %v307
  %v343 = vpack.c.b16 %v310, %v309
  %v344 = vpack.c.b16 %v312, %v311
  %v345 = vpack.c.b16 %v314, %v313
  %v346 = vpack.c.b16 %v316, %v315
  %v347 = vpack.c.b16 %v318, %v317
  %v348 = vpack.c.b16 %v320, %v319
  %v349 = vpack.c.b16 %v322, %v321
  %v350 = vpack.c.b16 %v324, %v323
  %v351 = vpack.c.b16 %v326, %v325
  %v352 = vpack.c.b16 %v328, %v327
  %v354 = vshrl.u32 %v329, 16
  %v356 = vshll.u32 %v329, 16
  %v358 = vrot.slane %v356, 1
  %v359 = vor.u32 %v354, %v358
  %v361 = vshrl.u32 %v330, 16
  %v363 = vshll.u32 %v330, 16
  %v365 = vrot.slane %v363, 1
  %v366 = vor.u32 %v361, %v365
  %v368 = vshrl.u32 %v331, 16
  %v370 = vshll.u32 %v331, 16
  %v372 = vrot.slane %v370, 1
  %v373 = vor.u32 %v368, %v372
  %v375 = vshrl.u32 %v332, 16
  %v377 = vshll.u32 %v332, 16
  %v379 = vrot.slane %v377, 1
  %v380 = vor.u32 %v375, %v379
  %v382 = vshrl.u32 %v333, 16
  %v384 = vshll.u32 %v333, 16
  %v386 = vrot.slane %v384, 1
  %v387 = vor.u32 %v382, %v386
  %v389 = vshrl.u32 %v334, 16
  %v391 = vshll.u32 %v334, 16
  %v393 = vrot.slane %v391, 1
  %v394 = vor.u32 %v389, %v393
  %v396 = vshrl.u32 %v335, 16
  %v398 = vshll.u32 %v335, 16
  %v400 = vrot.slane %v398, 1
  %v401 = vor.u32 %v396, %v400
  %v403 = vshrl.u32 %v336, 16
  %v405 = vshll.u32 %v336, 16
  %v407 = vrot.slane %v405, 1
  %v408 = vor.u32 %v403, %v407
  %v410 = vshrl.u32 %v337, 16
  %v412 = vshll.u32 %v337, 16
  %v414 = vrot.slane %v412, 1
  %v415 = vor.u32 %v410, %v414
  %v417 = vshrl.u32 %v338, 16
  %v419 = vshll.u32 %v338, 16
  %v421 = vrot.slane %v419, 1
  %v422 = vor.u32 %v417, %v421
  %v424 = vshrl.u32 %v339, 16
  %v426 = vshll.u32 %v339, 16
  %v428 = vrot.slane %v426, 1
  %v429 = vor.u32 %v424, %v428
  %v431 = vshrl.u32 %v340, 16
  %v433 = vshll.u32 %v340, 16
  %v435 = vrot.slane %v433, 1
  %v436 = vor.u32 %v431, %v435
  %v438 = vshrl.u32 %v341, 16
  %v440 = vshll.u32 %v341, 16
  %v442 = vrot.slane %v440, 1
  %v443 = vor.u32 %v438, %v442
  %v445 = vshrl.u32 %v342, 16
  %v447 = vshll.u32 %v342, 16
  %v449 = vrot.slane %v447, 1
  %v450 = vor.u32 %v445, %v449
  %v452 = vshrl.u32 %v343, 16
  %v454 = vshll.u32 %v343, 16
  %v456 = vrot.slane %v454, 1
  %v457 = vor.u32 %v452, %v456
  %v459 = vshrl.u32 %v344, 16
  %v461 = vshll.u32 %v344, 16
  %v463 = vrot.slane %v461, 1
  %v464 = vor.u32 %v459, %v463
  %v466 = vshrl.u32 %v345, 16
  %v468 = vshll.u32 %v345, 16
  %v470 = vrot.slane %v468, 1
  %v471 = vor.u32 %v466, %v470
  %v473 = vshrl.u32 %v346, 16
  %v475 = vshll.u32 %v346, 16
  %v477 = vrot.slane %v475, 1
  %v478 = vor.u32 %v473, %v477
  %v480 = vshrl.u32 %v347, 16
  %v482 = vshll.u32 %v347, 16
  %v484 = vrot.slane %v482, 1
  %v485 = vor.u32 %v480, %v484
  %v487 = vshrl.u32 %v348, 16
  %v489 = vshll.u32 %v348, 16
  %v491 = vrot.slane %v489, 1
  %v492 = vor.u32 %v487, %v491
  %v494 = vshrl.u32 %v349, 16
  %v496 = vshll.u32 %v349, 16
  %v498 = vrot.slane %v496, 1
  %v499 = vor.u32 %v494, %v498
  %v501 = vshrl.u32 %v350, 16
  %v503 = vshll.u32 %v350, 16
  %v505 = vrot.slane %v503, 1
  %v506 = vor.u32 %v501, %v505
  %v508 = vshrl.u32 %v351, 16
  %v510 = vshll.u32 %v351, 16
  %v512 = vrot.slane %v510, 1
  %v513 = vor.u32 %v508, %v512
  %v515 = vshrl.u32 %v352, 16
  %v517 = vshll.u32 %v352, 16
  %v519 = vrot.slane %v517, 1
  %v520 = vor.u32 %v515, %v519
  %v545 = vunpack.c.l.b16 %v63
  %v546 = vunpack.c.l.b16 %v64
  %v547 = vunpack.c.l.b16 %v65
  %v548 = vunpack.c.l.b16 %v66
  %v549 = vunpack.c.l.b16 %v67
  %v550 = vunpack.c.l.b16 %v68
  %v551 = vunpack.c.l.b16 %v69
  %v552 = vunpack.c.l.b16 %v70
  %v553 = vunpack.c.l.b16 %v71
  %v554 = vunpack.c.l.b16 %v72
  %v555 = vunpack.c.l.b16 %v73
  %v556 = vunpack.c.l.b16 %v74
  %v557 = vunpack.c.l.b16 %v75
  %v558 = vunpack.c.l.b16 %v76
  %v559 = vunpack.c.l.b16 %v77
  %v560 = vunpack.c.l.b16 %v78
  %v561 = vunpack.c.l.b16 %v79
  %v562 = vunpack.c.l.b16 %v80
  %v563 = vunpack.c.l.b16 %v81
  %v564 = vunpack.c.l.b16 %v82
  %v565 = vunpack.c.l.b16 %v83
  %v566 = vunpack.c.l.b16 %v84
  %v567 = vunpack.c.l.b16 %v85
  %v568 = vunpack.c.l.b16 %v86
  %v569 = vpack.c.b16 %v282, %v545
  %v570 = vpack.c.b16 %v284, %v546
  %v571 = vpack.c.b16 %v286, %v547
  %v572 = vpack.c.b16 %v288, %v548
  %v573 = vpack.c.b16 %v290, %v549
  %v574 = vpack.c.b16 %v292, %v550
  %v575 = vpack.c.b16 %v294, %v551
  %v576 = vpack.c.b16 %v296, %v552
  %v577 = vpack.c.b16 %v298, %v553
  %v578 = vpack.c.b16 %v300, %v554
  %v579 = vpack.c.b16 %v302, %v555
  %v580 = vpack.c.b16 %v304, %v556
  %v581 = vpack.c.b16 %v306, %v557
  %v582 = vpack.c.b16 %v308, %v558
  %v583 = vpack.c.b16 %v310, %v559
  %v584 = vpack.c.b16 %v312, %v560
  %v585 = vpack.c.b16 %v314, %v561
  %v586 = vpack.c.b16 %v316, %v562
  %v587 = vpack.c.b16 %v318, %v563
  %v588 = vpack.c.b16 %v320, %v564
  %v589 = vpack.c.b16 %v322, %v565
  %v590 = vpack.c.b16 %v324, %v566
  %v591 = vpack.c.b16 %v326, %v567
  %v592 = vpack.c.b16 %v328, %v568
  %v593 = vrot.slane %v569, 1
  %v594 = vrot.slane %v570, 1
  %v595 = vrot.slane %v571, 1
  %v596 = vrot.slane %v572, 1
  %v597 = vrot.slane %v573, 1
  %v598 = vrot.slane %v574, 1
  %v599 = vrot.slane %v575, 1
  %v600 = vrot.slane %v576, 1
  %v601 = vrot.slane %v577, 1
  %v602 = vrot.slane %v578, 1
  %v603 = vrot.slane %v579, 1
  %v604 = vrot.slane %v580, 1
  %v605 = vrot.slane %v581, 1
  %v606 = vrot.slane %v582, 1
  %v607 = vrot.slane %v583, 1
  %v608 = vrot.slane %v584, 1
  %v609 = vrot.slane %v585, 1
  %v610 = vrot.slane %v586, 1
  %v611 = vrot.slane %v587, 1
  %v612 = vrot.slane %v588, 1
  %v613 = vrot.slane %v589, 1
  %v614 = vrot.slane %v590, 1
  %v615 = vrot.slane %v591, 1
  %v616 = vrot.slane %v592, 1
  %v665 = vunpack.c.l.b16 %v88
  %v666 = vunpack.c.l.b16 %v112
  %v667 = vunpack.c.l.b16 %v89
  %v668 = vunpack.c.l.b16 %v113
  %v669 = vunpack.c.l.b16 %v90
  %v670 = vunpack.c.l.b16 %v114
  %v671 = vunpack.c.l.b16 %v91
  %v672 = vunpack.c.l.b16 %v115
  %v673 = vunpack.c.l.b16 %v92
  %v674 = vunpack.c.l.b16 %v116
  %v675 = vunpack.c.l.b16 %v93
  %v676 = vunpack.c.l.b16 %v117
  %v677 = vunpack.c.l.b16 %v94
  %v678 = vunpack.c.l.b16 %v118
  %v679 = vunpack.c.l.b16 %v95
  %v680 = vunpack.c.l.b16 %v119
  %v681 = vunpack.c.l.b16 %v96
  %v682 = vunpack.c.l.b16 %v120
  %v683 = vunpack.c.l.b16 %v97
  %v684 = vunpack.c.l.b16 %v121
  %v685 = vunpack.c.l.b16 %v98
  %v686 = vunpack.c.l.b16 %v122
  %v687 = vunpack.c.l.b16 %v99
  %v688 = vunpack.c.l.b16 %v123
  %v689 = vunpack.c.l.b16 %v100
  %v690 = vunpack.c.l.b16 %v124
  %v691 = vunpack.c.l.b16 %v101
  %v692 = vunpack.c.l.b16 %v125
  %v693 = vunpack.c.l.b16 %v102
  %v694 = vunpack.c.l.b16 %v126
  %v695 = vunpack.c.l.b16 %v103
  %v696 = vunpack.c.l.b16 %v127
  %v697 = vunpack.c.l.b16 %v104
  %v698 = vunpack.c.l.b16 %v128
  %v699 = vunpack.c.l.b16 %v105
  %v700 = vunpack.c.l.b16 %v129
  %v701 = vunpack.c.l.b16 %v106
  %v702 = vunpack.c.l.b16 %v130
  %v703 = vunpack.c.l.b16 %v107
  %v704 = vunpack.c.l.b16 %v131
  %v705 = vunpack.c.l.b16 %v108
  %v706 = vunpack.c.l.b16 %v132
  %v707 = vunpack.c.l.b16 %v109
  %v708 = vunpack.c.l.b16 %v133
  %v709 = vunpack.c.l.b16 %v110
  %v710 = vunpack.c.l.b16 %v134
  %v711 = vunpack.c.l.b16 %v111
  %v712 = vunpack.c.l.b16 %v135
  %v713 = vpack.c.b16 %v666, %v665
  %v714 = vpack.c.b16 %v668, %v667
  %v715 = vpack.c.b16 %v670, %v669
  %v716 = vpack.c.b16 %v672, %v671
  %v717 = vpack.c.b16 %v674, %v673
  %v718 = vpack.c.b16 %v676, %v675
  %v719 = vpack.c.b16 %v678, %v677
  %v720 = vpack.c.b16 %v680, %v679
  %v721 = vpack.c.b16 %v682, %v681
  %v722 = vpack.c.b16 %v684, %v683
  %v723 = vpack.c.b16 %v686, %v685
  %v724 = vpack.c.b16 %v688, %v687
  %v725 = vpack.c.b16 %v690, %v689
  %v726 = vpack.c.b16 %v692, %v691
  %v727 = vpack.c.b16 %v694, %v693
  %v728 = vpack.c.b16 %v696, %v695
  %v729 = vpack.c.b16 %v698, %v697
  %v730 = vpack.c.b16 %v700, %v699
  %v731 = vpack.c.b16 %v702, %v701
  %v732 = vpack.c.b16 %v704, %v703
  %v733 = vpack.c.b16 %v706, %v705
  %v734 = vpack.c.b16 %v708, %v707
  %v735 = vpack.c.b16 %v710, %v709
  %v736 = vpack.c.b16 %v712, %v711
  %v738 = vshrl.u32 %v713, 16
  %v740 = vshll.u32 %v713, 16
  %v742 = vrot.slane %v740, 1
  %v743 = vor.u32 %v738, %v742
  %v745 = vshrl.u32 %v714, 16
  %v747 = vshll.u32 %v714, 16
  %v749 = vrot.slane %v747, 1
  %v750 = vor.u32 %v745, %v749
  %v752 = vshrl.u32 %v715, 16
  %v754 = vshll.u32 %v715, 16
  %v756 = vrot.slane %v754, 1
  %v757 = vor.u32 %v752, %v756
  %v759 = vshrl.u32 %v716, 16
  %v761 = vshll.u32 %v716, 16
  %v763 = vrot.slane %v761, 1
  %v764 = vor.u32 %v759, %v763
  %v766 = vshrl.u32 %v717, 16
  %v768 = vshll.u32 %v717, 16
  %v770 = vrot.slane %v768, 1
  %v771 = vor.u32 %v766, %v770
  %v773 = vshrl.u32 %v718, 16
  %v775 = vshll.u32 %v718, 16
  %v777 = vrot.slane %v775, 1
  %v778 = vor.u32 %v773, %v777
  %v780 = vshrl.u32 %v719, 16
  %v782 = vshll.u32 %v719, 16
  %v784 = vrot.slane %v782, 1
  %v785 = vor.u32 %v780, %v784
  %v787 = vshrl.u32 %v720, 16
  %v789 = vshll.u32 %v720, 16
  %v791 = vrot.slane %v789, 1
  %v792 = vor.u32 %v787, %v791
  %v794 = vshrl.u32 %v721, 16
  %v796 = vshll.u32 %v721, 16
  %v798 = vrot.slane %v796, 1
  %v799 = vor.u32 %v794, %v798
  %v801 = vshrl.u32 %v722, 16
  %v803 = vshll.u32 %v722, 16
  %v805 = vrot.slane %v803, 1
  %v806 = vor.u32 %v801, %v805
  %v808 = vshrl.u32 %v723, 16
  %v810 = vshll.u32 %v723, 16
  %v812 = vrot.slane %v810, 1
  %v813 = vor.u32 %v808, %v812
  %v815 = vshrl.u32 %v724, 16
  %v817 = vshll.u32 %v724, 16
  %v819 = vrot.slane %v817, 1
  %v820 = vor.u32 %v815, %v819
  %v822 = vshrl.u32 %v725, 16
  %v824 = vshll.u32 %v725, 16
  %v826 = vrot.slane %v824, 1
  %v827 = vor.u32 %v822, %v826
  %v829 = vshrl.u32 %v726, 16
  %v831 = vshll.u32 %v726, 16
  %v833 = vrot.slane %v831, 1
  %v834 = vor.u32 %v829, %v833
  %v836 = vshrl.u32 %v727, 16
  %v838 = vshll.u32 %v727, 16
  %v840 = vrot.slane %v838, 1
  %v841 = vor.u32 %v836, %v840
  %v843 = vshrl.u32 %v728, 16
  %v845 = vshll.u32 %v728, 16
  %v847 = vrot.slane %v845, 1
  %v848 = vor.u32 %v843, %v847
  %v850 = vshrl.u32 %v729, 16
  %v852 = vshll.u32 %v729, 16
  %v854 = vrot.slane %v852, 1
  %v855 = vor.u32 %v850, %v854
  %v857 = vshrl.u32 %v730, 16
  %v859 = vshll.u32 %v730, 16
  %v861 = vrot.slane %v859, 1
  %v862 = vor.u32 %v857, %v861
  %v864 = vshrl.u32 %v731, 16
  %v866 = vshll.u32 %v731, 16
  %v868 = vrot.slane %v866, 1
  %v869 = vor.u32 %v864, %v868
  %v871 = vshrl.u32 %v732, 16
  %v873 = vshll.u32 %v732, 16
  %v875 = vrot.slane %v873, 1
  %v876 = vor.u32 %v871, %v875
  %v878 = vshrl.u32 %v733, 16
  %v880 = vshll.u32 %v733, 16
  %v882 = vrot.slane %v880, 1
  %v883 = vor.u32 %v878, %v882
  %v885 = vshrl.u32 %v734, 16
  %v887 = vshll.u32 %v734, 16
  %v889 = vrot.slane %v887, 1
  %v890 = vor.u32 %v885, %v889
  %v892 = vshrl.u32 %v735, 16
  %v894 = vshll.u32 %v735, 16
  %v896 = vrot.slane %v894, 1
  %v897 = vor.u32 %v892, %v896
  %v899 = vshrl.u32 %v736, 16
  %v901 = vshll.u32 %v736, 16
  %v903 = vrot.slane %v901, 1
  %v904 = vor.u32 %v899, %v903
  %v929 = vunpack.c.l.b16 %v136
  %v930 = vunpack.c.l.b16 %v137
  %v931 = vunpack.c.l.b16 %v138
  %v932 = vunpack.c.l.b16 %v139
  %v933 = vunpack.c.l.b16 %v140
  %v934 = vunpack.c.l.b16 %v141
  %v935 = vunpack.c.l.b16 %v142
  %v936 = vunpack.c.l.b16 %v143
  %v937 = vunpack.c.l.b16 %v144
  %v938 = vunpack.c.l.b16 %v145
  %v939 = vunpack.c.l.b16 %v146
  %v940 = vunpack.c.l.b16 %v147
  %v941 = vunpack.c.l.b16 %v148
  %v942 = vunpack.c.l.b16 %v149
  %v943 = vunpack.c.l.b16 %v150
  %v944 = vunpack.c.l.b16 %v151
  %v945 = vunpack.c.l.b16 %v152
  %v946 = vunpack.c.l.b16 %v153
  %v947 = vunpack.c.l.b16 %v154
  %v948 = vunpack.c.l.b16 %v155
  %v949 = vunpack.c.l.b16 %v156
  %v950 = vunpack.c.l.b16 %v157
  %v951 = vunpack.c.l.b16 %v158
  %v952 = vunpack.c.l.b16 %v159
  %v953 = vpack.c.b16 %v666, %v929
  %v954 = vpack.c.b16 %v668, %v930
  %v955 = vpack.c.b16 %v670, %v931
  %v956 = vpack.c.b16 %v672, %v932
  %v957 = vpack.c.b16 %v674, %v933
  %v958 = vpack.c.b16 %v676, %v934
  %v959 = vpack.c.b16 %v678, %v935
  %v960 = vpack.c.b16 %v680, %v936
  %v961 = vpack.c.b16 %v682, %v937
  %v962 = vpack.c.b16 %v684, %v938
  %v963 = vpack.c.b16 %v686, %v939
  %v964 = vpack.c.b16 %v688, %v940
  %v965 = vpack.c.b16 %v690, %v941
  %v966 = vpack.c.b16 %v692, %v942
  %v967 = vpack.c.b16 %v694, %v943
  %v968 = vpack.c.b16 %v696, %v944
  %v969 = vpack.c.b16 %v698, %v945
  %v970 = vpack.c.b16 %v700, %v946
  %v971 = vpack.c.b16 %v702, %v947
  %v972 = vpack.c.b16 %v704, %v948
  %v973 = vpack.c.b16 %v706, %v949
  %v974 = vpack.c.b16 %v708, %v950
  %v975 = vpack.c.b16 %v710, %v951
  %v976 = vpack.c.b16 %v712, %v952
  %v977 = vrot.slane %v953, 1
  %v978 = vrot.slane %v954, 1
  %v979 = vrot.slane %v955, 1
  %v980 = vrot.slane %v956, 1
  %v981 = vrot.slane %v957, 1
  %v982 = vrot.slane %v958, 1
  %v983 = vrot.slane %v959, 1
  %v984 = vrot.slane %v960, 1
  %v985 = vrot.slane %v961, 1
  %v986 = vrot.slane %v962, 1
  %v987 = vrot.slane %v963, 1
  %v988 = vrot.slane %v964, 1
  %v989 = vrot.slane %v965, 1
  %v990 = vrot.slane %v966, 1
  %v991 = vrot.slane %v967, 1
  %v992 = vrot.slane %v968, 1
  %v993 = vrot.slane %v969, 1
  %v994 = vrot.slane %v970, 1
  %v995 = vrot.slane %v971, 1
  %v996 = vrot.slane %v972, 1
  %v997 = vrot.slane %v973, 1
  %v998 = vrot.slane %v974, 1
  %v999 = vrot.slane %v975, 1
  %v1000 = vrot.slane %v976, 1
  %v1049 = vunpack.c.l.b16 %v161
  %v1050 = vunpack.c.l.b16 %v185
  %v1051 = vunpack.c.l.b16 %v162
  %v1052 = vunpack.c.l.b16 %v186
  %v1053 = vunpack.c.l.b16 %v163
  %v1054 = vunpack.c.l.b16 %v187
  %v1055 = vunpack.c.l.b16 %v164
  %v1056 = vunpack.c.l.b16 %v188
  %v1057 = vunpack.c.l.b16 %v165
  %v1058 = vunpack.c.l.b16 %v189
  %v1059 = vunpack.c.l.b16 %v166
  %v1060 = vunpack.c.l.b16 %v190
  %v1061 = vunpack.c.l.b16 %v167
  %v1062 = vunpack.c.l.b16 %v191
  %v1063 = vunpack.c.l.b16 %v168
  %v1064 = vunpack.c.l.b16 %v192
  %v1065 = vunpack.c.l.b16 %v169
  %v1066 = vunpack.c.l.b16 %v193
  %v1067 = vunpack.c.l.b16 %v170
  %v1068 = vunpack.c.l.b16 %v194
  %v1069 = vunpack.c.l.b16 %v171
  %v1070 = vunpack.c.l.b16 %v195
  %v1071 = vunpack.c.l.b16 %v172
  %v1072 = vunpack.c.l.b16 %v196
  %v1073 = vunpack.c.l.b16 %v173
  %v1074 = vunpack.c.l.b16 %v197
  %v1075 = vunpack.c.l.b16 %v174
  %v1076 = vunpack.c.l.b16 %v198
  %v1077 = vunpack.c.l.b16 %v175
  %v1078 = vunpack.c.l.b16 %v199
  %v1079 = vunpack.c.l.b16 %v176
  %v1080 = vunpack.c.l.b16 %v200
  %v1081 = vunpack.c.l.b16 %v177
  %v1082 = vunpack.c.l.b16 %v201
  %v1083 = vunpack.c.l.b16 %v178
  %v1084 = vunpack.c.l.b16 %v202
  %v1085 = vunpack.c.l.b16 %v179
  %v1086 = vunpack.c.l.b16 %v203
  %v1087 = vunpack.c.l.b16 %v180
  %v1088 = vunpack.c.l.b16 %v204
  %v1089 = vunpack.c.l.b16 %v181
  %v1090 = vunpack.c.l.b16 %v205
  %v1091 = vunpack.c.l.b16 %v182
  %v1092 = vunpack.c.l.b16 %v206
  %v1093 = vunpack.c.l.b16 %v183
  %v1094 = vunpack.c.l.b16 %v207
  %v1095 = vunpack.c.l.b16 %v184
  %v1096 = vunpack.c.l.b16 %v208
  %v1097 = vpack.c.b16 %v1050, %v1049
  %v1098 = vpack.c.b16 %v1052, %v1051
  %v1099 = vpack.c.b16 %v1054, %v1053
  %v1100 = vpack.c.b16 %v1056, %v1055
  %v1101 = vpack.c.b16 %v1058, %v1057
  %v1102 = vpack.c.b16 %v1060, %v1059
  %v1103 = vpack.c.b16 %v1062, %v1061
  %v1104 = vpack.c.b16 %v1064, %v1063
  %v1105 = vpack.c.b16 %v1066, %v1065
  %v1106 = vpack.c.b16 %v1068, %v1067
  %v1107 = vpack.c.b16 %v1070, %v1069
  %v1108 = vpack.c.b16 %v1072, %v1071
  %v1109 = vpack.c.b16 %v1074, %v1073
  %v1110 = vpack.c.b16 %v1076, %v1075
  %v1111 = vpack.c.b16 %v1078, %v1077
  %v1112 = vpack.c.b16 %v1080, %v1079
  %v1113 = vpack.c.b16 %v1082, %v1081
  %v1114 = vpack.c.b16 %v1084, %v1083
  %v1115 = vpack.c.b16 %v1086, %v1085
  %v1116 = vpack.c.b16 %v1088, %v1087
  %v1117 = vpack.c.b16 %v1090, %v1089
  %v1118 = vpack.c.b16 %v1092, %v1091
  %v1119 = vpack.c.b16 %v1094, %v1093
  %v1120 = vpack.c.b16 %v1096, %v1095
  %v1122 = vshrl.u32 %v1097, 16
  %v1124 = vshll.u32 %v1097, 16
  %v1126 = vrot.slane %v1124, 1
  %v1127 = vor.u32 %v1122, %v1126
  %v1129 = vshrl.u32 %v1098, 16
  %v1131 = vshll.u32 %v1098, 16
  %v1133 = vrot.slane %v1131, 1
  %v1134 = vor.u32 %v1129, %v1133
  %v1136 = vshrl.u32 %v1099, 16
  %v1138 = vshll.u32 %v1099, 16
  %v1140 = vrot.slane %v1138, 1
  %v1141 = vor.u32 %v1136, %v1140
  %v1143 = vshrl.u32 %v1100, 16
  %v1145 = vshll.u32 %v1100, 16
  %v1147 = vrot.slane %v1145, 1
  %v1148 = vor.u32 %v1143, %v1147
  %v1150 = vshrl.u32 %v1101, 16
  %v1152 = vshll.u32 %v1101, 16
  %v1154 = vrot.slane %v1152, 1
  %v1155 = vor.u32 %v1150, %v1154
  %v1157 = vshrl.u32 %v1102, 16
  %v1159 = vshll.u32 %v1102, 16
  %v1161 = vrot.slane %v1159, 1
  %v1162 = vor.u32 %v1157, %v1161
  %v1164 = vshrl.u32 %v1103, 16
  %v1166 = vshll.u32 %v1103, 16
  %v1168 = vrot.slane %v1166, 1
  %v1169 = vor.u32 %v1164, %v1168
  %v1171 = vshrl.u32 %v1104, 16
  %v1173 = vshll.u32 %v1104, 16
  %v1175 = vrot.slane %v1173, 1
  %v1176 = vor.u32 %v1171, %v1175
  %v1178 = vshrl.u32 %v1105, 16
  %v1180 = vshll.u32 %v1105, 16
  %v1182 = vrot.slane %v1180, 1
  %v1183 = vor.u32 %v1178, %v1182
  %v1185 = vshrl.u32 %v1106, 16
  %v1187 = vshll.u32 %v1106, 16
  %v1189 = vrot.slane %v1187, 1
  %v1190 = vor.u32 %v1185, %v1189
  %v1192 = vshrl.u32 %v1107, 16
  %v1194 = vshll.u32 %v1107, 16
  %v1196 = vrot.slane %v1194, 1
  %v1197 = vor.u32 %v1192, %v1196
  %v1199 = vshrl.u32 %v1108, 16
  %v1201 = vshll.u32 %v1108, 16
  %v1203 = vrot.slane %v1201, 1
  %v1204 = vor.u32 %v1199, %v1203
  %v1206 = vshrl.u32 %v1109, 16
  %v1208 = vshll.u32 %v1109, 16
  %v1210 = vrot.slane %v1208, 1
  %v1211 = vor.u32 %v1206, %v1210
  %v1213 = vshrl.u32 %v1110, 16
  %v1215 = vshll.u32 %v1110, 16
  %v1217 = vrot.slane %v1215, 1
  %v1218 = vor.u32 %v1213, %v1217
  %v1220 = vshrl.u32 %v1111, 16
  %v1222 = vshll.u32 %v1111, 16
  %v1224 = vrot.slane %v1222, 1
  %v1225 = vor.u32 %v1220, %v1224
  %v1227 = vshrl.u32 %v1112, 16
  %v1229 = vshll.u32 %v1112, 16
  %v1231 = vrot.slane %v1229, 1
  %v1232 = vor.u32 %v1227, %v1231
  %v1234 = vshrl.u32 %v1113, 16
  %v1236 = vshll.u32 %v1113, 16
  %v1238 = vrot.slane %v1236, 1
  %v1239 = vor.u32 %v1234, %v1238
  %v1241 = vshrl.u32 %v1114, 16
  %v1243 = vshll.u32 %v1114, 16
  %v1245 = vrot.slane %v1243, 1
  %v1246 = vor.u32 %v1241, %v1245
  %v1248 = vshrl.u32 %v1115, 16
  %v1250 = vshll.u32 %v1115, 16
  %v1252 = vrot.slane %v1250, 1
  %v1253 = vor.u32 %v1248, %v1252
  %v1255 = vshrl.u32 %v1116, 16
  %v1257 = vshll.u32 %v1116, 16
  %v1259 = vrot.slane %v1257, 1
  %v1260 = vor.u32 %v1255, %v1259
  %v1262 = vshrl.u32 %v1117, 16
  %v1264 = vshll.u32 %v1117, 16
  %v1266 = vrot.slane %v1264, 1
  %v1267 = vor.u32 %v1262, %v1266
  %v1269 = vshrl.u32 %v1118, 16
  %v1271 = vshll.u32 %v1118, 16
  %v1273 = vrot.slane %v1271, 1
  %v1274 = vor.u32 %v1269, %v1273
  %v1276 = vshrl.u32 %v1119, 16
  %v1278 = vshll.u32 %v1119, 16
  %v1280 = vrot.slane %v1278, 1
  %v1281 = vor.u32 %v1276, %v1280
  %v1283 = vshrl.u32 %v1120, 16
  %v1285 = vshll.u32 %v1120, 16
  %v1287 = vrot.slane %v1285, 1
  %v1288 = vor.u32 %v1283, %v1287
  %v1313 = vunpack.c.l.b16 %v209
  %v1314 = vunpack.c.l.b16 %v210
  %v1315 = vunpack.c.l.b16 %v211
  %v1316 = vunpack.c.l.b16 %v212
  %v1317 = vunpack.c.l.b16 %v213
  %v1318 = vunpack.c.l.b16 %v214
  %v1319 = vunpack.c.l.b16 %v215
  %v1320 = vunpack.c.l.b16 %v216
  %v1321 = vunpack.c.l.b16 %v217
  %v1322 = vunpack.c.l.b16 %v218
  %v1323 = vunpack.c.l.b16 %v219
  %v1324 = vunpack.c.l.b16 %v220
  %v1325 = vunpack.c.l.b16 %v221
  %v1326 = vunpack.c.l.b16 %v222
  %v1327 = vunpack.c.l.b16 %v223
  %v1328 = vunpack.c.l.b16 %v224
  %v1329 = vunpack.c.l.b16 %v225
  %v1330 = vunpack.c.l.b16 %v226
  %v1331 = vunpack.c.l.b16 %v227
  %v1332 = vunpack.c.l.b16 %v228
  %v1333 = vunpack.c.l.b16 %v229
  %v1334 = vunpack.c.l.b16 %v230
  %v1335 = vunpack.c.l.b16 %v231
  %v1336 = vunpack.c.l.b16 %v232
  %v1337 = vpack.c.b16 %v1050, %v1313
  %v1338 = vpack.c.b16 %v1052, %v1314
  %v1339 = vpack.c.b16 %v1054, %v1315
  %v1340 = vpack.c.b16 %v1056, %v1316
  %v1341 = vpack.c.b16 %v1058, %v1317
  %v1342 = vpack.c.b16 %v1060, %v1318
  %v1343 = vpack.c.b16 %v1062, %v1319
  %v1344 = vpack.c.b16 %v1064, %v1320
  %v1345 = vpack.c.b16 %v1066, %v1321
  %v1346 = vpack.c.b16 %v1068, %v1322
  %v1347 = vpack.c.b16 %v1070, %v1323
  %v1348 = vpack.c.b16 %v1072, %v1324
  %v1349 = vpack.c.b16 %v1074, %v1325
  %v1350 = vpack.c.b16 %v1076, %v1326
  %v1351 = vpack.c.b16 %v1078, %v1327
  %v1352 = vpack.c.b16 %v1080, %v1328
  %v1353 = vpack.c.b16 %v1082, %v1329
  %v1354 = vpack.c.b16 %v1084, %v1330
  %v1355 = vpack.c.b16 %v1086, %v1331
  %v1356 = vpack.c.b16 %v1088, %v1332
  %v1357 = vpack.c.b16 %v1090, %v1333
  %v1358 = vpack.c.b16 %v1092, %v1334
  %v1359 = vpack.c.b16 %v1094, %v1335
  %v1360 = vpack.c.b16 %v1096, %v1336
  %v1361 = vrot.slane %v1337, 1
  %v1362 = vrot.slane %v1338, 1
  %v1363 = vrot.slane %v1339, 1
  %v1364 = vrot.slane %v1340, 1
  %v1365 = vrot.slane %v1341, 1
  %v1366 = vrot.slane %v1342, 1
  %v1367 = vrot.slane %v1343, 1
  %v1368 = vrot.slane %v1344, 1
  %v1369 = vrot.slane %v1345, 1
  %v1370 = vrot.slane %v1346, 1
  %v1371 = vrot.slane %v1347, 1
  %v1372 = vrot.slane %v1348, 1
  %v1373 = vrot.slane %v1349, 1
  %v1374 = vrot.slane %v1350, 1
  %v1375 = vrot.slane %v1351, 1
  %v1376 = vrot.slane %v1352, 1
  %v1377 = vrot.slane %v1353, 1
  %v1378 = vrot.slane %v1354, 1
  %v1379 = vrot.slane %v1355, 1
  %v1380 = vrot.slane %v1356, 1
  %v1381 = vrot.slane %v1357, 1
  %v1382 = vrot.slane %v1358, 1
  %v1383 = vrot.slane %v1359, 1
  %v1384 = vrot.slane %v1360, 1
  %v1385 = vunpack.c.l.b16 %v359
  %v1386 = vunpack.c.l.b16 %v593
  %v1387 = vunpack.c.l.b16 %v743
  %v1388 = vunpack.c.l.b16 %v977
  %v1389 = vunpack.c.l.b16 %v1127
  %v1390 = vunpack.c.l.b16 %v1361
  %v1391 = vunpack.c.l.b16 %v366
  %v1392 = vunpack.c.l.b16 %v594
  %v1393 = vunpack.c.l.b16 %v750
  %v1394 = vunpack.c.l.b16 %v978
  %v1395 = vunpack.c.l.b16 %v1134
  %v1396 = vunpack.c.l.b16 %v1362
  %v1397 = vunpack.c.l.b16 %v373
  %v1398 = vunpack.c.l.b16 %v595
  %v1399 = vunpack.c.l.b16 %v757
  %v1400 = vunpack.c.l.b16 %v979
  %v1401 = vunpack.c.l.b16 %v1141
  %v1402 = vunpack.c.l.b16 %v1363
  %v1403 = vunpack.c.l.b16 %v380
  %v1404 = vunpack.c.l.b16 %v596
  %v1405 = vunpack.c.l.b16 %v764
  %v1406 = vunpack.c.l.b16 %v980
  %v1407 = vunpack.c.l.b16 %v1148
  %v1408 = vunpack.c.l.b16 %v1364
  %v1409 = vunpack.c.l.b16 %v387
  %v1410 = vunpack.c.l.b16 %v597
  %v1411 = vunpack.c.l.b16 %v771
  %v1412 = vunpack.c.l.b16 %v981
  %v1413 = vunpack.c.l.b16 %v1155
  %v1414 = vunpack.c.l.b16 %v1365
  %v1415 = vunpack.c.l.b16 %v394
  %v1416 = vunpack.c.l.b16 %v598
  %v1417 = vunpack.c.l.b16 %v778
  %v1418 = vunpack.c.l.b16 %v982
  %v1419 = vunpack.c.l.b16 %v1162
  %v1420 = vunpack.c.l.b16 %v1366
  %v1421 = vunpack.c.l.b16 %v401
  %v1422 = vunpack.c.l.b16 %v599
  %v1423 = vunpack.c.l.b16 %v785
  %v1424 = vunpack.c.l.b16 %v983
  %v1425 = vunpack.c.l.b16 %v1169
  %v1426 = vunpack.c.l.b16 %v1367
  %v1427 = vunpack.c.l.b16 %v408
  %v1428 = vunpack.c.l.b16 %v600
  %v1429 = vunpack.c.l.b16 %v792
  %v1430 = vunpack.c.l.b16 %v984
  %v1431 = vunpack.c.l.b16 %v1176
  %v1432 = vunpack.c.l.b16 %v1368
  %v1433 = vunpack.c.l.b16 %v415
  %v1434 = vunpack.c.l.b16 %v601
  %v1435 = vunpack.c.l.b16 %v799
  %v1436 = vunpack.c.l.b16 %v985
  %v1437 = vunpack.c.l.b16 %v1183
  %v1438 = vunpack.c.l.b16 %v1369
  %v1439 = vunpack.c.l.b16 %v422
  %v1440 = vunpack.c.l.b16 %v602
  %v1441 = vunpack.c.l.b16 %v806
  %v1442 = vunpack.c.l.b16 %v986
  %v1443 = vunpack.c.l.b16 %v1190
  %v1444 = vunpack.c.l.b16 %v1370
  %v1445 = vunpack.c.l.b16 %v429
  %v1446 = vunpack.c.l.b16 %v603
  %v1447 = vunpack.c.l.b16 %v813
  %v1448 = vunpack.c.l.b16 %v987
  %v1449 = vunpack.c.l.b16 %v1197
  %v1450 = vunpack.c.l.b16 %v1371
  %v1451 = vunpack.c.l.b16 %v436
  %v1452 = vunpack.c.l.b16 %v604
  %v1453 = vunpack.c.l.b16 %v820
  %v1454 = vunpack.c.l.b16 %v988
  %v1455 = vunpack.c.l.b16 %v1204
  %v1456 = vunpack.c.l.b16 %v1372
  %v1457 = vunpack.c.l.b16 %v443
  %v1458 = vunpack.c.l.b16 %v605
  %v1459 = vunpack.c.l.b16 %v827
  %v1460 = vunpack.c.l.b16 %v989
  %v1461 = vunpack.c.l.b16 %v1211
  %v1462 = vunpack.c.l.b16 %v1373
  %v1463 = vunpack.c.l.b16 %v450
  %v1464 = vunpack.c.l.b16 %v606
  %v1465 = vunpack.c.l.b16 %v834
  %v1466 = vunpack.c.l.b16 %v990
  %v1467 = vunpack.c.l.b16 %v1218
  %v1468 = vunpack.c.l.b16 %v1374
  %v1469 = vunpack.c.l.b16 %v457
  %v1470 = vunpack.c.l.b16 %v607
  %v1471 = vunpack.c.l.b16 %v841
  %v1472 = vunpack.c.l.b16 %v991
  %v1473 = vunpack.c.l.b16 %v1225
  %v1474 = vunpack.c.l.b16 %v1375
  %v1475 = vunpack.c.l.b16 %v464
  %v1476 = vunpack.c.l.b16 %v608
  %v1477 = vunpack.c.l.b16 %v848
  %v1478 = vunpack.c.l.b16 %v992
  %v1479 = vunpack.c.l.b16 %v1232
  %v1480 = vunpack.c.l.b16 %v1376
  %v1481 = vunpack.c.l.b16 %v471
  %v1482 = vunpack.c.l.b16 %v609
  %v1483 = vunpack.c.l.b16 %v855
  %v1484 = vunpack.c.l.b16 %v993
  %v1485 = vunpack.c.l.b16 %v1239
  %v1486 = vunpack.c.l.b16 %v1377
  %v1487 = vunpack.c.l.b16 %v478
  %v1488 = vunpack.c.l.b16 %v610
  %v1489 = vunpack.c.l.b16 %v862
  %v1490 = vunpack.c.l.b16 %v994
  %v1491 = vunpack.c.l.b16 %v1246
  %v1492 = vunpack.c.l.b16 %v1378
  %v1493 = vunpack.c.l.b16 %v485
  %v1494 = vunpack.c.l.b16 %v611
  %v1495 = vunpack.c.l.b16 %v869
  %v1496 = vunpack.c.l.b16 %v995
  %v1497 = vunpack.c.l.b16 %v1253
  %v1498 = vunpack.c.l.b16 %v1379
  %v1499 = vunpack.c.l.b16 %v492
  %v1500 = vunpack.c.l.b16 %v612
  %v1501 = vunpack.c.l.b16 %v876
  %v1502 = vunpack.c.l.b16 %v996
  %v1503 = vunpack.c.l.b16 %v1260
  %v1504 = vunpack.c.l.b16 %v1380
  %v1505 = vunpack.c.l.b16 %v499
  %v1506 = vunpack.c.l.b16 %v613
  %v1507 = vunpack.c.l.b16 %v883
  %v1508 = vunpack.c.l.b16 %v997
  %v1509 = vunpack.c.l.b16 %v1267
  %v1510 = vunpack.c.l.b16 %v1381
  %v1511 = vunpack.c.l.b16 %v506
  %v1512 = vunpack.c.l.b16 %v614
  %v1513 = vunpack.c.l.b16 %v890
  %v1514 = vunpack.c.l.b16 %v998
  %v1515 = vunpack.c.l.b16 %v1274
  %v1516 = vunpack.c.l.b16 %v1382
  %v1517 = vunpack.c.l.b16 %v513
  %v1518 = vunpack.c.l.b16 %v615
  %v1519 = vunpack.c.l.b16 %v897
  %v1520 = vunpack.c.l.b16 %v999
  %v1521 = vunpack.c.l.b16 %v1281
  %v1522 = vunpack.c.l.b16 %v1383
  %v1523 = vunpack.c.l.b16 %v520
  %v1524 = vunpack.c.l.b16 %v616
  %v1525 = vunpack.c.l.b16 %v904
  %v1526 = vunpack.c.l.b16 %v1000
  %v1527 = vunpack.c.l.b16 %v1288
  %v1528 = vunpack.c.l.b16 %v1384
  %v1529 = vld [vmem:[%s1] sm:$0xf]
  %v1530 = vld [vmem:[%s1 + $0x4] sm:$0xf]
  %v1531 = vld [vmem:[%s1 + $0x8] sm:$0xf]
  %v1532 = vld [vmem:[%s1 + $0xc] sm:$0xf]
  %v1533 = vld [vmem:[%s1 + $0x10] sm:$0xf]
  %v1534 = vld [vmem:[%s1 + $0x14] sm:$0xf]
  %v1535 = vld [vmem:[%s1 + $0x18] sm:$0xf]
  %v1536 = vld [vmem:[%s1 + $0x1c] sm:$0xf]
  %v1537 = vld [vmem:[%s1 + $0x20] sm:$0xf]
  %v1538 = vld [vmem:[%s1 + $0x24] sm:$0xf]
  %v1539 = vld [vmem:[%s1 + $0x28] sm:$0xf]
  %v1540 = vld [vmem:[%s1 + $0x2c] sm:$0xf]
  %v1541 = vld [vmem:[%s1 + $0x30] sm:$0xf]
  %v1542 = vld [vmem:[%s1 + $0x34] sm:$0xf]
  %v1543 = vld [vmem:[%s1 + $0x38] sm:$0xf]
  %v1544 = vld [vmem:[%s1 + $0x3c] sm:$0xf]
  %v1545 = vld [vmem:[%s1 + $0x40] sm:$0xf]
  %v1546 = vld [vmem:[%s1 + $0x44] sm:$0xf]
  %v1547 = vld [vmem:[%s1 + $0x48] sm:$0xf]
  %v1548 = vld [vmem:[%s1 + $0x4c] sm:$0xf]
  %v1549 = vld [vmem:[%s1 + $0x50] sm:$0xf]
  %v1550 = vld [vmem:[%s1 + $0x54] sm:$0xf]
  %v1551 = vld [vmem:[%s1 + $0x58] sm:$0xf]
  %v1552 = vld [vmem:[%s1 + $0x5c] sm:$0xf]
  %v1553 = vld [vmem:[%s1 + $0x60] sm:$0xf]
  %v1554 = vld [vmem:[%s1 + $0x64] sm:$0xf]
  %v1555 = vld [vmem:[%s1 + $0x68] sm:$0xf]
  %v1556 = vld [vmem:[%s1 + $0x6c] sm:$0xf]
  %v1557 = vld [vmem:[%s1 + $0x70] sm:$0xf]
  %v1558 = vld [vmem:[%s1 + $0x74] sm:$0xf]
  %v1559 = vld [vmem:[%s1 + $0x78] sm:$0xf]
  %v1560 = vld [vmem:[%s1 + $0x7c] sm:$0xf]
  %v1561 = vld [vmem:[%s1 + $0x80] sm:$0xf]
  %v1562 = vld [vmem:[%s1 + $0x84] sm:$0xf]
  %v1563 = vld [vmem:[%s1 + $0x88] sm:$0xf]
  %v1564 = vld [vmem:[%s1 + $0x8c] sm:$0xf]
  %v1565 = vld [vmem:[%s1 + $0x90] sm:$0xf]
  %v1566 = vld [vmem:[%s1 + $0x94] sm:$0xf]
  %v1567 = vld [vmem:[%s1 + $0x98] sm:$0xf]
  %v1568 = vld [vmem:[%s1 + $0x9c] sm:$0xf]
  %v1569 = vld [vmem:[%s1 + $0xa0] sm:$0xf]
  %v1570 = vld [vmem:[%s1 + $0xa4] sm:$0xf]
  %v1571 = vld [vmem:[%s1 + $0xa8] sm:$0xf]
  %v1572 = vld [vmem:[%s1 + $0xac] sm:$0xf]
  %v1573 = vld [vmem:[%s1 + $0xb0] sm:$0xf]
  %v1574 = vld [vmem:[%s1 + $0xb4] sm:$0xf]
  %v1575 = vld [vmem:[%s1 + $0xb8] sm:$0xf]
  %v1576 = vld [vmem:[%s1 + $0xbc] sm:$0xf]
  %v1577 = vld [vmem:[%s1 + $0xc0] sm:$0xf]
  %v1578 = vld [vmem:[%s1 + $0xc4] sm:$0xf]
  %v1579 = vld [vmem:[%s1 + $0xc8] sm:$0xf]
  %v1580 = vld [vmem:[%s1 + $0xcc] sm:$0xf]
  %v1581 = vld [vmem:[%s1 + $0xd0] sm:$0xf]
  %v1582 = vld [vmem:[%s1 + $0xd4] sm:$0xf]
  %v1583 = vld [vmem:[%s1 + $0xd8] sm:$0xf]
  %v1584 = vld [vmem:[%s1 + $0xdc] sm:$0xf]
  %v1585 = vld [vmem:[%s1 + $0xe0] sm:$0xf]
  %v1586 = vld [vmem:[%s1 + $0xe4] sm:$0xf]
  %v1587 = vld [vmem:[%s1 + $0xe8] sm:$0xf]
  %v1588 = vld [vmem:[%s1 + $0xec] sm:$0xf]
  %v1589 = vld [vmem:[%s1 + $0xf0] sm:$0xf]
  %v1590 = vld [vmem:[%s1 + $0xf4] sm:$0xf]
  %v1591 = vld [vmem:[%s1 + $0xf8] sm:$0xf]
  %v1592 = vld [vmem:[%s1 + $0xfc] sm:$0xf]
  %v1593 = vld [vmem:[%s1 + $0x100] sm:$0xf]
  %v1594 = vld [vmem:[%s1 + $0x104] sm:$0xf]
  %v1595 = vld [vmem:[%s1 + $0x108] sm:$0xf]
  %v1596 = vld [vmem:[%s1 + $0x10c] sm:$0xf]
  %v1597 = vld [vmem:[%s1 + $0x110] sm:$0xf]
  %v1598 = vld [vmem:[%s1 + $0x114] sm:$0xf]
  %v1599 = vld [vmem:[%s1 + $0x118] sm:$0xf]
  %v1600 = vld [vmem:[%s1 + $0x11c] sm:$0xf]
  %v1601 = vld [vmem:[%s1 + $0x120] sm:$0xf]
  %v1602 = vld [vmem:[%s1 + $0x124] sm:$0xf]
  %v1603 = vld [vmem:[%s1 + $0x128] sm:$0xf]
  %v1604 = vld [vmem:[%s1 + $0x12c] sm:$0xf]
  %v1605 = vld [vmem:[%s1 + $0x130] sm:$0xf]
  %v1606 = vld [vmem:[%s1 + $0x134] sm:$0xf]
  %v1607 = vld [vmem:[%s1 + $0x138] sm:$0xf]
  %v1608 = vld [vmem:[%s1 + $0x13c] sm:$0xf]
  %v1609 = vld [vmem:[%s1 + $0x140] sm:$0xf]
  %v1610 = vld [vmem:[%s1 + $0x144] sm:$0xf]
  %v1611 = vld [vmem:[%s1 + $0x148] sm:$0xf]
  %v1612 = vld [vmem:[%s1 + $0x14c] sm:$0xf]
  %v1613 = vld [vmem:[%s1 + $0x150] sm:$0xf]
  %v1614 = vld [vmem:[%s1 + $0x154] sm:$0xf]
  %v1615 = vld [vmem:[%s1 + $0x158] sm:$0xf]
  %v1616 = vld [vmem:[%s1 + $0x15c] sm:$0xf]
  %v1617 = vld [vmem:[%s1 + $0x160] sm:$0xf]
  %v1618 = vld [vmem:[%s1 + $0x164] sm:$0xf]
  %v1619 = vld [vmem:[%s1 + $0x168] sm:$0xf]
  %v1620 = vld [vmem:[%s1 + $0x16c] sm:$0xf]
  %v1621 = vld [vmem:[%s1 + $0x170] sm:$0xf]
  %v1622 = vld [vmem:[%s1 + $0x174] sm:$0xf]
  %v1623 = vld [vmem:[%s1 + $0x178] sm:$0xf]
  %v1624 = vld [vmem:[%s1 + $0x17c] sm:$0xf]
  %v1625 = vld [vmem:[%s1 + $0x180] sm:$0xf]
  %v1626 = vld [vmem:[%s1 + $0x184] sm:$0xf]
  %v1627 = vld [vmem:[%s1 + $0x188] sm:$0xf]
  %v1628 = vld [vmem:[%s1 + $0x18c] sm:$0xf]
  %v1629 = vld [vmem:[%s1 + $0x190] sm:$0xf]
  %v1630 = vld [vmem:[%s1 + $0x194] sm:$0xf]
  %v1631 = vld [vmem:[%s1 + $0x198] sm:$0xf]
  %v1632 = vld [vmem:[%s1 + $0x19c] sm:$0xf]
  %v1633 = vld [vmem:[%s1 + $0x1a0] sm:$0xf]
  %v1634 = vld [vmem:[%s1 + $0x1a4] sm:$0xf]
  %v1635 = vld [vmem:[%s1 + $0x1a8] sm:$0xf]
  %v1636 = vld [vmem:[%s1 + $0x1ac] sm:$0xf]
  %v1637 = vld [vmem:[%s1 + $0x1b0] sm:$0xf]
  %v1638 = vld [vmem:[%s1 + $0x1b4] sm:$0xf]
  %v1639 = vld [vmem:[%s1 + $0x1b8] sm:$0xf]
  %v1640 = vld [vmem:[%s1 + $0x1bc] sm:$0xf]
  %v1641 = vld [vmem:[%s1 + $0x1c0] sm:$0xf]
  %v1642 = vld [vmem:[%s1 + $0x1c4] sm:$0xf]
  %v1643 = vld [vmem:[%s1 + $0x1c8] sm:$0xf]
  %v1644 = vld [vmem:[%s1 + $0x1cc] sm:$0xf]
  %v1645 = vld [vmem:[%s1 + $0x1d0] sm:$0xf]
  %v1646 = vld [vmem:[%s1 + $0x1d4] sm:$0xf]
  %v1647 = vld [vmem:[%s1 + $0x1d8] sm:$0xf]
  %v1648 = vld [vmem:[%s1 + $0x1dc] sm:$0xf]
  %v1649 = vld [vmem:[%s1 + $0x1e0] sm:$0xf]
  %v1650 = vld [vmem:[%s1 + $0x1e4] sm:$0xf]
  %v1651 = vld [vmem:[%s1 + $0x1e8] sm:$0xf]
  %v1652 = vld [vmem:[%s1 + $0x1ec] sm:$0xf]
  %v1653 = vld [vmem:[%s1 + $0x1f0] sm:$0xf]
  %v1654 = vld [vmem:[%s1 + $0x1f4] sm:$0xf]
  %v1655 = vld [vmem:[%s1 + $0x1f8] sm:$0xf]
  %v1656 = vld [vmem:[%s1 + $0x1fc] sm:$0xf]
  %v1657 = vld [vmem:[%s1 + $0x200] sm:$0xf]
  %v1658 = vld [vmem:[%s1 + $0x204] sm:$0xf]
  %v1659 = vld [vmem:[%s1 + $0x208] sm:$0xf]
  %v1660 = vld [vmem:[%s1 + $0x20c] sm:$0xf]
  %v1661 = vld [vmem:[%s1 + $0x210] sm:$0xf]
  %v1662 = vld [vmem:[%s1 + $0x214] sm:$0xf]
  %v1663 = vld [vmem:[%s1 + $0x218] sm:$0xf]
  %v1664 = vld [vmem:[%s1 + $0x21c] sm:$0xf]
  %v1665 = vld [vmem:[%s1 + $0x220] sm:$0xf]
  %v1666 = vld [vmem:[%s1 + $0x224] sm:$0xf]
  %v1667 = vld [vmem:[%s1 + $0x228] sm:$0xf]
  %v1668 = vld [vmem:[%s1 + $0x22c] sm:$0xf]
  %v1669 = vld [vmem:[%s1 + $0x230] sm:$0xf]
  %v1670 = vld [vmem:[%s1 + $0x234] sm:$0xf]
  %v1671 = vld [vmem:[%s1 + $0x238] sm:$0xf]
  %v1672 = vld [vmem:[%s1 + $0x23c] sm:$0xf]
  %v1673 = vld [vmem:[%s2] sm:$0x1]
  %v1675 = vlaneseq
  %v1676 = vshrl.u32 %v1675, 7
  %v1677 = vsub.s32 0, %v1676
  %v1678 = vrot.slane %v1673, %v1677
  %v1680 = vpack.c.b16 %v283, %v281
  %v1681 = vpack.c.b16 %v1391, %v1385
  %v1682 = vpack.c.b16 %v1392, %v1386
  %v1683 = vpack.c.b16 %v667, %v665
  %v1684 = vpack.c.b16 %v1393, %v1387
  %v1685 = vpack.c.b16 %v1394, %v1388
  %v1686 = vpack.c.b16 %v1051, %v1049
  %v1687 = vpack.c.b16 %v1395, %v1389
  %v1688 = vpack.c.b16 %v1396, %v1390
  %v1689 = vpack.c.b16 %v287, %v285
  %v1690 = vpack.c.b16 %v1403, %v1397
  %v1691 = vpack.c.b16 %v1404, %v1398
  %v1692 = vpack.c.b16 %v671, %v669
  %v1693 = vpack.c.b16 %v1405, %v1399
  %v1694 = vpack.c.b16 %v1406, %v1400
  %v1695 = vpack.c.b16 %v1055, %v1053
  %v1696 = vpack.c.b16 %v1407, %v1401
  %v1697 = vpack.c.b16 %v1408, %v1402
  %v1698 = vpack.c.b16 %v291, %v289
  %v1699 = vpack.c.b16 %v1415, %v1409
  %v1700 = vpack.c.b16 %v1416, %v1410
  %v1701 = vpack.c.b16 %v675, %v673
  %v1702 = vpack.c.b16 %v1417, %v1411
  %v1703 = vpack.c.b16 %v1418, %v1412
  %v1704 = vpack.c.b16 %v1059, %v1057
  %v1705 = vpack.c.b16 %v1419, %v1413
  %v1706 = vpack.c.b16 %v1420, %v1414
  %v1707 = vpack.c.b16 %v295, %v293
  %v1708 = vpack.c.b16 %v1427, %v1421
  %v1709 = vpack.c.b16 %v1428, %v1422
  %v1710 = vpack.c.b16 %v679, %v677
  %v1711 = vpack.c.b16 %v1429, %v1423
  %v1712 = vpack.c.b16 %v1430, %v1424
  %v1713 = vpack.c.b16 %v1063, %v1061
  %v1714 = vpack.c.b16 %v1431, %v1425
  %v1715 = vpack.c.b16 %v1432, %v1426
  %v1716 = vpack.c.b16 %v299, %v297
  %v1717 = vpack.c.b16 %v1439, %v1433
  %v1718 = vpack.c.b16 %v1440, %v1434
  %v1719 = vpack.c.b16 %v683, %v681
  %v1720 = vpack.c.b16 %v1441, %v1435
  %v1721 = vpack.c.b16 %v1442, %v1436
  %v1722 = vpack.c.b16 %v1067, %v1065
  %v1723 = vpack.c.b16 %v1443, %v1437
  %v1724 = vpack.c.b16 %v1444, %v1438
  %v1725 = vpack.c.b16 %v303, %v301
  %v1726 = vpack.c.b16 %v1451, %v1445
  %v1727 = vpack.c.b16 %v1452, %v1446
  %v1728 = vpack.c.b16 %v687, %v685
  %v1729 = vpack.c.b16 %v1453, %v1447
  %v1730 = vpack.c.b16 %v1454, %v1448
  %v1731 = vpack.c.b16 %v1071, %v1069
  %v1732 = vpack.c.b16 %v1455, %v1449
  %v1733 = vpack.c.b16 %v1456, %v1450
  %v1734 = vpack.c.b16 %v307, %v305
  %v1735 = vpack.c.b16 %v1463, %v1457
  %v1736 = vpack.c.b16 %v1464, %v1458
  %v1737 = vpack.c.b16 %v691, %v689
  %v1738 = vpack.c.b16 %v1465, %v1459
  %v1739 = vpack.c.b16 %v1466, %v1460
  %v1740 = vpack.c.b16 %v1075, %v1073
  %v1741 = vpack.c.b16 %v1467, %v1461
  %v1742 = vpack.c.b16 %v1468, %v1462
  %v1743 = vpack.c.b16 %v311, %v309
  %v1744 = vpack.c.b16 %v1475, %v1469
  %v1745 = vpack.c.b16 %v1476, %v1470
  %v1746 = vpack.c.b16 %v695, %v693
  %v1747 = vpack.c.b16 %v1477, %v1471
  %v1748 = vpack.c.b16 %v1478, %v1472
  %v1749 = vpack.c.b16 %v1079, %v1077
  %v1750 = vpack.c.b16 %v1479, %v1473
  %v1751 = vpack.c.b16 %v1480, %v1474
  %v1752 = vpack.c.b16 %v315, %v313
  %v1753 = vpack.c.b16 %v1487, %v1481
  %v1754 = vpack.c.b16 %v1488, %v1482
  %v1755 = vpack.c.b16 %v699, %v697
  %v1756 = vpack.c.b16 %v1489, %v1483
  %v1757 = vpack.c.b16 %v1490, %v1484
  %v1758 = vpack.c.b16 %v1083, %v1081
  %v1759 = vpack.c.b16 %v1491, %v1485
  %v1760 = vpack.c.b16 %v1492, %v1486
  %v1761 = vpack.c.b16 %v319, %v317
  %v1762 = vpack.c.b16 %v1499, %v1493
  %v1763 = vpack.c.b16 %v1500, %v1494
  %v1764 = vpack.c.b16 %v703, %v701
  %v1765 = vpack.c.b16 %v1501, %v1495
  %v1766 = vpack.c.b16 %v1502, %v1496
  %v1767 = vpack.c.b16 %v1087, %v1085
  %v1768 = vpack.c.b16 %v1503, %v1497
  %v1769 = vpack.c.b16 %v1504, %v1498
  %v1770 = vpack.c.b16 %v323, %v321
  %v1771 = vpack.c.b16 %v1511, %v1505
  %v1772 = vpack.c.b16 %v1512, %v1506
  %v1773 = vpack.c.b16 %v707, %v705
  %v1774 = vpack.c.b16 %v1513, %v1507
  %v1775 = vpack.c.b16 %v1514, %v1508
  %v1776 = vpack.c.b16 %v1091, %v1089
  %v1777 = vpack.c.b16 %v1515, %v1509
  %v1778 = vpack.c.b16 %v1516, %v1510
  %v1779 = vpack.c.b16 %v327, %v325
  %v1780 = vpack.c.b16 %v1523, %v1517
  %v1781 = vpack.c.b16 %v1524, %v1518
  %v1782 = vpack.c.b16 %v711, %v709
  %v1783 = vpack.c.b16 %v1525, %v1519
  %v1784 = vpack.c.b16 %v1526, %v1520
  %v1785 = vpack.c.b16 %v1095, %v1093
  %v1786 = vpack.c.b16 %v1527, %v1521
  %v1787 = vpack.c.b16 %v1528, %v1522
  %v2040 = vunpack.c.l.b16 %v1529
  %v2041 = vunpack.c.l.b16 %v1530
  %v2042 = vunpack.c.l.b16 %v1531
  %v2043 = vunpack.c.l.b16 %v1532
  %v2044 = vunpack.c.l.b16 %v1533
  %v2045 = vunpack.c.l.b16 %v1534
  %v2046 = vunpack.c.l.b16 %v1535
  %v2047 = vunpack.c.l.b16 %v1536
  %v2048 = vunpack.c.l.b16 %v1537
  %v2049 = vunpack.c.l.b16 %v1538
  %v2050 = vunpack.c.l.b16 %v1539
  %v2051 = vunpack.c.l.b16 %v1540
  %v2052 = vunpack.c.l.b16 %v1541
  %v2053 = vunpack.c.l.b16 %v1542
  %v2054 = vunpack.c.l.b16 %v1543
  %v2055 = vunpack.c.l.b16 %v1544
  %v2056 = vunpack.c.l.b16 %v1545
  %v2057 = vunpack.c.l.b16 %v1546
  %v2058 = vunpack.c.l.b16 %v1547
  %v2059 = vunpack.c.l.b16 %v1548
  %v2060 = vunpack.c.l.b16 %v1549
  %v2061 = vunpack.c.l.b16 %v1550
  %v2062 = vunpack.c.l.b16 %v1551
  %v2063 = vunpack.c.l.b16 %v1552
  %v2064 = vunpack.c.l.b16 %v1553
  %v2065 = vunpack.c.l.b16 %v1554
  %v2066 = vunpack.c.l.b16 %v1555
  %v2067 = vunpack.c.l.b16 %v1556
  %v2068 = vunpack.c.l.b16 %v1557
  %v2069 = vunpack.c.l.b16 %v1558
  %v2070 = vunpack.c.l.b16 %v1559
  %v2071 = vunpack.c.l.b16 %v1560
  %v2072 = vunpack.c.l.b16 %v1561
  %v2073 = vunpack.c.l.b16 %v1562
  %v2074 = vunpack.c.l.b16 %v1563
  %v2075 = vunpack.c.l.b16 %v1564
  %v2076 = vunpack.c.l.b16 %v1565
  %v2077 = vunpack.c.l.b16 %v1566
  %v2078 = vunpack.c.l.b16 %v1567
  %v2079 = vunpack.c.l.b16 %v1568
  %v2080 = vunpack.c.l.b16 %v1569
  %v2081 = vunpack.c.l.b16 %v1570
  %v2082 = vunpack.c.l.b16 %v1571
  %v2083 = vunpack.c.l.b16 %v1572
  %v2084 = vunpack.c.l.b16 %v1573
  %v2085 = vunpack.c.l.b16 %v1574
  %v2086 = vunpack.c.l.b16 %v1575
  %v2087 = vunpack.c.l.b16 %v1576
  %v2088 = vunpack.c.l.b16 %v1577
  %v2089 = vunpack.c.l.b16 %v1578
  %v2090 = vunpack.c.l.b16 %v1579
  %v2091 = vunpack.c.l.b16 %v1580
  %v2092 = vunpack.c.l.b16 %v1581
  %v2093 = vunpack.c.l.b16 %v1582
  %v2094 = vunpack.c.l.b16 %v1583
  %v2095 = vunpack.c.l.b16 %v1584
  %v2096 = vunpack.c.l.b16 %v1585
  %v2097 = vunpack.c.l.b16 %v1586
  %v2098 = vunpack.c.l.b16 %v1587
  %v2099 = vunpack.c.l.b16 %v1588
  %v2100 = vunpack.c.l.b16 %v1589
  %v2101 = vunpack.c.l.b16 %v1590
  %v2102 = vunpack.c.l.b16 %v1591
  %v2103 = vunpack.c.l.b16 %v1592
  %v2104 = vunpack.c.l.b16 %v1593
  %v2105 = vunpack.c.l.b16 %v1594
  %v2106 = vunpack.c.l.b16 %v1595
  %v2107 = vunpack.c.l.b16 %v1596
  %v2108 = vunpack.c.l.b16 %v1597
  %v2109 = vunpack.c.l.b16 %v1598
  %v2110 = vunpack.c.l.b16 %v1599
  %v2111 = vunpack.c.l.b16 %v1600
  %v2112 = vunpack.c.l.b16 %v1601
  %v2113 = vunpack.c.l.b16 %v1602
  %v2114 = vunpack.c.l.b16 %v1603
  %v2115 = vunpack.c.l.b16 %v1604
  %v2116 = vunpack.c.l.b16 %v1605
  %v2117 = vunpack.c.l.b16 %v1606
  %v2118 = vunpack.c.l.b16 %v1607
  %v2119 = vunpack.c.l.b16 %v1608
  %v2120 = vunpack.c.l.b16 %v1609
  %v2121 = vunpack.c.l.b16 %v1610
  %v2122 = vunpack.c.l.b16 %v1611
  %v2123 = vunpack.c.l.b16 %v1612
  %v2124 = vunpack.c.l.b16 %v1613
  %v2125 = vunpack.c.l.b16 %v1614
  %v2126 = vunpack.c.l.b16 %v1615
  %v2127 = vunpack.c.l.b16 %v1616
  %v2128 = vunpack.c.l.b16 %v1617
  %v2129 = vunpack.c.l.b16 %v1618
  %v2130 = vunpack.c.l.b16 %v1619
  %v2131 = vunpack.c.l.b16 %v1620
  %v2132 = vunpack.c.l.b16 %v1621
  %v2133 = vunpack.c.l.b16 %v1622
  %v2134 = vunpack.c.l.b16 %v1623
  %v2135 = vunpack.c.l.b16 %v1624
  %v2136 = vunpack.c.l.b16 %v1625
  %v2137 = vunpack.c.l.b16 %v1626
  %v2138 = vunpack.c.l.b16 %v1627
  %v2139 = vunpack.c.l.b16 %v1628
  %v2140 = vunpack.c.l.b16 %v1629
  %v2141 = vunpack.c.l.b16 %v1630
  %v2142 = vunpack.c.l.b16 %v1631
  %v2143 = vunpack.c.l.b16 %v1632
  %v2144 = vunpack.c.l.b16 %v1633
  %v2145 = vunpack.c.l.b16 %v1634
  %v2146 = vunpack.c.l.b16 %v1635
  %v2147 = vunpack.c.l.b16 %v1636
  %v2148 = vunpack.c.l.b16 %v1637
  %v2149 = vunpack.c.l.b16 %v1638
  %v2150 = vunpack.c.l.b16 %v1639
  %v2151 = vunpack.c.l.b16 %v1640
  %v2152 = vunpack.c.l.b16 %v1641
  %v2153 = vunpack.c.l.b16 %v1642
  %v2154 = vunpack.c.l.b16 %v1643
  %v2155 = vunpack.c.l.b16 %v1644
  %v2156 = vunpack.c.l.b16 %v1645
  %v2157 = vunpack.c.l.b16 %v1646
  %v2158 = vunpack.c.l.b16 %v1647
  %v2159 = vunpack.c.l.b16 %v1648
  %v2160 = vunpack.c.l.b16 %v1649
  %v2161 = vunpack.c.l.b16 %v1650
  %v2162 = vunpack.c.l.b16 %v1651
  %v2163 = vunpack.c.l.b16 %v1652
  %v2164 = vunpack.c.l.b16 %v1653
  %v2165 = vunpack.c.l.b16 %v1654
  %v2166 = vunpack.c.l.b16 %v1655
  %v2167 = vunpack.c.l.b16 %v1656
  %v2168 = vunpack.c.l.b16 %v1657
  %v2169 = vunpack.c.l.b16 %v1658
  %v2170 = vunpack.c.l.b16 %v1659
  %v2171 = vunpack.c.l.b16 %v1660
  %v2172 = vunpack.c.l.b16 %v1661
  %v2173 = vunpack.c.l.b16 %v1662
  %v2174 = vunpack.c.l.b16 %v1663
  %v2175 = vunpack.c.l.b16 %v1664
  %v2176 = vunpack.c.l.b16 %v1665
  %v2177 = vunpack.c.l.b16 %v1666
  %v2178 = vunpack.c.l.b16 %v1667
  %v2179 = vunpack.c.l.b16 %v1668
  %v2180 = vunpack.c.l.b16 %v1669
  %v2181 = vunpack.c.l.b16 %v1670
  %v2182 = vunpack.c.l.b16 %v1671
  %v2183 = vunpack.c.l.b16 %v1672
  %v2184 = vpack.c.b16 %v2041, %v2040
  %v2185 = vpack.c.b16 %v2043, %v2042
  %v2186 = vpack.c.b16 %v2045, %v2044
  %v2187 = vpack.c.b16 %v2047, %v2046
  %v2188 = vpack.c.b16 %v2049, %v2048
  %v2189 = vpack.c.b16 %v2051, %v2050
  %v2190 = vpack.c.b16 %v2053, %v2052
  %v2191 = vpack.c.b16 %v2055, %v2054
  %v2192 = vpack.c.b16 %v2057, %v2056
  %v2193 = vpack.c.b16 %v2059, %v2058
  %v2194 = vpack.c.b16 %v2061, %v2060
  %v2195 = vpack.c.b16 %v2063, %v2062
  %v2196 = vpack.c.b16 %v2065, %v2064
  %v2197 = vpack.c.b16 %v2067, %v2066
  %v2198 = vpack.c.b16 %v2069, %v2068
  %v2199 = vpack.c.b16 %v2071, %v2070
  %v2200 = vpack.c.b16 %v2073, %v2072
  %v2201 = vpack.c.b16 %v2075, %v2074
  %v2202 = vpack.c.b16 %v2077, %v2076
  %v2203 = vpack.c.b16 %v2079, %v2078
  %v2204 = vpack.c.b16 %v2081, %v2080
  %v2205 = vpack.c.b16 %v2083, %v2082
  %v2206 = vpack.c.b16 %v2085, %v2084
  %v2207 = vpack.c.b16 %v2087, %v2086
  %v2208 = vpack.c.b16 %v2089, %v2088
  %v2209 = vpack.c.b16 %v2091, %v2090
  %v2210 = vpack.c.b16 %v2093, %v2092
  %v2211 = vpack.c.b16 %v2095, %v2094
  %v2212 = vpack.c.b16 %v2097, %v2096
  %v2213 = vpack.c.b16 %v2099, %v2098
  %v2214 = vpack.c.b16 %v2101, %v2100
  %v2215 = vpack.c.b16 %v2103, %v2102
  %v2216 = vpack.c.b16 %v2105, %v2104
  %v2217 = vpack.c.b16 %v2107, %v2106
  %v2218 = vpack.c.b16 %v2109, %v2108
  %v2219 = vpack.c.b16 %v2111, %v2110
  %v2220 = vpack.c.b16 %v2113, %v2112
  %v2221 = vpack.c.b16 %v2115, %v2114
  %v2222 = vpack.c.b16 %v2117, %v2116
  %v2223 = vpack.c.b16 %v2119, %v2118
  %v2224 = vpack.c.b16 %v2121, %v2120
  %v2225 = vpack.c.b16 %v2123, %v2122
  %v2226 = vpack.c.b16 %v2125, %v2124
  %v2227 = vpack.c.b16 %v2127, %v2126
  %v2228 = vpack.c.b16 %v2129, %v2128
  %v2229 = vpack.c.b16 %v2131, %v2130
  %v2230 = vpack.c.b16 %v2133, %v2132
  %v2231 = vpack.c.b16 %v2135, %v2134
  %v2232 = vpack.c.b16 %v2137, %v2136
  %v2233 = vpack.c.b16 %v2139, %v2138
  %v2234 = vpack.c.b16 %v2141, %v2140
  %v2235 = vpack.c.b16 %v2143, %v2142
  %v2236 = vpack.c.b16 %v2145, %v2144
  %v2237 = vpack.c.b16 %v2147, %v2146
  %v2238 = vpack.c.b16 %v2149, %v2148
  %v2239 = vpack.c.b16 %v2151, %v2150
  %v2240 = vpack.c.b16 %v2153, %v2152
  %v2241 = vpack.c.b16 %v2155, %v2154
  %v2242 = vpack.c.b16 %v2157, %v2156
  %v2243 = vpack.c.b16 %v2159, %v2158
  %v2244 = vpack.c.b16 %v2161, %v2160
  %v2245 = vpack.c.b16 %v2163, %v2162
  %v2246 = vpack.c.b16 %v2165, %v2164
  %v2247 = vpack.c.b16 %v2167, %v2166
  %v2248 = vpack.c.b16 %v2169, %v2168
  %v2249 = vpack.c.b16 %v2171, %v2170
  %v2250 = vpack.c.b16 %v2173, %v2172
  %v2251 = vpack.c.b16 %v2175, %v2174
  %v2252 = vpack.c.b16 %v2177, %v2176
  %v2253 = vpack.c.b16 %v2179, %v2178
  %v2254 = vpack.c.b16 %v2181, %v2180
  %v2255 = vpack.c.b16 %v2183, %v2182
  %2328 = vmatprep.subr.bf16.mxu0 0
  %2329 = vmatpush1.bf16.msra.mxu0 %v2184
  %2330 = vmatprep.subr.bf16.mxu0 0
  %2331 = vmatpush1.bf16.msra.mxu0 %v2185
  %2332 = vmatprep.subr.bf16.mxu0 0
  %2333 = vmatpush1.bf16.msra.mxu0 %v2186
  %2334 = vmatprep.subr.bf16.mxu0 0
  %2335 = vmatpush1.bf16.msra.mxu0 %v2187
  %2336 = vmatprep.subr.bf16.mxu0 0
  %2337 = vmatpush1.bf16.msra.mxu0 %v2188
  %2338 = vmatprep.subr.bf16.mxu0 0
  %2339 = vmatpush1.bf16.msra.mxu0 %v2189
  %2340 = vmatprep.subr.bf16.mxu0 0
  %2341 = vmatpush1.bf16.msra.mxu0 %v2190
  %2342 = vmatprep.subr.bf16.mxu0 0
  %2343 = vmatpush1.bf16.msra.mxu0 %v2191
  %2344 = vmatprep.subr.bf16.mxu0 0
  %2345 = vmatpush1.bf16.msra.mxu0 %v2192
  %2346 = vmatprep.subr.bf16.mxu0 0
  %2347 = vmatpush1.bf16.msra.mxu0 %v2193
  %2348 = vmatprep.subr.bf16.mxu0 0
  %2349 = vmatpush1.bf16.msra.mxu0 %v2194
  %2350 = vmatprep.subr.bf16.mxu0 0
  %2351 = vmatpush1.bf16.msra.mxu0 %v2195
  %2352 = vmatprep.subr.bf16.mxu0 0
  %2353 = vmatpush1.bf16.msra.mxu0 %v2196
  %2354 = vmatprep.subr.bf16.mxu0 0
  %2355 = vmatpush1.bf16.msra.mxu0 %v2197
  %2356 = vmatprep.subr.bf16.mxu0 0
  %2357 = vmatpush1.bf16.msra.mxu0 %v2198
  %2358 = vmatprep.subr.bf16.mxu0 0
  %2359 = vmatpush1.bf16.msra.mxu0 %v2199
  %2360 = vmatprep.mubr.bf16.mxu0 %v1681
  %2361 = vmatmul.mubr.bf16.gmra.mrb[0].mxu0 %v1680
  %v2362 = vpop.f32.mrb[0].mxu0
  %v2363 = vadd.f32 %v1678, %v2362
  %v2364 = vpop.f32.mrb[0].mxu0
  %v2365 = vpop.f32.mrb[0].mxu0
  %v2366 = vadd.f32 %v1678, %v2365
  %v2367 = vpop.f32.mrb[0].mxu0
  %2368 = vmatprep.mubr.bf16.mxu0 %v1690
  %2369 = vmatmul.mubr.bf16.gmra.mrb[0].mxu0 %v1689
  %v2370 = vpop.f32.mrb[0].mxu0
  %v2371 = vadd.f32 %v1678, %v2370
  %v2372 = vpop.f32.mrb[0].mxu0
  %v2373 = vpop.f32.mrb[0].mxu0
  %v2374 = vadd.f32 %v1678, %v2373
  %v2375 = vpop.f32.mrb[0].mxu0
  %2376 = vmatprep.mubr.bf16.mxu0 %v1699
  %2377 = vmatmul.mubr.bf16.gmra.mrb[0].mxu0 %v1698
  %v2378 = vpop.f32.mrb[0].mxu0
  %v2379 = vadd.f32 %v1678, %v2378
  %v2380 = vpop.f32.mrb[0].mxu0
  %v2381 = vpop.f32.mrb[0].mxu0
  %v2382 = vadd.f32 %v1678, %v2381
  %v2383 = vpop.f32.mrb[0].mxu0
  %2384 = vmatprep.mubr.bf16.mxu0 %v1708
  %2385 = vmatmul.mubr.bf16.gmra.mrb[0].mxu0 %v1707
  %v2386 = vpop.f32.mrb[0].mxu0
  %v2387 = vadd.f32 %v1678, %v2386
  %v2388 = vpop.f32.mrb[0].mxu0
  %v2389 = vpop.f32.mrb[0].mxu0
  %v2390 = vadd.f32 %v1678, %v2389
  %v2391 = vpop.f32.mrb[0].mxu0
  %2392 = vmatprep.mubr.bf16.mxu0 %v1717
  %2393 = vmatmul.mubr.bf16.gmra.mrb[0].mxu0 %v1716
  %v2394 = vpop.f32.mrb[0].mxu0
  %v2395 = vadd.f32 %v1678, %v2394
  %v2396 = vpop.f32.mrb[0].mxu0
  %v2397 = vpop.f32.mrb[0].mxu0
  %v2398 = vadd.f32 %v1678, %v2397
  %v2399 = vpop.f32.mrb[0].mxu0
  %2400 = vmatprep.mubr.bf16.mxu0 %v1726
  %2401 = vmatmul.mubr.bf16.gmra.mrb[0].mxu0 %v1725
  %v2402 = vpop.f32.mrb[0].mxu0
  %v2403 = vadd.f32 %v1678, %v2402
  %v2404 = vpop.f32.mrb[0].mxu0
  %v2405 = vpop.f32.mrb[0].mxu0
  %v2406 = vadd.f32 %v1678, %v2405
  %v2407 = vpop.f32.mrb[0].mxu0
  %2408 = vmatprep.mubr.bf16.mxu0 %v1735
  %2409 = vmatmul.mubr.bf16.gmra.mrb[0].mxu0 %v1734
  %v2410 = vpop.f32.mrb[0].mxu0
  %v2411 = vadd.f32 %v1678, %v2410
  %v2412 = vpop.f32.mrb[0].mxu0
  %v2413 = vpop.f32.mrb[0].mxu0
  %v2414 = vadd.f32 %v1678, %v2413
  %v2415 = vpop.f32.mrb[0].mxu0
  %2416 = vmatprep.mubr.bf16.mxu0 %v1744
  %2417 = vmatmul.mubr.bf16.gmra.mrb[0].mxu0 %v1743
  %v2418 = vpop.f32.mrb[0].mxu0
  %v2419 = vadd.f32 %v1678, %v2418
  %v2420 = vpop.f32.mrb[0].mxu0
  %v2421 = vpop.f32.mrb[0].mxu0
  %v2422 = vadd.f32 %v1678, %v2421
  %v2423 = vpop.f32.mrb[0].mxu0
  %2424 = vmatprep.mubr.bf16.mxu0 %v1753
  %2425 = vmatmul.mubr.bf16.gmra.mrb[0].mxu0 %v1752
  %v2426 = vpop.f32.mrb[0].mxu0
  %v2427 = vadd.f32 %v1678, %v2426
  %v2428 = vpop.f32.mrb[0].mxu0
  %v2429 = vpop.f32.mrb[0].mxu0
  %v2430 = vadd.f32 %v1678, %v2429
  %v2431 = vpop.f32.mrb[0].mxu0
  %2432 = vmatprep.mubr.bf16.mxu0 %v1762
  %2433 = vmatmul.mubr.bf16.gmra.mrb[0].mxu0 %v1761
  %v2434 = vpop.f32.mrb[0].mxu0
  %v2435 = vadd.f32 %v1678, %v2434
  %v2436 = vpop.f32.mrb[0].mxu0
  %v2437 = vpop.f32.mrb[0].mxu0
  %v2438 = vadd.f32 %v1678, %v2437
  %v2439 = vpop.f32.mrb[0].mxu0
  %2440 = vmatprep.mubr.bf16.mxu0 %v1771
  %2441 = vmatmul.mubr.bf16.gmra.mrb[0].mxu0 %v1770
  %v2442 = vpop.f32.mrb[0].mxu0
  %v2443 = vadd.f32 %v1678, %v2442
  %v2444 = vpop.f32.mrb[0].mxu0
  %v2445 = vpop.f32.mrb[0].mxu0
  %v2446 = vadd.f32 %v1678, %v2445
  %v2447 = vpop.f32.mrb[0].mxu0
  %2448 = vmatprep.mubr.bf16.mxu0 %v1780
  %2449 = vmatmul.mubr.bf16.gmra.mrb[0].mxu0 %v1779
  %v2450 = vpop.f32.mrb[0].mxu0
  %v2451 = vadd.f32 %v1678, %v2450
  %v2452 = vpop.f32.mrb[0].mxu0
  %v2453 = vpop.f32.mrb[0].mxu0
  %v2454 = vadd.f32 %v1678, %v2453
  %v2455 = vpop.f32.mrb[0].mxu0
  %2456 = vdwg.mxu0
  %2457 = vmatprep.subr.bf16.mxu0 0
  %2458 = vmatpush1.bf16.msra.mxu0 %v2200
  %2459 = vmatprep.subr.bf16.mxu0 0
  %2460 = vmatpush1.bf16.msra.mxu0 %v2201
  %2461 = vmatprep.subr.bf16.mxu0 0
  %2462 = vmatpush1.bf16.msra.mxu0 %v2202
  %2463 = vmatprep.subr.bf16.mxu0 0
  %2464 = vmatpush1.bf16.msra.mxu0 %v2203
  %2465 = vmatprep.subr.bf16.mxu0 0
  %2466 = vmatpush1.bf16.msra.mxu0 %v2204
  %2467 = vmatprep.subr.bf16.mxu0 0
  %2468 = vmatpush1.bf16.msra.mxu0 %v2205
  %2469 = vmatprep.subr.bf16.mxu0 0
  %2470 = vmatpush1.bf16.msra.mxu0 %v2206
  %2471 = vmatprep.subr.bf16.mxu0 0
  %2472 = vmatpush1.bf16.msra.mxu0 %v2207
  %2473 = vmatprep.subr.bf16.mxu0 0
  %2474 = vmatpush1.bf16.msra.mxu0 %v2208
  %2475 = vmatprep.subr.bf16.mxu0 0
  %2476 = vmatpush1.bf16.msra.mxu0 %v2209
  %2477 = vmatprep.subr.bf16.mxu0 0
  %2478 = vmatpush1.bf16.msra.mxu0 %v2210
  %2479 = vmatprep.subr.bf16.mxu0 0
  %2480 = vmatpush1.bf16.msra.mxu0 %v2211
  %2481 = vmatprep.subr.bf16.mxu0 0
  %2482 = vmatpush1.bf16.msra.mxu0 %v2212
  %2483 = vmatprep.subr.bf16.mxu0 0
  %2484 = vmatpush1.bf16.msra.mxu0 %v2213
  %2485 = vmatprep.subr.bf16.mxu0 0
  %2486 = vmatpush1.bf16.msra.mxu0 %v2214
  %2487 = vmatprep.subr.bf16.mxu0 0
  %2488 = vmatpush1.bf16.msra.mxu0 %v2215
  %2489 = vmatprep.mubr.bf16.mxu0 %v1683
  %2490 = vmatmul.mubr.bf16.gmra.mrb[0].mxu0 %v1682
  %v2491 = vpop.f32.mrb[0].mxu0
  %v2492 = vadd.f32 %v2363, %v2491
  %v2493 = vpop.f32.mrb[0].mxu0
  %v2494 = vpop.f32.mrb[0].mxu0
  %v2495 = vadd.f32 %v2366, %v2494
  %v2496 = vpop.f32.mrb[0].mxu0
  %2497 = vmatprep.mubr.bf16.mxu0 %v1692
  %2498 = vmatmul.mubr.bf16.gmra.mrb[0].mxu0 %v1691
  %v2499 = vpop.f32.mrb[0].mxu0
  %v2500 = vadd.f32 %v2371, %v2499
  %v2501 = vpop.f32.mrb[0].mxu0
  %v2502 = vpop.f32.mrb[0].mxu0
  %v2503 = vadd.f32 %v2374, %v2502
  %v2504 = vpop.f32.mrb[0].mxu0
  %2505 = vmatprep.mubr.bf16.mxu0 %v1701
  %2506 = vmatmul.mubr.bf16.gmra.mrb[0].mxu0 %v1700
  %v2507 = vpop.f32.mrb[0].mxu0
  %v2508 = vadd.f32 %v2379, %v2507
  %v2509 = vpop.f32.mrb[0].mxu0
  %v2510 = vpop.f32.mrb[0].mxu0
  %v2511 = vadd.f32 %v2382, %v2510
  %v2512 = vpop.f32.mrb[0].mxu0
  %2513 = vmatprep.mubr.bf16.mxu0 %v1710
  %2514 = vmatmul.mubr.bf16.gmra.mrb[0].mxu0 %v1709
  %v2515 = vpop.f32.mrb[0].mxu0
  %v2516 = vadd.f32 %v2387, %v2515
  %v2517 = vpop.f32.mrb[0].mxu0
  %v2518 = vpop.f32.mrb[0].mxu0
  %v2519 = vadd.f32 %v2390, %v2518
  %v2520 = vpop.f32.mrb[0].mxu0
  %2521 = vmatprep.mubr.bf16.mxu0 %v1719
  %2522 = vmatmul.mubr.bf16.gmra.mrb[0].mxu0 %v1718
  %v2523 = vpop.f32.mrb[0].mxu0
  %v2524 = vadd.f32 %v2395, %v2523
  %v2525 = vpop.f32.mrb[0].mxu0
  %v2526 = vpop.f32.mrb[0].mxu0
  %v2527 = vadd.f32 %v2398, %v2526
  %v2528 = vpop.f32.mrb[0].mxu0
  %2529 = vmatprep.mubr.bf16.mxu0 %v1728
  %2530 = vmatmul.mubr.bf16.gmra.mrb[0].mxu0 %v1727
  %v2531 = vpop.f32.mrb[0].mxu0
  %v2532 = vadd.f32 %v2403, %v2531
  %v2533 = vpop.f32.mrb[0].mxu0
  %v2534 = vpop.f32.mrb[0].mxu0
  %v2535 = vadd.f32 %v2406, %v2534
  %v2536 = vpop.f32.mrb[0].mxu0
  %2537 = vmatprep.mubr.bf16.mxu0 %v1737
  %2538 = vmatmul.mubr.bf16.gmra.mrb[0].mxu0 %v1736
  %v2539 = vpop.f32.mrb[0].mxu0
  %v2540 = vadd.f32 %v2411, %v2539
  %v2541 = vpop.f32.mrb[0].mxu0
  %v2542 = vpop.f32.mrb[0].mxu0
  %v2543 = vadd.f32 %v2414, %v2542
  %v2544 = vpop.f32.mrb[0].mxu0
  %2545 = vmatprep.mubr.bf16.mxu0 %v1746
  %2546 = vmatmul.mubr.bf16.gmra.mrb[0].mxu0 %v1745
  %v2547 = vpop.f32.mrb[0].mxu0
  %v2548 = vadd.f32 %v2419, %v2547
  %v2549 = vpop.f32.mrb[0].mxu0
  %v2550 = vpop.f32.mrb[0].mxu0
  %v2551 = vadd.f32 %v2422, %v2550
  %v2552 = vpop.f32.mrb[0].mxu0
  %2553 = vmatprep.mubr.bf16.mxu0 %v1755
  %2554 = vmatmul.mubr.bf16.gmra.mrb[0].mxu0 %v1754
  %v2555 = vpop.f32.mrb[0].mxu0
  %v2556 = vadd.f32 %v2427, %v2555
  %v2557 = vpop.f32.mrb[0].mxu0
  %v2558 = vpop.f32.mrb[0].mxu0
  %v2559 = vadd.f32 %v2430, %v2558
  %v2560 = vpop.f32.mrb[0].mxu0
  %2561 = vmatprep.mubr.bf16.mxu0 %v1764
  %2562 = vmatmul.mubr.bf16.gmra.mrb[0].mxu0 %v1763
  %v2563 = vpop.f32.mrb[0].mxu0
  %v2564 = vadd.f32 %v2435, %v2563
  %v2565 = vpop.f32.mrb[0].mxu0
  %v2566 = vpop.f32.mrb[0].mxu0
  %v2567 = vadd.f32 %v2438, %v2566
  %v2568 = vpop.f32.mrb[0].mxu0
  %2569 = vmatprep.mubr.bf16.mxu0 %v1773
  %2570 = vmatmul.mubr.bf16.gmra.mrb[0].mxu0 %v1772
  %v2571 = vpop.f32.mrb[0].mxu0
  %v2572 = vadd.f32 %v2443, %v2571
  %v2573 = vpop.f32.mrb[0].mxu0
  %v2574 = vpop.f32.mrb[0].mxu0
  %v2575 = vadd.f32 %v2446, %v2574
  %v2576 = vpop.f32.mrb[0].mxu0
  %2577 = vmatprep.mubr.bf16.mxu0 %v1782
  %2578 = vmatmul.mubr.bf16.gmra.mrb[0].mxu0 %v1781
  %v2579 = vpop.f32.mrb[0].mxu0
  %v2580 = vadd.f32 %v2451, %v2579
  %v2581 = vpop.f32.mrb[0].mxu0
  %v2582 = vpop.f32.mrb[0].mxu0
  %v2583 = vadd.f32 %v2454, %v2582
  %v2584 = vpop.f32.mrb[0].mxu0
  %2585 = vdwg.mxu0
  %2586 = vmatprep.subr.bf16.mxu0 0
  %2587 = vmatpush1.bf16.msra.mxu0 %v2216
  %2588 = vmatprep.subr.bf16.mxu0 0
  %2589 = vmatpush1.bf16.msra.mxu0 %v2217
  %2590 = vmatprep.subr.bf16.mxu0 0
  %2591 = vmatpush1.bf16.msra.mxu0 %v2218
  %2592 = vmatprep.subr.bf16.mxu0 0
  %2593 = vmatpush1.bf16.msra.mxu0 %v2219
  %2594 = vmatprep.subr.bf16.mxu0 0
  %2595 = vmatpush1.bf16.msra.mxu0 %v2220
  %2596 = vmatprep.subr.bf16.mxu0 0
  %2597 = vmatpush1.bf16.msra.mxu0 %v2221
  %2598 = vmatprep.subr.bf16.mxu0 0
  %2599 = vmatpush1.bf16.msra.mxu0 %v2222
  %2600 = vmatprep.subr.bf16.mxu0 0
  %2601 = vmatpush1.bf16.msra.mxu0 %v2223
  %2602 = vmatprep.subr.bf16.mxu0 0
  %2603 = vmatpush1.bf16.msra.mxu0 %v2224
  %2604 = vmatprep.subr.bf16.mxu0 0
  %2605 = vmatpush1.bf16.msra.mxu0 %v2225
  %2606 = vmatprep.subr.bf16.mxu0 0
  %2607 = vmatpush1.bf16.msra.mxu0 %v2226
  %2608 = vmatprep.subr.bf16.mxu0 0
  %2609 = vmatpush1.bf16.msra.mxu0 %v2227
  %2610 = vmatprep.subr.bf16.mxu0 0
  %2611 = vmatpush1.bf16.msra.mxu0 %v2228
  %2612 = vmatprep.subr.bf16.mxu0 0
  %2613 = vmatpush1.bf16.msra.mxu0 %v2229
  %2614 = vmatprep.subr.bf16.mxu0 0
  %2615 = vmatpush1.bf16.msra.mxu0 %v2230
  %2616 = vmatprep.subr.bf16.mxu0 0
  %2617 = vmatpush1.bf16.msra.mxu0 %v2231
  %2618 = vmatprep.mubr.bf16.mxu0 %v1685
  %2619 = vmatmul.mubr.bf16.gmra.mrb[0].mxu0 %v1684
  %v2620 = vpop.f32.mrb[0].mxu0
  %v2621 = vadd.f32 %v2492, %v2620
  %v2622 = vpop.f32.mrb[0].mxu0
  %v2623 = vpop.f32.mrb[0].mxu0
  %v2624 = vadd.f32 %v2495, %v2623
  %v2625 = vpop.f32.mrb[0].mxu0
  %2626 = vmatprep.mubr.bf16.mxu0 %v1694
  %2627 = vmatmul.mubr.bf16.gmra.mrb[0].mxu0 %v1693
  %v2628 = vpop.f32.mrb[0].mxu0
  %v2629 = vadd.f32 %v2500, %v2628
  %v2630 = vpop.f32.mrb[0].mxu0
  %v2631 = vpop.f32.mrb[0].mxu0
  %v2632 = vadd.f32 %v2503, %v2631
  %v2633 = vpop.f32.mrb[0].mxu0
  %2634 = vmatprep.mubr.bf16.mxu0 %v1703
  %2635 = vmatmul.mubr.bf16.gmra.mrb[0].mxu0 %v1702
  %v2636 = vpop.f32.mrb[0].mxu0
  %v2637 = vadd.f32 %v2508, %v2636
  %v2638 = vpop.f32.mrb[0].mxu0
  %v2639 = vpop.f32.mrb[0].mxu0
  %v2640 = vadd.f32 %v2511, %v2639
  %v2641 = vpop.f32.mrb[0].mxu0
  %2642 = vmatprep.mubr.bf16.mxu0 %v1712
  %2643 = vmatmul.mubr.bf16.gmra.mrb[0].mxu0 %v1711
  %v2644 = vpop.f32.mrb[0].mxu0
  %v2645 = vadd.f32 %v2516, %v2644
  %v2646 = vpop.f32.mrb[0].mxu0
  %v2647 = vpop.f32.mrb[0].mxu0
  %v2648 = vadd.f32 %v2519, %v2647
  %v2649 = vpop.f32.mrb[0].mxu0
  %2650 = vmatprep.mubr.bf16.mxu0 %v1721
  %2651 = vmatmul.mubr.bf16.gmra.mrb[0].mxu0 %v1720
  %v2652 = vpop.f32.mrb[0].mxu0
  %v2653 = vadd.f32 %v2524, %v2652
  %v2654 = vpop.f32.mrb[0].mxu0
  %v2655 = vpop.f32.mrb[0].mxu0
  %v2656 = vadd.f32 %v2527, %v2655
  %v2657 = vpop.f32.mrb[0].mxu0
  %2658 = vmatprep.mubr.bf16.mxu0 %v1730
  %2659 = vmatmul.mubr.bf16.gmra.mrb[0].mxu0 %v1729
  %v2660 = vpop.f32.mrb[0].mxu0
  %v2661 = vadd.f32 %v2532, %v2660
  %v2662 = vpop.f32.mrb[0].mxu0
  %v2663 = vpop.f32.mrb[0].mxu0
  %v2664 = vadd.f32 %v2535, %v2663
  %v2665 = vpop.f32.mrb[0].mxu0
  %2666 = vmatprep.mubr.bf16.mxu0 %v1739
  %2667 = vmatmul.mubr.bf16.gmra.mrb[0].mxu0 %v1738
  %v2668 = vpop.f32.mrb[0].mxu0
  %v2669 = vadd.f32 %v2540, %v2668
  %v2670 = vpop.f32.mrb[0].mxu0
  %v2671 = vpop.f32.mrb[0].mxu0
  %v2672 = vadd.f32 %v2543, %v2671
  %v2673 = vpop.f32.mrb[0].mxu0
  %2674 = vmatprep.mubr.bf16.mxu0 %v1748
  %2675 = vmatmul.mubr.bf16.gmra.mrb[0].mxu0 %v1747
  %v2676 = vpop.f32.mrb[0].mxu0
  %v2677 = vadd.f32 %v2548, %v2676
  %v2678 = vpop.f32.mrb[0].mxu0
  %v2679 = vpop.f32.mrb[0].mxu0
  %v2680 = vadd.f32 %v2551, %v2679
  %v2681 = vpop.f32.mrb[0].mxu0
  %2682 = vmatprep.mubr.bf16.mxu0 %v1757
  %2683 = vmatmul.mubr.bf16.gmra.mrb[0].mxu0 %v1756
  %v2684 = vpop.f32.mrb[0].mxu0
  %v2685 = vadd.f32 %v2556, %v2684
  %v2686 = vpop.f32.mrb[0].mxu0
  %v2687 = vpop.f32.mrb[0].mxu0
  %v2688 = vadd.f32 %v2559, %v2687
  %v2689 = vpop.f32.mrb[0].mxu0
  %2690 = vmatprep.mubr.bf16.mxu0 %v1766
  %2691 = vmatmul.mubr.bf16.gmra.mrb[0].mxu0 %v1765
  %v2692 = vpop.f32.mrb[0].mxu0
  %v2693 = vadd.f32 %v2564, %v2692
  %v2694 = vpop.f32.mrb[0].mxu0
  %v2695 = vpop.f32.mrb[0].mxu0
  %v2696 = vadd.f32 %v2567, %v2695
  %v2697 = vpop.f32.mrb[0].mxu0
  %2698 = vmatprep.mubr.bf16.mxu0 %v1775
  %2699 = vmatmul.mubr.bf16.gmra.mrb[0].mxu0 %v1774
  %v2700 = vpop.f32.mrb[0].mxu0
  %v2701 = vadd.f32 %v2572, %v2700
  %v2702 = vpop.f32.mrb[0].mxu0
  %v2703 = vpop.f32.mrb[0].mxu0
  %v2704 = vadd.f32 %v2575, %v2703
  %v2705 = vpop.f32.mrb[0].mxu0
  %2706 = vmatprep.mubr.bf16.mxu0 %v1784
  %2707 = vmatmul.mubr.bf16.gmra.mrb[0].mxu0 %v1783
  %v2708 = vpop.f32.mrb[0].mxu0
  %v2709 = vadd.f32 %v2580, %v2708
  %v2710 = vpop.f32.mrb[0].mxu0
  %v2711 = vpop.f32.mrb[0].mxu0
  %v2712 = vadd.f32 %v2583, %v2711
  %v2713 = vpop.f32.mrb[0].mxu0
  %2714 = vdwg.mxu0
  %2715 = vmatprep.subr.bf16.mxu0 0
  %2716 = vmatpush1.bf16.msra.mxu0 %v2232
  %2717 = vmatprep.subr.bf16.mxu0 0
  %2718 = vmatpush1.bf16.msra.mxu0 %v2233
  %2719 = vmatprep.subr.bf16.mxu0 0
  %2720 = vmatpush1.bf16.msra.mxu0 %v2234
  %2721 = vmatprep.subr.bf16.mxu0 0
  %2722 = vmatpush1.bf16.msra.mxu0 %v2235
  %2723 = vmatprep.subr.bf16.mxu0 0
  %2724 = vmatpush1.bf16.msra.mxu0 %v2236
  %2725 = vmatprep.subr.bf16.mxu0 0
  %2726 = vmatpush1.bf16.msra.mxu0 %v2237
  %2727 = vmatprep.subr.bf16.mxu0 0
  %2728 = vmatpush1.bf16.msra.mxu0 %v2238
  %2729 = vmatprep.subr.bf16.mxu0 0
  %2730 = vmatpush1.bf16.msra.mxu0 %v2239
  %2731 = vmatprep.subr.bf16.mxu0 0
  %2732 = vmatpush1.bf16.msra.mxu0 %v2240
  %2733 = vmatprep.subr.bf16.mxu0 0
  %2734 = vmatpush1.bf16.msra.mxu0 %v2241
  %2735 = vmatprep.subr.bf16.mxu0 0
  %2736 = vmatpush1.bf16.msra.mxu0 %v2242
  %2737 = vmatprep.subr.bf16.mxu0 0
  %2738 = vmatpush1.bf16.msra.mxu0 %v2243
  %2739 = vmatprep.subr.bf16.mxu0 0
  %2740 = vmatpush1.bf16.msra.mxu0 %v2244
  %2741 = vmatprep.subr.bf16.mxu0 0
  %2742 = vmatpush1.bf16.msra.mxu0 %v2245
  %2743 = vmatprep.subr.bf16.mxu0 0
  %2744 = vmatpush1.bf16.msra.mxu0 %v2246
  %2745 = vmatprep.subr.bf16.mxu0 0
  %2746 = vmatpush1.bf16.msra.mxu0 %v2247
  %2747 = vmatprep.mubr.bf16.mxu0 %v1687
  %2748 = vmatmul.mubr.bf16.gmra.mrb[0].mxu0 %v1686
  %v2749 = vpop.f32.mrb[0].mxu0
  %v2750 = vadd.f32 %v2621, %v2749
  %v2751 = vpop.f32.mrb[0].mxu0
  %v2752 = vpop.f32.mrb[0].mxu0
  %v2753 = vadd.f32 %v2624, %v2752
  %v2754 = vpop.f32.mrb[0].mxu0
  %2755 = vmatprep.mubr.bf16.mxu0 %v1696
  %2756 = vmatmul.mubr.bf16.gmra.mrb[0].mxu0 %v1695
  %v2757 = vpop.f32.mrb[0].mxu0
  %v2758 = vadd.f32 %v2629, %v2757
  %v2759 = vpop.f32.mrb[0].mxu0
  %v2760 = vpop.f32.mrb[0].mxu0
  %v2761 = vadd.f32 %v2632, %v2760
  %v2762 = vpop.f32.mrb[0].mxu0
  %2763 = vmatprep.mubr.bf16.mxu0 %v1705
  %2764 = vmatmul.mubr.bf16.gmra.mrb[0].mxu0 %v1704
  %v2765 = vpop.f32.mrb[0].mxu0
  %v2766 = vadd.f32 %v2637, %v2765
  %v2767 = vpop.f32.mrb[0].mxu0
  %v2768 = vpop.f32.mrb[0].mxu0
  %v2769 = vadd.f32 %v2640, %v2768
  %v2770 = vpop.f32.mrb[0].mxu0
  %2771 = vmatprep.mubr.bf16.mxu0 %v1714
  %2772 = vmatmul.mubr.bf16.gmra.mrb[0].mxu0 %v1713
  %v2773 = vpop.f32.mrb[0].mxu0
  %v2774 = vadd.f32 %v2645, %v2773
  %v2775 = vpop.f32.mrb[0].mxu0
  %v2776 = vpop.f32.mrb[0].mxu0
  %v2777 = vadd.f32 %v2648, %v2776
  %v2778 = vpop.f32.mrb[0].mxu0
  %2779 = vmatprep.mubr.bf16.mxu0 %v1723
  %2780 = vmatmul.mubr.bf16.gmra.mrb[0].mxu0 %v1722
  %v2781 = vpop.f32.mrb[0].mxu0
  %v2782 = vadd.f32 %v2653, %v2781
  %v2783 = vpop.f32.mrb[0].mxu0
  %v2784 = vpop.f32.mrb[0].mxu0
  %v2785 = vadd.f32 %v2656, %v2784
  %v2786 = vpop.f32.mrb[0].mxu0
  %2787 = vmatprep.mubr.bf16.mxu0 %v1732
  %2788 = vmatmul.mubr.bf16.gmra.mrb[0].mxu0 %v1731
  %v2789 = vpop.f32.mrb[0].mxu0
  %v2790 = vadd.f32 %v2661, %v2789
  %v2791 = vpop.f32.mrb[0].mxu0
  %v2792 = vpop.f32.mrb[0].mxu0
  %v2793 = vadd.f32 %v2664, %v2792
  %v2794 = vpop.f32.mrb[0].mxu0
  %2795 = vmatprep.mubr.bf16.mxu0 %v1741
  %2796 = vmatmul.mubr.bf16.gmra.mrb[0].mxu0 %v1740
  %v2797 = vpop.f32.mrb[0].mxu0
  %v2798 = vadd.f32 %v2669, %v2797
  %v2799 = vpop.f32.mrb[0].mxu0
  %v2800 = vpop.f32.mrb[0].mxu0
  %v2801 = vadd.f32 %v2672, %v2800
  %v2802 = vpop.f32.mrb[0].mxu0
  %2803 = vmatprep.mubr.bf16.mxu0 %v1750
  %2804 = vmatmul.mubr.bf16.gmra.mrb[0].mxu0 %v1749
  %v2805 = vpop.f32.mrb[0].mxu0
  %v2806 = vadd.f32 %v2677, %v2805
  %v2807 = vpop.f32.mrb[0].mxu0
  %v2808 = vpop.f32.mrb[0].mxu0
  %v2809 = vadd.f32 %v2680, %v2808
  %v2810 = vpop.f32.mrb[0].mxu0
  %2811 = vmatprep.mubr.bf16.mxu0 %v1759
  %2812 = vmatmul.mubr.bf16.gmra.mrb[0].mxu0 %v1758
  %v2813 = vpop.f32.mrb[0].mxu0
  %v2814 = vadd.f32 %v2685, %v2813
  %v2815 = vpop.f32.mrb[0].mxu0
  %v2816 = vpop.f32.mrb[0].mxu0
  %v2817 = vadd.f32 %v2688, %v2816
  %v2818 = vpop.f32.mrb[0].mxu0
  %2819 = vmatprep.mubr.bf16.mxu0 %v1768
  %2820 = vmatmul.mubr.bf16.gmra.mrb[0].mxu0 %v1767
  %v2821 = vpop.f32.mrb[0].mxu0
  %v2822 = vadd.f32 %v2693, %v2821
  %v2823 = vpop.f32.mrb[0].mxu0
  %v2824 = vpop.f32.mrb[0].mxu0
  %v2825 = vadd.f32 %v2696, %v2824
  %v2826 = vpop.f32.mrb[0].mxu0
  %2827 = vmatprep.mubr.bf16.mxu0 %v1777
  %2828 = vmatmul.mubr.bf16.gmra.mrb[0].mxu0 %v1776
  %v2829 = vpop.f32.mrb[0].mxu0
  %v2830 = vadd.f32 %v2701, %v2829
  %v2831 = vpop.f32.mrb[0].mxu0
  %v2832 = vpop.f32.mrb[0].mxu0
  %v2833 = vadd.f32 %v2704, %v2832
  %v2834 = vpop.f32.mrb[0].mxu0
  %2835 = vmatprep.mubr.bf16.mxu0 %v1786
  %2836 = vmatmul.mubr.bf16.gmra.mrb[0].mxu0 %v1785
  %v2837 = vpop.f32.mrb[0].mxu0
  %v2838 = vadd.f32 %v2709, %v2837
  %v2839 = vpop.f32.mrb[0].mxu0
  %v2840 = vpop.f32.mrb[0].mxu0
  %v2841 = vadd.f32 %v2712, %v2840
  %v2842 = vpop.f32.mrb[0].mxu0
  %2843 = vdwg.mxu0
  %2844 = vmatprep.subr.bf16.mxu0 0
  %2845 = vmatpush1.bf16.msra.mxu0 %v2248
  %2846 = vmatprep.subr.bf16.mxu0 0
  %2847 = vmatpush1.bf16.msra.mxu0 %v2249
  %2848 = vmatprep.subr.bf16.mxu0 0
  %2849 = vmatpush1.bf16.msra.mxu0 %v2250
  %2850 = vmatprep.subr.bf16.mxu0 0
  %2851 = vmatpush1.bf16.msra.mxu0 %v2251
  %2852 = vmatprep.subr.bf16.mxu0 0
  %2853 = vmatpush1.bf16.msra.mxu0 %v2252
  %2854 = vmatprep.subr.bf16.mxu0 0
  %2855 = vmatpush1.bf16.msra.mxu0 %v2253
  %2856 = vmatprep.subr.bf16.mxu0 0
  %2857 = vmatpush1.bf16.msra.mxu0 %v2254
  %2858 = vmatprep.subr.bf16.mxu0 0
  %2859 = vmatpush1.bf16.msra.mxu0 %v2255
  %2860 = vmatprep.subr.bf16.mxu0 0
  %2861 = vmatpush1.bf16.msra.mxu0 0
  %2862 = vmatprep.subr.bf16.mxu0 0
  %2863 = vmatpush1.bf16.msra.mxu0 0
  %2864 = vmatprep.subr.bf16.mxu0 0
  %2865 = vmatpush1.bf16.msra.mxu0 0
  %2866 = vmatprep.subr.bf16.mxu0 0
  %2867 = vmatpush1.bf16.msra.mxu0 0
  %2868 = vmatprep.subr.bf16.mxu0 0
  %2869 = vmatpush1.bf16.msra.mxu0 0
  %2870 = vmatprep.subr.bf16.mxu0 0
  %2871 = vmatpush1.bf16.msra.mxu0 0
  %2872 = vmatprep.subr.bf16.mxu0 0
  %2873 = vmatpush1.bf16.msra.mxu0 0
  %2874 = vmatprep.subr.bf16.mxu0 0
  %2875 = vmatpush1.bf16.msra.mxu0 0
  %2876 = vmatprep.mubr.bf16.mxu0 0
  %2877 = vmatmul.mubr.bf16.gmra.mrb[0].mxu0 %v1688
  %v2878 = vpop.f32.mrb[0].mxu0
  %v2879 = vadd.f32 %v2750, %v2878
  %v2880 = vpop.f32.mrb[0].mxu0
  %v2881 = vpop.f32.mrb[0].mxu0
  %v2882 = vadd.f32 %v2753, %v2881
  %v2883 = vpop.f32.mrb[0].mxu0
  %2884 = vmatprep.mubr.bf16.mxu0 0
  %2885 = vmatmul.mubr.bf16.gmra.mrb[0].mxu0 %v1697
  %v2886 = vpop.f32.mrb[0].mxu0
  %v2887 = vadd.f32 %v2758, %v2886
  %v2888 = vpop.f32.mrb[0].mxu0
  %v2889 = vpop.f32.mrb[0].mxu0
  %v2890 = vadd.f32 %v2761, %v2889
  %v2891 = vpop.f32.mrb[0].mxu0
  %2892 = vmatprep.mubr.bf16.mxu0 0
  %2893 = vmatmul.mubr.bf16.gmra.mrb[0].mxu0 %v1706
  %v2894 = vpop.f32.mrb[0].mxu0
  %v2895 = vadd.f32 %v2766, %v2894
  %v2896 = vpop.f32.mrb[0].mxu0
  %v2897 = vpop.f32.mrb[0].mxu0
  %v2898 = vadd.f32 %v2769, %v2897
  %v2899 = vpop.f32.mrb[0].mxu0
  %2900 = vmatprep.mubr.bf16.mxu0 0
  %2901 = vmatmul.mubr.bf16.gmra.mrb[0].mxu0 %v1715
  %v2902 = vpop.f32.mrb[0].mxu0
  %v2903 = vadd.f32 %v2774, %v2902
  %v2904 = vpop.f32.mrb[0].mxu0
  %v2905 = vpop.f32.mrb[0].mxu0
  %v2906 = vadd.f32 %v2777, %v2905
  %v2907 = vpop.f32.mrb[0].mxu0
  %2908 = vmatprep.mubr.bf16.mxu0 0
  %2909 = vmatmul.mubr.bf16.gmra.mrb[0].mxu0 %v1724
  %v2910 = vpop.f32.mrb[0].mxu0
  %v2911 = vadd.f32 %v2782, %v2910
  %v2912 = vpop.f32.mrb[0].mxu0
  %v2913 = vpop.f32.mrb[0].mxu0
  %v2914 = vadd.f32 %v2785, %v2913
  %v2915 = vpop.f32.mrb[0].mxu0
  %2916 = vmatprep.mubr.bf16.mxu0 0
  %2917 = vmatmul.mubr.bf16.gmra.mrb[0].mxu0 %v1733
  %v2918 = vpop.f32.mrb[0].mxu0
  %v2919 = vadd.f32 %v2790, %v2918
  %v2920 = vpop.f32.mrb[0].mxu0
  %v2921 = vpop.f32.mrb[0].mxu0
  %v2922 = vadd.f32 %v2793, %v2921
  %v2923 = vpop.f32.mrb[0].mxu0
  %2924 = vmatprep.mubr.bf16.mxu0 0
  %2925 = vmatmul.mubr.bf16.gmra.mrb[0].mxu0 %v1742
  %v2926 = vpop.f32.mrb[0].mxu0
  %v2927 = vadd.f32 %v2798, %v2926
  %v2928 = vpop.f32.mrb[0].mxu0
  %v2929 = vpop.f32.mrb[0].mxu0
  %v2930 = vadd.f32 %v2801, %v2929
  %v2931 = vpop.f32.mrb[0].mxu0
  %2932 = vmatprep.mubr.bf16.mxu0 0
  %2933 = vmatmul.mubr.bf16.gmra.mrb[0].mxu0 %v1751
  %v2934 = vpop.f32.mrb[0].mxu0
  %v2935 = vadd.f32 %v2806, %v2934
  %v2936 = vpop.f32.mrb[0].mxu0
  %v2937 = vpop.f32.mrb[0].mxu0
  %v2938 = vadd.f32 %v2809, %v2937
  %v2939 = vpop.f32.mrb[0].mxu0
  %2940 = vmatprep.mubr.bf16.mxu0 0
  %2941 = vmatmul.mubr.bf16.gmra.mrb[0].mxu0 %v1760
  %v2942 = vpop.f32.mrb[0].mxu0
  %v2943 = vadd.f32 %v2814, %v2942
  %v2944 = vpop.f32.mrb[0].mxu0
  %v2945 = vpop.f32.mrb[0].mxu0
  %v2946 = vadd.f32 %v2817, %v2945
  %v2947 = vpop.f32.mrb[0].mxu0
  %2948 = vmatprep.mubr.bf16.mxu0 0
  %2949 = vmatmul.mubr.bf16.gmra.mrb[0].mxu0 %v1769
  %v2950 = vpop.f32.mrb[0].mxu0
  %v2951 = vadd.f32 %v2822, %v2950
  %v2952 = vpop.f32.mrb[0].mxu0
  %v2953 = vpop.f32.mrb[0].mxu0
  %v2954 = vadd.f32 %v2825, %v2953
  %v2955 = vpop.f32.mrb[0].mxu0
  %2956 = vmatprep.mubr.bf16.mxu0 0
  %2957 = vmatmul.mubr.bf16.gmra.mrb[0].mxu0 %v1778
  %v2958 = vpop.f32.mrb[0].mxu0
  %v2959 = vadd.f32 %v2830, %v2958
  %v2960 = vpop.f32.mrb[0].mxu0
  %v2961 = vpop.f32.mrb[0].mxu0
  %v2962 = vadd.f32 %v2833, %v2961
  %v2963 = vpop.f32.mrb[0].mxu0
  %2964 = vmatprep.mubr.bf16.mxu0 0
  %2965 = vmatmul.mubr.bf16.gmra.mrb[0].mxu0 %v1787
  %v2966 = vpop.f32.mrb[0].mxu0
  %v2967 = vadd.f32 %v2838, %v2966
  %v2968 = vpop.f32.mrb[0].mxu0
  %v2969 = vpop.f32.mrb[0].mxu0
  %v2970 = vadd.f32 %v2841, %v2969
  %v2971 = vpop.f32.mrb[0].mxu0
  %2972 = vdwg.mxu0
  %v2973 = vmax.f32 %v2879, 0.0
  %v2974 = vmax.f32 %v2882, 0.0
  %v2975 = vmax.f32 %v2887, 0.0
  %v2976 = vmax.f32 %v2890, 0.0
  %v2977 = vmax.f32 %v2895, 0.0
  %v2978 = vmax.f32 %v2898, 0.0
  %v2979 = vmax.f32 %v2903, 0.0
  %v2980 = vmax.f32 %v2906, 0.0
  %v2981 = vmax.f32 %v2911, 0.0
  %v2982 = vmax.f32 %v2914, 0.0
  %v2983 = vmax.f32 %v2919, 0.0
  %v2984 = vmax.f32 %v2922, 0.0
  %v2985 = vmax.f32 %v2927, 0.0
  %v2986 = vmax.f32 %v2930, 0.0
  %v2987 = vmax.f32 %v2935, 0.0
  %v2988 = vmax.f32 %v2938, 0.0
  %v2989 = vmax.f32 %v2943, 0.0
  %v2990 = vmax.f32 %v2946, 0.0
  %v2991 = vmax.f32 %v2951, 0.0
  %v2992 = vmax.f32 %v2954, 0.0
  %v2993 = vmax.f32 %v2959, 0.0
  %v2994 = vmax.f32 %v2962, 0.0
  %v2995 = vmax.f32 %v2967, 0.0
  %v2996 = vmax.f32 %v2970, 0.0
  %v2997 = vpack.c.bf16 %v2973, %v2973
  %v2998 = vpack.c.bf16 %v2974, %v2974
  %v2999 = vpack.c.bf16 %v2975, %v2975
  %v3000 = vpack.c.bf16 %v2976, %v2976
  %v3001 = vpack.c.bf16 %v2977, %v2977
  %v3002 = vpack.c.bf16 %v2978, %v2978
  %v3003 = vpack.c.bf16 %v2979, %v2979
  %v3004 = vpack.c.bf16 %v2980, %v2980
  %v3005 = vpack.c.bf16 %v2981, %v2981
  %v3006 = vpack.c.bf16 %v2982, %v2982
  %v3007 = vpack.c.bf16 %v2983, %v2983
  %v3008 = vpack.c.bf16 %v2984, %v2984
  %v3009 = vpack.c.bf16 %v2985, %v2985
  %v3010 = vpack.c.bf16 %v2986, %v2986
  %v3011 = vpack.c.bf16 %v2987, %v2987
  %v3012 = vpack.c.bf16 %v2988, %v2988
  %v3013 = vpack.c.bf16 %v2989, %v2989
  %v3014 = vpack.c.bf16 %v2990, %v2990
  %v3015 = vpack.c.bf16 %v2991, %v2991
  %v3016 = vpack.c.bf16 %v2992, %v2992
  %v3017 = vpack.c.bf16 %v2993, %v2993
  %v3018 = vpack.c.bf16 %v2994, %v2994
  %v3019 = vpack.c.bf16 %v2995, %v2995
  %v3020 = vpack.c.bf16 %v2996, %v2996
  %3021 = vst [vmem:[%s3] sm:$0xf] %v2997
  %3022 = vst [vmem:[%s3 + $0x4] sm:$0xf] %v2998
  %3023 = vst [vmem:[%s3 + $0x8] sm:$0xf] %v2999
  %3024 = vst [vmem:[%s3 + $0xc] sm:$0xf] %v3000
  %3025 = vst [vmem:[%s3 + $0x10] sm:$0xf] %v3001
  %3026 = vst [vmem:[%s3 + $0x14] sm:$0xf] %v3002
  %3027 = vst [vmem:[%s3 + $0x18] sm:$0xf] %v3003
  %3028 = vst [vmem:[%s3 + $0x1c] sm:$0xf] %v3004
  %3029 = vst [vmem:[%s3 + $0x20] sm:$0xf] %v3005
  %3030 = vst [vmem:[%s3 + $0x24] sm:$0xf] %v3006
  %3031 = vst [vmem:[%s3 + $0x28] sm:$0xf] %v3007
  %3032 = vst [vmem:[%s3 + $0x2c] sm:$0xf] %v3008
  %3033 = vst [vmem:[%s3 + $0x30] sm:$0xf] %v3009
  %3034 = vst [vmem:[%s3 + $0x34] sm:$0xf] %v3010
  %3035 = vst [vmem:[%s3 + $0x38] sm:$0xf] %v3011
  %3036 = vst [vmem:[%s3 + $0x3c] sm:$0xf] %v3012
  %3037 = vst [vmem:[%s3 + $0x40] sm:$0xf] %v3013
  %3038 = vst [vmem:[%s3 + $0x44] sm:$0xf] %v3014
  %3039 = vst [vmem:[%s3 + $0x48] sm:$0xf] %v3015
  %3040 = vst [vmem:[%s3 + $0x4c] sm:$0xf] %v3016
  %3041 = vst [vmem:[%s3 + $0x50] sm:$0xf] %v3017
  %3042 = vst [vmem:[%s3 + $0x54] sm:$0xf] %v3018
  %3043 = vst [vmem:[%s3 + $0x58] sm:$0xf] %v3019
  %3044 = vst [vmem:[%s3 + $0x5c] sm:$0xf] %v3020
  // Predicated region
  $region14: #{dqn_forward.7} parent=0 // pred_check
    _
  $region15: #{dqn_forward.7} parent=0 // pred_check_branch
    %3046 = sbr.rel (0) target = $region17
  $region16: #{dqn_forward.7} parent=0 // pred_region
    _
  $region17: #{dqn_forward.7} parent=0 // pred_fallthru
    _
  // Predicated region
  $region18: #{dqn_forward.7} parent=0 // pred_check
    _
  $region19: #{dqn_forward.7} parent=0 // pred_check_branch
    %3048 = sbr.rel (0) target = $region21
  $region20: #{dqn_forward.7} parent=0 // pred_region
    _
  $region21: #{dqn_forward.7} parent=0 // pred_fallthru
    _

// kernel: dqn_forward.9
$region0: #{dqn_forward.9}
  #allocation0 [shape = 'u32[]', space=smem, size = 0x4, offset = 0x4, fixed_abs, tag = 'smem constant byte address 0x4 - core index']
  #allocation1 [shape = 'u32[144,128]{1,0:T(1,128)}', space=vmem, size = 0x12000, scoped, tag = 'internal scratch']
  #allocation2 [shape = 'f32[2,256]{1,0:T(2,128)}', space=vmem, size = 0x800, scoped, tag = 'scratch operand']
  #allocation3 [shape = 'f32[2,256]{1,0:T(2,128)}', space=vmem, size = 0x800, scoped, tag = 'scratch operand']
  %s0 = inlined_call_operand.vmem [shape: bf16[2,2,1024], index: 0, kind: input, shape index: {}]
  %s1 = inlined_call_operand.vmem [shape: bf16[256,1024], index: 1, kind: input, shape index: {}]
  %s2 = inlined_call_operand.vmem [shape: bf16[256,128], index: 2, kind: input, shape index: {}]
  %s3 = inlined_call_operand.vmem [shape: f32[1,128], index: 3, kind: input, shape index: {}]
  %s4 = inlined_call_operand.vmem [shape: bf16[128,128], index: 4, kind: input, shape index: {}]
  %s5 = inlined_call_operand.vmem [shape: f32[1,128], index: 5, kind: input, shape index: {}]
  %s6 = inlined_call_operand.vmem [shape: bf16[128,128], index: 6, kind: input, shape index: {}]
  %s7 = inlined_call_operand.vmem [shape: f32[1,128], index: 7, kind: input, shape index: {}]
  %s8 = inlined_call_operand.hbm [shape: f32[2,128], index: 8, kind: output, shape index: {0}]
  %s9 = inlined_call_operand.hbm [shape: f32[2,256], index: 9, kind: output, shape index: {1}]
  %s10 = inlined_call_operand.hbm [shape: f32[2,256], index: 10, kind: output, shape index: {2}]
  %11 = xla_tuple %s8, %s9, %s10
  %s12 = sld [smem:[#allocation0]]
  $region89: #{dqn_forward.9} parent=0
    _
  %s14 = ssub.s32 1, %s12
  %s15 = scalar_select 0, %s14, %s12
  $region1: #{dqn_forward.9} parent=0
    #allocation4 [shape = 'u8[1024]{0}', space=vmem, size = 0x400, scoped, tag = 'output window, operand 0, single buffered']
    #allocation5 [shape = 's32[2]{0}', space=sflag, size = 0x8, scoped, tag = 'scoped memory for dqn_forward.9']
    #allocation6 [shape = 'u8[2048]{0}', space=vmem, size = 0x800, scoped, tag = 'output window, operand 1, single buffered']
    #allocation7 [shape = 's32[1]{0}', space=sflag, size = 0x4, scoped, tag = 'scoped memory for dqn_forward.9']
    #allocation8 [shape = 'u8[2048]{0}', space=vmem, size = 0x800, scoped, tag = 'output window, operand 2, single buffered']
    %16 = vsyncpa [#allocation5], 0
    %17 = vsyncpa [#allocation7], 0
    loop: start=0, step=1, limit=4
    $region2: #{dqn_forward.9} parent=1 // loop_pre_header
      _
    $region3: #{dqn_forward.9} parent=1 // loop_header
      %s19 = sphi 0, %s23
      %p20 = scmp.ge.s32.totalorder %s19, 4
      %s29 = sphi 0, %s31
      %s32 = sphi 0, %s29
      %s33 = sphi 0, %s32
      %s49 = sphi 0, %s33
      %s53 = sphi 0, %s53
      %s55 = sphi 0, %s53
      %s56 = sphi 0, %s55
      %s70 = sphi 0, %s56
      %s74 = sphi 0, %s74
      %s76 = sphi 0, %s74
      %s77 = sphi 0, %s76
      %s91 = sphi 0, %s77
      %s95 = sphi 0, %s95
      %s97 = sphi 0, %s95
      %s98 = sphi 0, %s97
      %s112 = sphi 0, %s98
      %s116 = sphi 0, %s116
      %s118 = sphi 0, %s116
      %s119 = sphi 0, %s118
      %s133 = sphi 0, %s119
      %s137 = sphi 0, %s137
      %s139 = sphi 0, %s137
      %s140 = sphi 0, %s139
      %s154 = sphi 0, %s140
      %s158 = sphi 0, %s158
      %s160 = sphi 0, %s158
      %s161 = sphi 0, %s160
      %s175 = sphi 0, %s161
      %s179 = sphi 0, %s179
      %s181 = sphi 0, %s179
      %s182 = sphi 0, %s181
      %s196 = sphi 0, %s182
      %s200 = sphi 0, %s200
      %s202 = sphi 0, %s200
      %s203 = sphi 0, %s202
      %s217 = sphi 0, %s203
      %s221 = sphi 0, %s221
      %s223 = sphi 0, %s221
      %s224 = sphi 0, %s223
      %s238 = sphi 0, %s224
      %s242 = sphi 0, %s242
      %s244 = sphi 0, %s242
      %s245 = sphi 0, %s244
      %s259 = sphi 0, %s245
    $region4: #{dqn_forward.9} parent=1 // loop_header_branch
      %22 = sbr.rel (%p20) target = $region8
    $region5: #{dqn_forward.9} parent=1 // loop_body
      %s24 = ssub.s32 %s19, 1
      %s25 = ssub.s32 %s19, 2
      %s26 = sadd.s32 %s19, 1
      %s27 = ssub.s32 %s19, %s26
      %p28 = scmp.eq.s32.totalorder %s27, 0
      %s30 = sadd.s32 %s29, 1
      %s31 = scalar_select %p28, %s29, %s30
      %p34 = pneg %p28
      %p35 = scmp.eq.s32.totalorder %s19, 1
      %p36 = por %p34, %p35
      %p37 = scmp.ne.s32.totalorder %s29, %s32
      %p38 = scmp.eq.s32.totalorder %s19, 0
      %p39 = por %p37, %p38
      %p40 = scmp.ne.s32.totalorder %s29, %s32
      %p41 = scmp.eq.s32.totalorder %s24, 1
      %p42 = por %p40, %p41
      %p43 = scmp.ne.s32.totalorder %s32, %s33
      %p44 = scmp.eq.s32.totalorder %s24, 0
      %p45 = por %p43, %p44
      %p46 = scmp.ne.s32.totalorder %s32, %s33
      %p47 = scmp.eq.s32.totalorder %s25, 1
      %p48 = por %p46, %p47
      %p50 = scmp.ne.s32.totalorder %s33, %s49
      %p51 = scmp.eq.s32.totalorder %s25, 0
      %p52 = por %p50, %p51
      %s54 = sadd.s32 %s53, 1
      %p57 = scmp.eq.s32.totalorder %s19, 1
      %p58 = scmp.ne.s32.totalorder %s53, %s55
      %p59 = scmp.eq.s32.totalorder %s19, 0
      %p60 = por %p58, %p59
      %p61 = scmp.ne.s32.totalorder %s53, %s55
      %p62 = scmp.eq.s32.totalorder %s24, 1
      %p63 = por %p61, %p62
      %p64 = scmp.ne.s32.totalorder %s55, %s56
      %p65 = scmp.eq.s32.totalorder %s24, 0
      %p66 = por %p64, %p65
      %p67 = scmp.ne.s32.totalorder %s55, %s56
      %p68 = scmp.eq.s32.totalorder %s25, 1
      %p69 = por %p67, %p68
      %p71 = scmp.ne.s32.totalorder %s56, %s70
      %p72 = scmp.eq.s32.totalorder %s25, 0
      %p73 = por %p71, %p72
      %s75 = sadd.s32 %s74, 1
      %p78 = scmp.eq.s32.totalorder %s19, 1
      %p79 = scmp.ne.s32.totalorder %s74, %s76
      %p80 = scmp.eq.s32.totalorder %s19, 0
      %p81 = por %p79, %p80
      %p82 = scmp.ne.s32.totalorder %s74, %s76
      %p83 = scmp.eq.s32.totalorder %s24, 1
      %p84 = por %p82, %p83
      %p85 = scmp.ne.s32.totalorder %s76, %s77
      %p86 = scmp.eq.s32.totalorder %s24, 0
      %p87 = por %p85, %p86
      %p88 = scmp.ne.s32.totalorder %s76, %s77
      %p89 = scmp.eq.s32.totalorder %s25, 1
      %p90 = por %p88, %p89
      %p92 = scmp.ne.s32.totalorder %s77, %s91
      %p93 = scmp.eq.s32.totalorder %s25, 0
      %p94 = por %p92, %p93
      %s96 = sadd.s32 %s95, 1
      %p99 = scmp.eq.s32.totalorder %s19, 1
      %p100 = scmp.ne.s32.totalorder %s95, %s97
      %p101 = scmp.eq.s32.totalorder %s19, 0
      %p102 = por %p100, %p101
      %p103 = scmp.ne.s32.totalorder %s95, %s97
      %p104 = scmp.eq.s32.totalorder %s24, 1
      %p105 = por %p103, %p104
      %p106 = scmp.ne.s32.totalorder %s97, %s98
      %p107 = scmp.eq.s32.totalorder %s24, 0
      %p108 = por %p106, %p107
      %p109 = scmp.ne.s32.totalorder %s97, %s98
      %p110 = scmp.eq.s32.totalorder %s25, 1
      %p111 = por %p109, %p110
      %p113 = scmp.ne.s32.totalorder %s98, %s112
      %p114 = scmp.eq.s32.totalorder %s25, 0
      %p115 = por %p113, %p114
      %s117 = sadd.s32 %s116, 1
      %p120 = scmp.eq.s32.totalorder %s19, 1
      %p121 = scmp.ne.s32.totalorder %s116, %s118
      %p122 = scmp.eq.s32.totalorder %s19, 0
      %p123 = por %p121, %p122
      %p124 = scmp.ne.s32.totalorder %s116, %s118
      %p125 = scmp.eq.s32.totalorder %s24, 1
      %p126 = por %p124, %p125
      %p127 = scmp.ne.s32.totalorder %s118, %s119
      %p128 = scmp.eq.s32.totalorder %s24, 0
      %p129 = por %p127, %p128
      %p130 = scmp.ne.s32.totalorder %s118, %s119
      %p131 = scmp.eq.s32.totalorder %s25, 1
      %p132 = por %p130, %p131
      %p134 = scmp.ne.s32.totalorder %s119, %s133
      %p135 = scmp.eq.s32.totalorder %s25, 0
      %p136 = por %p134, %p135
      %s138 = sadd.s32 %s137, 1
      %p141 = scmp.eq.s32.totalorder %s19, 1
      %p142 = scmp.ne.s32.totalorder %s137, %s139
      %p143 = scmp.eq.s32.totalorder %s19, 0
      %p144 = por %p142, %p143
      %p145 = scmp.ne.s32.totalorder %s137, %s139
      %p146 = scmp.eq.s32.totalorder %s24, 1
      %p147 = por %p145, %p146
      %p148 = scmp.ne.s32.totalorder %s139, %s140
      %p149 = scmp.eq.s32.totalorder %s24, 0
      %p150 = por %p148, %p149
      %p151 = scmp.ne.s32.totalorder %s139, %s140
      %p152 = scmp.eq.s32.totalorder %s25, 1
      %p153 = por %p151, %p152
      %p155 = scmp.ne.s32.totalorder %s140, %s154
      %p156 = scmp.eq.s32.totalorder %s25, 0
      %p157 = por %p155, %p156
      %s159 = sadd.s32 %s158, 1
      %p162 = scmp.eq.s32.totalorder %s19, 1
      %p163 = scmp.ne.s32.totalorder %s158, %s160
      %p164 = scmp.eq.s32.totalorder %s19, 0
      %p165 = por %p163, %p164
      %p166 = scmp.ne.s32.totalorder %s158, %s160
      %p167 = scmp.eq.s32.totalorder %s24, 1
      %p168 = por %p166, %p167
      %p169 = scmp.ne.s32.totalorder %s160, %s161
      %p170 = scmp.eq.s32.totalorder %s24, 0
      %p171 = por %p169, %p170
      %p172 = scmp.ne.s32.totalorder %s160, %s161
      %p173 = scmp.eq.s32.totalorder %s25, 1
      %p174 = por %p172, %p173
      %p176 = scmp.ne.s32.totalorder %s161, %s175
      %p177 = scmp.eq.s32.totalorder %s25, 0
      %p178 = por %p176, %p177
      %s180 = sadd.s32 %s179, 1
      %p183 = scmp.eq.s32.totalorder %s19, 1
      %p184 = scmp.ne.s32.totalorder %s179, %s181
      %p185 = scmp.eq.s32.totalorder %s19, 0
      %p186 = por %p184, %p185
      %p187 = scmp.ne.s32.totalorder %s179, %s181
      %p188 = scmp.eq.s32.totalorder %s24, 1
      %p189 = por %p187, %p188
      %p190 = scmp.ne.s32.totalorder %s181, %s182
      %p191 = scmp.eq.s32.totalorder %s24, 0
      %p192 = por %p190, %p191
      %p193 = scmp.ne.s32.totalorder %s181, %s182
      %p194 = scmp.eq.s32.totalorder %s25, 1
      %p195 = por %p193, %p194
      %p197 = scmp.ne.s32.totalorder %s182, %s196
      %p198 = scmp.eq.s32.totalorder %s25, 0
      %p199 = por %p197, %p198
      %s201 = sadd.s32 %s200, 1
      %p204 = scmp.eq.s32.totalorder %s19, 1
      %p205 = scmp.ne.s32.totalorder %s200, %s202
      %p206 = scmp.eq.s32.totalorder %s19, 0
      %p207 = por %p205, %p206
      %p208 = scmp.ne.s32.totalorder %s200, %s202
      %p209 = scmp.eq.s32.totalorder %s24, 1
      %p210 = por %p208, %p209
      %p211 = scmp.ne.s32.totalorder %s202, %s203
      %p212 = scmp.eq.s32.totalorder %s24, 0
      %p213 = por %p211, %p212
      %p214 = scmp.ne.s32.totalorder %s202, %s203
      %p215 = scmp.eq.s32.totalorder %s25, 1
      %p216 = por %p214, %p215
      %p218 = scmp.ne.s32.totalorder %s203, %s217
      %p219 = scmp.eq.s32.totalorder %s25, 0
      %p220 = por %p218, %p219
      %s222 = sadd.s32 %s221, 1
      %p225 = scmp.eq.s32.totalorder %s19, 1
      %p226 = scmp.ne.s32.totalorder %s221, %s223
      %p227 = scmp.eq.s32.totalorder %s19, 0
      %p228 = por %p226, %p227
      %p229 = scmp.ne.s32.totalorder %s221, %s223
      %p230 = scmp.eq.s32.totalorder %s24, 1
      %p231 = por %p229, %p230
      %p232 = scmp.ne.s32.totalorder %s223, %s224
      %p233 = scmp.eq.s32.totalorder %s24, 0
      %p234 = por %p232, %p233
      %p235 = scmp.ne.s32.totalorder %s223, %s224
      %p236 = scmp.eq.s32.totalorder %s25, 1
      %p237 = por %p235, %p236
      %p239 = scmp.ne.s32.totalorder %s224, %s238
      %p240 = scmp.eq.s32.totalorder %s25, 0
      %p241 = por %p239, %p240
      %s243 = sadd.s32 %s242, 1
      %p246 = scmp.eq.s32.totalorder %s19, 1
      %p247 = scmp.ne.s32.totalorder %s242, %s244
      %p248 = scmp.eq.s32.totalorder %s19, 0
      %p249 = por %p247, %p248
      %p250 = scmp.ne.s32.totalorder %s242, %s244
      %p251 = scmp.eq.s32.totalorder %s24, 1
      %p252 = por %p250, %p251
      %p253 = scmp.ne.s32.totalorder %s244, %s245
      %p254 = scmp.eq.s32.totalorder %s24, 0
      %p255 = por %p253, %p254
      %p256 = scmp.ne.s32.totalorder %s244, %s245
      %p257 = scmp.eq.s32.totalorder %s25, 1
      %p258 = por %p256, %p257
      %p260 = scmp.ne.s32.totalorder %s245, %s259
      %p261 = scmp.eq.s32.totalorder %s25, 0
      %p262 = por %p260, %p261
      %p263 = scmp.le.s32.totalorder 1, %s19
      %p264 = scmp.lt.s32.totalorder %s19, 3
      %p265 = pnand %p263, %p264
      %p266 = pneg %p265
      // Predicated region
      $region9: #{dqn_forward.9} parent=5 // pred_check
        _
      $region10: #{dqn_forward.9} parent=5 // pred_check_branch
        %268 = sbr.rel (%p265) target = $region12
      $region11: #{dqn_forward.9} parent=5 // pred_region
        %s269 = ssub.s32 %s19, 1
        // Predicated region
        $region13: #{dqn_forward.9} parent=11 // pred_check
          %p270 = pneg %p66
        $region14: #{dqn_forward.9} parent=11 // pred_check_branch
          %272 = sbr.rel (%p270) target = $region16
        $region15: #{dqn_forward.9} parent=11 // pred_region
          _
        $region16: #{dqn_forward.9} parent=11 // pred_fallthru
          _
        // Predicated region
        $region17: #{dqn_forward.9} parent=11 // pred_check
          %p273 = pneg %p87
        $region18: #{dqn_forward.9} parent=11 // pred_check_branch
          %275 = sbr.rel (%p273) target = $region20
        $region19: #{dqn_forward.9} parent=11 // pred_region
          _
        $region20: #{dqn_forward.9} parent=11 // pred_fallthru
          _
        // Predicated region
        $region21: #{dqn_forward.9} parent=11 // pred_check
          %p276 = pneg %p108
        $region22: #{dqn_forward.9} parent=11 // pred_check_branch
          %278 = sbr.rel (%p276) target = $region24
        $region23: #{dqn_forward.9} parent=11 // pred_region
          _
        $region24: #{dqn_forward.9} parent=11 // pred_fallthru
          _
        // Predicated region
        $region25: #{dqn_forward.9} parent=11 // pred_check
          %p279 = pneg %p129
        $region26: #{dqn_forward.9} parent=11 // pred_check_branch
          %281 = sbr.rel (%p279) target = $region28
        $region27: #{dqn_forward.9} parent=11 // pred_region
          _
        $region28: #{dqn_forward.9} parent=11 // pred_fallthru
          _
        // Predicated region
        $region29: #{dqn_forward.9} parent=11 // pred_check
          %p282 = pneg %p150
        $region30: #{dqn_forward.9} parent=11 // pred_check_branch
          %284 = sbr.rel (%p282) target = $region32
        $region31: #{dqn_forward.9} parent=11 // pred_region
          _
        $region32: #{dqn_forward.9} parent=11 // pred_fallthru
          _
        // Predicated region
        $region33: #{dqn_forward.9} parent=11 // pred_check
          %p285 = pneg %p171
        $region34: #{dqn_forward.9} parent=11 // pred_check_branch
          %287 = sbr.rel (%p285) target = $region36
        $region35: #{dqn_forward.9} parent=11 // pred_region
          _
        $region36: #{dqn_forward.9} parent=11 // pred_fallthru
          _
        // Predicated region
        $region37: #{dqn_forward.9} parent=11 // pred_check
          %p288 = pneg %p192
        $region38: #{dqn_forward.9} parent=11 // pred_check_branch
          %290 = sbr.rel (%p288) target = $region40
        $region39: #{dqn_forward.9} parent=11 // pred_region
          _
        $region40: #{dqn_forward.9} parent=11 // pred_fallthru
          _
      $region12: #{dqn_forward.9} parent=5 // pred_fallthru
        _
      %p291 = scmp.lt.s32.totalorder %s19, 2
      // Predicated region
      $region41: #{dqn_forward.9} parent=5 // pred_check
        %p292 = pneg %p291
      $region42: #{dqn_forward.9} parent=5 // pred_check_branch
        %294 = sbr.rel (%p292) target = $region44
      $region43: #{dqn_forward.9} parent=5 // pred_region
        // Predicated region
        $region45: #{dqn_forward.9} parent=43 // pred_check
          %p295 = pneg %p39
        $region46: #{dqn_forward.9} parent=43 // pred_check_branch
          %297 = sbr.rel (%p295) target = $region48
        $region47: #{dqn_forward.9} parent=43 // pred_region
          %p298 = scmp.lt.s32.totalorder %s19, 1
          %s299 = scalar_select %p298, %s19, 1
          %s300 = smul.addr %s299, 8
          %s301 = scalar_lea.vmem %s0, %s300
        $region48: #{dqn_forward.9} parent=43 // pred_fallthru
          _
      $region44: #{dqn_forward.9} parent=5 // pred_fallthru
        _
      %p302 = scmp.le.s32.totalorder 1, %s19
      %p303 = scmp.lt.s32.totalorder %s19, 3
      %p304 = pnand %p302, %p303
      %p305 = pneg %p304
      // Predicated region
      $region49: #{dqn_forward.9} parent=5 // pred_check
        _
      $region50: #{dqn_forward.9} parent=5 // pred_check_branch
        %307 = sbr.rel (%p304) target = $region52
      $region51: #{dqn_forward.9} parent=5 // pred_region
        %s308 = ssub.s32 %s19, 1
        %p309 = scmp.lt.s32.totalorder %s24, 1
        %s310 = scalar_select %p309, %s24, 1
        %s311 = smul.addr %s310, 8
        %s312 = scalar_lea.vmem %s0, %s311
        %p313 = pneg %p45
        %p314 = pneg %p42
        %p315 = pneg %p66
        %p316 = pneg %p63
        %p317 = pneg %p87
        %p318 = pneg %p84
        %p319 = pneg %p108
        %p320 = pneg %p105
        %p321 = pneg %p129
        %p322 = pneg %p126
        %p323 = pneg %p150
        %p324 = pneg %p147
        %p325 = pneg %p171
        %p326 = pneg %p168
        %p327 = pneg %p192
        %p328 = pneg %p189
        %p329 = pneg %p213
        %p330 = pneg %p210
        %p331 = pneg %p234
        %p332 = pneg %p231
        %p333 = pneg %p255
        %p334 = pneg %p252
        %p335 = scmp.lt.s32.totalorder %s24, 1
        %s336 = scalar_select %p335, %s24, 1
        %s337 = smul.addr %s336, 8
        %s338 = scalar_lea.vmem %s0, %s337
        %p340 = scmp.eq.s32.totalorder %s24, 0
        // Predicated region
        $region53: #{dqn_forward.9} parent=51 // pred_check
          %p341 = pneg %p340
        $region54: #{dqn_forward.9} parent=51 // pred_check_branch
          %343 = sbr.rel (%p341) target = $region56
        $region55: #{dqn_forward.9} parent=51 // pred_region
          %344 = vst [vmem:[#allocation2] sm:$0xf] 0.0
          %345 = vst [vmem:[#allocation3] sm:$0xf] 0.0
        $region56: #{dqn_forward.9} parent=51 // pred_fallthru
          _
        %v346 = vld [vmem:[%s338] sm:$0xff]
        %v347 = vunpack.c.l.bf16 %v346
        %v348 = vunpack.c.h.bf16 %v346
        %v349 = vld [vmem:[#allocation2] sm:$0xf]
        %v352 = vunpack.c.l.s4 1983009808
        %v353 = vunpack.c.0.s8 %v352
        %v354 = vlaneseq
        %v355 = vshrl.u32 %v354, 7
        %v356 = vsub.s32 %v353, %v355
        %v357 = vrot.slane %v349, %v356
        %v358 = vcombine.high %v357, %v357
        %v361 = vpack.c.bf16 %v357, %v357
        %v362 = vpack.c.bf16 %v358, %v358
        %v363 = vld [vmem:[%s1] sm:$0xff]
        %v364 = vld [vmem:[%s1 + $0x8] sm:$0xff]
        %v365 = vld [vmem:[%s1 + $0x10] sm:$0xff]
        %v366 = vld [vmem:[%s1 + $0x18] sm:$0xff]
        %v367 = vld [vmem:[%s1 + $0x20] sm:$0xff]
        %v368 = vld [vmem:[%s1 + $0x28] sm:$0xff]
        %v369 = vld [vmem:[%s1 + $0x30] sm:$0xff]
        %v370 = vld [vmem:[%s1 + $0x38] sm:$0xff]
        %v371 = vld [vmem:[%s1 + $0x40] sm:$0xff]
        %v372 = vld [vmem:[%s1 + $0x48] sm:$0xff]
        %v373 = vld [vmem:[%s1 + $0x50] sm:$0xff]
        %v374 = vld [vmem:[%s1 + $0x58] sm:$0xff]
        %v375 = vld [vmem:[%s1 + $0x60] sm:$0xff]
        %v376 = vld [vmem:[%s1 + $0x68] sm:$0xff]
        %v377 = vld [vmem:[%s1 + $0x70] sm:$0xff]
        %v378 = vld [vmem:[%s1 + $0x78] sm:$0xff]
        %v379 = vld [vmem:[%s1 + $0x80] sm:$0xff]
        %v380 = vld [vmem:[%s1 + $0x88] sm:$0xff]
        %v381 = vld [vmem:[%s1 + $0x90] sm:$0xff]
        %v382 = vld [vmem:[%s1 + $0x98] sm:$0xff]
        %v383 = vld [vmem:[%s1 + $0xa0] sm:$0xff]
        %v384 = vld [vmem:[%s1 + $0xa8] sm:$0xff]
        %v385 = vld [vmem:[%s1 + $0xb0] sm:$0xff]
        %v386 = vld [vmem:[%s1 + $0xb8] sm:$0xff]
        %v387 = vld [vmem:[%s1 + $0xc0] sm:$0xff]
        %v388 = vld [vmem:[%s1 + $0xc8] sm:$0xff]
        %v389 = vld [vmem:[%s1 + $0xd0] sm:$0xff]
        %v390 = vld [vmem:[%s1 + $0xd8] sm:$0xff]
        %v391 = vld [vmem:[%s1 + $0xe0] sm:$0xff]
        %v392 = vld [vmem:[%s1 + $0xe8] sm:$0xff]
        %v393 = vld [vmem:[%s1 + $0xf0] sm:$0xff]
        %v394 = vld [vmem:[%s1 + $0xf8] sm:$0xff]
        %v395 = vld [vmem:[%s1 + $0x100] sm:$0xff]
        %v396 = vld [vmem:[%s1 + $0x108] sm:$0xff]
        %v397 = vld [vmem:[%s1 + $0x110] sm:$0xff]
        %v398 = vld [vmem:[%s1 + $0x118] sm:$0xff]
        %v399 = vld [vmem:[%s1 + $0x120] sm:$0xff]
        %v400 = vld [vmem:[%s1 + $0x128] sm:$0xff]
        %v401 = vld [vmem:[%s1 + $0x130] sm:$0xff]
        %v402 = vld [vmem:[%s1 + $0x138] sm:$0xff]
        %v403 = vld [vmem:[%s1 + $0x140] sm:$0xff]
        %v404 = vld [vmem:[%s1 + $0x148] sm:$0xff]
        %v405 = vld [vmem:[%s1 + $0x150] sm:$0xff]
        %v406 = vld [vmem:[%s1 + $0x158] sm:$0xff]
        %v407 = vld [vmem:[%s1 + $0x160] sm:$0xff]
        %v408 = vld [vmem:[%s1 + $0x168] sm:$0xff]
        %v409 = vld [vmem:[%s1 + $0x170] sm:$0xff]
        %v410 = vld [vmem:[%s1 + $0x178] sm:$0xff]
        %v411 = vld [vmem:[%s1 + $0x180] sm:$0xff]
        %v412 = vld [vmem:[%s1 + $0x188] sm:$0xff]
        %v413 = vld [vmem:[%s1 + $0x190] sm:$0xff]
        %v414 = vld [vmem:[%s1 + $0x198] sm:$0xff]
        %v415 = vld [vmem:[%s1 + $0x1a0] sm:$0xff]
        %v416 = vld [vmem:[%s1 + $0x1a8] sm:$0xff]
        %v417 = vld [vmem:[%s1 + $0x1b0] sm:$0xff]
        %v418 = vld [vmem:[%s1 + $0x1b8] sm:$0xff]
        %v419 = vld [vmem:[%s1 + $0x1c0] sm:$0xff]
        %v420 = vld [vmem:[%s1 + $0x1c8] sm:$0xff]
        %v421 = vld [vmem:[%s1 + $0x1d0] sm:$0xff]
        %v422 = vld [vmem:[%s1 + $0x1d8] sm:$0xff]
        %v423 = vld [vmem:[%s1 + $0x1e0] sm:$0xff]
        %v424 = vld [vmem:[%s1 + $0x1e8] sm:$0xff]
        %v425 = vld [vmem:[%s1 + $0x1f0] sm:$0xff]
        %v426 = vld [vmem:[%s1 + $0x1f8] sm:$0xff]
        %v427 = vld [vmem:[%s1 + $0x200] sm:$0xff]
        %v428 = vld [vmem:[%s1 + $0x208] sm:$0xff]
        %v429 = vld [vmem:[%s1 + $0x210] sm:$0xff]
        %v430 = vld [vmem:[%s1 + $0x218] sm:$0xff]
        %v431 = vld [vmem:[%s1 + $0x220] sm:$0xff]
        %v432 = vld [vmem:[%s1 + $0x228] sm:$0xff]
        %v433 = vld [vmem:[%s1 + $0x230] sm:$0xff]
        %v434 = vld [vmem:[%s1 + $0x238] sm:$0xff]
        %v435 = vld [vmem:[%s1 + $0x240] sm:$0xff]
        %v436 = vld [vmem:[%s1 + $0x248] sm:$0xff]
        %v437 = vld [vmem:[%s1 + $0x250] sm:$0xff]
        %v438 = vld [vmem:[%s1 + $0x258] sm:$0xff]
        %v439 = vld [vmem:[%s1 + $0x260] sm:$0xff]
        %v440 = vld [vmem:[%s1 + $0x268] sm:$0xff]
        %v441 = vld [vmem:[%s1 + $0x270] sm:$0xff]
        %v442 = vld [vmem:[%s1 + $0x278] sm:$0xff]
        %v443 = vld [vmem:[%s1 + $0x280] sm:$0xff]
        %v444 = vld [vmem:[%s1 + $0x288] sm:$0xff]
        %v445 = vld [vmem:[%s1 + $0x290] sm:$0xff]
        %v446 = vld [vmem:[%s1 + $0x298] sm:$0xff]
        %v447 = vld [vmem:[%s1 + $0x2a0] sm:$0xff]
        %v448 = vld [vmem:[%s1 + $0x2a8] sm:$0xff]
        %v449 = vld [vmem:[%s1 + $0x2b0] sm:$0xff]
        %v450 = vld [vmem:[%s1 + $0x2b8] sm:$0xff]
        %v451 = vld [vmem:[%s1 + $0x2c0] sm:$0xff]
        %v452 = vld [vmem:[%s1 + $0x2c8] sm:$0xff]
        %v453 = vld [vmem:[%s1 + $0x2d0] sm:$0xff]
        %v454 = vld [vmem:[%s1 + $0x2d8] sm:$0xff]
        %v455 = vld [vmem:[%s1 + $0x2e0] sm:$0xff]
        %v456 = vld [vmem:[%s1 + $0x2e8] sm:$0xff]
        %v457 = vld [vmem:[%s1 + $0x2f0] sm:$0xff]
        %v458 = vld [vmem:[%s1 + $0x2f8] sm:$0xff]
        %v459 = vld [vmem:[%s1 + $0x300] sm:$0xff]
        %v460 = vld [vmem:[%s1 + $0x308] sm:$0xff]
        %v461 = vld [vmem:[%s1 + $0x310] sm:$0xff]
        %v462 = vld [vmem:[%s1 + $0x318] sm:$0xff]
        %v463 = vld [vmem:[%s1 + $0x320] sm:$0xff]
        %v464 = vld [vmem:[%s1 + $0x328] sm:$0xff]
        %v465 = vld [vmem:[%s1 + $0x330] sm:$0xff]
        %v466 = vld [vmem:[%s1 + $0x338] sm:$0xff]
        %v467 = vld [vmem:[%s1 + $0x340] sm:$0xff]
        %v468 = vld [vmem:[%s1 + $0x348] sm:$0xff]
        %v469 = vld [vmem:[%s1 + $0x350] sm:$0xff]
        %v470 = vld [vmem:[%s1 + $0x358] sm:$0xff]
        %v471 = vld [vmem:[%s1 + $0x360] sm:$0xff]
        %v472 = vld [vmem:[%s1 + $0x368] sm:$0xff]
        %v473 = vld [vmem:[%s1 + $0x370] sm:$0xff]
        %v474 = vld [vmem:[%s1 + $0x378] sm:$0xff]
        %v475 = vld [vmem:[%s1 + $0x380] sm:$0xff]
        %v476 = vld [vmem:[%s1 + $0x388] sm:$0xff]
        %v477 = vld [vmem:[%s1 + $0x390] sm:$0xff]
        %v478 = vld [vmem:[%s1 + $0x398] sm:$0xff]
        %v479 = vld [vmem:[%s1 + $0x3a0] sm:$0xff]
        %v480 = vld [vmem:[%s1 + $0x3a8] sm:$0xff]
        %v481 = vld [vmem:[%s1 + $0x3b0] sm:$0xff]
        %v482 = vld [vmem:[%s1 + $0x3b8] sm:$0xff]
        %v483 = vld [vmem:[%s1 + $0x3c0] sm:$0xff]
        %v484 = vld [vmem:[%s1 + $0x3c8] sm:$0xff]
        %v485 = vld [vmem:[%s1 + $0x3d0] sm:$0xff]
        %v486 = vld [vmem:[%s1 + $0x3d8] sm:$0xff]
        %v487 = vld [vmem:[%s1 + $0x3e0] sm:$0xff]
        %v488 = vld [vmem:[%s1 + $0x3e8] sm:$0xff]
        %v489 = vld [vmem:[%s1 + $0x3f0] sm:$0xff]
        %v490 = vld [vmem:[%s1 + $0x3f8] sm:$0xff]
        %v619 = vunpack.c.l.b16 %v363
        %v620 = vunpack.c.h.b16 %v363
        %v621 = vunpack.c.l.b16 %v364
        %v622 = vunpack.c.h.b16 %v364
        %v623 = vunpack.c.l.b16 %v365
        %v624 = vunpack.c.h.b16 %v365
        %v625 = vunpack.c.l.b16 %v366
        %v626 = vunpack.c.h.b16 %v366
        %v627 = vunpack.c.l.b16 %v367
        %v628 = vunpack.c.h.b16 %v367
        %v629 = vunpack.c.l.b16 %v368
        %v630 = vunpack.c.h.b16 %v368
        %v631 = vunpack.c.l.b16 %v369
        %v632 = vunpack.c.h.b16 %v369
        %v633 = vunpack.c.l.b16 %v370
        %v634 = vunpack.c.h.b16 %v370
        %v635 = vunpack.c.l.b16 %v371
        %v636 = vunpack.c.h.b16 %v371
        %v637 = vunpack.c.l.b16 %v372
        %v638 = vunpack.c.h.b16 %v372
        %v639 = vunpack.c.l.b16 %v373
        %v640 = vunpack.c.h.b16 %v373
        %v641 = vunpack.c.l.b16 %v374
        %v642 = vunpack.c.h.b16 %v374
        %v643 = vunpack.c.l.b16 %v375
        %v644 = vunpack.c.h.b16 %v375
        %v645 = vunpack.c.l.b16 %v376
        %v646 = vunpack.c.h.b16 %v376
        %v647 = vunpack.c.l.b16 %v377
        %v648 = vunpack.c.h.b16 %v377
        %v649 = vunpack.c.l.b16 %v378
        %v650 = vunpack.c.h.b16 %v378
        %v651 = vunpack.c.l.b16 %v379
        %v652 = vunpack.c.h.b16 %v379
        %v653 = vunpack.c.l.b16 %v380
        %v654 = vunpack.c.h.b16 %v380
        %v655 = vunpack.c.l.b16 %v381
        %v656 = vunpack.c.h.b16 %v381
        %v657 = vunpack.c.l.b16 %v382
        %v658 = vunpack.c.h.b16 %v382
        %v659 = vunpack.c.l.b16 %v383
        %v660 = vunpack.c.h.b16 %v383
        %v661 = vunpack.c.l.b16 %v384
        %v662 = vunpack.c.h.b16 %v384
        %v663 = vunpack.c.l.b16 %v385
        %v664 = vunpack.c.h.b16 %v385
        %v665 = vunpack.c.l.b16 %v386
        %v666 = vunpack.c.h.b16 %v386
        %v667 = vunpack.c.l.b16 %v387
        %v668 = vunpack.c.h.b16 %v387
        %v669 = vunpack.c.l.b16 %v388
        %v670 = vunpack.c.h.b16 %v388
        %v671 = vunpack.c.l.b16 %v389
        %v672 = vunpack.c.h.b16 %v389
        %v673 = vunpack.c.l.b16 %v390
        %v674 = vunpack.c.h.b16 %v390
        %v675 = vunpack.c.l.b16 %v391
        %v676 = vunpack.c.h.b16 %v391
        %v677 = vunpack.c.l.b16 %v392
        %v678 = vunpack.c.h.b16 %v392
        %v679 = vunpack.c.l.b16 %v393
        %v680 = vunpack.c.h.b16 %v393
        %v681 = vunpack.c.l.b16 %v394
        %v682 = vunpack.c.h.b16 %v394
        %v683 = vunpack.c.l.b16 %v395
        %v684 = vunpack.c.h.b16 %v395
        %v685 = vunpack.c.l.b16 %v396
        %v686 = vunpack.c.h.b16 %v396
        %v687 = vunpack.c.l.b16 %v397
        %v688 = vunpack.c.h.b16 %v397
        %v689 = vunpack.c.l.b16 %v398
        %v690 = vunpack.c.h.b16 %v398
        %v691 = vunpack.c.l.b16 %v399
        %v692 = vunpack.c.h.b16 %v399
        %v693 = vunpack.c.l.b16 %v400
        %v694 = vunpack.c.h.b16 %v400
        %v695 = vunpack.c.l.b16 %v401
        %v696 = vunpack.c.h.b16 %v401
        %v697 = vunpack.c.l.b16 %v402
        %v698 = vunpack.c.h.b16 %v402
        %v699 = vunpack.c.l.b16 %v403
        %v700 = vunpack.c.h.b16 %v403
        %v701 = vunpack.c.l.b16 %v404
        %v702 = vunpack.c.h.b16 %v404
        %v703 = vunpack.c.l.b16 %v405
        %v704 = vunpack.c.h.b16 %v405
        %v705 = vunpack.c.l.b16 %v406
        %v706 = vunpack.c.h.b16 %v406
        %v707 = vunpack.c.l.b16 %v407
        %v708 = vunpack.c.h.b16 %v407
        %v709 = vunpack.c.l.b16 %v408
        %v710 = vunpack.c.h.b16 %v408
        %v711 = vunpack.c.l.b16 %v409
        %v712 = vunpack.c.h.b16 %v409
        %v713 = vunpack.c.l.b16 %v410
        %v714 = vunpack.c.h.b16 %v410
        %v715 = vunpack.c.l.b16 %v411
        %v716 = vunpack.c.h.b16 %v411
        %v717 = vunpack.c.l.b16 %v412
        %v718 = vunpack.c.h.b16 %v412
        %v719 = vunpack.c.l.b16 %v413
        %v720 = vunpack.c.h.b16 %v413
        %v721 = vunpack.c.l.b16 %v414
        %v722 = vunpack.c.h.b16 %v414
        %v723 = vunpack.c.l.b16 %v415
        %v724 = vunpack.c.h.b16 %v415
        %v725 = vunpack.c.l.b16 %v416
        %v726 = vunpack.c.h.b16 %v416
        %v727 = vunpack.c.l.b16 %v417
        %v728 = vunpack.c.h.b16 %v417
        %v729 = vunpack.c.l.b16 %v418
        %v730 = vunpack.c.h.b16 %v418
        %v731 = vunpack.c.l.b16 %v419
        %v732 = vunpack.c.h.b16 %v419
        %v733 = vunpack.c.l.b16 %v420
        %v734 = vunpack.c.h.b16 %v420
        %v735 = vunpack.c.l.b16 %v421
        %v736 = vunpack.c.h.b16 %v421
        %v737 = vunpack.c.l.b16 %v422
        %v738 = vunpack.c.h.b16 %v422
        %v739 = vunpack.c.l.b16 %v423
        %v740 = vunpack.c.h.b16 %v423
        %v741 = vunpack.c.l.b16 %v424
        %v742 = vunpack.c.h.b16 %v424
        %v743 = vunpack.c.l.b16 %v425
        %v744 = vunpack.c.h.b16 %v425
        %v745 = vunpack.c.l.b16 %v426
        %v746 = vunpack.c.h.b16 %v426
        %v747 = vunpack.c.l.b16 %v427
        %v748 = vunpack.c.h.b16 %v427
        %v749 = vunpack.c.l.b16 %v428
        %v750 = vunpack.c.h.b16 %v428
        %v751 = vunpack.c.l.b16 %v429
        %v752 = vunpack.c.h.b16 %v429
        %v753 = vunpack.c.l.b16 %v430
        %v754 = vunpack.c.h.b16 %v430
        %v755 = vunpack.c.l.b16 %v431
        %v756 = vunpack.c.h.b16 %v431
        %v757 = vunpack.c.l.b16 %v432
        %v758 = vunpack.c.h.b16 %v432
        %v759 = vunpack.c.l.b16 %v433
        %v760 = vunpack.c.h.b16 %v433
        %v761 = vunpack.c.l.b16 %v434
        %v762 = vunpack.c.h.b16 %v434
        %v763 = vunpack.c.l.b16 %v435
        %v764 = vunpack.c.h.b16 %v435
        %v765 = vunpack.c.l.b16 %v436
        %v766 = vunpack.c.h.b16 %v436
        %v767 = vunpack.c.l.b16 %v437
        %v768 = vunpack.c.h.b16 %v437
        %v769 = vunpack.c.l.b16 %v438
        %v770 = vunpack.c.h.b16 %v438
        %v771 = vunpack.c.l.b16 %v439
        %v772 = vunpack.c.h.b16 %v439
        %v773 = vunpack.c.l.b16 %v440
        %v774 = vunpack.c.h.b16 %v440
        %v775 = vunpack.c.l.b16 %v441
        %v776 = vunpack.c.h.b16 %v441
        %v777 = vunpack.c.l.b16 %v442
        %v778 = vunpack.c.h.b16 %v442
        %v779 = vunpack.c.l.b16 %v443
        %v780 = vunpack.c.h.b16 %v443
        %v781 = vunpack.c.l.b16 %v444
        %v782 = vunpack.c.h.b16 %v444
        %v783 = vunpack.c.l.b16 %v445
        %v784 = vunpack.c.h.b16 %v445
        %v785 = vunpack.c.l.b16 %v446
        %v786 = vunpack.c.h.b16 %v446
        %v787 = vunpack.c.l.b16 %v447
        %v788 = vunpack.c.h.b16 %v447
        %v789 = vunpack.c.l.b16 %v448
        %v790 = vunpack.c.h.b16 %v448
        %v791 = vunpack.c.l.b16 %v449
        %v792 = vunpack.c.h.b16 %v449
        %v793 = vunpack.c.l.b16 %v450
        %v794 = vunpack.c.h.b16 %v450
        %v795 = vunpack.c.l.b16 %v451
        %v796 = vunpack.c.h.b16 %v451
        %v797 = vunpack.c.l.b16 %v452
        %v798 = vunpack.c.h.b16 %v452
        %v799 = vunpack.c.l.b16 %v453
        %v800 = vunpack.c.h.b16 %v453
        %v801 = vunpack.c.l.b16 %v454
        %v802 = vunpack.c.h.b16 %v454
        %v803 = vunpack.c.l.b16 %v455
        %v804 = vunpack.c.h.b16 %v455
        %v805 = vunpack.c.l.b16 %v456
        %v806 = vunpack.c.h.b16 %v456
        %v807 = vunpack.c.l.b16 %v457
        %v808 = vunpack.c.h.b16 %v457
        %v809 = vunpack.c.l.b16 %v458
        %v810 = vunpack.c.h.b16 %v458
        %v811 = vunpack.c.l.b16 %v459
        %v812 = vunpack.c.h.b16 %v459
        %v813 = vunpack.c.l.b16 %v460
        %v814 = vunpack.c.h.b16 %v460
        %v815 = vunpack.c.l.b16 %v461
        %v816 = vunpack.c.h.b16 %v461
        %v817 = vunpack.c.l.b16 %v462
        %v818 = vunpack.c.h.b16 %v462
        %v819 = vunpack.c.l.b16 %v463
        %v820 = vunpack.c.h.b16 %v463
        %v821 = vunpack.c.l.b16 %v464
        %v822 = vunpack.c.h.b16 %v464
        %v823 = vunpack.c.l.b16 %v465
        %v824 = vunpack.c.h.b16 %v465
        %v825 = vunpack.c.l.b16 %v466
        %v826 = vunpack.c.h.b16 %v466
        %v827 = vunpack.c.l.b16 %v467
        %v828 = vunpack.c.h.b16 %v467
        %v829 = vunpack.c.l.b16 %v468
        %v830 = vunpack.c.h.b16 %v468
        %v831 = vunpack.c.l.b16 %v469
        %v832 = vunpack.c.h.b16 %v469
        %v833 = vunpack.c.l.b16 %v470
        %v834 = vunpack.c.h.b16 %v470
        %v835 = vunpack.c.l.b16 %v471
        %v836 = vunpack.c.h.b16 %v471
        %v837 = vunpack.c.l.b16 %v472
        %v838 = vunpack.c.h.b16 %v472
        %v839 = vunpack.c.l.b16 %v473
        %v840 = vunpack.c.h.b16 %v473
        %v841 = vunpack.c.l.b16 %v474
        %v842 = vunpack.c.h.b16 %v474
        %v843 = vunpack.c.l.b16 %v475
        %v844 = vunpack.c.h.b16 %v475
        %v845 = vunpack.c.l.b16 %v476
        %v846 = vunpack.c.h.b16 %v476
        %v847 = vunpack.c.l.b16 %v477
        %v848 = vunpack.c.h.b16 %v477
        %v849 = vunpack.c.l.b16 %v478
        %v850 = vunpack.c.h.b16 %v478
        %v851 = vunpack.c.l.b16 %v479
        %v852 = vunpack.c.h.b16 %v479
        %v853 = vunpack.c.l.b16 %v480
        %v854 = vunpack.c.h.b16 %v480
        %v855 = vunpack.c.l.b16 %v481
        %v856 = vunpack.c.h.b16 %v481
        %v857 = vunpack.c.l.b16 %v482
        %v858 = vunpack.c.h.b16 %v482
        %v859 = vunpack.c.l.b16 %v483
        %v860 = vunpack.c.h.b16 %v483
        %v861 = vunpack.c.l.b16 %v484
        %v862 = vunpack.c.h.b16 %v484
        %v863 = vunpack.c.l.b16 %v485
        %v864 = vunpack.c.h.b16 %v485
        %v865 = vunpack.c.l.b16 %v486
        %v866 = vunpack.c.h.b16 %v486
        %v867 = vunpack.c.l.b16 %v487
        %v868 = vunpack.c.h.b16 %v487
        %v869 = vunpack.c.l.b16 %v488
        %v870 = vunpack.c.h.b16 %v488
        %v871 = vunpack.c.l.b16 %v489
        %v872 = vunpack.c.h.b16 %v489
        %v873 = vunpack.c.l.b16 %v490
        %v874 = vunpack.c.h.b16 %v490
        %v875 = vpack.c.b16 %v627, %v619
        %v876 = vpack.c.b16 %v628, %v620
        %v877 = vpack.c.b16 %v629, %v621
        %v878 = vpack.c.b16 %v630, %v622
        %v879 = vpack.c.b16 %v631, %v623
        %v880 = vpack.c.b16 %v632, %v624
        %v881 = vpack.c.b16 %v633, %v625
        %v882 = vpack.c.b16 %v634, %v626
        %v883 = vpack.c.b16 %v643, %v635
        %v884 = vpack.c.b16 %v644, %v636
        %v885 = vpack.c.b16 %v645, %v637
        %v886 = vpack.c.b16 %v646, %v638
        %v887 = vpack.c.b16 %v647, %v639
        %v888 = vpack.c.b16 %v648, %v640
        %v889 = vpack.c.b16 %v649, %v641
        %v890 = vpack.c.b16 %v650, %v642
        %v891 = vpack.c.b16 %v659, %v651
        %v892 = vpack.c.b16 %v660, %v652
        %v893 = vpack.c.b16 %v661, %v653
        %v894 = vpack.c.b16 %v662, %v654
        %v895 = vpack.c.b16 %v663, %v655
        %v896 = vpack.c.b16 %v664, %v656
        %v897 = vpack.c.b16 %v665, %v657
        %v898 = vpack.c.b16 %v666, %v658
        %v899 = vpack.c.b16 %v675, %v667
        %v900 = vpack.c.b16 %v676, %v668
        %v901 = vpack.c.b16 %v677, %v669
        %v902 = vpack.c.b16 %v678, %v670
        %v903 = vpack.c.b16 %v679, %v671
        %v904 = vpack.c.b16 %v680, %v672
        %v905 = vpack.c.b16 %v681, %v673
        %v906 = vpack.c.b16 %v682, %v674
        %v907 = vpack.c.b16 %v691, %v683
        %v908 = vpack.c.b16 %v692, %v684
        %v909 = vpack.c.b16 %v693, %v685
        %v910 = vpack.c.b16 %v694, %v686
        %v911 = vpack.c.b16 %v695, %v687
        %v912 = vpack.c.b16 %v696, %v688
        %v913 = vpack.c.b16 %v697, %v689
        %v914 = vpack.c.b16 %v698, %v690
        %v915 = vpack.c.b16 %v707, %v699
        %v916 = vpack.c.b16 %v708, %v700
        %v917 = vpack.c.b16 %v709, %v701
        %v918 = vpack.c.b16 %v710, %v702
        %v919 = vpack.c.b16 %v711, %v703
        %v920 = vpack.c.b16 %v712, %v704
        %v921 = vpack.c.b16 %v713, %v705
        %v922 = vpack.c.b16 %v714, %v706
        %v923 = vpack.c.b16 %v723, %v715
        %v924 = vpack.c.b16 %v724, %v716
        %v925 = vpack.c.b16 %v725, %v717
        %v926 = vpack.c.b16 %v726, %v718
        %v927 = vpack.c.b16 %v727, %v719
        %v928 = vpack.c.b16 %v728, %v720
        %v929 = vpack.c.b16 %v729, %v721
        %v930 = vpack.c.b16 %v730, %v722
        %v931 = vpack.c.b16 %v739, %v731
        %v932 = vpack.c.b16 %v740, %v732
        %v933 = vpack.c.b16 %v741, %v733
        %v934 = vpack.c.b16 %v742, %v734
        %v935 = vpack.c.b16 %v743, %v735
        %v936 = vpack.c.b16 %v744, %v736
        %v937 = vpack.c.b16 %v745, %v737
        %v938 = vpack.c.b16 %v746, %v738
        %v939 = vpack.c.b16 %v755, %v747
        %v940 = vpack.c.b16 %v756, %v748
        %v941 = vpack.c.b16 %v757, %v749
        %v942 = vpack.c.b16 %v758, %v750
        %v943 = vpack.c.b16 %v759, %v751
        %v944 = vpack.c.b16 %v760, %v752
        %v945 = vpack.c.b16 %v761, %v753
        %v946 = vpack.c.b16 %v762, %v754
        %v947 = vpack.c.b16 %v771, %v763
        %v948 = vpack.c.b16 %v772, %v764
        %v949 = vpack.c.b16 %v773, %v765
        %v950 = vpack.c.b16 %v774, %v766
        %v951 = vpack.c.b16 %v775, %v767
        %v952 = vpack.c.b16 %v776, %v768
        %v953 = vpack.c.b16 %v777, %v769
        %v954 = vpack.c.b16 %v778, %v770
        %v955 = vpack.c.b16 %v787, %v779
        %v956 = vpack.c.b16 %v788, %v780
        %v957 = vpack.c.b16 %v789, %v781
        %v958 = vpack.c.b16 %v790, %v782
        %v959 = vpack.c.b16 %v791, %v783
        %v960 = vpack.c.b16 %v792, %v784
        %v961 = vpack.c.b16 %v793, %v785
        %v962 = vpack.c.b16 %v794, %v786
        %v963 = vpack.c.b16 %v803, %v795
        %v964 = vpack.c.b16 %v804, %v796
        %v965 = vpack.c.b16 %v805, %v797
        %v966 = vpack.c.b16 %v806, %v798
        %v967 = vpack.c.b16 %v807, %v799
        %v968 = vpack.c.b16 %v808, %v800
        %v969 = vpack.c.b16 %v809, %v801
        %v970 = vpack.c.b16 %v810, %v802
        %v971 = vpack.c.b16 %v819, %v811
        %v972 = vpack.c.b16 %v820, %v812
        %v973 = vpack.c.b16 %v821, %v813
        %v974 = vpack.c.b16 %v822, %v814
        %v975 = vpack.c.b16 %v823, %v815
        %v976 = vpack.c.b16 %v824, %v816
        %v977 = vpack.c.b16 %v825, %v817
        %v978 = vpack.c.b16 %v826, %v818
        %v979 = vpack.c.b16 %v835, %v827
        %v980 = vpack.c.b16 %v836, %v828
        %v981 = vpack.c.b16 %v837, %v829
        %v982 = vpack.c.b16 %v838, %v830
        %v983 = vpack.c.b16 %v839, %v831
        %v984 = vpack.c.b16 %v840, %v832
        %v985 = vpack.c.b16 %v841, %v833
        %v986 = vpack.c.b16 %v842, %v834
        %v987 = vpack.c.b16 %v851, %v843
        %v988 = vpack.c.b16 %v852, %v844
        %v989 = vpack.c.b16 %v853, %v845
        %v990 = vpack.c.b16 %v854, %v846
        %v991 = vpack.c.b16 %v855, %v847
        %v992 = vpack.c.b16 %v856, %v848
        %v993 = vpack.c.b16 %v857, %v849
        %v994 = vpack.c.b16 %v858, %v850
        %v995 = vpack.c.b16 %v867, %v859
        %v996 = vpack.c.b16 %v868, %v860
        %v997 = vpack.c.b16 %v869, %v861
        %v998 = vpack.c.b16 %v870, %v862
        %v999 = vpack.c.b16 %v871, %v863
        %v1000 = vpack.c.b16 %v872, %v864
        %v1001 = vpack.c.b16 %v873, %v865
        %v1002 = vpack.c.b16 %v874, %v866
        %1131 = vmatprep.subr.bf16.mxu0 %v876
        %1132 = vmatpush1.bf16.msra.mxu0 %v875
        %1133 = vmatprep.subr.bf16.mxu0 %v884
        %1134 = vmatpush1.bf16.msra.mxu0 %v883
        %1135 = vmatprep.subr.bf16.mxu0 %v892
        %1136 = vmatpush1.bf16.msra.mxu0 %v891
        %1137 = vmatprep.subr.bf16.mxu0 %v900
        %1138 = vmatpush1.bf16.msra.mxu0 %v899
        %1139 = vmatprep.subr.bf16.mxu0 %v908
        %1140 = vmatpush1.bf16.msra.mxu0 %v907
        %1141 = vmatprep.subr.bf16.mxu0 %v916
        %1142 = vmatpush1.bf16.msra.mxu0 %v915
        %1143 = vmatprep.subr.bf16.mxu0 %v924
        %1144 = vmatpush1.bf16.msra.mxu0 %v923
        %1145 = vmatprep.subr.bf16.mxu0 %v932
        %1146 = vmatpush1.bf16.msra.mxu0 %v931
        %1147 = vmatprep.subr.bf16.mxu0 %v940
        %1148 = vmatpush1.bf16.msra.mxu0 %v939
        %1149 = vmatprep.subr.bf16.mxu0 %v948
        %1150 = vmatpush1.bf16.msra.mxu0 %v947
        %1151 = vmatprep.subr.bf16.mxu0 %v956
        %1152 = vmatpush1.bf16.msra.mxu0 %v955
        %1153 = vmatprep.subr.bf16.mxu0 %v964
        %1154 = vmatpush1.bf16.msra.mxu0 %v963
        %1155 = vmatprep.subr.bf16.mxu0 %v972
        %1156 = vmatpush1.bf16.msra.mxu0 %v971
        %1157 = vmatprep.subr.bf16.mxu0 %v980
        %1158 = vmatpush1.bf16.msra.mxu0 %v979
        %1159 = vmatprep.subr.bf16.mxu0 %v988
        %1160 = vmatpush1.bf16.msra.mxu0 %v987
        %1161 = vmatprep.subr.bf16.mxu0 %v996
        %1162 = vmatpush1.bf16.msra.mxu0 %v995
        %1163 = vmatprep.mubr.bf16.mxu0 %v362
        %1164 = vmatmul.mubr.bf16.gmra.mrb[0].mxu0 %v361
        %v1165 = vpop.f32.mrb[0].mxu0
        %v1166 = vadd.f32 0.0, %v1165
        %v1167 = vpop.f32.mrb[0].mxu0
        %v1168 = vadd.f32 0.0, %v1167
        %v1169 = vpop.f32.mrb[0].mxu0
        %v1170 = vpop.f32.mrb[0].mxu0
        %1171 = vdwg.mxu0
        %1172 = vmatprep.subr.bf16.mxu0 %v878
        %1173 = vmatpush1.bf16.msra.mxu0 %v877
        %1174 = vmatprep.subr.bf16.mxu0 %v886
        %1175 = vmatpush1.bf16.msra.mxu0 %v885
        %1176 = vmatprep.subr.bf16.mxu0 %v894
        %1177 = vmatpush1.bf16.msra.mxu0 %v893
        %1178 = vmatprep.subr.bf16.mxu0 %v902
        %1179 = vmatpush1.bf16.msra.mxu0 %v901
        %1180 = vmatprep.subr.bf16.mxu0 %v910
        %1181 = vmatpush1.bf16.msra.mxu0 %v909
        %1182 = vmatprep.subr.bf16.mxu0 %v918
        %1183 = vmatpush1.bf16.msra.mxu0 %v917
        %1184 = vmatprep.subr.bf16.mxu0 %v926
        %1185 = vmatpush1.bf16.msra.mxu0 %v925
        %1186 = vmatprep.subr.bf16.mxu0 %v934
        %1187 = vmatpush1.bf16.msra.mxu0 %v933
        %1188 = vmatprep.subr.bf16.mxu0 %v942
        %1189 = vmatpush1.bf16.msra.mxu0 %v941
        %1190 = vmatprep.subr.bf16.mxu0 %v950
        %1191 = vmatpush1.bf16.msra.mxu0 %v949
        %1192 = vmatprep.subr.bf16.mxu0 %v958
        %1193 = vmatpush1.bf16.msra.mxu0 %v957
        %1194 = vmatprep.subr.bf16.mxu0 %v966
        %1195 = vmatpush1.bf16.msra.mxu0 %v965
        %1196 = vmatprep.subr.bf16.mxu0 %v974
        %1197 = vmatpush1.bf16.msra.mxu0 %v973
        %1198 = vmatprep.subr.bf16.mxu0 %v982
        %1199 = vmatpush1.bf16.msra.mxu0 %v981
        %1200 = vmatprep.subr.bf16.mxu0 %v990
        %1201 = vmatpush1.bf16.msra.mxu0 %v989
        %1202 = vmatprep.subr.bf16.mxu0 %v998
        %1203 = vmatpush1.bf16.msra.mxu0 %v997
        %1204 = vmatprep.mubr.bf16.mxu0 %v362
        %1205 = vmatmul.mubr.bf16.gmra.mrb[0].mxu0 %v361
        %v1206 = vpop.f32.mrb[0].mxu0
        %v1207 = vadd.f32 0.0, %v1206
        %v1208 = vpop.f32.mrb[0].mxu0
        %v1209 = vadd.f32 0.0, %v1208
        %v1210 = vpop.f32.mrb[0].mxu0
        %v1211 = vpop.f32.mrb[0].mxu0
        %1212 = vdwg.mxu0
        %1213 = vmatprep.subr.bf16.mxu0 %v880
        %1214 = vmatpush1.bf16.msra.mxu0 %v879
        %1215 = vmatprep.subr.bf16.mxu0 %v888
        %1216 = vmatpush1.bf16.msra.mxu0 %v887
        %1217 = vmatprep.subr.bf16.mxu0 %v896
        %1218 = vmatpush1.bf16.msra.mxu0 %v895
        %1219 = vmatprep.subr.bf16.mxu0 %v904
        %1220 = vmatpush1.bf16.msra.mxu0 %v903
        %1221 = vmatprep.subr.bf16.mxu0 %v912
        %1222 = vmatpush1.bf16.msra.mxu0 %v911
        %1223 = vmatprep.subr.bf16.mxu0 %v920
        %1224 = vmatpush1.bf16.msra.mxu0 %v919
        %1225 = vmatprep.subr.bf16.mxu0 %v928
        %1226 = vmatpush1.bf16.msra.mxu0 %v927
        %1227 = vmatprep.subr.bf16.mxu0 %v936
        %1228 = vmatpush1.bf16.msra.mxu0 %v935
        %1229 = vmatprep.subr.bf16.mxu0 %v944
        %1230 = vmatpush1.bf16.msra.mxu0 %v943
        %1231 = vmatprep.subr.bf16.mxu0 %v952
        %1232 = vmatpush1.bf16.msra.mxu0 %v951
        %1233 = vmatprep.subr.bf16.mxu0 %v960
        %1234 = vmatpush1.bf16.msra.mxu0 %v959
        %1235 = vmatprep.subr.bf16.mxu0 %v968
        %1236 = vmatpush1.bf16.msra.mxu0 %v967
        %1237 = vmatprep.subr.bf16.mxu0 %v976
        %1238 = vmatpush1.bf16.msra.mxu0 %v975
        %1239 = vmatprep.subr.bf16.mxu0 %v984
        %1240 = vmatpush1.bf16.msra.mxu0 %v983
        %1241 = vmatprep.subr.bf16.mxu0 %v992
        %1242 = vmatpush1.bf16.msra.mxu0 %v991
        %1243 = vmatprep.subr.bf16.mxu0 %v1000
        %1244 = vmatpush1.bf16.msra.mxu0 %v999
        %1245 = vmatprep.mubr.bf16.mxu0 %v362
        %1246 = vmatmul.mubr.bf16.gmra.mrb[0].mxu0 %v361
        %v1247 = vpop.f32.mrb[0].mxu0
        %v1248 = vadd.f32 0.0, %v1247
        %v1249 = vpop.f32.mrb[0].mxu0
        %v1250 = vadd.f32 0.0, %v1249
        %v1251 = vpop.f32.mrb[0].mxu0
        %v1252 = vpop.f32.mrb[0].mxu0
        %1253 = vdwg.mxu0
        %1254 = vmatprep.subr.bf16.mxu0 %v882
        %1255 = vmatpush1.bf16.msra.mxu0 %v881
        %1256 = vmatprep.subr.bf16.mxu0 %v890
        %1257 = vmatpush1.bf16.msra.mxu0 %v889
        %1258 = vmatprep.subr.bf16.mxu0 %v898
        %1259 = vmatpush1.bf16.msra.mxu0 %v897
        %1260 = vmatprep.subr.bf16.mxu0 %v906
        %1261 = vmatpush1.bf16.msra.mxu0 %v905
        %1262 = vmatprep.subr.bf16.mxu0 %v914
        %1263 = vmatpush1.bf16.msra.mxu0 %v913
        %1264 = vmatprep.subr.bf16.mxu0 %v922
        %1265 = vmatpush1.bf16.msra.mxu0 %v921
        %1266 = vmatprep.subr.bf16.mxu0 %v930
        %1267 = vmatpush1.bf16.msra.mxu0 %v929
        %1268 = vmatprep.subr.bf16.mxu0 %v938
        %1269 = vmatpush1.bf16.msra.mxu0 %v937
        %1270 = vmatprep.subr.bf16.mxu0 %v946
        %1271 = vmatpush1.bf16.msra.mxu0 %v945
        %1272 = vmatprep.subr.bf16.mxu0 %v954
        %1273 = vmatpush1.bf16.msra.mxu0 %v953
        %1274 = vmatprep.subr.bf16.mxu0 %v962
        %1275 = vmatpush1.bf16.msra.mxu0 %v961
        %1276 = vmatprep.subr.bf16.mxu0 %v970
        %1277 = vmatpush1.bf16.msra.mxu0 %v969
        %1278 = vmatprep.subr.bf16.mxu0 %v978
        %1279 = vmatpush1.bf16.msra.mxu0 %v977
        %1280 = vmatprep.subr.bf16.mxu0 %v986
        %1281 = vmatpush1.bf16.msra.mxu0 %v985
        %1282 = vmatprep.subr.bf16.mxu0 %v994
        %1283 = vmatpush1.bf16.msra.mxu0 %v993
        %1284 = vmatprep.subr.bf16.mxu0 %v1002
        %1285 = vmatpush1.bf16.msra.mxu0 %v1001
        %1286 = vmatprep.mubr.bf16.mxu0 %v362
        %1287 = vmatmul.mubr.bf16.gmra.mrb[0].mxu0 %v361
        %v1288 = vpop.f32.mrb[0].mxu0
        %v1289 = vadd.f32 0.0, %v1288
        %v1290 = vpop.f32.mrb[0].mxu0
        %v1291 = vadd.f32 0.0, %v1290
        %v1292 = vpop.f32.mrb[0].mxu0
        %v1293 = vpop.f32.mrb[0].mxu0
        %1294 = vdwg.mxu0
        %v1303 = vcombine.low %v1166, %v1168
        %v1304 = vcombine.low %v1207, %v1209
        %v1306 = vunpack.c.l.s4 1983009808
        %v1307 = vunpack.c.0.s8 %v1306
        %v1308 = vlaneseq
        %v1309 = vshrl.u32 %v1308, 7
        %v1310 = vsub.s32 %v1307, %v1309
        %v1311 = vrot.slane %v1303, %v1310
        %v1313 = vunpack.c.l.s4 1983009808
        %v1314 = vunpack.c.0.s8 %v1313
        %v1315 = vlaneseq
        %v1316 = vshrl.u32 %v1315, 7
        %v1317 = vsub.s32 %v1314, %v1316
        %v1318 = vrot.slane %v1304, %v1317
        %v1319 = vcombine.low %v1311, %v1318
        %v1320 = vcombine.low %v1248, %v1250
        %v1321 = vcombine.low %v1289, %v1291
        %v1323 = vunpack.c.l.s4 1983009808
        %v1324 = vunpack.c.0.s8 %v1323
        %v1325 = vlaneseq
        %v1326 = vshrl.u32 %v1325, 7
        %v1327 = vsub.s32 %v1324, %v1326
        %v1328 = vrot.slane %v1320, %v1327
        %v1330 = vunpack.c.l.s4 1983009808
        %v1331 = vunpack.c.0.s8 %v1330
        %v1332 = vlaneseq
        %v1333 = vshrl.u32 %v1332, 7
        %v1334 = vsub.s32 %v1331, %v1333
        %v1335 = vrot.slane %v1321, %v1334
        %v1336 = vcombine.low %v1328, %v1335
        %v1339 = vadd.f32 %v347, %v1319
        %v1340 = vadd.f32 %v348, %v1336
        %v1341 = vxor.u32 %v1339, 2147483648
        %v1342 = vmul.f32 %v1341, 1.442695
        %v1343 = vpow.pop %v1342
        %v1344 = vadd.f32 %v1343, 1.0
        %v1345 = vrcp.pop %v1344
        %v1346 = vmul.f32 1.0, %v1345
        %v1348 = vrot.slane %v1339, 4
        %v1350 = vxor.u32 %v1348, 2147483648
        %v1351 = vmul.f32 %v1350, 1.442695
        %v1352 = vpow.pop %v1351
        %v1353 = vadd.f32 %v1352, 1.0
        %v1354 = vrcp.pop %v1353
        %v1355 = vmul.f32 1.0, %v1354
        %v1356 = vtanh.pop %v1340
        %v1358 = vrot.slane %v1340, 4
        %v1360 = vxor.u32 %v1358, 2147483648
        %v1361 = vmul.f32 %v1360, 1.442695
        %v1362 = vpow.pop %v1361
        %v1363 = vadd.f32 %v1362, 1.0
        %v1364 = vrcp.pop %v1363
        %v1365 = vmul.f32 1.0, %v1364
        %v1366 = vld [vmem:[#allocation3] sm:$0xf]
        %v1367 = vmul.f32 %v1355, %v1366
        %v1368 = vmul.f32 %v1346, %v1356
        %v1369 = vadd.f32 %v1367, %v1368
        %v1370 = vtanh.pop %v1369
        %v1371 = vmul.f32 %v1365, %v1370
        %1372 = vst [vmem:[#allocation3] sm:$0xf] %v1369
        %1373 = vst [vmem:[#allocation2] sm:$0xf] %v1371
        %p1374 = scmp.eq.s32.totalorder %s24, 1
        // Predicated region
        $region57: #{dqn_forward.9} parent=51 // pred_check
          %p1375 = pneg %p1374
        $region58: #{dqn_forward.9} parent=51 // pred_check_branch
          %1377 = sbr.rel (%p1375) target = $region60
        $region59: #{dqn_forward.9} parent=51 // pred_region
          %1378 = vst [vmem:[#allocation6] sm:$0xf] %v1371
          %1379 = vst [vmem:[#allocation8] sm:$0xf] %v1369
          %v1382 = vunpack.c.l.s4 1983009808
          %v1383 = vunpack.c.0.s8 %v1382
          %v1384 = vlaneseq
          %v1385 = vshrl.u32 %v1384, 7
          %v1386 = vsub.s32 %v1383, %v1385
          %v1387 = vrot.slane %v1371, %v1386
          %v1388 = vcombine.high %v1387, %v1387
          %v1391 = vpack.c.bf16 %v1387, %v1387
          %v1392 = vpack.c.bf16 %v1388, %v1388
          %v1393 = vld [vmem:[%s2] sm:$0xf]
          %v1394 = vld [vmem:[%s2 + $0x4] sm:$0xf]
          %v1395 = vld [vmem:[%s2 + $0x8] sm:$0xf]
          %v1396 = vld [vmem:[%s2 + $0xc] sm:$0xf]
          %v1397 = vld [vmem:[%s2 + $0x10] sm:$0xf]
          %v1398 = vld [vmem:[%s2 + $0x14] sm:$0xf]
          %v1399 = vld [vmem:[%s2 + $0x18] sm:$0xf]
          %v1400 = vld [vmem:[%s2 + $0x1c] sm:$0xf]
          %v1401 = vld [vmem:[%s2 + $0x20] sm:$0xf]
          %v1402 = vld [vmem:[%s2 + $0x24] sm:$0xf]
          %v1403 = vld [vmem:[%s2 + $0x28] sm:$0xf]
          %v1404 = vld [vmem:[%s2 + $0x2c] sm:$0xf]
          %v1405 = vld [vmem:[%s2 + $0x30] sm:$0xf]
          %v1406 = vld [vmem:[%s2 + $0x34] sm:$0xf]
          %v1407 = vld [vmem:[%s2 + $0x38] sm:$0xf]
          %v1408 = vld [vmem:[%s2 + $0x3c] sm:$0xf]
          %v1409 = vld [vmem:[%s2 + $0x40] sm:$0xf]
          %v1410 = vld [vmem:[%s2 + $0x44] sm:$0xf]
          %v1411 = vld [vmem:[%s2 + $0x48] sm:$0xf]
          %v1412 = vld [vmem:[%s2 + $0x4c] sm:$0xf]
          %v1413 = vld [vmem:[%s2 + $0x50] sm:$0xf]
          %v1414 = vld [vmem:[%s2 + $0x54] sm:$0xf]
          %v1415 = vld [vmem:[%s2 + $0x58] sm:$0xf]
          %v1416 = vld [vmem:[%s2 + $0x5c] sm:$0xf]
          %v1417 = vld [vmem:[%s2 + $0x60] sm:$0xf]
          %v1418 = vld [vmem:[%s2 + $0x64] sm:$0xf]
          %v1419 = vld [vmem:[%s2 + $0x68] sm:$0xf]
          %v1420 = vld [vmem:[%s2 + $0x6c] sm:$0xf]
          %v1421 = vld [vmem:[%s2 + $0x70] sm:$0xf]
          %v1422 = vld [vmem:[%s2 + $0x74] sm:$0xf]
          %v1423 = vld [vmem:[%s2 + $0x78] sm:$0xf]
          %v1424 = vld [vmem:[%s2 + $0x7c] sm:$0xf]
          %v1425 = vld [vmem:[%s3] sm:$0x1]
          %v1427 = vlaneseq
          %v1428 = vshrl.u32 %v1427, 7
          %v1429 = vsub.s32 0, %v1428
          %v1430 = vrot.slane %v1425, %v1429
          %v1464 = vunpack.c.l.b16 %v1393
          %v1465 = vunpack.c.l.b16 %v1394
          %v1466 = vunpack.c.l.b16 %v1395
          %v1467 = vunpack.c.l.b16 %v1396
          %v1468 = vunpack.c.l.b16 %v1397
          %v1469 = vunpack.c.l.b16 %v1398
          %v1470 = vunpack.c.l.b16 %v1399
          %v1471 = vunpack.c.l.b16 %v1400
          %v1472 = vunpack.c.l.b16 %v1401
          %v1473 = vunpack.c.l.b16 %v1402
          %v1474 = vunpack.c.l.b16 %v1403
          %v1475 = vunpack.c.l.b16 %v1404
          %v1476 = vunpack.c.l.b16 %v1405
          %v1477 = vunpack.c.l.b16 %v1406
          %v1478 = vunpack.c.l.b16 %v1407
          %v1479 = vunpack.c.l.b16 %v1408
          %v1480 = vunpack.c.l.b16 %v1409
          %v1481 = vunpack.c.l.b16 %v1410
          %v1482 = vunpack.c.l.b16 %v1411
          %v1483 = vunpack.c.l.b16 %v1412
          %v1484 = vunpack.c.l.b16 %v1413
          %v1485 = vunpack.c.l.b16 %v1414
          %v1486 = vunpack.c.l.b16 %v1415
          %v1487 = vunpack.c.l.b16 %v1416
          %v1488 = vunpack.c.l.b16 %v1417
          %v1489 = vunpack.c.l.b16 %v1418
          %v1490 = vunpack.c.l.b16 %v1419
          %v1491 = vunpack.c.l.b16 %v1420
          %v1492 = vunpack.c.l.b16 %v1421
          %v1493 = vunpack.c.l.b16 %v1422
          %v1494 = vunpack.c.l.b16 %v1423
          %v1495 = vunpack.c.l.b16 %v1424
          %v1496 = vpack.c.b16 %v1465, %v1464
          %v1497 = vpack.c.b16 %v1467, %v1466
          %v1498 = vpack.c.b16 %v1469, %v1468
          %v1499 = vpack.c.b16 %v1471, %v1470
          %v1500 = vpack.c.b16 %v1473, %v1472
          %v1501 = vpack.c.b16 %v1475, %v1474
          %v1502 = vpack.c.b16 %v1477, %v1476
          %v1503 = vpack.c.b16 %v1479, %v1478
          %v1504 = vpack.c.b16 %v1481, %v1480
          %v1505 = vpack.c.b16 %v1483, %v1482
          %v1506 = vpack.c.b16 %v1485, %v1484
          %v1507 = vpack.c.b16 %v1487, %v1486
          %v1508 = vpack.c.b16 %v1489, %v1488
          %v1509 = vpack.c.b16 %v1491, %v1490
          %v1510 = vpack.c.b16 %v1493, %v1492
          %v1511 = vpack.c.b16 %v1495, %v1494
          %1528 = vmatprep.subr.bf16.mxu0 0
          %1529 = vmatpush1.bf16.msra.mxu0 %v1496
          %1530 = vmatprep.subr.bf16.mxu0 0
          %1531 = vmatpush1.bf16.msra.mxu0 %v1497
          %1532 = vmatprep.subr.bf16.mxu0 0
          %1533 = vmatpush1.bf16.msra.mxu0 %v1498
          %1534 = vmatprep.subr.bf16.mxu0 0
          %1535 = vmatpush1.bf16.msra.mxu0 %v1499
          %1536 = vmatprep.subr.bf16.mxu0 0
          %1537 = vmatpush1.bf16.msra.mxu0 %v1500
          %1538 = vmatprep.subr.bf16.mxu0 0
          %1539 = vmatpush1.bf16.msra.mxu0 %v1501
          %1540 = vmatprep.subr.bf16.mxu0 0
          %1541 = vmatpush1.bf16.msra.mxu0 %v1502
          %1542 = vmatprep.subr.bf16.mxu0 0
          %1543 = vmatpush1.bf16.msra.mxu0 %v1503
          %1544 = vmatprep.subr.bf16.mxu0 0
          %1545 = vmatpush1.bf16.msra.mxu0 %v1504
          %1546 = vmatprep.subr.bf16.mxu0 0
          %1547 = vmatpush1.bf16.msra.mxu0 %v1505
          %1548 = vmatprep.subr.bf16.mxu0 0
          %1549 = vmatpush1.bf16.msra.mxu0 %v1506
          %1550 = vmatprep.subr.bf16.mxu0 0
          %1551 = vmatpush1.bf16.msra.mxu0 %v1507
          %1552 = vmatprep.subr.bf16.mxu0 0
          %1553 = vmatpush1.bf16.msra.mxu0 %v1508
          %1554 = vmatprep.subr.bf16.mxu0 0
          %1555 = vmatpush1.bf16.msra.mxu0 %v1509
          %1556 = vmatprep.subr.bf16.mxu0 0
          %1557 = vmatpush1.bf16.msra.mxu0 %v1510
          %1558 = vmatprep.subr.bf16.mxu0 0
          %1559 = vmatpush1.bf16.msra.mxu0 %v1511
          %1560 = vmatprep.mubr.bf16.mxu0 %v1392
          %1561 = vmatmul.mubr.bf16.gmra.mrb[0].mxu0 %v1391
          %v1562 = vpop.f32.mrb[0].mxu0
          %v1563 = vadd.f32 %v1430, %v1562
          %v1564 = vpop.f32.mrb[0].mxu0
          %v1565 = vpop.f32.mrb[0].mxu0
          %v1566 = vpop.f32.mrb[0].mxu0
          %1567 = vdwg.mxu0
          %v1568 = vmax.f32 %v1563, 0.0
          %v1569 = vpack.c.bf16 %v1568, %v1568
          %v1570 = vld [vmem:[%s4] sm:$0xf]
          %v1571 = vld [vmem:[%s4 + $0x4] sm:$0xf]
          %v1572 = vld [vmem:[%s4 + $0x8] sm:$0xf]
          %v1573 = vld [vmem:[%s4 + $0xc] sm:$0xf]
          %v1574 = vld [vmem:[%s4 + $0x10] sm:$0xf]
          %v1575 = vld [vmem:[%s4 + $0x14] sm:$0xf]
          %v1576 = vld [vmem:[%s4 + $0x18] sm:$0xf]
          %v1577 = vld [vmem:[%s4 + $0x1c] sm:$0xf]
          %v1578 = vld [vmem:[%s4 + $0x20] sm:$0xf]
          %v1579 = vld [vmem:[%s4 + $0x24] sm:$0xf]
          %v1580 = vld [vmem:[%s4 + $0x28] sm:$0xf]
          %v1581 = vld [vmem:[%s4 + $0x2c] sm:$0xf]
          %v1582 = vld [vmem:[%s4 + $0x30] sm:$0xf]
          %v1583 = vld [vmem:[%s4 + $0x34] sm:$0xf]
          %v1584 = vld [vmem:[%s4 + $0x38] sm:$0xf]
          %v1585 = vld [vmem:[%s4 + $0x3c] sm:$0xf]
          %v1586 = vld [vmem:[%s5] sm:$0x1]
          %v1588 = vlaneseq
          %v1589 = vshrl.u32 %v1588, 7
          %v1590 = vsub.s32 0, %v1589
          %v1591 = vrot.slane %v1586, %v1590
          %v1609 = vunpack.c.l.b16 %v1570
          %v1610 = vunpack.c.l.b16 %v1571
          %v1611 = vunpack.c.l.b16 %v1572
          %v1612 = vunpack.c.l.b16 %v1573
          %v1613 = vunpack.c.l.b16 %v1574
          %v1614 = vunpack.c.l.b16 %v1575
          %v1615 = vunpack.c.l.b16 %v1576
          %v1616 = vunpack.c.l.b16 %v1577
          %v1617 = vunpack.c.l.b16 %v1578
          %v1618 = vunpack.c.l.b16 %v1579
          %v1619 = vunpack.c.l.b16 %v1580
          %v1620 = vunpack.c.l.b16 %v1581
          %v1621 = vunpack.c.l.b16 %v1582
          %v1622 = vunpack.c.l.b16 %v1583
          %v1623 = vunpack.c.l.b16 %v1584
          %v1624 = vunpack.c.l.b16 %v1585
          %v1625 = vpack.c.b16 %v1610, %v1609
          %v1626 = vpack.c.b16 %v1612, %v1611
          %v1627 = vpack.c.b16 %v1614, %v1613
          %v1628 = vpack.c.b16 %v1616, %v1615
          %v1629 = vpack.c.b16 %v1618, %v1617
          %v1630 = vpack.c.b16 %v1620, %v1619
          %v1631 = vpack.c.b16 %v1622, %v1621
          %v1632 = vpack.c.b16 %v1624, %v1623
          %1641 = vmatprep.subr.bf16.mxu0 0
          %1642 = vmatpush1.bf16.msra.mxu0 %v1625
          %1643 = vmatprep.subr.bf16.mxu0 0
          %1644 = vmatpush1.bf16.msra.mxu0 %v1626
          %1645 = vmatprep.subr.bf16.mxu0 0
          %1646 = vmatpush1.bf16.msra.mxu0 %v1627
          %1647 = vmatprep.subr.bf16.mxu0 0
          %1648 = vmatpush1.bf16.msra.mxu0 %v1628
          %1649 = vmatprep.subr.bf16.mxu0 0
          %1650 = vmatpush1.bf16.msra.mxu0 %v1629
          %1651 = vmatprep.subr.bf16.mxu0 0
          %1652 = vmatpush1.bf16.msra.mxu0 %v1630
          %1653 = vmatprep.subr.bf16.mxu0 0
          %1654 = vmatpush1.bf16.msra.mxu0 %v1631
          %1655 = vmatprep.subr.bf16.mxu0 0
          %1656 = vmatpush1.bf16.msra.mxu0 %v1632
          %1657 = vmatprep.subr.bf16.mxu0 0
          %1658 = vmatpush1.bf16.msra.mxu0 0
          %1659 = vmatprep.subr.bf16.mxu0 0
          %1660 = vmatpush1.bf16.msra.mxu0 0
          %1661 = vmatprep.subr.bf16.mxu0 0
          %1662 = vmatpush1.bf16.msra.mxu0 0
          %1663 = vmatprep.subr.bf16.mxu0 0
          %1664 = vmatpush1.bf16.msra.mxu0 0
          %1665 = vmatprep.subr.bf16.mxu0 0
          %1666 = vmatpush1.bf16.msra.mxu0 0
          %1667 = vmatprep.subr.bf16.mxu0 0
          %1668 = vmatpush1.bf16.msra.mxu0 0
          %1669 = vmatprep.subr.bf16.mxu0 0
          %1670 = vmatpush1.bf16.msra.mxu0 0
          %1671 = vmatprep.subr.bf16.mxu0 0
          %1672 = vmatpush1.bf16.msra.mxu0 0
          %1673 = vmatprep.mubr.bf16.mxu0 0
          %1674 = vmatmul.mubr.bf16.gmra.mrb[0].mxu0 %v1569
          %v1675 = vpop.f32.mrb[0].mxu0
          %v1676 = vadd.f32 %v1591, %v1675
          %v1677 = vpop.f32.mrb[0].mxu0
          %v1678 = vpop.f32.mrb[0].mxu0
          %v1679 = vpop.f32.mrb[0].mxu0
          %1680 = vdwg.mxu0
          %v1681 = vmax.f32 %v1676, 0.0
          %v1682 = vpack.c.bf16 %v1681, %v1681
          %v1683 = vld [vmem:[%s6] sm:$0xf]
          %v1684 = vld [vmem:[%s6 + $0x4] sm:$0xf]
          %v1685 = vld [vmem:[%s6 + $0x8] sm:$0xf]
          %v1686 = vld [vmem:[%s6 + $0xc] sm:$0xf]
          %v1687 = vld [vmem:[%s6 + $0x10] sm:$0xf]
          %v1688 = vld [vmem:[%s6 + $0x14] sm:$0xf]
          %v1689 = vld [vmem:[%s6 + $0x18] sm:$0xf]
          %v1690 = vld [vmem:[%s6 + $0x1c] sm:$0xf]
          %v1691 = vld [vmem:[%s6 + $0x20] sm:$0xf]
          %v1692 = vld [vmem:[%s6 + $0x24] sm:$0xf]
          %v1693 = vld [vmem:[%s6 + $0x28] sm:$0xf]
          %v1694 = vld [vmem:[%s6 + $0x2c] sm:$0xf]
          %v1695 = vld [vmem:[%s6 + $0x30] sm:$0xf]
          %v1696 = vld [vmem:[%s6 + $0x34] sm:$0xf]
          %v1697 = vld [vmem:[%s6 + $0x38] sm:$0xf]
          %v1698 = vld [vmem:[%s6 + $0x3c] sm:$0xf]
          %v1699 = vld [vmem:[%s7] sm:$0x1]
          %v1701 = vlaneseq
          %v1702 = vshrl.u32 %v1701, 7
          %v1703 = vsub.s32 0, %v1702
          %v1704 = vrot.slane %v1699, %v1703
          %v1722 = vunpack.c.l.b16 %v1683
          %v1723 = vunpack.c.l.b16 %v1684
          %v1724 = vunpack.c.l.b16 %v1685
          %v1725 = vunpack.c.l.b16 %v1686
          %v1726 = vunpack.c.l.b16 %v1687
          %v1727 = vunpack.c.l.b16 %v1688
          %v1728 = vunpack.c.l.b16 %v1689
          %v1729 = vunpack.c.l.b16 %v1690
          %v1730 = vunpack.c.l.b16 %v1691
          %v1731 = vunpack.c.l.b16 %v1692
          %v1732 = vunpack.c.l.b16 %v1693
          %v1733 = vunpack.c.l.b16 %v1694
          %v1734 = vunpack.c.l.b16 %v1695
          %v1735 = vunpack.c.l.b16 %v1696
          %v1736 = vunpack.c.l.b16 %v1697
          %v1737 = vunpack.c.l.b16 %v1698
          %v1738 = vpack.c.b16 %v1723, %v1722
          %v1739 = vpack.c.b16 %v1725, %v1724
          %v1740 = vpack.c.b16 %v1727, %v1726
          %v1741 = vpack.c.b16 %v1729, %v1728
          %v1742 = vpack.c.b16 %v1731, %v1730
          %v1743 = vpack.c.b16 %v1733, %v1732
          %v1744 = vpack.c.b16 %v1735, %v1734
          %v1745 = vpack.c.b16 %v1737, %v1736
          %1754 = vmatprep.subr.bf16.mxu0 0
          %1755 = vmatpush1.bf16.msra.mxu0 %v1738
          %1756 = vmatprep.subr.bf16.mxu0 0
          %1757 = vmatpush1.bf16.msra.mxu0 %v1739
          %1758 = vmatprep.subr.bf16.mxu0 0
          %1759 = vmatpush1.bf16.msra.mxu0 %v1740
          %1760 = vmatprep.subr.bf16.mxu0 0
          %1761 = vmatpush1.bf16.msra.mxu0 %v1741
          %1762 = vmatprep.subr.bf16.mxu0 0
          %1763 = vmatpush1.bf16.msra.mxu0 %v1742
          %1764 = vmatprep.subr.bf16.mxu0 0
          %1765 = vmatpush1.bf16.msra.mxu0 %v1743
          %1766 = vmatprep.subr.bf16.mxu0 0
          %1767 = vmatpush1.bf16.msra.mxu0 %v1744
          %1768 = vmatprep.subr.bf16.mxu0 0
          %1769 = vmatpush1.bf16.msra.mxu0 %v1745
          %1770 = vmatprep.subr.bf16.mxu0 0
          %1771 = vmatpush1.bf16.msra.mxu0 0
          %1772 = vmatprep.subr.bf16.mxu0 0
          %1773 = vmatpush1.bf16.msra.mxu0 0
          %1774 = vmatprep.subr.bf16.mxu0 0
          %1775 = vmatpush1.bf16.msra.mxu0 0
          %1776 = vmatprep.subr.bf16.mxu0 0
          %1777 = vmatpush1.bf16.msra.mxu0 0
          %1778 = vmatprep.subr.bf16.mxu0 0
          %1779 = vmatpush1.bf16.msra.mxu0 0
          %1780 = vmatprep.subr.bf16.mxu0 0
          %1781 = vmatpush1.bf16.msra.mxu0 0
          %1782 = vmatprep.subr.bf16.mxu0 0
          %1783 = vmatpush1.bf16.msra.mxu0 0
          %1784 = vmatprep.subr.bf16.mxu0 0
          %1785 = vmatpush1.bf16.msra.mxu0 0
          %1786 = vmatprep.mubr.bf16.mxu0 0
          %1787 = vmatmul.mubr.bf16.gmra.mrb[0].mxu0 %v1682
          %v1788 = vpop.f32.mrb[0].mxu0
          %v1789 = vadd.f32 %v1704, %v1788
          %v1790 = vpop.f32.mrb[0].mxu0
          %v1791 = vpop.f32.mrb[0].mxu0
          %v1792 = vpop.f32.mrb[0].mxu0
          %1793 = vdwg.mxu0
          %1794 = vst [vmem:[#allocation4] sm:$0x3] %v1789
        $region60: #{dqn_forward.9} parent=51 // pred_fallthru
          _
        // Predicated region
        $region61: #{dqn_forward.9} parent=51 // pred_check
          %p1795 = pneg %p210
        $region62: #{dqn_forward.9} parent=51 // pred_check_branch
          %1797 = sbr.rel (%p1795) target = $region64
        $region63: #{dqn_forward.9} parent=51 // pred_region
          %s1799 = ssub.s32 32, 32
          %1800 = vsyncadd [#allocation5], %s1799
          %s1802 = sshll.u32 [#allocation4], 4
          %s1803 = int_to_ptr.vmem [resolvable:$true] %s1802
          %1805 = dma.vmem_to_hbm [thread:$0]  %s1803, 32, %s8, [#allocation5]
        $region64: #{dqn_forward.9} parent=51 // pred_fallthru
          _
        // Predicated region
        $region65: #{dqn_forward.9} parent=51 // pred_check
          %p1806 = pneg %p231
        $region66: #{dqn_forward.9} parent=51 // pred_check_branch
          %1808 = sbr.rel (%p1806) target = $region68
        $region67: #{dqn_forward.9} parent=51 // pred_region
          %s1810 = ssub.s32 64, 64
          %1811 = vsyncadd [#allocation7], %s1810
          %s1813 = sshll.u32 [#allocation6], 4
          %s1814 = int_to_ptr.vmem [resolvable:$true] %s1813
          %1816 = dma.vmem_to_hbm [thread:$0]  %s1814, 64, %s9, [#allocation7]
        $region68: #{dqn_forward.9} parent=51 // pred_fallthru
          _
        // Predicated region
        $region69: #{dqn_forward.9} parent=51 // pred_check
          %p1817 = pneg %p252
        $region70: #{dqn_forward.9} parent=51 // pred_check_branch
          %1819 = sbr.rel (%p1817) target = $region72
        $region71: #{dqn_forward.9} parent=51 // pred_region
          %s1821 = ssub.s32 64, 64
          %1822 = vsyncadd [#allocation7], %s1821
          %s1824 = sshll.u32 [#allocation8], 4
          %s1825 = int_to_ptr.vmem [resolvable:$true] %s1824
          %1827 = dma.vmem_to_hbm [thread:$0]  %s1825, 64, %s10, [#allocation7]
        $region72: #{dqn_forward.9} parent=51 // pred_fallthru
          _
        // Predicated region
        $region73: #{dqn_forward.9} parent=51 // pred_check
          %p1828 = pneg %p210
        $region74: #{dqn_forward.9} parent=51 // pred_check_branch
          %1830 = sbr.rel (%p1828) target = $region76
        $region75: #{dqn_forward.9} parent=51 // pred_region
          %1831 = dma.done [#allocation5], 32
        $region76: #{dqn_forward.9} parent=51 // pred_fallthru
          _
        // Predicated region
        $region77: #{dqn_forward.9} parent=51 // pred_check
          %p1832 = pneg %p231
        $region78: #{dqn_forward.9} parent=51 // pred_check_branch
          %1834 = sbr.rel (%p1832) target = $region80
        $region79: #{dqn_forward.9} parent=51 // pred_region
          %1835 = dma.done [#allocation7], 64
        $region80: #{dqn_forward.9} parent=51 // pred_fallthru
          _
        // Predicated region
        $region81: #{dqn_forward.9} parent=51 // pred_check
          %p1836 = pneg %p252
        $region82: #{dqn_forward.9} parent=51 // pred_check_branch
          %1838 = sbr.rel (%p1836) target = $region84
        $region83: #{dqn_forward.9} parent=51 // pred_region
          %1839 = dma.done [#allocation7], 64
        $region84: #{dqn_forward.9} parent=51 // pred_fallthru
          _
      $region52: #{dqn_forward.9} parent=5 // pred_fallthru
        _
      %p1840 = scmp.le.s32.totalorder 2, %s19
      // Predicated region
      $region85: #{dqn_forward.9} parent=5 // pred_check
        %p1841 = pneg %p1840
      $region86: #{dqn_forward.9} parent=5 // pred_check_branch
        %1843 = sbr.rel (%p1841) target = $region88
      $region87: #{dqn_forward.9} parent=5 // pred_region
        %s1844 = ssub.s32 %s19, 2
      $region88: #{dqn_forward.9} parent=5 // pred_fallthru
        _
    $region6: #{dqn_forward.9} parent=1 // loop_footer
      %s23 = sadd.s32 1, %s19
    $region7: #{dqn_forward.9} parent=1 // loop_footer_branch
      %18 = sbr.rel target = $region3
    $region8: #{dqn_forward.9} parent=1 // loop_exit
      _
    %1845 = vsyncpa [#allocation5], 1
    %s1846 = scalar_lea.sflag [#allocation5], 1
    %1847 = vsyncpa %s1846, 1
    %1848 = vsyncpa [#allocation7], 1

// kernel: dqn_forward.8
$region0: #{dqn_forward.8}
  #allocation0 [shape = 'u32[]', space=smem, size = 0x4, offset = 0x4, fixed_abs, tag = 'smem constant byte address 0x4 - core index']
  #allocation1 [shape = 'u32[144,128]{1,0:T(1,128)}', space=vmem, size = 0x12000, scoped, tag = 'internal scratch']
  %s0 = inlined_call_operand.vmem [shape: bf16[8,4608], index: 0, kind: input, shape index: {}]
  %s1 = inlined_call_operand.vmem [shape: f32[8,1], index: 1, kind: input, shape index: {}]
  %s2 = inlined_call_operand.vmem [shape: bf16[4608,128], index: 2, kind: input, shape index: {}]
  %s3 = inlined_call_operand.vmem [shape: f32[1,128], index: 3, kind: input, shape index: {}]
  %s4 = inlined_call_operand.vmem [shape: bf16[128,1024], index: 4, kind: input, shape index: {}]
  %s5 = inlined_call_operand.vmem [shape: f32[1,1024], index: 5, kind: input, shape index: {}]
  %s6 = inlined_call_operand.vmem [shape: f32[1,1024], index: 6, kind: input, shape index: {}]
  %s7 = inlined_call_operand.vmem [shape: bf16[8,1024], index: 7, kind: output, shape index: {}]
  %s8 = sld [smem:[#allocation0]]
  $region38: #{dqn_forward.8} parent=0
    _
  %s10 = ssub.s32 1, %s8
  %s11 = scalar_select 0, %s10, %s8
  // Predicated region
  $region2: #{dqn_forward.8} parent=0 // pred_check
    _
  $region3: #{dqn_forward.8} parent=0 // pred_check_branch
    %13 = sbr.rel (0) target = $region5
  $region4: #{dqn_forward.8} parent=0 // pred_region
    _
  $region5: #{dqn_forward.8} parent=0 // pred_fallthru
    _
  // Predicated region
  $region6: #{dqn_forward.8} parent=0 // pred_check
    _
  $region7: #{dqn_forward.8} parent=0 // pred_check_branch
    %15 = sbr.rel (0) target = $region9
  $region8: #{dqn_forward.8} parent=0 // pred_region
    _
  $region9: #{dqn_forward.8} parent=0 // pred_fallthru
    _
  // Predicated region
  $region10: #{dqn_forward.8} parent=0 // pred_check
    _
  $region11: #{dqn_forward.8} parent=0 // pred_check_branch
    %17 = sbr.rel (0) target = $region13
  $region12: #{dqn_forward.8} parent=0 // pred_region
    _
  $region13: #{dqn_forward.8} parent=0 // pred_fallthru
    _
  // Predicated region
  $region14: #{dqn_forward.8} parent=0 // pred_check
    _
  $region15: #{dqn_forward.8} parent=0 // pred_check_branch
    %19 = sbr.rel (0) target = $region17
  $region16: #{dqn_forward.8} parent=0 // pred_region
    _
  $region17: #{dqn_forward.8} parent=0 // pred_fallthru
    _
  // Predicated region
  $region18: #{dqn_forward.8} parent=0 // pred_check
    _
  $region19: #{dqn_forward.8} parent=0 // pred_check_branch
    %21 = sbr.rel (0) target = $region21
  $region20: #{dqn_forward.8} parent=0 // pred_region
    _
  $region21: #{dqn_forward.8} parent=0 // pred_fallthru
    _
  // Predicated region
  $region22: #{dqn_forward.8} parent=0 // pred_check
    _
  $region23: #{dqn_forward.8} parent=0 // pred_check_branch
    %23 = sbr.rel (0) target = $region25
  $region24: #{dqn_forward.8} parent=0 // pred_region
    _
  $region25: #{dqn_forward.8} parent=0 // pred_fallthru
    _
  // Predicated region
  $region26: #{dqn_forward.8} parent=0 // pred_check
    _
  $region27: #{dqn_forward.8} parent=0 // pred_check_branch
    %25 = sbr.rel (0) target = $region29
  $region28: #{dqn_forward.8} parent=0 // pred_region
    _
  $region29: #{dqn_forward.8} parent=0 // pred_fallthru
    _
  %v27 = vld [vmem:[%s0] sm:$0xff]
  %v28 = vld [vmem:[%s0 + $0x8] sm:$0xff]
  %v29 = vld [vmem:[%s0 + $0x10] sm:$0xff]
  %v30 = vld [vmem:[%s0 + $0x18] sm:$0xff]
  %v31 = vld [vmem:[%s0 + $0x20] sm:$0xff]
  %v32 = vld [vmem:[%s0 + $0x28] sm:$0xff]
  %v33 = vld [vmem:[%s0 + $0x30] sm:$0xff]
  %v34 = vld [vmem:[%s0 + $0x38] sm:$0xff]
  %v35 = vld [vmem:[%s0 + $0x40] sm:$0xff]
  %v36 = vld [vmem:[%s0 + $0x48] sm:$0xff]
  %v37 = vld [vmem:[%s0 + $0x50] sm:$0xff]
  %v38 = vld [vmem:[%s0 + $0x58] sm:$0xff]
  %v39 = vld [vmem:[%s0 + $0x60] sm:$0xff]
  %v40 = vld [vmem:[%s0 + $0x68] sm:$0xff]
  %v41 = vld [vmem:[%s0 + $0x70] sm:$0xff]
  %v42 = vld [vmem:[%s0 + $0x78] sm:$0xff]
  %v43 = vld [vmem:[%s0 + $0x80] sm:$0xff]
  %v44 = vld [vmem:[%s0 + $0x88] sm:$0xff]
  %v45 = vld [vmem:[%s2] sm:$0xf]
  %v46 = vld [vmem:[%s2 + $0x4] sm:$0xf]
  %v47 = vld [vmem:[%s2 + $0x8] sm:$0xf]
  %v48 = vld [vmem:[%s2 + $0xc] sm:$0xf]
  %v49 = vld [vmem:[%s2 + $0x10] sm:$0xf]
  %v50 = vld [vmem:[%s2 + $0x14] sm:$0xf]
  %v51 = vld [vmem:[%s2 + $0x18] sm:$0xf]
  %v52 = vld [vmem:[%s2 + $0x1c] sm:$0xf]
  %v53 = vld [vmem:[%s2 + $0x20] sm:$0xf]
  %v54 = vld [vmem:[%s2 + $0x24] sm:$0xf]
  %v55 = vld [vmem:[%s2 + $0x28] sm:$0xf]
  %v56 = vld [vmem:[%s2 + $0x2c] sm:$0xf]
  %v57 = vld [vmem:[%s2 + $0x30] sm:$0xf]
  %v58 = vld [vmem:[%s2 + $0x34] sm:$0xf]
  %v59 = vld [vmem:[%s2 + $0x38] sm:$0xf]
  %v60 = vld [vmem:[%s2 + $0x3c] sm:$0xf]
  %v61 = vld [vmem:[%s2 + $0x40] sm:$0xf]
  %v62 = vld [vmem:[%s2 + $0x44] sm:$0xf]
  %v63 = vld [vmem:[%s2 + $0x48] sm:$0xf]
  %v64 = vld [vmem:[%s2 + $0x4c] sm:$0xf]
  %v65 = vld [vmem:[%s2 + $0x50] sm:$0xf]
  %v66 = vld [vmem:[%s2 + $0x54] sm:$0xf]
  %v67 = vld [vmem:[%s2 + $0x58] sm:$0xf]
  %v68 = vld [vmem:[%s2 + $0x5c] sm:$0xf]
  %v69 = vld [vmem:[%s2 + $0x60] sm:$0xf]
  %v70 = vld [vmem:[%s2 + $0x64] sm:$0xf]
  %v71 = vld [vmem:[%s2 + $0x68] sm:$0xf]
  %v72 = vld [vmem:[%s2 + $0x6c] sm:$0xf]
  %v73 = vld [vmem:[%s2 + $0x70] sm:$0xf]
  %v74 = vld [vmem:[%s2 + $0x74] sm:$0xf]
  %v75 = vld [vmem:[%s2 + $0x78] sm:$0xf]
  %v76 = vld [vmem:[%s2 + $0x7c] sm:$0xf]
  %v77 = vld [vmem:[%s2 + $0x80] sm:$0xf]
  %v78 = vld [vmem:[%s2 + $0x84] sm:$0xf]
  %v79 = vld [vmem:[%s2 + $0x88] sm:$0xf]
  %v80 = vld [vmem:[%s2 + $0x8c] sm:$0xf]
  %v81 = vld [vmem:[%s2 + $0x90] sm:$0xf]
  %v82 = vld [vmem:[%s2 + $0x94] sm:$0xf]
  %v83 = vld [vmem:[%s2 + $0x98] sm:$0xf]
  %v84 = vld [vmem:[%s2 + $0x9c] sm:$0xf]
  %v85 = vld [vmem:[%s2 + $0xa0] sm:$0xf]
  %v86 = vld [vmem:[%s2 + $0xa4] sm:$0xf]
  %v87 = vld [vmem:[%s2 + $0xa8] sm:$0xf]
  %v88 = vld [vmem:[%s2 + $0xac] sm:$0xf]
  %v89 = vld [vmem:[%s2 + $0xb0] sm:$0xf]
  %v90 = vld [vmem:[%s2 + $0xb4] sm:$0xf]
  %v91 = vld [vmem:[%s2 + $0xb8] sm:$0xf]
  %v92 = vld [vmem:[%s2 + $0xbc] sm:$0xf]
  %v93 = vld [vmem:[%s2 + $0xc0] sm:$0xf]
  %v94 = vld [vmem:[%s2 + $0xc4] sm:$0xf]
  %v95 = vld [vmem:[%s2 + $0xc8] sm:$0xf]
  %v96 = vld [vmem:[%s2 + $0xcc] sm:$0xf]
  %v97 = vld [vmem:[%s2 + $0xd0] sm:$0xf]
  %v98 = vld [vmem:[%s2 + $0xd4] sm:$0xf]
  %v99 = vld [vmem:[%s2 + $0xd8] sm:$0xf]
  %v100 = vld [vmem:[%s2 + $0xdc] sm:$0xf]
  %v101 = vld [vmem:[%s2 + $0xe0] sm:$0xf]
  %v102 = vld [vmem:[%s2 + $0xe4] sm:$0xf]
  %v103 = vld [vmem:[%s2 + $0xe8] sm:$0xf]
  %v104 = vld [vmem:[%s2 + $0xec] sm:$0xf]
  %v105 = vld [vmem:[%s2 + $0xf0] sm:$0xf]
  %v106 = vld [vmem:[%s2 + $0xf4] sm:$0xf]
  %v107 = vld [vmem:[%s2 + $0xf8] sm:$0xf]
  %v108 = vld [vmem:[%s2 + $0xfc] sm:$0xf]
  %v109 = vld [vmem:[%s2 + $0x100] sm:$0xf]
  %v110 = vld [vmem:[%s2 + $0x104] sm:$0xf]
  %v111 = vld [vmem:[%s2 + $0x108] sm:$0xf]
  %v112 = vld [vmem:[%s2 + $0x10c] sm:$0xf]
  %v113 = vld [vmem:[%s2 + $0x110] sm:$0xf]
  %v114 = vld [vmem:[%s2 + $0x114] sm:$0xf]
  %v115 = vld [vmem:[%s2 + $0x118] sm:$0xf]
  %v116 = vld [vmem:[%s2 + $0x11c] sm:$0xf]
  %v117 = vld [vmem:[%s2 + $0x120] sm:$0xf]
  %v118 = vld [vmem:[%s2 + $0x124] sm:$0xf]
  %v119 = vld [vmem:[%s2 + $0x128] sm:$0xf]
  %v120 = vld [vmem:[%s2 + $0x12c] sm:$0xf]
  %v121 = vld [vmem:[%s2 + $0x130] sm:$0xf]
  %v122 = vld [vmem:[%s2 + $0x134] sm:$0xf]
  %v123 = vld [vmem:[%s2 + $0x138] sm:$0xf]
  %v124 = vld [vmem:[%s2 + $0x13c] sm:$0xf]
  %v125 = vld [vmem:[%s2 + $0x140] sm:$0xf]
  %v126 = vld [vmem:[%s2 + $0x144] sm:$0xf]
  %v127 = vld [vmem:[%s2 + $0x148] sm:$0xf]
  %v128 = vld [vmem:[%s2 + $0x14c] sm:$0xf]
  %v129 = vld [vmem:[%s2 + $0x150] sm:$0xf]
  %v130 = vld [vmem:[%s2 + $0x154] sm:$0xf]
  %v131 = vld [vmem:[%s2 + $0x158] sm:$0xf]
  %v132 = vld [vmem:[%s2 + $0x15c] sm:$0xf]
  %v133 = vld [vmem:[%s2 + $0x160] sm:$0xf]
  %v134 = vld [vmem:[%s2 + $0x164] sm:$0xf]
  %v135 = vld [vmem:[%s2 + $0x168] sm:$0xf]
  %v136 = vld [vmem:[%s2 + $0x16c] sm:$0xf]
  %v137 = vld [vmem:[%s2 + $0x170] sm:$0xf]
  %v138 = vld [vmem:[%s2 + $0x174] sm:$0xf]
  %v139 = vld [vmem:[%s2 + $0x178] sm:$0xf]
  %v140 = vld [vmem:[%s2 + $0x17c] sm:$0xf]
  %v141 = vld [vmem:[%s2 + $0x180] sm:$0xf]
  %v142 = vld [vmem:[%s2 + $0x184] sm:$0xf]
  %v143 = vld [vmem:[%s2 + $0x188] sm:$0xf]
  %v144 = vld [vmem:[%s2 + $0x18c] sm:$0xf]
  %v145 = vld [vmem:[%s2 + $0x190] sm:$0xf]
  %v146 = vld [vmem:[%s2 + $0x194] sm:$0xf]
  %v147 = vld [vmem:[%s2 + $0x198] sm:$0xf]
  %v148 = vld [vmem:[%s2 + $0x19c] sm:$0xf]
  %v149 = vld [vmem:[%s2 + $0x1a0] sm:$0xf]
  %v150 = vld [vmem:[%s2 + $0x1a4] sm:$0xf]
  %v151 = vld [vmem:[%s2 + $0x1a8] sm:$0xf]
  %v152 = vld [vmem:[%s2 + $0x1ac] sm:$0xf]
  %v153 = vld [vmem:[%s2 + $0x1b0] sm:$0xf]
  %v154 = vld [vmem:[%s2 + $0x1b4] sm:$0xf]
  %v155 = vld [vmem:[%s2 + $0x1b8] sm:$0xf]
  %v156 = vld [vmem:[%s2 + $0x1bc] sm:$0xf]
  %v157 = vld [vmem:[%s2 + $0x1c0] sm:$0xf]
  %v158 = vld [vmem:[%s2 + $0x1c4] sm:$0xf]
  %v159 = vld [vmem:[%s2 + $0x1c8] sm:$0xf]
  %v160 = vld [vmem:[%s2 + $0x1cc] sm:$0xf]
  %v161 = vld [vmem:[%s2 + $0x1d0] sm:$0xf]
  %v162 = vld [vmem:[%s2 + $0x1d4] sm:$0xf]
  %v163 = vld [vmem:[%s2 + $0x1d8] sm:$0xf]
  %v164 = vld [vmem:[%s2 + $0x1dc] sm:$0xf]
  %v165 = vld [vmem:[%s2 + $0x1e0] sm:$0xf]
  %v166 = vld [vmem:[%s2 + $0x1e4] sm:$0xf]
  %v167 = vld [vmem:[%s2 + $0x1e8] sm:$0xf]
  %v168 = vld [vmem:[%s2 + $0x1ec] sm:$0xf]
  %v169 = vld [vmem:[%s2 + $0x1f0] sm:$0xf]
  %v170 = vld [vmem:[%s2 + $0x1f4] sm:$0xf]
  %v171 = vld [vmem:[%s2 + $0x1f8] sm:$0xf]
  %v172 = vld [vmem:[%s2 + $0x1fc] sm:$0xf]
  %v173 = vld [vmem:[%s2 + $0x200] sm:$0xf]
  %v174 = vld [vmem:[%s2 + $0x204] sm:$0xf]
  %v175 = vld [vmem:[%s2 + $0x208] sm:$0xf]
  %v176 = vld [vmem:[%s2 + $0x20c] sm:$0xf]
  %v177 = vld [vmem:[%s2 + $0x210] sm:$0xf]
  %v178 = vld [vmem:[%s2 + $0x214] sm:$0xf]
  %v179 = vld [vmem:[%s2 + $0x218] sm:$0xf]
  %v180 = vld [vmem:[%s2 + $0x21c] sm:$0xf]
  %v181 = vld [vmem:[%s2 + $0x220] sm:$0xf]
  %v182 = vld [vmem:[%s2 + $0x224] sm:$0xf]
  %v183 = vld [vmem:[%s2 + $0x228] sm:$0xf]
  %v184 = vld [vmem:[%s2 + $0x22c] sm:$0xf]
  %v185 = vld [vmem:[%s2 + $0x230] sm:$0xf]
  %v186 = vld [vmem:[%s2 + $0x234] sm:$0xf]
  %v187 = vld [vmem:[%s2 + $0x238] sm:$0xf]
  %v188 = vld [vmem:[%s2 + $0x23c] sm:$0xf]
  %v189 = vld [vmem:[%s2 + $0x240] sm:$0xf]
  %v190 = vld [vmem:[%s2 + $0x244] sm:$0xf]
  %v191 = vld [vmem:[%s2 + $0x248] sm:$0xf]
  %v192 = vld [vmem:[%s2 + $0x24c] sm:$0xf]
  %v193 = vld [vmem:[%s2 + $0x250] sm:$0xf]
  %v194 = vld [vmem:[%s2 + $0x254] sm:$0xf]
  %v195 = vld [vmem:[%s2 + $0x258] sm:$0xf]
  %v196 = vld [vmem:[%s2 + $0x25c] sm:$0xf]
  %v197 = vld [vmem:[%s2 + $0x260] sm:$0xf]
  %v198 = vld [vmem:[%s2 + $0x264] sm:$0xf]
  %v199 = vld [vmem:[%s2 + $0x268] sm:$0xf]
  %v200 = vld [vmem:[%s2 + $0x26c] sm:$0xf]
  %v201 = vld [vmem:[%s2 + $0x270] sm:$0xf]
  %v202 = vld [vmem:[%s2 + $0x274] sm:$0xf]
  %v203 = vld [vmem:[%s2 + $0x278] sm:$0xf]
  %v204 = vld [vmem:[%s2 + $0x27c] sm:$0xf]
  %v205 = vld [vmem:[%s2 + $0x280] sm:$0xf]
  %v206 = vld [vmem:[%s2 + $0x284] sm:$0xf]
  %v207 = vld [vmem:[%s2 + $0x288] sm:$0xf]
  %v208 = vld [vmem:[%s2 + $0x28c] sm:$0xf]
  %v209 = vld [vmem:[%s2 + $0x290] sm:$0xf]
  %v210 = vld [vmem:[%s2 + $0x294] sm:$0xf]
  %v211 = vld [vmem:[%s2 + $0x298] sm:$0xf]
  %v212 = vld [vmem:[%s2 + $0x29c] sm:$0xf]
  %v213 = vld [vmem:[%s2 + $0x2a0] sm:$0xf]
  %v214 = vld [vmem:[%s2 + $0x2a4] sm:$0xf]
  %v215 = vld [vmem:[%s2 + $0x2a8] sm:$0xf]
  %v216 = vld [vmem:[%s2 + $0x2ac] sm:$0xf]
  %v217 = vld [vmem:[%s2 + $0x2b0] sm:$0xf]
  %v218 = vld [vmem:[%s2 + $0x2b4] sm:$0xf]
  %v219 = vld [vmem:[%s2 + $0x2b8] sm:$0xf]
  %v220 = vld [vmem:[%s2 + $0x2bc] sm:$0xf]
  %v221 = vld [vmem:[%s2 + $0x2c0] sm:$0xf]
  %v222 = vld [vmem:[%s2 + $0x2c4] sm:$0xf]
  %v223 = vld [vmem:[%s2 + $0x2c8] sm:$0xf]
  %v224 = vld [vmem:[%s2 + $0x2cc] sm:$0xf]
  %v225 = vld [vmem:[%s2 + $0x2d0] sm:$0xf]
  %v226 = vld [vmem:[%s2 + $0x2d4] sm:$0xf]
  %v227 = vld [vmem:[%s2 + $0x2d8] sm:$0xf]
  %v228 = vld [vmem:[%s2 + $0x2dc] sm:$0xf]
  %v229 = vld [vmem:[%s2 + $0x2e0] sm:$0xf]
  %v230 = vld [vmem:[%s2 + $0x2e4] sm:$0xf]
  %v231 = vld [vmem:[%s2 + $0x2e8] sm:$0xf]
  %v232 = vld [vmem:[%s2 + $0x2ec] sm:$0xf]
  %v233 = vld [vmem:[%s2 + $0x2f0] sm:$0xf]
  %v234 = vld [vmem:[%s2 + $0x2f4] sm:$0xf]
  %v235 = vld [vmem:[%s2 + $0x2f8] sm:$0xf]
  %v236 = vld [vmem:[%s2 + $0x2fc] sm:$0xf]
  %v237 = vld [vmem:[%s2 + $0x300] sm:$0xf]
  %v238 = vld [vmem:[%s2 + $0x304] sm:$0xf]
  %v239 = vld [vmem:[%s2 + $0x308] sm:$0xf]
  %v240 = vld [vmem:[%s2 + $0x30c] sm:$0xf]
  %v241 = vld [vmem:[%s2 + $0x310] sm:$0xf]
  %v242 = vld [vmem:[%s2 + $0x314] sm:$0xf]
  %v243 = vld [vmem:[%s2 + $0x318] sm:$0xf]
  %v244 = vld [vmem:[%s2 + $0x31c] sm:$0xf]
  %v245 = vld [vmem:[%s2 + $0x320] sm:$0xf]
  %v246 = vld [vmem:[%s2 + $0x324] sm:$0xf]
  %v247 = vld [vmem:[%s2 + $0x328] sm:$0xf]
  %v248 = vld [vmem:[%s2 + $0x32c] sm:$0xf]
  %v249 = vld [vmem:[%s2 + $0x330] sm:$0xf]
  %v250 = vld [vmem:[%s2 + $0x334] sm:$0xf]
  %v251 = vld [vmem:[%s2 + $0x338] sm:$0xf]
  %v252 = vld [vmem:[%s2 + $0x33c] sm:$0xf]
  %v253 = vld [vmem:[%s2 + $0x340] sm:$0xf]
  %v254 = vld [vmem:[%s2 + $0x344] sm:$0xf]
  %v255 = vld [vmem:[%s2 + $0x348] sm:$0xf]
  %v256 = vld [vmem:[%s2 + $0x34c] sm:$0xf]
  %v257 = vld [vmem:[%s2 + $0x350] sm:$0xf]
  %v258 = vld [vmem:[%s2 + $0x354] sm:$0xf]
  %v259 = vld [vmem:[%s2 + $0x358] sm:$0xf]
  %v260 = vld [vmem:[%s2 + $0x35c] sm:$0xf]
  %v261 = vld [vmem:[%s2 + $0x360] sm:$0xf]
  %v262 = vld [vmem:[%s2 + $0x364] sm:$0xf]
  %v263 = vld [vmem:[%s2 + $0x368] sm:$0xf]
  %v264 = vld [vmem:[%s2 + $0x36c] sm:$0xf]
  %v265 = vld [vmem:[%s2 + $0x370] sm:$0xf]
  %v266 = vld [vmem:[%s2 + $0x374] sm:$0xf]
  %v267 = vld [vmem:[%s2 + $0x378] sm:$0xf]
  %v268 = vld [vmem:[%s2 + $0x37c] sm:$0xf]
  %v269 = vld [vmem:[%s2 + $0x380] sm:$0xf]
  %v270 = vld [vmem:[%s2 + $0x384] sm:$0xf]
  %v271 = vld [vmem:[%s2 + $0x388] sm:$0xf]
  %v272 = vld [vmem:[%s2 + $0x38c] sm:$0xf]
  %v273 = vld [vmem:[%s2 + $0x390] sm:$0xf]
  %v274 = vld [vmem:[%s2 + $0x394] sm:$0xf]
  %v275 = vld [vmem:[%s2 + $0x398] sm:$0xf]
  %v276 = vld [vmem:[%s2 + $0x39c] sm:$0xf]
  %v277 = vld [vmem:[%s2 + $0x3a0] sm:$0xf]
  %v278 = vld [vmem:[%s2 + $0x3a4] sm:$0xf]
  %v279 = vld [vmem:[%s2 + $0x3a8] sm:$0xf]
  %v280 = vld [vmem:[%s2 + $0x3ac] sm:$0xf]
  %v281 = vld [vmem:[%s2 + $0x3b0] sm:$0xf]
  %v282 = vld [vmem:[%s2 + $0x3b4] sm:$0xf]
  %v283 = vld [vmem:[%s2 + $0x3b8] sm:$0xf]
  %v284 = vld [vmem:[%s2 + $0x3bc] sm:$0xf]
  %v285 = vld [vmem:[%s2 + $0x3c0] sm:$0xf]
  %v286 = vld [vmem:[%s2 + $0x3c4] sm:$0xf]
  %v287 = vld [vmem:[%s2 + $0x3c8] sm:$0xf]
  %v288 = vld [vmem:[%s2 + $0x3cc] sm:$0xf]
  %v289 = vld [vmem:[%s2 + $0x3d0] sm:$0xf]
  %v290 = vld [vmem:[%s2 + $0x3d4] sm:$0xf]
  %v291 = vld [vmem:[%s2 + $0x3d8] sm:$0xf]
  %v292 = vld [vmem:[%s2 + $0x3dc] sm:$0xf]
  %v293 = vld [vmem:[%s2 + $0x3e0] sm:$0xf]
  %v294 = vld [vmem:[%s2 + $0x3e4] sm:$0xf]
  %v295 = vld [vmem:[%s2 + $0x3e8] sm:$0xf]
  %v296 = vld [vmem:[%s2 + $0x3ec] sm:$0xf]
  %v297 = vld [vmem:[%s2 + $0x3f0] sm:$0xf]
  %v298 = vld [vmem:[%s2 + $0x3f4] sm:$0xf]
  %v299 = vld [vmem:[%s2 + $0x3f8] sm:$0xf]
  %v300 = vld [vmem:[%s2 + $0x3fc] sm:$0xf]
  %v301 = vld [vmem:[%s2 + $0x400] sm:$0xf]
  %v302 = vld [vmem:[%s2 + $0x404] sm:$0xf]
  %v303 = vld [vmem:[%s2 + $0x408] sm:$0xf]
  %v304 = vld [vmem:[%s2 + $0x40c] sm:$0xf]
  %v305 = vld [vmem:[%s2 + $0x410] sm:$0xf]
  %v306 = vld [vmem:[%s2 + $0x414] sm:$0xf]
  %v307 = vld [vmem:[%s2 + $0x418] sm:$0xf]
  %v308 = vld [vmem:[%s2 + $0x41c] sm:$0xf]
  %v309 = vld [vmem:[%s2 + $0x420] sm:$0xf]
  %v310 = vld [vmem:[%s2 + $0x424] sm:$0xf]
  %v311 = vld [vmem:[%s2 + $0x428] sm:$0xf]
  %v312 = vld [vmem:[%s2 + $0x42c] sm:$0xf]
  %v313 = vld [vmem:[%s2 + $0x430] sm:$0xf]
  %v314 = vld [vmem:[%s2 + $0x434] sm:$0xf]
  %v315 = vld [vmem:[%s2 + $0x438] sm:$0xf]
  %v316 = vld [vmem:[%s2 + $0x43c] sm:$0xf]
  %v317 = vld [vmem:[%s2 + $0x440] sm:$0xf]
  %v318 = vld [vmem:[%s2 + $0x444] sm:$0xf]
  %v319 = vld [vmem:[%s2 + $0x448] sm:$0xf]
  %v320 = vld [vmem:[%s2 + $0x44c] sm:$0xf]
  %v321 = vld [vmem:[%s2 + $0x450] sm:$0xf]
  %v322 = vld [vmem:[%s2 + $0x454] sm:$0xf]
  %v323 = vld [vmem:[%s2 + $0x458] sm:$0xf]
  %v324 = vld [vmem:[%s2 + $0x45c] sm:$0xf]
  %v325 = vld [vmem:[%s2 + $0x460] sm:$0xf]
  %v326 = vld [vmem:[%s2 + $0x464] sm:$0xf]
  %v327 = vld [vmem:[%s2 + $0x468] sm:$0xf]
  %v328 = vld [vmem:[%s2 + $0x46c] sm:$0xf]
  %v329 = vld [vmem:[%s2 + $0x470] sm:$0xf]
  %v330 = vld [vmem:[%s2 + $0x474] sm:$0xf]
  %v331 = vld [vmem:[%s2 + $0x478] sm:$0xf]
  %v332 = vld [vmem:[%s2 + $0x47c] sm:$0xf]
  %v333 = vld [vmem:[%s2 + $0x480] sm:$0xf]
  %v334 = vld [vmem:[%s2 + $0x484] sm:$0xf]
  %v335 = vld [vmem:[%s2 + $0x488] sm:$0xf]
  %v336 = vld [vmem:[%s2 + $0x48c] sm:$0xf]
  %v337 = vld [vmem:[%s2 + $0x490] sm:$0xf]
  %v338 = vld [vmem:[%s2 + $0x494] sm:$0xf]
  %v339 = vld [vmem:[%s2 + $0x498] sm:$0xf]
  %v340 = vld [vmem:[%s2 + $0x49c] sm:$0xf]
  %v341 = vld [vmem:[%s2 + $0x4a0] sm:$0xf]
  %v342 = vld [vmem:[%s2 + $0x4a4] sm:$0xf]
  %v343 = vld [vmem:[%s2 + $0x4a8] sm:$0xf]
  %v344 = vld [vmem:[%s2 + $0x4ac] sm:$0xf]
  %v345 = vld [vmem:[%s2 + $0x4b0] sm:$0xf]
  %v346 = vld [vmem:[%s2 + $0x4b4] sm:$0xf]
  %v347 = vld [vmem:[%s2 + $0x4b8] sm:$0xf]
  %v348 = vld [vmem:[%s2 + $0x4bc] sm:$0xf]
  %v349 = vld [vmem:[%s2 + $0x4c0] sm:$0xf]
  %v350 = vld [vmem:[%s2 + $0x4c4] sm:$0xf]
  %v351 = vld [vmem:[%s2 + $0x4c8] sm:$0xf]
  %v352 = vld [vmem:[%s2 + $0x4cc] sm:$0xf]
  %v353 = vld [vmem:[%s2 + $0x4d0] sm:$0xf]
  %v354 = vld [vmem:[%s2 + $0x4d4] sm:$0xf]
  %v355 = vld [vmem:[%s2 + $0x4d8] sm:$0xf]
  %v356 = vld [vmem:[%s2 + $0x4dc] sm:$0xf]
  %v357 = vld [vmem:[%s2 + $0x4e0] sm:$0xf]
  %v358 = vld [vmem:[%s2 + $0x4e4] sm:$0xf]
  %v359 = vld [vmem:[%s2 + $0x4e8] sm:$0xf]
  %v360 = vld [vmem:[%s2 + $0x4ec] sm:$0xf]
  %v361 = vld [vmem:[%s2 + $0x4f0] sm:$0xf]
  %v362 = vld [vmem:[%s2 + $0x4f4] sm:$0xf]
  %v363 = vld [vmem:[%s2 + $0x4f8] sm:$0xf]
  %v364 = vld [vmem:[%s2 + $0x4fc] sm:$0xf]
  %v365 = vld [vmem:[%s2 + $0x500] sm:$0xf]
  %v366 = vld [vmem:[%s2 + $0x504] sm:$0xf]
  %v367 = vld [vmem:[%s2 + $0x508] sm:$0xf]
  %v368 = vld [vmem:[%s2 + $0x50c] sm:$0xf]
  %v369 = vld [vmem:[%s2 + $0x510] sm:$0xf]
  %v370 = vld [vmem:[%s2 + $0x514] sm:$0xf]
  %v371 = vld [vmem:[%s2 + $0x518] sm:$0xf]
  %v372 = vld [vmem:[%s2 + $0x51c] sm:$0xf]
  %v373 = vld [vmem:[%s2 + $0x520] sm:$0xf]
  %v374 = vld [vmem:[%s2 + $0x524] sm:$0xf]
  %v375 = vld [vmem:[%s2 + $0x528] sm:$0xf]
  %v376 = vld [vmem:[%s2 + $0x52c] sm:$0xf]
  %v377 = vld [vmem:[%s2 + $0x530] sm:$0xf]
  %v378 = vld [vmem:[%s2 + $0x534] sm:$0xf]
  %v379 = vld [vmem:[%s2 + $0x538] sm:$0xf]
  %v380 = vld [vmem:[%s2 + $0x53c] sm:$0xf]
  %v381 = vld [vmem:[%s2 + $0x540] sm:$0xf]
  %v382 = vld [vmem:[%s2 + $0x544] sm:$0xf]
  %v383 = vld [vmem:[%s2 + $0x548] sm:$0xf]
  %v384 = vld [vmem:[%s2 + $0x54c] sm:$0xf]
  %v385 = vld [vmem:[%s2 + $0x550] sm:$0xf]
  %v386 = vld [vmem:[%s2 + $0x554] sm:$0xf]
  %v387 = vld [vmem:[%s2 + $0x558] sm:$0xf]
  %v388 = vld [vmem:[%s2 + $0x55c] sm:$0xf]
  %v389 = vld [vmem:[%s2 + $0x560] sm:$0xf]
  %v390 = vld [vmem:[%s2 + $0x564] sm:$0xf]
  %v391 = vld [vmem:[%s2 + $0x568] sm:$0xf]
  %v392 = vld [vmem:[%s2 + $0x56c] sm:$0xf]
  %v393 = vld [vmem:[%s2 + $0x570] sm:$0xf]
  %v394 = vld [vmem:[%s2 + $0x574] sm:$0xf]
  %v395 = vld [vmem:[%s2 + $0x578] sm:$0xf]
  %v396 = vld [vmem:[%s2 + $0x57c] sm:$0xf]
  %v397 = vld [vmem:[%s2 + $0x580] sm:$0xf]
  %v398 = vld [vmem:[%s2 + $0x584] sm:$0xf]
  %v399 = vld [vmem:[%s2 + $0x588] sm:$0xf]
  %v400 = vld [vmem:[%s2 + $0x58c] sm:$0xf]
  %v401 = vld [vmem:[%s2 + $0x590] sm:$0xf]
  %v402 = vld [vmem:[%s2 + $0x594] sm:$0xf]
  %v403 = vld [vmem:[%s2 + $0x598] sm:$0xf]
  %v404 = vld [vmem:[%s2 + $0x59c] sm:$0xf]
  %v405 = vld [vmem:[%s2 + $0x5a0] sm:$0xf]
  %v406 = vld [vmem:[%s2 + $0x5a4] sm:$0xf]
  %v407 = vld [vmem:[%s2 + $0x5a8] sm:$0xf]
  %v408 = vld [vmem:[%s2 + $0x5ac] sm:$0xf]
  %v409 = vld [vmem:[%s2 + $0x5b0] sm:$0xf]
  %v410 = vld [vmem:[%s2 + $0x5b4] sm:$0xf]
  %v411 = vld [vmem:[%s2 + $0x5b8] sm:$0xf]
  %v412 = vld [vmem:[%s2 + $0x5bc] sm:$0xf]
  %v413 = vld [vmem:[%s2 + $0x5c0] sm:$0xf]
  %v414 = vld [vmem:[%s2 + $0x5c4] sm:$0xf]
  %v415 = vld [vmem:[%s2 + $0x5c8] sm:$0xf]
  %v416 = vld [vmem:[%s2 + $0x5cc] sm:$0xf]
  %v417 = vld [vmem:[%s2 + $0x5d0] sm:$0xf]
  %v418 = vld [vmem:[%s2 + $0x5d4] sm:$0xf]
  %v419 = vld [vmem:[%s2 + $0x5d8] sm:$0xf]
  %v420 = vld [vmem:[%s2 + $0x5dc] sm:$0xf]
  %v421 = vld [vmem:[%s2 + $0x5e0] sm:$0xf]
  %v422 = vld [vmem:[%s2 + $0x5e4] sm:$0xf]
  %v423 = vld [vmem:[%s2 + $0x5e8] sm:$0xf]
  %v424 = vld [vmem:[%s2 + $0x5ec] sm:$0xf]
  %v425 = vld [vmem:[%s2 + $0x5f0] sm:$0xf]
  %v426 = vld [vmem:[%s2 + $0x5f4] sm:$0xf]
  %v427 = vld [vmem:[%s2 + $0x5f8] sm:$0xf]
  %v428 = vld [vmem:[%s2 + $0x5fc] sm:$0xf]
  %v429 = vld [vmem:[%s2 + $0x600] sm:$0xf]
  %v430 = vld [vmem:[%s2 + $0x604] sm:$0xf]
  %v431 = vld [vmem:[%s2 + $0x608] sm:$0xf]
  %v432 = vld [vmem:[%s2 + $0x60c] sm:$0xf]
  %v433 = vld [vmem:[%s2 + $0x610] sm:$0xf]
  %v434 = vld [vmem:[%s2 + $0x614] sm:$0xf]
  %v435 = vld [vmem:[%s2 + $0x618] sm:$0xf]
  %v436 = vld [vmem:[%s2 + $0x61c] sm:$0xf]
  %v437 = vld [vmem:[%s2 + $0x620] sm:$0xf]
  %v438 = vld [vmem:[%s2 + $0x624] sm:$0xf]
  %v439 = vld [vmem:[%s2 + $0x628] sm:$0xf]
  %v440 = vld [vmem:[%s2 + $0x62c] sm:$0xf]
  %v441 = vld [vmem:[%s2 + $0x630] sm:$0xf]
  %v442 = vld [vmem:[%s2 + $0x634] sm:$0xf]
  %v443 = vld [vmem:[%s2 + $0x638] sm:$0xf]
  %v444 = vld [vmem:[%s2 + $0x63c] sm:$0xf]
  %v445 = vld [vmem:[%s2 + $0x640] sm:$0xf]
  %v446 = vld [vmem:[%s2 + $0x644] sm:$0xf]
  %v447 = vld [vmem:[%s2 + $0x648] sm:$0xf]
  %v448 = vld [vmem:[%s2 + $0x64c] sm:$0xf]
  %v449 = vld [vmem:[%s2 + $0x650] sm:$0xf]
  %v450 = vld [vmem:[%s2 + $0x654] sm:$0xf]
  %v451 = vld [vmem:[%s2 + $0x658] sm:$0xf]
  %v452 = vld [vmem:[%s2 + $0x65c] sm:$0xf]
  %v453 = vld [vmem:[%s2 + $0x660] sm:$0xf]
  %v454 = vld [vmem:[%s2 + $0x664] sm:$0xf]
  %v455 = vld [vmem:[%s2 + $0x668] sm:$0xf]
  %v456 = vld [vmem:[%s2 + $0x66c] sm:$0xf]
  %v457 = vld [vmem:[%s2 + $0x670] sm:$0xf]
  %v458 = vld [vmem:[%s2 + $0x674] sm:$0xf]
  %v459 = vld [vmem:[%s2 + $0x678] sm:$0xf]
  %v460 = vld [vmem:[%s2 + $0x67c] sm:$0xf]
  %v461 = vld [vmem:[%s2 + $0x680] sm:$0xf]
  %v462 = vld [vmem:[%s2 + $0x684] sm:$0xf]
  %v463 = vld [vmem:[%s2 + $0x688] sm:$0xf]
  %v464 = vld [vmem:[%s2 + $0x68c] sm:$0xf]
  %v465 = vld [vmem:[%s2 + $0x690] sm:$0xf]
  %v466 = vld [vmem:[%s2 + $0x694] sm:$0xf]
  %v467 = vld [vmem:[%s2 + $0x698] sm:$0xf]
  %v468 = vld [vmem:[%s2 + $0x69c] sm:$0xf]
  %v469 = vld [vmem:[%s2 + $0x6a0] sm:$0xf]
  %v470 = vld [vmem:[%s2 + $0x6a4] sm:$0xf]
  %v471 = vld [vmem:[%s2 + $0x6a8] sm:$0xf]
  %v472 = vld [vmem:[%s2 + $0x6ac] sm:$0xf]
  %v473 = vld [vmem:[%s2 + $0x6b0] sm:$0xf]
  %v474 = vld [vmem:[%s2 + $0x6b4] sm:$0xf]
  %v475 = vld [vmem:[%s2 + $0x6b8] sm:$0xf]
  %v476 = vld [vmem:[%s2 + $0x6bc] sm:$0xf]
  %v477 = vld [vmem:[%s2 + $0x6c0] sm:$0xf]
  %v478 = vld [vmem:[%s2 + $0x6c4] sm:$0xf]
  %v479 = vld [vmem:[%s2 + $0x6c8] sm:$0xf]
  %v480 = vld [vmem:[%s2 + $0x6cc] sm:$0xf]
  %v481 = vld [vmem:[%s2 + $0x6d0] sm:$0xf]
  %v482 = vld [vmem:[%s2 + $0x6d4] sm:$0xf]
  %v483 = vld [vmem:[%s2 + $0x6d8] sm:$0xf]
  %v484 = vld [vmem:[%s2 + $0x6dc] sm:$0xf]
  %v485 = vld [vmem:[%s2 + $0x6e0] sm:$0xf]
  %v486 = vld [vmem:[%s2 + $0x6e4] sm:$0xf]
  %v487 = vld [vmem:[%s2 + $0x6e8] sm:$0xf]
  %v488 = vld [vmem:[%s2 + $0x6ec] sm:$0xf]
  %v489 = vld [vmem:[%s2 + $0x6f0] sm:$0xf]
  %v490 = vld [vmem:[%s2 + $0x6f4] sm:$0xf]
  %v491 = vld [vmem:[%s2 + $0x6f8] sm:$0xf]
  %v492 = vld [vmem:[%s2 + $0x6fc] sm:$0xf]
  %v493 = vld [vmem:[%s2 + $0x700] sm:$0xf]
  %v494 = vld [vmem:[%s2 + $0x704] sm:$0xf]
  %v495 = vld [vmem:[%s2 + $0x708] sm:$0xf]
  %v496 = vld [vmem:[%s2 + $0x70c] sm:$0xf]
  %v497 = vld [vmem:[%s2 + $0x710] sm:$0xf]
  %v498 = vld [vmem:[%s2 + $0x714] sm:$0xf]
  %v499 = vld [vmem:[%s2 + $0x718] sm:$0xf]
  %v500 = vld [vmem:[%s2 + $0x71c] sm:$0xf]
  %v501 = vld [vmem:[%s2 + $0x720] sm:$0xf]
  %v502 = vld [vmem:[%s2 + $0x724] sm:$0xf]
  %v503 = vld [vmem:[%s2 + $0x728] sm:$0xf]
  %v504 = vld [vmem:[%s2 + $0x72c] sm:$0xf]
  %v505 = vld [vmem:[%s2 + $0x730] sm:$0xf]
  %v506 = vld [vmem:[%s2 + $0x734] sm:$0xf]
  %v507 = vld [vmem:[%s2 + $0x738] sm:$0xf]
  %v508 = vld [vmem:[%s2 + $0x73c] sm:$0xf]
  %v509 = vld [vmem:[%s2 + $0x740] sm:$0xf]
  %v510 = vld [vmem:[%s2 + $0x744] sm:$0xf]
  %v511 = vld [vmem:[%s2 + $0x748] sm:$0xf]
  %v512 = vld [vmem:[%s2 + $0x74c] sm:$0xf]
  %v513 = vld [vmem:[%s2 + $0x750] sm:$0xf]
  %v514 = vld [vmem:[%s2 + $0x754] sm:$0xf]
  %v515 = vld [vmem:[%s2 + $0x758] sm:$0xf]
  %v516 = vld [vmem:[%s2 + $0x75c] sm:$0xf]
  %v517 = vld [vmem:[%s2 + $0x760] sm:$0xf]
  %v518 = vld [vmem:[%s2 + $0x764] sm:$0xf]
  %v519 = vld [vmem:[%s2 + $0x768] sm:$0xf]
  %v520 = vld [vmem:[%s2 + $0x76c] sm:$0xf]
  %v521 = vld [vmem:[%s2 + $0x770] sm:$0xf]
  %v522 = vld [vmem:[%s2 + $0x774] sm:$0xf]
  %v523 = vld [vmem:[%s2 + $0x778] sm:$0xf]
  %v524 = vld [vmem:[%s2 + $0x77c] sm:$0xf]
  %v525 = vld [vmem:[%s2 + $0x780] sm:$0xf]
  %v526 = vld [vmem:[%s2 + $0x784] sm:$0xf]
  %v527 = vld [vmem:[%s2 + $0x788] sm:$0xf]
  %v528 = vld [vmem:[%s2 + $0x78c] sm:$0xf]
  %v529 = vld [vmem:[%s2 + $0x790] sm:$0xf]
  %v530 = vld [vmem:[%s2 + $0x794] sm:$0xf]
  %v531 = vld [vmem:[%s2 + $0x798] sm:$0xf]
  %v532 = vld [vmem:[%s2 + $0x79c] sm:$0xf]
  %v533 = vld [vmem:[%s2 + $0x7a0] sm:$0xf]
  %v534 = vld [vmem:[%s2 + $0x7a4] sm:$0xf]
  %v535 = vld [vmem:[%s2 + $0x7a8] sm:$0xf]
  %v536 = vld [vmem:[%s2 + $0x7ac] sm:$0xf]
  %v537 = vld [vmem:[%s2 + $0x7b0] sm:$0xf]
  %v538 = vld [vmem:[%s2 + $0x7b4] sm:$0xf]
  %v539 = vld [vmem:[%s2 + $0x7b8] sm:$0xf]
  %v540 = vld [vmem:[%s2 + $0x7bc] sm:$0xf]
  %v541 = vld [vmem:[%s2 + $0x7c0] sm:$0xf]
  %v542 = vld [vmem:[%s2 + $0x7c4] sm:$0xf]
  %v543 = vld [vmem:[%s2 + $0x7c8] sm:$0xf]
  %v544 = vld [vmem:[%s2 + $0x7cc] sm:$0xf]
  %v545 = vld [vmem:[%s2 + $0x7d0] sm:$0xf]
  %v546 = vld [vmem:[%s2 + $0x7d4] sm:$0xf]
  %v547 = vld [vmem:[%s2 + $0x7d8] sm:$0xf]
  %v548 = vld [vmem:[%s2 + $0x7dc] sm:$0xf]
  %v549 = vld [vmem:[%s2 + $0x7e0] sm:$0xf]
  %v550 = vld [vmem:[%s2 + $0x7e4] sm:$0xf]
  %v551 = vld [vmem:[%s2 + $0x7e8] sm:$0xf]
  %v552 = vld [vmem:[%s2 + $0x7ec] sm:$0xf]
  %v553 = vld [vmem:[%s2 + $0x7f0] sm:$0xf]
  %v554 = vld [vmem:[%s2 + $0x7f4] sm:$0xf]
  %v555 = vld [vmem:[%s2 + $0x7f8] sm:$0xf]
  %v556 = vld [vmem:[%s2 + $0x7fc] sm:$0xf]
  %v557 = vld [vmem:[%s2 + $0x800] sm:$0xf]
  %v558 = vld [vmem:[%s2 + $0x804] sm:$0xf]
  %v559 = vld [vmem:[%s2 + $0x808] sm:$0xf]
  %v560 = vld [vmem:[%s2 + $0x80c] sm:$0xf]
  %v561 = vld [vmem:[%s2 + $0x810] sm:$0xf]
  %v562 = vld [vmem:[%s2 + $0x814] sm:$0xf]
  %v563 = vld [vmem:[%s2 + $0x818] sm:$0xf]
  %v564 = vld [vmem:[%s2 + $0x81c] sm:$0xf]
  %v565 = vld [vmem:[%s2 + $0x820] sm:$0xf]
  %v566 = vld [vmem:[%s2 + $0x824] sm:$0xf]
  %v567 = vld [vmem:[%s2 + $0x828] sm:$0xf]
  %v568 = vld [vmem:[%s2 + $0x82c] sm:$0xf]
  %v569 = vld [vmem:[%s2 + $0x830] sm:$0xf]
  %v570 = vld [vmem:[%s2 + $0x834] sm:$0xf]
  %v571 = vld [vmem:[%s2 + $0x838] sm:$0xf]
  %v572 = vld [vmem:[%s2 + $0x83c] sm:$0xf]
  %v573 = vld [vmem:[%s2 + $0x840] sm:$0xf]
  %v574 = vld [vmem:[%s2 + $0x844] sm:$0xf]
  %v575 = vld [vmem:[%s2 + $0x848] sm:$0xf]
  %v576 = vld [vmem:[%s2 + $0x84c] sm:$0xf]
  %v577 = vld [vmem:[%s2 + $0x850] sm:$0xf]
  %v578 = vld [vmem:[%s2 + $0x854] sm:$0xf]
  %v579 = vld [vmem:[%s2 + $0x858] sm:$0xf]
  %v580 = vld [vmem:[%s2 + $0x85c] sm:$0xf]
  %v581 = vld [vmem:[%s2 + $0x860] sm:$0xf]
  %v582 = vld [vmem:[%s2 + $0x864] sm:$0xf]
  %v583 = vld [vmem:[%s2 + $0x868] sm:$0xf]
  %v584 = vld [vmem:[%s2 + $0x86c] sm:$0xf]
  %v585 = vld [vmem:[%s2 + $0x870] sm:$0xf]
  %v586 = vld [vmem:[%s2 + $0x874] sm:$0xf]
  %v587 = vld [vmem:[%s2 + $0x878] sm:$0xf]
  %v588 = vld [vmem:[%s2 + $0x87c] sm:$0xf]
  %v589 = vld [vmem:[%s2 + $0x880] sm:$0xf]
  %v590 = vld [vmem:[%s2 + $0x884] sm:$0xf]
  %v591 = vld [vmem:[%s2 + $0x888] sm:$0xf]
  %v592 = vld [vmem:[%s2 + $0x88c] sm:$0xf]
  %v593 = vld [vmem:[%s2 + $0x890] sm:$0xf]
  %v594 = vld [vmem:[%s2 + $0x894] sm:$0xf]
  %v595 = vld [vmem:[%s2 + $0x898] sm:$0xf]
  %v596 = vld [vmem:[%s2 + $0x89c] sm:$0xf]
  %v597 = vld [vmem:[%s2 + $0x8a0] sm:$0xf]
  %v598 = vld [vmem:[%s2 + $0x8a4] sm:$0xf]
  %v599 = vld [vmem:[%s2 + $0x8a8] sm:$0xf]
  %v600 = vld [vmem:[%s2 + $0x8ac] sm:$0xf]
  %v601 = vld [vmem:[%s2 + $0x8b0] sm:$0xf]
  %v602 = vld [vmem:[%s2 + $0x8b4] sm:$0xf]
  %v603 = vld [vmem:[%s2 + $0x8b8] sm:$0xf]
  %v604 = vld [vmem:[%s2 + $0x8bc] sm:$0xf]
  %v605 = vld [vmem:[%s2 + $0x8c0] sm:$0xf]
  %v606 = vld [vmem:[%s2 + $0x8c4] sm:$0xf]
  %v607 = vld [vmem:[%s2 + $0x8c8] sm:$0xf]
  %v608 = vld [vmem:[%s2 + $0x8cc] sm:$0xf]
  %v609 = vld [vmem:[%s2 + $0x8d0] sm:$0xf]
  %v610 = vld [vmem:[%s2 + $0x8d4] sm:$0xf]
  %v611 = vld [vmem:[%s2 + $0x8d8] sm:$0xf]
  %v612 = vld [vmem:[%s2 + $0x8dc] sm:$0xf]
  %v613 = vld [vmem:[%s2 + $0x8e0] sm:$0xf]
  %v614 = vld [vmem:[%s2 + $0x8e4] sm:$0xf]
  %v615 = vld [vmem:[%s2 + $0x8e8] sm:$0xf]
  %v616 = vld [vmem:[%s2 + $0x8ec] sm:$0xf]
  %v617 = vld [vmem:[%s2 + $0x8f0] sm:$0xf]
  %v618 = vld [vmem:[%s2 + $0x8f4] sm:$0xf]
  %v619 = vld [vmem:[%s2 + $0x8f8] sm:$0xf]
  %v620 = vld [vmem:[%s2 + $0x8fc] sm:$0xf]
  %v621 = vld [vmem:[%s3] sm:$0x1]
  %v623 = vlaneseq
  %v624 = vshrl.u32 %v623, 7
  %v625 = vsub.s32 0, %v624
  %v626 = vrot.slane %v621, %v625
  %v646 = vunpack.c.l.b16 %v27
  %v647 = vunpack.c.h.b16 %v27
  %v648 = vunpack.c.l.b16 %v28
  %v649 = vunpack.c.h.b16 %v28
  %v650 = vunpack.c.l.b16 %v29
  %v651 = vunpack.c.h.b16 %v29
  %v652 = vunpack.c.l.b16 %v30
  %v653 = vunpack.c.h.b16 %v30
  %v654 = vunpack.c.l.b16 %v31
  %v655 = vunpack.c.h.b16 %v31
  %v656 = vunpack.c.l.b16 %v32
  %v657 = vunpack.c.h.b16 %v32
  %v658 = vunpack.c.l.b16 %v33
  %v659 = vunpack.c.h.b16 %v33
  %v660 = vunpack.c.l.b16 %v34
  %v661 = vunpack.c.h.b16 %v34
  %v662 = vunpack.c.l.b16 %v35
  %v663 = vunpack.c.h.b16 %v35
  %v664 = vunpack.c.l.b16 %v36
  %v665 = vunpack.c.h.b16 %v36
  %v666 = vunpack.c.l.b16 %v37
  %v667 = vunpack.c.h.b16 %v37
  %v668 = vunpack.c.l.b16 %v38
  %v669 = vunpack.c.h.b16 %v38
  %v670 = vunpack.c.l.b16 %v39
  %v671 = vunpack.c.h.b16 %v39
  %v672 = vunpack.c.l.b16 %v40
  %v673 = vunpack.c.h.b16 %v40
  %v674 = vunpack.c.l.b16 %v41
  %v675 = vunpack.c.h.b16 %v41
  %v676 = vunpack.c.l.b16 %v42
  %v677 = vunpack.c.h.b16 %v42
  %v678 = vunpack.c.l.b16 %v43
  %v679 = vunpack.c.h.b16 %v43
  %v680 = vunpack.c.l.b16 %v44
  %v681 = vunpack.c.h.b16 %v44
  %v682 = vpack.c.b16 %v646, %v646
  %v683 = vpack.c.b16 %v647, %v647
  %v684 = vpack.c.b16 %v648, %v648
  %v685 = vpack.c.b16 %v649, %v649
  %v686 = vpack.c.b16 %v650, %v650
  %v687 = vpack.c.b16 %v651, %v651
  %v688 = vpack.c.b16 %v652, %v652
  %v689 = vpack.c.b16 %v653, %v653
  %v690 = vpack.c.b16 %v654, %v654
  %v691 = vpack.c.b16 %v655, %v655
  %v692 = vpack.c.b16 %v656, %v656
  %v693 = vpack.c.b16 %v657, %v657
  %v694 = vpack.c.b16 %v658, %v658
  %v695 = vpack.c.b16 %v659, %v659
  %v696 = vpack.c.b16 %v660, %v660
  %v697 = vpack.c.b16 %v661, %v661
  %v698 = vpack.c.b16 %v662, %v662
  %v699 = vpack.c.b16 %v663, %v663
  %v700 = vpack.c.b16 %v664, %v664
  %v701 = vpack.c.b16 %v665, %v665
  %v702 = vpack.c.b16 %v666, %v666
  %v703 = vpack.c.b16 %v667, %v667
  %v704 = vpack.c.b16 %v668, %v668
  %v705 = vpack.c.b16 %v669, %v669
  %v706 = vpack.c.b16 %v670, %v670
  %v707 = vpack.c.b16 %v671, %v671
  %v708 = vpack.c.b16 %v672, %v672
  %v709 = vpack.c.b16 %v673, %v673
  %v710 = vpack.c.b16 %v674, %v674
  %v711 = vpack.c.b16 %v675, %v675
  %v712 = vpack.c.b16 %v676, %v676
  %v713 = vpack.c.b16 %v677, %v677
  %v714 = vpack.c.b16 %v678, %v678
  %v715 = vpack.c.b16 %v679, %v679
  %v716 = vpack.c.b16 %v680, %v680
  %v717 = vpack.c.b16 %v681, %v681
  %v1330 = vunpack.c.l.b16 %v45
  %v1331 = vunpack.c.l.b16 %v46
  %v1332 = vunpack.c.l.b16 %v47
  %v1333 = vunpack.c.l.b16 %v48
  %v1334 = vunpack.c.l.b16 %v49
  %v1335 = vunpack.c.l.b16 %v50
  %v1336 = vunpack.c.l.b16 %v51
  %v1337 = vunpack.c.l.b16 %v52
  %v1338 = vunpack.c.l.b16 %v53
  %v1339 = vunpack.c.l.b16 %v54
  %v1340 = vunpack.c.l.b16 %v55
  %v1341 = vunpack.c.l.b16 %v56
  %v1342 = vunpack.c.l.b16 %v57
  %v1343 = vunpack.c.l.b16 %v58
  %v1344 = vunpack.c.l.b16 %v59
  %v1345 = vunpack.c.l.b16 %v60
  %v1346 = vunpack.c.l.b16 %v61
  %v1347 = vunpack.c.l.b16 %v62
  %v1348 = vunpack.c.l.b16 %v63
  %v1349 = vunpack.c.l.b16 %v64
  %v1350 = vunpack.c.l.b16 %v65
  %v1351 = vunpack.c.l.b16 %v66
  %v1352 = vunpack.c.l.b16 %v67
  %v1353 = vunpack.c.l.b16 %v68
  %v1354 = vunpack.c.l.b16 %v69
  %v1355 = vunpack.c.l.b16 %v70
  %v1356 = vunpack.c.l.b16 %v71
  %v1357 = vunpack.c.l.b16 %v72
  %v1358 = vunpack.c.l.b16 %v73
  %v1359 = vunpack.c.l.b16 %v74
  %v1360 = vunpack.c.l.b16 %v75
  %v1361 = vunpack.c.l.b16 %v76
  %v1362 = vunpack.c.l.b16 %v77
  %v1363 = vunpack.c.l.b16 %v78
  %v1364 = vunpack.c.l.b16 %v79
  %v1365 = vunpack.c.l.b16 %v80
  %v1366 = vunpack.c.l.b16 %v81
  %v1367 = vunpack.c.l.b16 %v82
  %v1368 = vunpack.c.l.b16 %v83
  %v1369 = vunpack.c.l.b16 %v84
  %v1370 = vunpack.c.l.b16 %v85
  %v1371 = vunpack.c.l.b16 %v86
  %v1372 = vunpack.c.l.b16 %v87
  %v1373 = vunpack.c.l.b16 %v88
  %v1374 = vunpack.c.l.b16 %v89
  %v1375 = vunpack.c.l.b16 %v90
  %v1376 = vunpack.c.l.b16 %v91
  %v1377 = vunpack.c.l.b16 %v92
  %v1378 = vunpack.c.l.b16 %v93
  %v1379 = vunpack.c.l.b16 %v94
  %v1380 = vunpack.c.l.b16 %v95
  %v1381 = vunpack.c.l.b16 %v96
  %v1382 = vunpack.c.l.b16 %v97
  %v1383 = vunpack.c.l.b16 %v98
  %v1384 = vunpack.c.l.b16 %v99
  %v1385 = vunpack.c.l.b16 %v100
  %v1386 = vunpack.c.l.b16 %v101
  %v1387 = vunpack.c.l.b16 %v102
  %v1388 = vunpack.c.l.b16 %v103
  %v1389 = vunpack.c.l.b16 %v104
  %v1390 = vunpack.c.l.b16 %v105
  %v1391 = vunpack.c.l.b16 %v106
  %v1392 = vunpack.c.l.b16 %v107
  %v1393 = vunpack.c.l.b16 %v108
  %v1394 = vunpack.c.l.b16 %v109
  %v1395 = vunpack.c.l.b16 %v110
  %v1396 = vunpack.c.l.b16 %v111
  %v1397 = vunpack.c.l.b16 %v112
  %v1398 = vunpack.c.l.b16 %v113
  %v1399 = vunpack.c.l.b16 %v114
  %v1400 = vunpack.c.l.b16 %v115
  %v1401 = vunpack.c.l.b16 %v116
  %v1402 = vunpack.c.l.b16 %v117
  %v1403 = vunpack.c.l.b16 %v118
  %v1404 = vunpack.c.l.b16 %v119
  %v1405 = vunpack.c.l.b16 %v120
  %v1406 = vunpack.c.l.b16 %v121
  %v1407 = vunpack.c.l.b16 %v122
  %v1408 = vunpack.c.l.b16 %v123
  %v1409 = vunpack.c.l.b16 %v124
  %v1410 = vunpack.c.l.b16 %v125
  %v1411 = vunpack.c.l.b16 %v126
  %v1412 = vunpack.c.l.b16 %v127
  %v1413 = vunpack.c.l.b16 %v128
  %v1414 = vunpack.c.l.b16 %v129
  %v1415 = vunpack.c.l.b16 %v130
  %v1416 = vunpack.c.l.b16 %v131
  %v1417 = vunpack.c.l.b16 %v132
  %v1418 = vunpack.c.l.b16 %v133
  %v1419 = vunpack.c.l.b16 %v134
  %v1420 = vunpack.c.l.b16 %v135
  %v1421 = vunpack.c.l.b16 %v136
  %v1422 = vunpack.c.l.b16 %v137
  %v1423 = vunpack.c.l.b16 %v138
  %v1424 = vunpack.c.l.b16 %v139
  %v1425 = vunpack.c.l.b16 %v140
  %v1426 = vunpack.c.l.b16 %v141
  %v1427 = vunpack.c.l.b16 %v142
  %v1428 = vunpack.c.l.b16 %v143
  %v1429 = vunpack.c.l.b16 %v144
  %v1430 = vunpack.c.l.b16 %v145
  %v1431 = vunpack.c.l.b16 %v146
  %v1432 = vunpack.c.l.b16 %v147
  %v1433 = vunpack.c.l.b16 %v148
  %v1434 = vunpack.c.l.b16 %v149
  %v1435 = vunpack.c.l.b16 %v150
  %v1436 = vunpack.c.l.b16 %v151
  %v1437 = vunpack.c.l.b16 %v152
  %v1438 = vunpack.c.l.b16 %v153
  %v1439 = vunpack.c.l.b16 %v154
  %v1440 = vunpack.c.l.b16 %v155
  %v1441 = vunpack.c.l.b16 %v156
  %v1442 = vunpack.c.l.b16 %v157
  %v1443 = vunpack.c.l.b16 %v158
  %v1444 = vunpack.c.l.b16 %v159
  %v1445 = vunpack.c.l.b16 %v160
  %v1446 = vunpack.c.l.b16 %v161
  %v1447 = vunpack.c.l.b16 %v162
  %v1448 = vunpack.c.l.b16 %v163
  %v1449 = vunpack.c.l.b16 %v164
  %v1450 = vunpack.c.l.b16 %v165
  %v1451 = vunpack.c.l.b16 %v166
  %v1452 = vunpack.c.l.b16 %v167
  %v1453 = vunpack.c.l.b16 %v168
  %v1454 = vunpack.c.l.b16 %v169
  %v1455 = vunpack.c.l.b16 %v170
  %v1456 = vunpack.c.l.b16 %v171
  %v1457 = vunpack.c.l.b16 %v172
  %v1458 = vunpack.c.l.b16 %v173
  %v1459 = vunpack.c.l.b16 %v174
  %v1460 = vunpack.c.l.b16 %v175
  %v1461 = vunpack.c.l.b16 %v176
  %v1462 = vunpack.c.l.b16 %v177
  %v1463 = vunpack.c.l.b16 %v178
  %v1464 = vunpack.c.l.b16 %v179
  %v1465 = vunpack.c.l.b16 %v180
  %v1466 = vunpack.c.l.b16 %v181
  %v1467 = vunpack.c.l.b16 %v182
  %v1468 = vunpack.c.l.b16 %v183
  %v1469 = vunpack.c.l.b16 %v184
  %v1470 = vunpack.c.l.b16 %v185
  %v1471 = vunpack.c.l.b16 %v186
  %v1472 = vunpack.c.l.b16 %v187
  %v1473 = vunpack.c.l.b16 %v188
  %v1474 = vunpack.c.l.b16 %v189
  %v1475 = vunpack.c.l.b16 %v190
  %v1476 = vunpack.c.l.b16 %v191
  %v1477 = vunpack.c.l.b16 %v192
  %v1478 = vunpack.c.l.b16 %v193
  %v1479 = vunpack.c.l.b16 %v194
  %v1480 = vunpack.c.l.b16 %v195
  %v1481 = vunpack.c.l.b16 %v196
  %v1482 = vunpack.c.l.b16 %v197
  %v1483 = vunpack.c.l.b16 %v198
  %v1484 = vunpack.c.l.b16 %v199
  %v1485 = vunpack.c.l.b16 %v200
  %v1486 = vunpack.c.l.b16 %v201
  %v1487 = vunpack.c.l.b16 %v202
  %v1488 = vunpack.c.l.b16 %v203
  %v1489 = vunpack.c.l.b16 %v204
  %v1490 = vunpack.c.l.b16 %v205
  %v1491 = vunpack.c.l.b16 %v206
  %v1492 = vunpack.c.l.b16 %v207
  %v1493 = vunpack.c.l.b16 %v208
  %v1494 = vunpack.c.l.b16 %v209
  %v1495 = vunpack.c.l.b16 %v210
  %v1496 = vunpack.c.l.b16 %v211
  %v1497 = vunpack.c.l.b16 %v212
  %v1498 = vunpack.c.l.b16 %v213
  %v1499 = vunpack.c.l.b16 %v214
  %v1500 = vunpack.c.l.b16 %v215
  %v1501 = vunpack.c.l.b16 %v216
  %v1502 = vunpack.c.l.b16 %v217
  %v1503 = vunpack.c.l.b16 %v218
  %v1504 = vunpack.c.l.b16 %v219
  %v1505 = vunpack.c.l.b16 %v220
  %v1506 = vunpack.c.l.b16 %v221
  %v1507 = vunpack.c.l.b16 %v222
  %v1508 = vunpack.c.l.b16 %v223
  %v1509 = vunpack.c.l.b16 %v224
  %v1510 = vunpack.c.l.b16 %v225
  %v1511 = vunpack.c.l.b16 %v226
  %v1512 = vunpack.c.l.b16 %v227
  %v1513 = vunpack.c.l.b16 %v228
  %v1514 = vunpack.c.l.b16 %v229
  %v1515 = vunpack.c.l.b16 %v230
  %v1516 = vunpack.c.l.b16 %v231
  %v1517 = vunpack.c.l.b16 %v232
  %v1518 = vunpack.c.l.b16 %v233
  %v1519 = vunpack.c.l.b16 %v234
  %v1520 = vunpack.c.l.b16 %v235
  %v1521 = vunpack.c.l.b16 %v236
  %v1522 = vunpack.c.l.b16 %v237
  %v1523 = vunpack.c.l.b16 %v238
  %v1524 = vunpack.c.l.b16 %v239
  %v1525 = vunpack.c.l.b16 %v240
  %v1526 = vunpack.c.l.b16 %v241
  %v1527 = vunpack.c.l.b16 %v242
  %v1528 = vunpack.c.l.b16 %v243
  %v1529 = vunpack.c.l.b16 %v244
  %v1530 = vunpack.c.l.b16 %v245
  %v1531 = vunpack.c.l.b16 %v246
  %v1532 = vunpack.c.l.b16 %v247
  %v1533 = vunpack.c.l.b16 %v248
  %v1534 = vunpack.c.l.b16 %v249
  %v1535 = vunpack.c.l.b16 %v250
  %v1536 = vunpack.c.l.b16 %v251
  %v1537 = vunpack.c.l.b16 %v252
  %v1538 = vunpack.c.l.b16 %v253
  %v1539 = vunpack.c.l.b16 %v254
  %v1540 = vunpack.c.l.b16 %v255
  %v1541 = vunpack.c.l.b16 %v256
  %v1542 = vunpack.c.l.b16 %v257
  %v1543 = vunpack.c.l.b16 %v258
  %v1544 = vunpack.c.l.b16 %v259
  %v1545 = vunpack.c.l.b16 %v260
  %v1546 = vunpack.c.l.b16 %v261
  %v1547 = vunpack.c.l.b16 %v262
  %v1548 = vunpack.c.l.b16 %v263
  %v1549 = vunpack.c.l.b16 %v264
  %v1550 = vunpack.c.l.b16 %v265
  %v1551 = vunpack.c.l.b16 %v266
  %v1552 = vunpack.c.l.b16 %v267
  %v1553 = vunpack.c.l.b16 %v268
  %v1554 = vunpack.c.l.b16 %v269
  %v1555 = vunpack.c.l.b16 %v270
  %v1556 = vunpack.c.l.b16 %v271
  %v1557 = vunpack.c.l.b16 %v272
  %v1558 = vunpack.c.l.b16 %v273
  %v1559 = vunpack.c.l.b16 %v274
  %v1560 = vunpack.c.l.b16 %v275
  %v1561 = vunpack.c.l.b16 %v276
  %v1562 = vunpack.c.l.b16 %v277
  %v1563 = vunpack.c.l.b16 %v278
  %v1564 = vunpack.c.l.b16 %v279
  %v1565 = vunpack.c.l.b16 %v280
  %v1566 = vunpack.c.l.b16 %v281
  %v1567 = vunpack.c.l.b16 %v282
  %v1568 = vunpack.c.l.b16 %v283
  %v1569 = vunpack.c.l.b16 %v284
  %v1570 = vunpack.c.l.b16 %v285
  %v1571 = vunpack.c.l.b16 %v286
  %v1572 = vunpack.c.l.b16 %v287
  %v1573 = vunpack.c.l.b16 %v288
  %v1574 = vunpack.c.l.b16 %v289
  %v1575 = vunpack.c.l.b16 %v290
  %v1576 = vunpack.c.l.b16 %v291
  %v1577 = vunpack.c.l.b16 %v292
  %v1578 = vunpack.c.l.b16 %v293
  %v1579 = vunpack.c.l.b16 %v294
  %v1580 = vunpack.c.l.b16 %v295
  %v1581 = vunpack.c.l.b16 %v296
  %v1582 = vunpack.c.l.b16 %v297
  %v1583 = vunpack.c.l.b16 %v298
  %v1584 = vunpack.c.l.b16 %v299
  %v1585 = vunpack.c.l.b16 %v300
  %v1586 = vunpack.c.l.b16 %v301
  %v1587 = vunpack.c.l.b16 %v302
  %v1588 = vunpack.c.l.b16 %v303
  %v1589 = vunpack.c.l.b16 %v304
  %v1590 = vunpack.c.l.b16 %v305
  %v1591 = vunpack.c.l.b16 %v306
  %v1592 = vunpack.c.l.b16 %v307
  %v1593 = vunpack.c.l.b16 %v308
  %v1594 = vunpack.c.l.b16 %v309
  %v1595 = vunpack.c.l.b16 %v310
  %v1596 = vunpack.c.l.b16 %v311
  %v1597 = vunpack.c.l.b16 %v312
  %v1598 = vunpack.c.l.b16 %v313
  %v1599 = vunpack.c.l.b16 %v314
  %v1600 = vunpack.c.l.b16 %v315
  %v1601 = vunpack.c.l.b16 %v316
  %v1602 = vunpack.c.l.b16 %v317
  %v1603 = vunpack.c.l.b16 %v318
  %v1604 = vunpack.c.l.b16 %v319
  %v1605 = vunpack.c.l.b16 %v320
  %v1606 = vunpack.c.l.b16 %v321
  %v1607 = vunpack.c.l.b16 %v322
  %v1608 = vunpack.c.l.b16 %v323
  %v1609 = vunpack.c.l.b16 %v324
  %v1610 = vunpack.c.l.b16 %v325
  %v1611 = vunpack.c.l.b16 %v326
  %v1612 = vunpack.c.l.b16 %v327
  %v1613 = vunpack.c.l.b16 %v328
  %v1614 = vunpack.c.l.b16 %v329
  %v1615 = vunpack.c.l.b16 %v330
  %v1616 = vunpack.c.l.b16 %v331
  %v1617 = vunpack.c.l.b16 %v332
  %v1618 = vunpack.c.l.b16 %v333
  %v1619 = vunpack.c.l.b16 %v334
  %v1620 = vunpack.c.l.b16 %v335
  %v1621 = vunpack.c.l.b16 %v336
  %v1622 = vunpack.c.l.b16 %v337
  %v1623 = vunpack.c.l.b16 %v338
  %v1624 = vunpack.c.l.b16 %v339
  %v1625 = vunpack.c.l.b16 %v340
  %v1626 = vunpack.c.l.b16 %v341
  %v1627 = vunpack.c.l.b16 %v342
  %v1628 = vunpack.c.l.b16 %v343
  %v1629 = vunpack.c.l.b16 %v344
  %v1630 = vunpack.c.l.b16 %v345
  %v1631 = vunpack.c.l.b16 %v346
  %v1632 = vunpack.c.l.b16 %v347
  %v1633 = vunpack.c.l.b16 %v348
  %v1634 = vunpack.c.l.b16 %v349
  %v1635 = vunpack.c.l.b16 %v350
  %v1636 = vunpack.c.l.b16 %v351
  %v1637 = vunpack.c.l.b16 %v352
  %v1638 = vunpack.c.l.b16 %v353
  %v1639 = vunpack.c.l.b16 %v354
  %v1640 = vunpack.c.l.b16 %v355
  %v1641 = vunpack.c.l.b16 %v356
  %v1642 = vunpack.c.l.b16 %v357
  %v1643 = vunpack.c.l.b16 %v358
  %v1644 = vunpack.c.l.b16 %v359
  %v1645 = vunpack.c.l.b16 %v360
  %v1646 = vunpack.c.l.b16 %v361
  %v1647 = vunpack.c.l.b16 %v362
  %v1648 = vunpack.c.l.b16 %v363
  %v1649 = vunpack.c.l.b16 %v364
  %v1650 = vunpack.c.l.b16 %v365
  %v1651 = vunpack.c.l.b16 %v366
  %v1652 = vunpack.c.l.b16 %v367
  %v1653 = vunpack.c.l.b16 %v368
  %v1654 = vunpack.c.l.b16 %v369
  %v1655 = vunpack.c.l.b16 %v370
  %v1656 = vunpack.c.l.b16 %v371
  %v1657 = vunpack.c.l.b16 %v372
  %v1658 = vunpack.c.l.b16 %v373
  %v1659 = vunpack.c.l.b16 %v374
  %v1660 = vunpack.c.l.b16 %v375
  %v1661 = vunpack.c.l.b16 %v376
  %v1662 = vunpack.c.l.b16 %v377
  %v1663 = vunpack.c.l.b16 %v378
  %v1664 = vunpack.c.l.b16 %v379
  %v1665 = vunpack.c.l.b16 %v380
  %v1666 = vunpack.c.l.b16 %v381
  %v1667 = vunpack.c.l.b16 %v382
  %v1668 = vunpack.c.l.b16 %v383
  %v1669 = vunpack.c.l.b16 %v384
  %v1670 = vunpack.c.l.b16 %v385
  %v1671 = vunpack.c.l.b16 %v386
  %v1672 = vunpack.c.l.b16 %v387
  %v1673 = vunpack.c.l.b16 %v388
  %v1674 = vunpack.c.l.b16 %v389
  %v1675 = vunpack.c.l.b16 %v390
  %v1676 = vunpack.c.l.b16 %v391
  %v1677 = vunpack.c.l.b16 %v392
  %v1678 = vunpack.c.l.b16 %v393
  %v1679 = vunpack.c.l.b16 %v394
  %v1680 = vunpack.c.l.b16 %v395
  %v1681 = vunpack.c.l.b16 %v396
  %v1682 = vunpack.c.l.b16 %v397
  %v1683 = vunpack.c.l.b16 %v398
  %v1684 = vunpack.c.l.b16 %v399
  %v1685 = vunpack.c.l.b16 %v400
  %v1686 = vunpack.c.l.b16 %v401
  %v1687 = vunpack.c.l.b16 %v402
  %v1688 = vunpack.c.l.b16 %v403
  %v1689 = vunpack.c.l.b16 %v404
  %v1690 = vunpack.c.l.b16 %v405
  %v1691 = vunpack.c.l.b16 %v406
  %v1692 = vunpack.c.l.b16 %v407
  %v1693 = vunpack.c.l.b16 %v408
  %v1694 = vunpack.c.l.b16 %v409
  %v1695 = vunpack.c.l.b16 %v410
  %v1696 = vunpack.c.l.b16 %v411
  %v1697 = vunpack.c.l.b16 %v412
  %v1698 = vunpack.c.l.b16 %v413
  %v1699 = vunpack.c.l.b16 %v414
  %v1700 = vunpack.c.l.b16 %v415
  %v1701 = vunpack.c.l.b16 %v416
  %v1702 = vunpack.c.l.b16 %v417
  %v1703 = vunpack.c.l.b16 %v418
  %v1704 = vunpack.c.l.b16 %v419
  %v1705 = vunpack.c.l.b16 %v420
  %v1706 = vunpack.c.l.b16 %v421
  %v1707 = vunpack.c.l.b16 %v422
  %v1708 = vunpack.c.l.b16 %v423
  %v1709 = vunpack.c.l.b16 %v424
  %v1710 = vunpack.c.l.b16 %v425
  %v1711 = vunpack.c.l.b16 %v426
  %v1712 = vunpack.c.l.b16 %v427
  %v1713 = vunpack.c.l.b16 %v428
  %v1714 = vunpack.c.l.b16 %v429
  %v1715 = vunpack.c.l.b16 %v430
  %v1716 = vunpack.c.l.b16 %v431
  %v1717 = vunpack.c.l.b16 %v432
  %v1718 = vunpack.c.l.b16 %v433
  %v1719 = vunpack.c.l.b16 %v434
  %v1720 = vunpack.c.l.b16 %v435
  %v1721 = vunpack.c.l.b16 %v436
  %v1722 = vunpack.c.l.b16 %v437
  %v1723 = vunpack.c.l.b16 %v438
  %v1724 = vunpack.c.l.b16 %v439
  %v1725 = vunpack.c.l.b16 %v440
  %v1726 = vunpack.c.l.b16 %v441
  %v1727 = vunpack.c.l.b16 %v442
  %v1728 = vunpack.c.l.b16 %v443
  %v1729 = vunpack.c.l.b16 %v444
  %v1730 = vunpack.c.l.b16 %v445
  %v1731 = vunpack.c.l.b16 %v446
  %v1732 = vunpack.c.l.b16 %v447
  %v1733 = vunpack.c.l.b16 %v448
  %v1734 = vunpack.c.l.b16 %v449
  %v1735 = vunpack.c.l.b16 %v450
  %v1736 = vunpack.c.l.b16 %v451
  %v1737 = vunpack.c.l.b16 %v452
  %v1738 = vunpack.c.l.b16 %v453
  %v1739 = vunpack.c.l.b16 %v454
  %v1740 = vunpack.c.l.b16 %v455
  %v1741 = vunpack.c.l.b16 %v456
  %v1742 = vunpack.c.l.b16 %v457
  %v1743 = vunpack.c.l.b16 %v458
  %v1744 = vunpack.c.l.b16 %v459
  %v1745 = vunpack.c.l.b16 %v460
  %v1746 = vunpack.c.l.b16 %v461
  %v1747 = vunpack.c.l.b16 %v462
  %v1748 = vunpack.c.l.b16 %v463
  %v1749 = vunpack.c.l.b16 %v464
  %v1750 = vunpack.c.l.b16 %v465
  %v1751 = vunpack.c.l.b16 %v466
  %v1752 = vunpack.c.l.b16 %v467
  %v1753 = vunpack.c.l.b16 %v468
  %v1754 = vunpack.c.l.b16 %v469
  %v1755 = vunpack.c.l.b16 %v470
  %v1756 = vunpack.c.l.b16 %v471
  %v1757 = vunpack.c.l.b16 %v472
  %v1758 = vunpack.c.l.b16 %v473
  %v1759 = vunpack.c.l.b16 %v474
  %v1760 = vunpack.c.l.b16 %v475
  %v1761 = vunpack.c.l.b16 %v476
  %v1762 = vunpack.c.l.b16 %v477
  %v1763 = vunpack.c.l.b16 %v478
  %v1764 = vunpack.c.l.b16 %v479
  %v1765 = vunpack.c.l.b16 %v480
  %v1766 = vunpack.c.l.b16 %v481
  %v1767 = vunpack.c.l.b16 %v482
  %v1768 = vunpack.c.l.b16 %v483
  %v1769 = vunpack.c.l.b16 %v484
  %v1770 = vunpack.c.l.b16 %v485
  %v1771 = vunpack.c.l.b16 %v486
  %v1772 = vunpack.c.l.b16 %v487
  %v1773 = vunpack.c.l.b16 %v488
  %v1774 = vunpack.c.l.b16 %v489
  %v1775 = vunpack.c.l.b16 %v490
  %v1776 = vunpack.c.l.b16 %v491
  %v1777 = vunpack.c.l.b16 %v492
  %v1778 = vunpack.c.l.b16 %v493
  %v1779 = vunpack.c.l.b16 %v494
  %v1780 = vunpack.c.l.b16 %v495
  %v1781 = vunpack.c.l.b16 %v496
  %v1782 = vunpack.c.l.b16 %v497
  %v1783 = vunpack.c.l.b16 %v498
  %v1784 = vunpack.c.l.b16 %v499
  %v1785 = vunpack.c.l.b16 %v500
  %v1786 = vunpack.c.l.b16 %v501
  %v1787 = vunpack.c.l.b16 %v502
  %v1788 = vunpack.c.l.b16 %v503
  %v1789 = vunpack.c.l.b16 %v504
  %v1790 = vunpack.c.l.b16 %v505
  %v1791 = vunpack.c.l.b16 %v506
  %v1792 = vunpack.c.l.b16 %v507
  %v1793 = vunpack.c.l.b16 %v508
  %v1794 = vunpack.c.l.b16 %v509
  %v1795 = vunpack.c.l.b16 %v510
  %v1796 = vunpack.c.l.b16 %v511
  %v1797 = vunpack.c.l.b16 %v512
  %v1798 = vunpack.c.l.b16 %v513
  %v1799 = vunpack.c.l.b16 %v514
  %v1800 = vunpack.c.l.b16 %v515
  %v1801 = vunpack.c.l.b16 %v516
  %v1802 = vunpack.c.l.b16 %v517
  %v1803 = vunpack.c.l.b16 %v518
  %v1804 = vunpack.c.l.b16 %v519
  %v1805 = vunpack.c.l.b16 %v520
  %v1806 = vunpack.c.l.b16 %v521
  %v1807 = vunpack.c.l.b16 %v522
  %v1808 = vunpack.c.l.b16 %v523
  %v1809 = vunpack.c.l.b16 %v524
  %v1810 = vunpack.c.l.b16 %v525
  %v1811 = vunpack.c.l.b16 %v526
  %v1812 = vunpack.c.l.b16 %v527
  %v1813 = vunpack.c.l.b16 %v528
  %v1814 = vunpack.c.l.b16 %v529
  %v1815 = vunpack.c.l.b16 %v530
  %v1816 = vunpack.c.l.b16 %v531
  %v1817 = vunpack.c.l.b16 %v532
  %v1818 = vunpack.c.l.b16 %v533
  %v1819 = vunpack.c.l.b16 %v534
  %v1820 = vunpack.c.l.b16 %v535
  %v1821 = vunpack.c.l.b16 %v536
  %v1822 = vunpack.c.l.b16 %v537
  %v1823 = vunpack.c.l.b16 %v538
  %v1824 = vunpack.c.l.b16 %v539
  %v1825 = vunpack.c.l.b16 %v540
  %v1826 = vunpack.c.l.b16 %v541
  %v1827 = vunpack.c.l.b16 %v542
  %v1828 = vunpack.c.l.b16 %v543
  %v1829 = vunpack.c.l.b16 %v544
  %v1830 = vunpack.c.l.b16 %v545
  %v1831 = vunpack.c.l.b16 %v546
  %v1832 = vunpack.c.l.b16 %v547
  %v1833 = vunpack.c.l.b16 %v548
  %v1834 = vunpack.c.l.b16 %v549
  %v1835 = vunpack.c.l.b16 %v550
  %v1836 = vunpack.c.l.b16 %v551
  %v1837 = vunpack.c.l.b16 %v552
  %v1838 = vunpack.c.l.b16 %v553
  %v1839 = vunpack.c.l.b16 %v554
  %v1840 = vunpack.c.l.b16 %v555
  %v1841 = vunpack.c.l.b16 %v556
  %v1842 = vunpack.c.l.b16 %v557
  %v1843 = vunpack.c.l.b16 %v558
  %v1844 = vunpack.c.l.b16 %v559
  %v1845 = vunpack.c.l.b16 %v560
  %v1846 = vunpack.c.l.b16 %v561
  %v1847 = vunpack.c.l.b16 %v562
  %v1848 = vunpack.c.l.b16 %v563
  %v1849 = vunpack.c.l.b16 %v564
  %v1850 = vunpack.c.l.b16 %v565
  %v1851 = vunpack.c.l.b16 %v566
  %v1852 = vunpack.c.l.b16 %v567
  %v1853 = vunpack.c.l.b16 %v568
  %v1854 = vunpack.c.l.b16 %v569
  %v1855 = vunpack.c.l.b16 %v570
  %v1856 = vunpack.c.l.b16 %v571
  %v1857 = vunpack.c.l.b16 %v572
  %v1858 = vunpack.c.l.b16 %v573
  %v1859 = vunpack.c.l.b16 %v574
  %v1860 = vunpack.c.l.b16 %v575
  %v1861 = vunpack.c.l.b16 %v576
  %v1862 = vunpack.c.l.b16 %v577
  %v1863 = vunpack.c.l.b16 %v578
  %v1864 = vunpack.c.l.b16 %v579
  %v1865 = vunpack.c.l.b16 %v580
  %v1866 = vunpack.c.l.b16 %v581
  %v1867 = vunpack.c.l.b16 %v582
  %v1868 = vunpack.c.l.b16 %v583
  %v1869 = vunpack.c.l.b16 %v584
  %v1870 = vunpack.c.l.b16 %v585
  %v1871 = vunpack.c.l.b16 %v586
  %v1872 = vunpack.c.l.b16 %v587
  %v1873 = vunpack.c.l.b16 %v588
  %v1874 = vunpack.c.l.b16 %v589
  %v1875 = vunpack.c.l.b16 %v590
  %v1876 = vunpack.c.l.b16 %v591
  %v1877 = vunpack.c.l.b16 %v592
  %v1878 = vunpack.c.l.b16 %v593
  %v1879 = vunpack.c.l.b16 %v594
  %v1880 = vunpack.c.l.b16 %v595
  %v1881 = vunpack.c.l.b16 %v596
  %v1882 = vunpack.c.l.b16 %v597
  %v1883 = vunpack.c.l.b16 %v598
  %v1884 = vunpack.c.l.b16 %v599
  %v1885 = vunpack.c.l.b16 %v600
  %v1886 = vunpack.c.l.b16 %v601
  %v1887 = vunpack.c.l.b16 %v602
  %v1888 = vunpack.c.l.b16 %v603
  %v1889 = vunpack.c.l.b16 %v604
  %v1890 = vunpack.c.l.b16 %v605
  %v1891 = vunpack.c.l.b16 %v606
  %v1892 = vunpack.c.l.b16 %v607
  %v1893 = vunpack.c.l.b16 %v608
  %v1894 = vunpack.c.l.b16 %v609
  %v1895 = vunpack.c.l.b16 %v610
  %v1896 = vunpack.c.l.b16 %v611
  %v1897 = vunpack.c.l.b16 %v612
  %v1898 = vunpack.c.l.b16 %v613
  %v1899 = vunpack.c.l.b16 %v614
  %v1900 = vunpack.c.l.b16 %v615
  %v1901 = vunpack.c.l.b16 %v616
  %v1902 = vunpack.c.l.b16 %v617
  %v1903 = vunpack.c.l.b16 %v618
  %v1904 = vunpack.c.l.b16 %v619
  %v1905 = vunpack.c.l.b16 %v620
  %v1906 = vpack.c.b16 %v1331, %v1330
  %v1907 = vpack.c.b16 %v1333, %v1332
  %v1908 = vpack.c.b16 %v1335, %v1334
  %v1909 = vpack.c.b16 %v1337, %v1336
  %v1910 = vpack.c.b16 %v1339, %v1338
  %v1911 = vpack.c.b16 %v1341, %v1340
  %v1912 = vpack.c.b16 %v1343, %v1342
  %v1913 = vpack.c.b16 %v1345, %v1344
  %v1914 = vpack.c.b16 %v1347, %v1346
  %v1915 = vpack.c.b16 %v1349, %v1348
  %v1916 = vpack.c.b16 %v1351, %v1350
  %v1917 = vpack.c.b16 %v1353, %v1352
  %v1918 = vpack.c.b16 %v1355, %v1354
  %v1919 = vpack.c.b16 %v1357, %v1356
  %v1920 = vpack.c.b16 %v1359, %v1358
  %v1921 = vpack.c.b16 %v1361, %v1360
  %v1922 = vpack.c.b16 %v1363, %v1362
  %v1923 = vpack.c.b16 %v1365, %v1364
  %v1924 = vpack.c.b16 %v1367, %v1366
  %v1925 = vpack.c.b16 %v1369, %v1368
  %v1926 = vpack.c.b16 %v1371, %v1370
  %v1927 = vpack.c.b16 %v1373, %v1372
  %v1928 = vpack.c.b16 %v1375, %v1374
  %v1929 = vpack.c.b16 %v1377, %v1376
  %v1930 = vpack.c.b16 %v1379, %v1378
  %v1931 = vpack.c.b16 %v1381, %v1380
  %v1932 = vpack.c.b16 %v1383, %v1382
  %v1933 = vpack.c.b16 %v1385, %v1384
  %v1934 = vpack.c.b16 %v1387, %v1386
  %v1935 = vpack.c.b16 %v1389, %v1388
  %v1936 = vpack.c.b16 %v1391, %v1390
  %v1937 = vpack.c.b16 %v1393, %v1392
  %v1938 = vpack.c.b16 %v1395, %v1394
  %v1939 = vpack.c.b16 %v1397, %v1396
  %v1940 = vpack.c.b16 %v1399, %v1398
  %v1941 = vpack.c.b16 %v1401, %v1400
  %v1942 = vpack.c.b16 %v1403, %v1402
  %v1943 = vpack.c.b16 %v1405, %v1404
  %v1944 = vpack.c.b16 %v1407, %v1406
  %v1945 = vpack.c.b16 %v1409, %v1408
  %v1946 = vpack.c.b16 %v1411, %v1410
  %v1947 = vpack.c.b16 %v1413, %v1412
  %v1948 = vpack.c.b16 %v1415, %v1414
  %v1949 = vpack.c.b16 %v1417, %v1416
  %v1950 = vpack.c.b16 %v1419, %v1418
  %v1951 = vpack.c.b16 %v1421, %v1420
  %v1952 = vpack.c.b16 %v1423, %v1422
  %v1953 = vpack.c.b16 %v1425, %v1424
  %v1954 = vpack.c.b16 %v1427, %v1426
  %v1955 = vpack.c.b16 %v1429, %v1428
  %v1956 = vpack.c.b16 %v1431, %v1430
  %v1957 = vpack.c.b16 %v1433, %v1432
  %v1958 = vpack.c.b16 %v1435, %v1434
  %v1959 = vpack.c.b16 %v1437, %v1436
  %v1960 = vpack.c.b16 %v1439, %v1438
  %v1961 = vpack.c.b16 %v1441, %v1440
  %v1962 = vpack.c.b16 %v1443, %v1442
  %v1963 = vpack.c.b16 %v1445, %v1444
  %v1964 = vpack.c.b16 %v1447, %v1446
  %v1965 = vpack.c.b16 %v1449, %v1448
  %v1966 = vpack.c.b16 %v1451, %v1450
  %v1967 = vpack.c.b16 %v1453, %v1452
  %v1968 = vpack.c.b16 %v1455, %v1454
  %v1969 = vpack.c.b16 %v1457, %v1456
  %v1970 = vpack.c.b16 %v1459, %v1458
  %v1971 = vpack.c.b16 %v1461, %v1460
  %v1972 = vpack.c.b16 %v1463, %v1462
  %v1973 = vpack.c.b16 %v1465, %v1464
  %v1974 = vpack.c.b16 %v1467, %v1466
  %v1975 = vpack.c.b16 %v1469, %v1468
  %v1976 = vpack.c.b16 %v1471, %v1470
  %v1977 = vpack.c.b16 %v1473, %v1472
  %v1978 = vpack.c.b16 %v1475, %v1474
  %v1979 = vpack.c.b16 %v1477, %v1476
  %v1980 = vpack.c.b16 %v1479, %v1478
  %v1981 = vpack.c.b16 %v1481, %v1480
  %v1982 = vpack.c.b16 %v1483, %v1482
  %v1983 = vpack.c.b16 %v1485, %v1484
  %v1984 = vpack.c.b16 %v1487, %v1486
  %v1985 = vpack.c.b16 %v1489, %v1488
  %v1986 = vpack.c.b16 %v1491, %v1490
  %v1987 = vpack.c.b16 %v1493, %v1492
  %v1988 = vpack.c.b16 %v1495, %v1494
  %v1989 = vpack.c.b16 %v1497, %v1496
  %v1990 = vpack.c.b16 %v1499, %v1498
  %v1991 = vpack.c.b16 %v1501, %v1500
  %v1992 = vpack.c.b16 %v1503, %v1502
  %v1993 = vpack.c.b16 %v1505, %v1504
  %v1994 = vpack.c.b16 %v1507, %v1506
  %v1995 = vpack.c.b16 %v1509, %v1508
  %v1996 = vpack.c.b16 %v1511, %v1510
  %v1997 = vpack.c.b16 %v1513, %v1512
  %v1998 = vpack.c.b16 %v1515, %v1514
  %v1999 = vpack.c.b16 %v1517, %v1516
  %v2000 = vpack.c.b16 %v1519, %v1518
  %v2001 = vpack.c.b16 %v1521, %v1520
  %v2002 = vpack.c.b16 %v1523, %v1522
  %v2003 = vpack.c.b16 %v1525, %v1524
  %v2004 = vpack.c.b16 %v1527, %v1526
  %v2005 = vpack.c.b16 %v1529, %v1528
  %v2006 = vpack.c.b16 %v1531, %v1530
  %v2007 = vpack.c.b16 %v1533, %v1532
  %v2008 = vpack.c.b16 %v1535, %v1534
  %v2009 = vpack.c.b16 %v1537, %v1536
  %v2010 = vpack.c.b16 %v1539, %v1538
  %v2011 = vpack.c.b16 %v1541, %v1540
  %v2012 = vpack.c.b16 %v1543, %v1542
  %v2013 = vpack.c.b16 %v1545, %v1544
  %v2014 = vpack.c.b16 %v1547, %v1546
  %v2015 = vpack.c.b16 %v1549, %v1548
  %v2016 = vpack.c.b16 %v1551, %v1550
  %v2017 = vpack.c.b16 %v1553, %v1552
  %v2018 = vpack.c.b16 %v1555, %v1554
  %v2019 = vpack.c.b16 %v1557, %v1556
  %v2020 = vpack.c.b16 %v1559, %v1558
  %v2021 = vpack.c.b16 %v1561, %v1560
  %v2022 = vpack.c.b16 %v1563, %v1562
  %v2023 = vpack.c.b16 %v1565, %v1564
  %v2024 = vpack.c.b16 %v1567, %v1566
  %v2025 = vpack.c.b16 %v1569, %v1568
  %v2026 = vpack.c.b16 %v1571, %v1570
  %v2027 = vpack.c.b16 %v1573, %v1572
  %v2028 = vpack.c.b16 %v1575, %v1574
  %v2029 = vpack.c.b16 %v1577, %v1576
  %v2030 = vpack.c.b16 %v1579, %v1578
  %v2031 = vpack.c.b16 %v1581, %v1580
  %v2032 = vpack.c.b16 %v1583, %v1582
  %v2033 = vpack.c.b16 %v1585, %v1584
  %v2034 = vpack.c.b16 %v1587, %v1586
  %v2035 = vpack.c.b16 %v1589, %v1588
  %v2036 = vpack.c.b16 %v1591, %v1590
  %v2037 = vpack.c.b16 %v1593, %v1592
  %v2038 = vpack.c.b16 %v1595, %v1594
  %v2039 = vpack.c.b16 %v1597, %v1596
  %v2040 = vpack.c.b16 %v1599, %v1598
  %v2041 = vpack.c.b16 %v1601, %v1600
  %v2042 = vpack.c.b16 %v1603, %v1602
  %v2043 = vpack.c.b16 %v1605, %v1604
  %v2044 = vpack.c.b16 %v1607, %v1606
  %v2045 = vpack.c.b16 %v1609, %v1608
  %v2046 = vpack.c.b16 %v1611, %v1610
  %v2047 = vpack.c.b16 %v1613, %v1612
  %v2048 = vpack.c.b16 %v1615, %v1614
  %v2049 = vpack.c.b16 %v1617, %v1616
  %v2050 = vpack.c.b16 %v1619, %v1618
  %v2051 = vpack.c.b16 %v1621, %v1620
  %v2052 = vpack.c.b16 %v1623, %v1622
  %v2053 = vpack.c.b16 %v1625, %v1624
  %v2054 = vpack.c.b16 %v1627, %v1626
  %v2055 = vpack.c.b16 %v1629, %v1628
  %v2056 = vpack.c.b16 %v1631, %v1630
  %v2057 = vpack.c.b16 %v1633, %v1632
  %v2058 = vpack.c.b16 %v1635, %v1634
  %v2059 = vpack.c.b16 %v1637, %v1636
  %v2060 = vpack.c.b16 %v1639, %v1638
  %v2061 = vpack.c.b16 %v1641, %v1640
  %v2062 = vpack.c.b16 %v1643, %v1642
  %v2063 = vpack.c.b16 %v1645, %v1644
  %v2064 = vpack.c.b16 %v1647, %v1646
  %v2065 = vpack.c.b16 %v1649, %v1648
  %v2066 = vpack.c.b16 %v1651, %v1650
  %v2067 = vpack.c.b16 %v1653, %v1652
  %v2068 = vpack.c.b16 %v1655, %v1654
  %v2069 = vpack.c.b16 %v1657, %v1656
  %v2070 = vpack.c.b16 %v1659, %v1658
  %v2071 = vpack.c.b16 %v1661, %v1660
  %v2072 = vpack.c.b16 %v1663, %v1662
  %v2073 = vpack.c.b16 %v1665, %v1664
  %v2074 = vpack.c.b16 %v1667, %v1666
  %v2075 = vpack.c.b16 %v1669, %v1668
  %v2076 = vpack.c.b16 %v1671, %v1670
  %v2077 = vpack.c.b16 %v1673, %v1672
  %v2078 = vpack.c.b16 %v1675, %v1674
  %v2079 = vpack.c.b16 %v1677, %v1676
  %v2080 = vpack.c.b16 %v1679, %v1678
  %v2081 = vpack.c.b16 %v1681, %v1680
  %v2082 = vpack.c.b16 %v1683, %v1682
  %v2083 = vpack.c.b16 %v1685, %v1684
  %v2084 = vpack.c.b16 %v1687, %v1686
  %v2085 = vpack.c.b16 %v1689, %v1688
  %v2086 = vpack.c.b16 %v1691, %v1690
  %v2087 = vpack.c.b16 %v1693, %v1692
  %v2088 = vpack.c.b16 %v1695, %v1694
  %v2089 = vpack.c.b16 %v1697, %v1696
  %v2090 = vpack.c.b16 %v1699, %v1698
  %v2091 = vpack.c.b16 %v1701, %v1700
  %v2092 = vpack.c.b16 %v1703, %v1702
  %v2093 = vpack.c.b16 %v1705, %v1704
  %v2094 = vpack.c.b16 %v1707, %v1706
  %v2095 = vpack.c.b16 %v1709, %v1708
  %v2096 = vpack.c.b16 %v1711, %v1710
  %v2097 = vpack.c.b16 %v1713, %v1712
  %v2098 = vpack.c.b16 %v1715, %v1714
  %v2099 = vpack.c.b16 %v1717, %v1716
  %v2100 = vpack.c.b16 %v1719, %v1718
  %v2101 = vpack.c.b16 %v1721, %v1720
  %v2102 = vpack.c.b16 %v1723, %v1722
  %v2103 = vpack.c.b16 %v1725, %v1724
  %v2104 = vpack.c.b16 %v1727, %v1726
  %v2105 = vpack.c.b16 %v1729, %v1728
  %v2106 = vpack.c.b16 %v1731, %v1730
  %v2107 = vpack.c.b16 %v1733, %v1732
  %v2108 = vpack.c.b16 %v1735, %v1734
  %v2109 = vpack.c.b16 %v1737, %v1736
  %v2110 = vpack.c.b16 %v1739, %v1738
  %v2111 = vpack.c.b16 %v1741, %v1740
  %v2112 = vpack.c.b16 %v1743, %v1742
  %v2113 = vpack.c.b16 %v1745, %v1744
  %v2114 = vpack.c.b16 %v1747, %v1746
  %v2115 = vpack.c.b16 %v1749, %v1748
  %v2116 = vpack.c.b16 %v1751, %v1750
  %v2117 = vpack.c.b16 %v1753, %v1752
  %v2118 = vpack.c.b16 %v1755, %v1754
  %v2119 = vpack.c.b16 %v1757, %v1756
  %v2120 = vpack.c.b16 %v1759, %v1758
  %v2121 = vpack.c.b16 %v1761, %v1760
  %v2122 = vpack.c.b16 %v1763, %v1762
  %v2123 = vpack.c.b16 %v1765, %v1764
  %v2124 = vpack.c.b16 %v1767, %v1766
  %v2125 = vpack.c.b16 %v1769, %v1768
  %v2126 = vpack.c.b16 %v1771, %v1770
  %v2127 = vpack.c.b16 %v1773, %v1772
  %v2128 = vpack.c.b16 %v1775, %v1774
  %v2129 = vpack.c.b16 %v1777, %v1776
  %v2130 = vpack.c.b16 %v1779, %v1778
  %v2131 = vpack.c.b16 %v1781, %v1780
  %v2132 = vpack.c.b16 %v1783, %v1782
  %v2133 = vpack.c.b16 %v1785, %v1784
  %v2134 = vpack.c.b16 %v1787, %v1786
  %v2135 = vpack.c.b16 %v1789, %v1788
  %v2136 = vpack.c.b16 %v1791, %v1790
  %v2137 = vpack.c.b16 %v1793, %v1792
  %v2138 = vpack.c.b16 %v1795, %v1794
  %v2139 = vpack.c.b16 %v1797, %v1796
  %v2140 = vpack.c.b16 %v1799, %v1798
  %v2141 = vpack.c.b16 %v1801, %v1800
  %v2142 = vpack.c.b16 %v1803, %v1802
  %v2143 = vpack.c.b16 %v1805, %v1804
  %v2144 = vpack.c.b16 %v1807, %v1806
  %v2145 = vpack.c.b16 %v1809, %v1808
  %v2146 = vpack.c.b16 %v1811, %v1810
  %v2147 = vpack.c.b16 %v1813, %v1812
  %v2148 = vpack.c.b16 %v1815, %v1814
  %v2149 = vpack.c.b16 %v1817, %v1816
  %v2150 = vpack.c.b16 %v1819, %v1818
  %v2151 = vpack.c.b16 %v1821, %v1820
  %v2152 = vpack.c.b16 %v1823, %v1822
  %v2153 = vpack.c.b16 %v1825, %v1824
  %v2154 = vpack.c.b16 %v1827, %v1826
  %v2155 = vpack.c.b16 %v1829, %v1828
  %v2156 = vpack.c.b16 %v1831, %v1830
  %v2157 = vpack.c.b16 %v1833, %v1832
  %v2158 = vpack.c.b16 %v1835, %v1834
  %v2159 = vpack.c.b16 %v1837, %v1836
  %v2160 = vpack.c.b16 %v1839, %v1838
  %v2161 = vpack.c.b16 %v1841, %v1840
  %v2162 = vpack.c.b16 %v1843, %v1842
  %v2163 = vpack.c.b16 %v1845, %v1844
  %v2164 = vpack.c.b16 %v1847, %v1846
  %v2165 = vpack.c.b16 %v1849, %v1848
  %v2166 = vpack.c.b16 %v1851, %v1850
  %v2167 = vpack.c.b16 %v1853, %v1852
  %v2168 = vpack.c.b16 %v1855, %v1854
  %v2169 = vpack.c.b16 %v1857, %v1856
  %v2170 = vpack.c.b16 %v1859, %v1858
  %v2171 = vpack.c.b16 %v1861, %v1860
  %v2172 = vpack.c.b16 %v1863, %v1862
  %v2173 = vpack.c.b16 %v1865, %v1864
  %v2174 = vpack.c.b16 %v1867, %v1866
  %v2175 = vpack.c.b16 %v1869, %v1868
  %v2176 = vpack.c.b16 %v1871, %v1870
  %v2177 = vpack.c.b16 %v1873, %v1872
  %v2178 = vpack.c.b16 %v1875, %v1874
  %v2179 = vpack.c.b16 %v1877, %v1876
  %v2180 = vpack.c.b16 %v1879, %v1878
  %v2181 = vpack.c.b16 %v1881, %v1880
  %v2182 = vpack.c.b16 %v1883, %v1882
  %v2183 = vpack.c.b16 %v1885, %v1884
  %v2184 = vpack.c.b16 %v1887, %v1886
  %v2185 = vpack.c.b16 %v1889, %v1888
  %v2186 = vpack.c.b16 %v1891, %v1890
  %v2187 = vpack.c.b16 %v1893, %v1892
  %v2188 = vpack.c.b16 %v1895, %v1894
  %v2189 = vpack.c.b16 %v1897, %v1896
  %v2190 = vpack.c.b16 %v1899, %v1898
  %v2191 = vpack.c.b16 %v1901, %v1900
  %v2192 = vpack.c.b16 %v1903, %v1902
  %v2193 = vpack.c.b16 %v1905, %v1904
  %2482 = vmatprep.subr.bf16.mxu0 0
  %2483 = vmatpush1.bf16.msra.mxu0 %v1906
  %2484 = vmatprep.subr.bf16.mxu0 0
  %2485 = vmatpush1.bf16.msra.mxu0 %v1907
  %2486 = vmatprep.subr.bf16.mxu0 0
  %2487 = vmatpush1.bf16.msra.mxu0 %v1908
  %2488 = vmatprep.subr.bf16.mxu0 0
  %2489 = vmatpush1.bf16.msra.mxu0 %v1909
  %2490 = vmatprep.subr.bf16.mxu0 0
  %2491 = vmatpush1.bf16.msra.mxu0 %v1910
  %2492 = vmatprep.subr.bf16.mxu0 0
  %2493 = vmatpush1.bf16.msra.mxu0 %v1911
  %2494 = vmatprep.subr.bf16.mxu0 0
  %2495 = vmatpush1.bf16.msra.mxu0 %v1912
  %2496 = vmatprep.subr.bf16.mxu0 0
  %2497 = vmatpush1.bf16.msra.mxu0 %v1913
  %2498 = vmatprep.subr.bf16.mxu0 0
  %2499 = vmatpush1.bf16.msra.mxu0 %v1914
  %2500 = vmatprep.subr.bf16.mxu0 0
  %2501 = vmatpush1.bf16.msra.mxu0 %v1915
  %2502 = vmatprep.subr.bf16.mxu0 0
  %2503 = vmatpush1.bf16.msra.mxu0 %v1916
  %2504 = vmatprep.subr.bf16.mxu0 0
  %2505 = vmatpush1.bf16.msra.mxu0 %v1917
  %2506 = vmatprep.subr.bf16.mxu0 0
  %2507 = vmatpush1.bf16.msra.mxu0 %v1918
  %2508 = vmatprep.subr.bf16.mxu0 0
  %2509 = vmatpush1.bf16.msra.mxu0 %v1919
  %2510 = vmatprep.subr.bf16.mxu0 0
  %2511 = vmatpush1.bf16.msra.mxu0 %v1920
  %2512 = vmatprep.subr.bf16.mxu0 0
  %2513 = vmatpush1.bf16.msra.mxu0 %v1921
  %2514 = vmatprep.mubr.bf16.mxu0 %v683
  %2515 = vmatmul.mubr.bf16.gmra.mrb[0].mxu0 %v682
  %v2516 = vpop.f32.mrb[0].mxu0
  %v2517 = vadd.f32 %v626, %v2516
  %v2518 = vpop.f32.mrb[0].mxu0
  %v2519 = vpop.f32.mrb[0].mxu0
  %v2520 = vpop.f32.mrb[0].mxu0
  %2521 = vdwg.mxu0
  %2522 = vmatprep.subr.bf16.mxu0 0
  %2523 = vmatpush1.bf16.msra.mxu0 %v1922
  %2524 = vmatprep.subr.bf16.mxu0 0
  %2525 = vmatpush1.bf16.msra.mxu0 %v1923
  %2526 = vmatprep.subr.bf16.mxu0 0
  %2527 = vmatpush1.bf16.msra.mxu0 %v1924
  %2528 = vmatprep.subr.bf16.mxu0 0
  %2529 = vmatpush1.bf16.msra.mxu0 %v1925
  %2530 = vmatprep.subr.bf16.mxu0 0
  %2531 = vmatpush1.bf16.msra.mxu0 %v1926
  %2532 = vmatprep.subr.bf16.mxu0 0
  %2533 = vmatpush1.bf16.msra.mxu0 %v1927
  %2534 = vmatprep.subr.bf16.mxu0 0
  %2535 = vmatpush1.bf16.msra.mxu0 %v1928
  %2536 = vmatprep.subr.bf16.mxu0 0
  %2537 = vmatpush1.bf16.msra.mxu0 %v1929
  %2538 = vmatprep.subr.bf16.mxu0 0
  %2539 = vmatpush1.bf16.msra.mxu0 %v1930
  %2540 = vmatprep.subr.bf16.mxu0 0
  %2541 = vmatpush1.bf16.msra.mxu0 %v1931
  %2542 = vmatprep.subr.bf16.mxu0 0
  %2543 = vmatpush1.bf16.msra.mxu0 %v1932
  %2544 = vmatprep.subr.bf16.mxu0 0
  %2545 = vmatpush1.bf16.msra.mxu0 %v1933
  %2546 = vmatprep.subr.bf16.mxu0 0
  %2547 = vmatpush1.bf16.msra.mxu0 %v1934
  %2548 = vmatprep.subr.bf16.mxu0 0
  %2549 = vmatpush1.bf16.msra.mxu0 %v1935
  %2550 = vmatprep.subr.bf16.mxu0 0
  %2551 = vmatpush1.bf16.msra.mxu0 %v1936
  %2552 = vmatprep.subr.bf16.mxu0 0
  %2553 = vmatpush1.bf16.msra.mxu0 %v1937
  %2554 = vmatprep.mubr.bf16.mxu0 %v685
  %2555 = vmatmul.mubr.bf16.gmra.mrb[0].mxu0 %v684
  %v2556 = vpop.f32.mrb[0].mxu0
  %v2557 = vadd.f32 %v2517, %v2556
  %v2558 = vpop.f32.mrb[0].mxu0
  %v2559 = vpop.f32.mrb[0].mxu0
  %v2560 = vpop.f32.mrb[0].mxu0
  %2561 = vdwg.mxu0
  %2562 = vmatprep.subr.bf16.mxu0 0
  %2563 = vmatpush1.bf16.msra.mxu0 %v1938
  %2564 = vmatprep.subr.bf16.mxu0 0
  %2565 = vmatpush1.bf16.msra.mxu0 %v1939
  %2566 = vmatprep.subr.bf16.mxu0 0
  %2567 = vmatpush1.bf16.msra.mxu0 %v1940
  %2568 = vmatprep.subr.bf16.mxu0 0
  %2569 = vmatpush1.bf16.msra.mxu0 %v1941
  %2570 = vmatprep.subr.bf16.mxu0 0
  %2571 = vmatpush1.bf16.msra.mxu0 %v1942
  %2572 = vmatprep.subr.bf16.mxu0 0
  %2573 = vmatpush1.bf16.msra.mxu0 %v1943
  %2574 = vmatprep.subr.bf16.mxu0 0
  %2575 = vmatpush1.bf16.msra.mxu0 %v1944
  %2576 = vmatprep.subr.bf16.mxu0 0
  %2577 = vmatpush1.bf16.msra.mxu0 %v1945
  %2578 = vmatprep.subr.bf16.mxu0 0
  %2579 = vmatpush1.bf16.msra.mxu0 %v1946
  %2580 = vmatprep.subr.bf16.mxu0 0
  %2581 = vmatpush1.bf16.msra.mxu0 %v1947
  %2582 = vmatprep.subr.bf16.mxu0 0
  %2583 = vmatpush1.bf16.msra.mxu0 %v1948
  %2584 = vmatprep.subr.bf16.mxu0 0
  %2585 = vmatpush1.bf16.msra.mxu0 %v1949
  %2586 = vmatprep.subr.bf16.mxu0 0
  %2587 = vmatpush1.bf16.msra.mxu0 %v1950
  %2588 = vmatprep.subr.bf16.mxu0 0
  %2589 = vmatpush1.bf16.msra.mxu0 %v1951
  %2590 = vmatprep.subr.bf16.mxu0 0
  %2591 = vmatpush1.bf16.msra.mxu0 %v1952
  %2592 = vmatprep.subr.bf16.mxu0 0
  %2593 = vmatpush1.bf16.msra.mxu0 %v1953
  %2594 = vmatprep.mubr.bf16.mxu0 %v687
  %2595 = vmatmul.mubr.bf16.gmra.mrb[0].mxu0 %v686
  %v2596 = vpop.f32.mrb[0].mxu0
  %v2597 = vadd.f32 %v2557, %v2596
  %v2598 = vpop.f32.mrb[0].mxu0
  %v2599 = vpop.f32.mrb[0].mxu0
  %v2600 = vpop.f32.mrb[0].mxu0
  %2601 = vdwg.mxu0
  %2602 = vmatprep.subr.bf16.mxu0 0
  %2603 = vmatpush1.bf16.msra.mxu0 %v1954
  %2604 = vmatprep.subr.bf16.mxu0 0
  %2605 = vmatpush1.bf16.msra.mxu0 %v1955
  %2606 = vmatprep.subr.bf16.mxu0 0
  %2607 = vmatpush1.bf16.msra.mxu0 %v1956
  %2608 = vmatprep.subr.bf16.mxu0 0
  %2609 = vmatpush1.bf16.msra.mxu0 %v1957
  %2610 = vmatprep.subr.bf16.mxu0 0
  %2611 = vmatpush1.bf16.msra.mxu0 %v1958
  %2612 = vmatprep.subr.bf16.mxu0 0
  %2613 = vmatpush1.bf16.msra.mxu0 %v1959
  %2614 = vmatprep.subr.bf16.mxu0 0
  %2615 = vmatpush1.bf16.msra.mxu0 %v1960
  %2616 = vmatprep.subr.bf16.mxu0 0
  %2617 = vmatpush1.bf16.msra.mxu0 %v1961
  %2618 = vmatprep.subr.bf16.mxu0 0
  %2619 = vmatpush1.bf16.msra.mxu0 %v1962
  %2620 = vmatprep.subr.bf16.mxu0 0
  %2621 = vmatpush1.bf16.msra.mxu0 %v1963
  %2622 = vmatprep.subr.bf16.mxu0 0
  %2623 = vmatpush1.bf16.msra.mxu0 %v1964
  %2624 = vmatprep.subr.bf16.mxu0 0
  %2625 = vmatpush1.bf16.msra.mxu0 %v1965
  %2626 = vmatprep.subr.bf16.mxu0 0
  %2627 = vmatpush1.bf16.msra.mxu0 %v1966
  %2628 = vmatprep.subr.bf16.mxu0 0
  %2629 = vmatpush1.bf16.msra.mxu0 %v1967
  %2630 = vmatprep.subr.bf16.mxu0 0
  %2631 = vmatpush1.bf16.msra.mxu0 %v1968
  %2632 = vmatprep.subr.bf16.mxu0 0
  %2633 = vmatpush1.bf16.msra.mxu0 %v1969
  %2634 = vmatprep.mubr.bf16.mxu0 %v689
  %2635 = vmatmul.mubr.bf16.gmra.mrb[0].mxu0 %v688
  %v2636 = vpop.f32.mrb[0].mxu0
  %v2637 = vadd.f32 %v2597, %v2636
  %v2638 = vpop.f32.mrb[0].mxu0
  %v2639 = vpop.f32.mrb[0].mxu0
  %v2640 = vpop.f32.mrb[0].mxu0
  %2641 = vdwg.mxu0
  %2642 = vmatprep.subr.bf16.mxu0 0
  %2643 = vmatpush1.bf16.msra.mxu0 %v1970
  %2644 = vmatprep.subr.bf16.mxu0 0
  %2645 = vmatpush1.bf16.msra.mxu0 %v1971
  %2646 = vmatprep.subr.bf16.mxu0 0
  %2647 = vmatpush1.bf16.msra.mxu0 %v1972
  %2648 = vmatprep.subr.bf16.mxu0 0
  %2649 = vmatpush1.bf16.msra.mxu0 %v1973
  %2650 = vmatprep.subr.bf16.mxu0 0
  %2651 = vmatpush1.bf16.msra.mxu0 %v1974
  %2652 = vmatprep.subr.bf16.mxu0 0
  %2653 = vmatpush1.bf16.msra.mxu0 %v1975
  %2654 = vmatprep.subr.bf16.mxu0 0
  %2655 = vmatpush1.bf16.msra.mxu0 %v1976
  %2656 = vmatprep.subr.bf16.mxu0 0
  %2657 = vmatpush1.bf16.msra.mxu0 %v1977
  %2658 = vmatprep.subr.bf16.mxu0 0
  %2659 = vmatpush1.bf16.msra.mxu0 %v1978
  %2660 = vmatprep.subr.bf16.mxu0 0
  %2661 = vmatpush1.bf16.msra.mxu0 %v1979
  %2662 = vmatprep.subr.bf16.mxu0 0
  %2663 = vmatpush1.bf16.msra.mxu0 %v1980
  %2664 = vmatprep.subr.bf16.mxu0 0
  %2665 = vmatpush1.bf16.msra.mxu0 %v1981
  %2666 = vmatprep.subr.bf16.mxu0 0
  %2667 = vmatpush1.bf16.msra.mxu0 %v1982
  %2668 = vmatprep.subr.bf16.mxu0 0
  %2669 = vmatpush1.bf16.msra.mxu0 %v1983
  %2670 = vmatprep.subr.bf16.mxu0 0
  %2671 = vmatpush1.bf16.msra.mxu0 %v1984
  %2672 = vmatprep.subr.bf16.mxu0 0
  %2673 = vmatpush1.bf16.msra.mxu0 %v1985
  %2674 = vmatprep.mubr.bf16.mxu0 %v691
  %2675 = vmatmul.mubr.bf16.gmra.mrb[0].mxu0 %v690
  %v2676 = vpop.f32.mrb[0].mxu0
  %v2677 = vadd.f32 %v2637, %v2676
  %v2678 = vpop.f32.mrb[0].mxu0
  %v2679 = vpop.f32.mrb[0].mxu0
  %v2680 = vpop.f32.mrb[0].mxu0
  %2681 = vdwg.mxu0
  %2682 = vmatprep.subr.bf16.mxu0 0
  %2683 = vmatpush1.bf16.msra.mxu0 %v1986
  %2684 = vmatprep.subr.bf16.mxu0 0
  %2685 = vmatpush1.bf16.msra.mxu0 %v1987
  %2686 = vmatprep.subr.bf16.mxu0 0
  %2687 = vmatpush1.bf16.msra.mxu0 %v1988
  %2688 = vmatprep.subr.bf16.mxu0 0
  %2689 = vmatpush1.bf16.msra.mxu0 %v1989
  %2690 = vmatprep.subr.bf16.mxu0 0
  %2691 = vmatpush1.bf16.msra.mxu0 %v1990
  %2692 = vmatprep.subr.bf16.mxu0 0
  %2693 = vmatpush1.bf16.msra.mxu0 %v1991
  %2694 = vmatprep.subr.bf16.mxu0 0
  %2695 = vmatpush1.bf16.msra.mxu0 %v1992
  %2696 = vmatprep.subr.bf16.mxu0 0
  %2697 = vmatpush1.bf16.msra.mxu0 %v1993
  %2698 = vmatprep.subr.bf16.mxu0 0
  %2699 = vmatpush1.bf16.msra.mxu0 %v1994
  %2700 = vmatprep.subr.bf16.mxu0 0
  %2701 = vmatpush1.bf16.msra.mxu0 %v1995
  %2702 = vmatprep.subr.bf16.mxu0 0
  %2703 = vmatpush1.bf16.msra.mxu0 %v1996
  %2704 = vmatprep.subr.bf16.mxu0 0
  %2705 = vmatpush1.bf16.msra.mxu0 %v1997
  %2706 = vmatprep.subr.bf16.mxu0 0
  %2707 = vmatpush1.bf16.msra.mxu0 %v1998
  %2708 = vmatprep.subr.bf16.mxu0 0
  %2709 = vmatpush1.bf16.msra.mxu0 %v1999
  %2710 = vmatprep.subr.bf16.mxu0 0
  %2711 = vmatpush1.bf16.msra.mxu0 %v2000
  %2712 = vmatprep.subr.bf16.mxu0 0
  %2713 = vmatpush1.bf16.msra.mxu0 %v2001
  %2714 = vmatprep.mubr.bf16.mxu0 %v693
  %2715 = vmatmul.mubr.bf16.gmra.mrb[0].mxu0 %v692
  %v2716 = vpop.f32.mrb[0].mxu0
  %v2717 = vadd.f32 %v2677, %v2716
  %v2718 = vpop.f32.mrb[0].mxu0
  %v2719 = vpop.f32.mrb[0].mxu0
  %v2720 = vpop.f32.mrb[0].mxu0
  %2721 = vdwg.mxu0
  %2722 = vmatprep.subr.bf16.mxu0 0
  %2723 = vmatpush1.bf16.msra.mxu0 %v2002
  %2724 = vmatprep.subr.bf16.mxu0 0
  %2725 = vmatpush1.bf16.msra.mxu0 %v2003
  %2726 = vmatprep.subr.bf16.mxu0 0
  %2727 = vmatpush1.bf16.msra.mxu0 %v2004
  %2728 = vmatprep.subr.bf16.mxu0 0
  %2729 = vmatpush1.bf16.msra.mxu0 %v2005
  %2730 = vmatprep.subr.bf16.mxu0 0
  %2731 = vmatpush1.bf16.msra.mxu0 %v2006
  %2732 = vmatprep.subr.bf16.mxu0 0
  %2733 = vmatpush1.bf16.msra.mxu0 %v2007
  %2734 = vmatprep.subr.bf16.mxu0 0
  %2735 = vmatpush1.bf16.msra.mxu0 %v2008
  %2736 = vmatprep.subr.bf16.mxu0 0
  %2737 = vmatpush1.bf16.msra.mxu0 %v2009
  %2738 = vmatprep.subr.bf16.mxu0 0
  %2739 = vmatpush1.bf16.msra.mxu0 %v2010
  %2740 = vmatprep.subr.bf16.mxu0 0
  %2741 = vmatpush1.bf16.msra.mxu0 %v2011
  %2742 = vmatprep.subr.bf16.mxu0 0
  %2743 = vmatpush1.bf16.msra.mxu0 %v2012
  %2744 = vmatprep.subr.bf16.mxu0 0
  %2745 = vmatpush1.bf16.msra.mxu0 %v2013
  %2746 = vmatprep.subr.bf16.mxu0 0
  %2747 = vmatpush1.bf16.msra.mxu0 %v2014
  %2748 = vmatprep.subr.bf16.mxu0 0
  %2749 = vmatpush1.bf16.msra.mxu0 %v2015
  %2750 = vmatprep.subr.bf16.mxu0 0
  %2751 = vmatpush1.bf16.msra.mxu0 %v2016
  %2752 = vmatprep.subr.bf16.mxu0 0
  %2753 = vmatpush1.bf16.msra.mxu0 %v2017
  %2754 = vmatprep.mubr.bf16.mxu0 %v695
  %2755 = vmatmul.mubr.bf16.gmra.mrb[0].mxu0 %v694
  %v2756 = vpop.f32.mrb[0].mxu0
  %v2757 = vadd.f32 %v2717, %v2756
  %v2758 = vpop.f32.mrb[0].mxu0
  %v2759 = vpop.f32.mrb[0].mxu0
  %v2760 = vpop.f32.mrb[0].mxu0
  %2761 = vdwg.mxu0
  %2762 = vmatprep.subr.bf16.mxu0 0
  %2763 = vmatpush1.bf16.msra.mxu0 %v2018
  %2764 = vmatprep.subr.bf16.mxu0 0
  %2765 = vmatpush1.bf16.msra.mxu0 %v2019
  %2766 = vmatprep.subr.bf16.mxu0 0
  %2767 = vmatpush1.bf16.msra.mxu0 %v2020
  %2768 = vmatprep.subr.bf16.mxu0 0
  %2769 = vmatpush1.bf16.msra.mxu0 %v2021
  %2770 = vmatprep.subr.bf16.mxu0 0
  %2771 = vmatpush1.bf16.msra.mxu0 %v2022
  %2772 = vmatprep.subr.bf16.mxu0 0
  %2773 = vmatpush1.bf16.msra.mxu0 %v2023
  %2774 = vmatprep.subr.bf16.mxu0 0
  %2775 = vmatpush1.bf16.msra.mxu0 %v2024
  %2776 = vmatprep.subr.bf16.mxu0 0
  %2777 = vmatpush1.bf16.msra.mxu0 %v2025
  %2778 = vmatprep.subr.bf16.mxu0 0
  %2779 = vmatpush1.bf16.msra.mxu0 %v2026
  %2780 = vmatprep.subr.bf16.mxu0 0
  %2781 = vmatpush1.bf16.msra.mxu0 %v2027
  %2782 = vmatprep.subr.bf16.mxu0 0
  %2783 = vmatpush1.bf16.msra.mxu0 %v2028
  %2784 = vmatprep.subr.bf16.mxu0 0
  %2785 = vmatpush1.bf16.msra.mxu0 %v2029
  %2786 = vmatprep.subr.bf16.mxu0 0
  %2787 = vmatpush1.bf16.msra.mxu0 %v2030
  %2788 = vmatprep.subr.bf16.mxu0 0
  %2789 = vmatpush1.bf16.msra.mxu0 %v2031
  %2790 = vmatprep.subr.bf16.mxu0 0
  %2791 = vmatpush1.bf16.msra.mxu0 %v2032
  %2792 = vmatprep.subr.bf16.mxu0 0
  %2793 = vmatpush1.bf16.msra.mxu0 %v2033
  %2794 = vmatprep.mubr.bf16.mxu0 %v697
  %2795 = vmatmul.mubr.bf16.gmra.mrb[0].mxu0 %v696
  %v2796 = vpop.f32.mrb[0].mxu0
  %v2797 = vadd.f32 %v2757, %v2796
  %v2798 = vpop.f32.mrb[0].mxu0
  %v2799 = vpop.f32.mrb[0].mxu0
  %v2800 = vpop.f32.mrb[0].mxu0
  %2801 = vdwg.mxu0
  %2802 = vmatprep.subr.bf16.mxu0 0
  %2803 = vmatpush1.bf16.msra.mxu0 %v2034
  %2804 = vmatprep.subr.bf16.mxu0 0
  %2805 = vmatpush1.bf16.msra.mxu0 %v2035
  %2806 = vmatprep.subr.bf16.mxu0 0
  %2807 = vmatpush1.bf16.msra.mxu0 %v2036
  %2808 = vmatprep.subr.bf16.mxu0 0
  %2809 = vmatpush1.bf16.msra.mxu0 %v2037
  %2810 = vmatprep.subr.bf16.mxu0 0
  %2811 = vmatpush1.bf16.msra.mxu0 %v2038
  %2812 = vmatprep.subr.bf16.mxu0 0
  %2813 = vmatpush1.bf16.msra.mxu0 %v2039
  %2814 = vmatprep.subr.bf16.mxu0 0
  %2815 = vmatpush1.bf16.msra.mxu0 %v2040
  %2816 = vmatprep.subr.bf16.mxu0 0
  %2817 = vmatpush1.bf16.msra.mxu0 %v2041
  %2818 = vmatprep.subr.bf16.mxu0 0
  %2819 = vmatpush1.bf16.msra.mxu0 %v2042
  %2820 = vmatprep.subr.bf16.mxu0 0
  %2821 = vmatpush1.bf16.msra.mxu0 %v2043
  %2822 = vmatprep.subr.bf16.mxu0 0
  %2823 = vmatpush1.bf16.msra.mxu0 %v2044
  %2824 = vmatprep.subr.bf16.mxu0 0
  %2825 = vmatpush1.bf16.msra.mxu0 %v2045
  %2826 = vmatprep.subr.bf16.mxu0 0
  %2827 = vmatpush1.bf16.msra.mxu0 %v2046
  %2828 = vmatprep.subr.bf16.mxu0 0
  %2829 = vmatpush1.bf16.msra.mxu0 %v2047
  %2830 = vmatprep.subr.bf16.mxu0 0
  %2831 = vmatpush1.bf16.msra.mxu0 %v2048
  %2832 = vmatprep.subr.bf16.mxu0 0
  %2833 = vmatpush1.bf16.msra.mxu0 %v2049
  %2834 = vmatprep.mubr.bf16.mxu0 %v699
  %2835 = vmatmul.mubr.bf16.gmra.mrb[0].mxu0 %v698
  %v2836 = vpop.f32.mrb[0].mxu0
  %v2837 = vadd.f32 %v2797, %v2836
  %v2838 = vpop.f32.mrb[0].mxu0
  %v2839 = vpop.f32.mrb[0].mxu0
  %v2840 = vpop.f32.mrb[0].mxu0
  %2841 = vdwg.mxu0
  %2842 = vmatprep.subr.bf16.mxu0 0
  %2843 = vmatpush1.bf16.msra.mxu0 %v2050
  %2844 = vmatprep.subr.bf16.mxu0 0
  %2845 = vmatpush1.bf16.msra.mxu0 %v2051
  %2846 = vmatprep.subr.bf16.mxu0 0
  %2847 = vmatpush1.bf16.msra.mxu0 %v2052
  %2848 = vmatprep.subr.bf16.mxu0 0
  %2849 = vmatpush1.bf16.msra.mxu0 %v2053
  %2850 = vmatprep.subr.bf16.mxu0 0
  %2851 = vmatpush1.bf16.msra.mxu0 %v2054
  %2852 = vmatprep.subr.bf16.mxu0 0
  %2853 = vmatpush1.bf16.msra.mxu0 %v2055
  %2854 = vmatprep.subr.bf16.mxu0 0
  %2855 = vmatpush1.bf16.msra.mxu0 %v2056
  %2856 = vmatprep.subr.bf16.mxu0 0
  %2857 = vmatpush1.bf16.msra.mxu0 %v2057
  %2858 = vmatprep.subr.bf16.mxu0 0
  %2859 = vmatpush1.bf16.msra.mxu0 %v2058
  %2860 = vmatprep.subr.bf16.mxu0 0
  %2861 = vmatpush1.bf16.msra.mxu0 %v2059
  %2862 = vmatprep.subr.bf16.mxu0 0
  %2863 = vmatpush1.bf16.msra.mxu0 %v2060
  %2864 = vmatprep.subr.bf16.mxu0 0
  %2865 = vmatpush1.bf16.msra.mxu0 %v2061
  %2866 = vmatprep.subr.bf16.mxu0 0
  %2867 = vmatpush1.bf16.msra.mxu0 %v2062
  %2868 = vmatprep.subr.bf16.mxu0 0
  %2869 = vmatpush1.bf16.msra.mxu0 %v2063
  %2870 = vmatprep.subr.bf16.mxu0 0
  %2871 = vmatpush1.bf16.msra.mxu0 %v2064
  %2872 = vmatprep.subr.bf16.mxu0 0
  %2873 = vmatpush1.bf16.msra.mxu0 %v2065
  %2874 = vmatprep.mubr.bf16.mxu0 %v701
  %2875 = vmatmul.mubr.bf16.gmra.mrb[0].mxu0 %v700
  %v2876 = vpop.f32.mrb[0].mxu0
  %v2877 = vadd.f32 %v2837, %v2876
  %v2878 = vpop.f32.mrb[0].mxu0
  %v2879 = vpop.f32.mrb[0].mxu0
  %v2880 = vpop.f32.mrb[0].mxu0
  %2881 = vdwg.mxu0
  %2882 = vmatprep.subr.bf16.mxu0 0
  %2883 = vmatpush1.bf16.msra.mxu0 %v2066
  %2884 = vmatprep.subr.bf16.mxu0 0
  %2885 = vmatpush1.bf16.msra.mxu0 %v2067
  %2886 = vmatprep.subr.bf16.mxu0 0
  %2887 = vmatpush1.bf16.msra.mxu0 %v2068
  %2888 = vmatprep.subr.bf16.mxu0 0
  %2889 = vmatpush1.bf16.msra.mxu0 %v2069
  %2890 = vmatprep.subr.bf16.mxu0 0
  %2891 = vmatpush1.bf16.msra.mxu0 %v2070
  %2892 = vmatprep.subr.bf16.mxu0 0
  %2893 = vmatpush1.bf16.msra.mxu0 %v2071
  %2894 = vmatprep.subr.bf16.mxu0 0
  %2895 = vmatpush1.bf16.msra.mxu0 %v2072
  %2896 = vmatprep.subr.bf16.mxu0 0
  %2897 = vmatpush1.bf16.msra.mxu0 %v2073
  %2898 = vmatprep.subr.bf16.mxu0 0
  %2899 = vmatpush1.bf16.msra.mxu0 %v2074
  %2900 = vmatprep.subr.bf16.mxu0 0
  %2901 = vmatpush1.bf16.msra.mxu0 %v2075
  %2902 = vmatprep.subr.bf16.mxu0 0
  %2903 = vmatpush1.bf16.msra.mxu0 %v2076
  %2904 = vmatprep.subr.bf16.mxu0 0
  %2905 = vmatpush1.bf16.msra.mxu0 %v2077
  %2906 = vmatprep.subr.bf16.mxu0 0
  %2907 = vmatpush1.bf16.msra.mxu0 %v2078
  %2908 = vmatprep.subr.bf16.mxu0 0
  %2909 = vmatpush1.bf16.msra.mxu0 %v2079
  %2910 = vmatprep.subr.bf16.mxu0 0
  %2911 = vmatpush1.bf16.msra.mxu0 %v2080
  %2912 = vmatprep.subr.bf16.mxu0 0
  %2913 = vmatpush1.bf16.msra.mxu0 %v2081
  %2914 = vmatprep.mubr.bf16.mxu0 %v703
  %2915 = vmatmul.mubr.bf16.gmra.mrb[0].mxu0 %v702
  %v2916 = vpop.f32.mrb[0].mxu0
  %v2917 = vadd.f32 %v2877, %v2916
  %v2918 = vpop.f32.mrb[0].mxu0
  %v2919 = vpop.f32.mrb[0].mxu0
  %v2920 = vpop.f32.mrb[0].mxu0
  %2921 = vdwg.mxu0
  %2922 = vmatprep.subr.bf16.mxu0 0
  %2923 = vmatpush1.bf16.msra.mxu0 %v2082
  %2924 = vmatprep.subr.bf16.mxu0 0
  %2925 = vmatpush1.bf16.msra.mxu0 %v2083
  %2926 = vmatprep.subr.bf16.mxu0 0
  %2927 = vmatpush1.bf16.msra.mxu0 %v2084
  %2928 = vmatprep.subr.bf16.mxu0 0
  %2929 = vmatpush1.bf16.msra.mxu0 %v2085
  %2930 = vmatprep.subr.bf16.mxu0 0
  %2931 = vmatpush1.bf16.msra.mxu0 %v2086
  %2932 = vmatprep.subr.bf16.mxu0 0
  %2933 = vmatpush1.bf16.msra.mxu0 %v2087
  %2934 = vmatprep.subr.bf16.mxu0 0
  %2935 = vmatpush1.bf16.msra.mxu0 %v2088
  %2936 = vmatprep.subr.bf16.mxu0 0
  %2937 = vmatpush1.bf16.msra.mxu0 %v2089
  %2938 = vmatprep.subr.bf16.mxu0 0
  %2939 = vmatpush1.bf16.msra.mxu0 %v2090
  %2940 = vmatprep.subr.bf16.mxu0 0
  %2941 = vmatpush1.bf16.msra.mxu0 %v2091
  %2942 = vmatprep.subr.bf16.mxu0 0
  %2943 = vmatpush1.bf16.msra.mxu0 %v2092
  %2944 = vmatprep.subr.bf16.mxu0 0
  %2945 = vmatpush1.bf16.msra.mxu0 %v2093
  %2946 = vmatprep.subr.bf16.mxu0 0
  %2947 = vmatpush1.bf16.msra.mxu0 %v2094
  %2948 = vmatprep.subr.bf16.mxu0 0
  %2949 = vmatpush1.bf16.msra.mxu0 %v2095
  %2950 = vmatprep.subr.bf16.mxu0 0
  %2951 = vmatpush1.bf16.msra.mxu0 %v2096
  %2952 = vmatprep.subr.bf16.mxu0 0
  %2953 = vmatpush1.bf16.msra.mxu0 %v2097
  %2954 = vmatprep.mubr.bf16.mxu0 %v705
  %2955 = vmatmul.mubr.bf16.gmra.mrb[0].mxu0 %v704
  %v2956 = vpop.f32.mrb[0].mxu0
  %v2957 = vadd.f32 %v2917, %v2956
  %v2958 = vpop.f32.mrb[0].mxu0
  %v2959 = vpop.f32.mrb[0].mxu0
  %v2960 = vpop.f32.mrb[0].mxu0
  %2961 = vdwg.mxu0
  %2962 = vmatprep.subr.bf16.mxu0 0
  %2963 = vmatpush1.bf16.msra.mxu0 %v2098
  %2964 = vmatprep.subr.bf16.mxu0 0
  %2965 = vmatpush1.bf16.msra.mxu0 %v2099
  %2966 = vmatprep.subr.bf16.mxu0 0
  %2967 = vmatpush1.bf16.msra.mxu0 %v2100
  %2968 = vmatprep.subr.bf16.mxu0 0
  %2969 = vmatpush1.bf16.msra.mxu0 %v2101
  %2970 = vmatprep.subr.bf16.mxu0 0
  %2971 = vmatpush1.bf16.msra.mxu0 %v2102
  %2972 = vmatprep.subr.bf16.mxu0 0
  %2973 = vmatpush1.bf16.msra.mxu0 %v2103
  %2974 = vmatprep.subr.bf16.mxu0 0
  %2975 = vmatpush1.bf16.msra.mxu0 %v2104
  %2976 = vmatprep.subr.bf16.mxu0 0
  %2977 = vmatpush1.bf16.msra.mxu0 %v2105
  %2978 = vmatprep.subr.bf16.mxu0 0
  %2979 = vmatpush1.bf16.msra.mxu0 %v2106
  %2980 = vmatprep.subr.bf16.mxu0 0
  %2981 = vmatpush1.bf16.msra.mxu0 %v2107
  %2982 = vmatprep.subr.bf16.mxu0 0
  %2983 = vmatpush1.bf16.msra.mxu0 %v2108
  %2984 = vmatprep.subr.bf16.mxu0 0
  %2985 = vmatpush1.bf16.msra.mxu0 %v2109
  %2986 = vmatprep.subr.bf16.mxu0 0
  %2987 = vmatpush1.bf16.msra.mxu0 %v2110
  %2988 = vmatprep.subr.bf16.mxu0 0
  %2989 = vmatpush1.bf16.msra.mxu0 %v2111
  %2990 = vmatprep.subr.bf16.mxu0 0
  %2991 = vmatpush1.bf16.msra.mxu0 %v2112
  %2992 = vmatprep.subr.bf16.mxu0 0
  %2993 = vmatpush1.bf16.msra.mxu0 %v2113
  %2994 = vmatprep.mubr.bf16.mxu0 %v707
  %2995 = vmatmul.mubr.bf16.gmra.mrb[0].mxu0 %v706
  %v2996 = vpop.f32.mrb[0].mxu0
  %v2997 = vadd.f32 %v2957, %v2996
  %v2998 = vpop.f32.mrb[0].mxu0
  %v2999 = vpop.f32.mrb[0].mxu0
  %v3000 = vpop.f32.mrb[0].mxu0
  %3001 = vdwg.mxu0
  %3002 = vmatprep.subr.bf16.mxu0 0
  %3003 = vmatpush1.bf16.msra.mxu0 %v2114
  %3004 = vmatprep.subr.bf16.mxu0 0
  %3005 = vmatpush1.bf16.msra.mxu0 %v2115
  %3006 = vmatprep.subr.bf16.mxu0 0
  %3007 = vmatpush1.bf16.msra.mxu0 %v2116
  %3008 = vmatprep.subr.bf16.mxu0 0
  %3009 = vmatpush1.bf16.msra.mxu0 %v2117
  %3010 = vmatprep.subr.bf16.mxu0 0
  %3011 = vmatpush1.bf16.msra.mxu0 %v2118
  %3012 = vmatprep.subr.bf16.mxu0 0
  %3013 = vmatpush1.bf16.msra.mxu0 %v2119
  %3014 = vmatprep.subr.bf16.mxu0 0
  %3015 = vmatpush1.bf16.msra.mxu0 %v2120
  %3016 = vmatprep.subr.bf16.mxu0 0
  %3017 = vmatpush1.bf16.msra.mxu0 %v2121
  %3018 = vmatprep.subr.bf16.mxu0 0
  %3019 = vmatpush1.bf16.msra.mxu0 %v2122
  %3020 = vmatprep.subr.bf16.mxu0 0
  %3021 = vmatpush1.bf16.msra.mxu0 %v2123
  %3022 = vmatprep.subr.bf16.mxu0 0
  %3023 = vmatpush1.bf16.msra.mxu0 %v2124
  %3024 = vmatprep.subr.bf16.mxu0 0
  %3025 = vmatpush1.bf16.msra.mxu0 %v2125
  %3026 = vmatprep.subr.bf16.mxu0 0
  %3027 = vmatpush1.bf16.msra.mxu0 %v2126
  %3028 = vmatprep.subr.bf16.mxu0 0
  %3029 = vmatpush1.bf16.msra.mxu0 %v2127
  %3030 = vmatprep.subr.bf16.mxu0 0
  %3031 = vmatpush1.bf16.msra.mxu0 %v2128
  %3032 = vmatprep.subr.bf16.mxu0 0
  %3033 = vmatpush1.bf16.msra.mxu0 %v2129
  %3034 = vmatprep.mubr.bf16.mxu0 %v709
  %3035 = vmatmul.mubr.bf16.gmra.mrb[0].mxu0 %v708
  %v3036 = vpop.f32.mrb[0].mxu0
  %v3037 = vadd.f32 %v2997, %v3036
  %v3038 = vpop.f32.mrb[0].mxu0
  %v3039 = vpop.f32.mrb[0].mxu0
  %v3040 = vpop.f32.mrb[0].mxu0
  %3041 = vdwg.mxu0
  %3042 = vmatprep.subr.bf16.mxu0 0
  %3043 = vmatpush1.bf16.msra.mxu0 %v2130
  %3044 = vmatprep.subr.bf16.mxu0 0
  %3045 = vmatpush1.bf16.msra.mxu0 %v2131
  %3046 = vmatprep.subr.bf16.mxu0 0
  %3047 = vmatpush1.bf16.msra.mxu0 %v2132
  %3048 = vmatprep.subr.bf16.mxu0 0
  %3049 = vmatpush1.bf16.msra.mxu0 %v2133
  %3050 = vmatprep.subr.bf16.mxu0 0
  %3051 = vmatpush1.bf16.msra.mxu0 %v2134
  %3052 = vmatprep.subr.bf16.mxu0 0
  %3053 = vmatpush1.bf16.msra.mxu0 %v2135
  %3054 = vmatprep.subr.bf16.mxu0 0
  %3055 = vmatpush1.bf16.msra.mxu0 %v2136
  %3056 = vmatprep.subr.bf16.mxu0 0
  %3057 = vmatpush1.bf16.msra.mxu0 %v2137
  %3058 = vmatprep.subr.bf16.mxu0 0
  %3059 = vmatpush1.bf16.msra.mxu0 %v2138
  %3060 = vmatprep.subr.bf16.mxu0 0
  %3061 = vmatpush1.bf16.msra.mxu0 %v2139
  %3062 = vmatprep.subr.bf16.mxu0 0
  %3063 = vmatpush1.bf16.msra.mxu0 %v2140
  %3064 = vmatprep.subr.bf16.mxu0 0
  %3065 = vmatpush1.bf16.msra.mxu0 %v2141
  %3066 = vmatprep.subr.bf16.mxu0 0
  %3067 = vmatpush1.bf16.msra.mxu0 %v2142
  %3068 = vmatprep.subr.bf16.mxu0 0
  %3069 = vmatpush1.bf16.msra.mxu0 %v2143
  %3070 = vmatprep.subr.bf16.mxu0 0
  %3071 = vmatpush1.bf16.msra.mxu0 %v2144
  %3072 = vmatprep.subr.bf16.mxu0 0
  %3073 = vmatpush1.bf16.msra.mxu0 %v2145
  %3074 = vmatprep.mubr.bf16.mxu0 %v711
  %3075 = vmatmul.mubr.bf16.gmra.mrb[0].mxu0 %v710
  %v3076 = vpop.f32.mrb[0].mxu0
  %v3077 = vadd.f32 %v3037, %v3076
  %v3078 = vpop.f32.mrb[0].mxu0
  %v3079 = vpop.f32.mrb[0].mxu0
  %v3080 = vpop.f32.mrb[0].mxu0
  %3081 = vdwg.mxu0
  %3082 = vmatprep.subr.bf16.mxu0 0
  %3083 = vmatpush1.bf16.msra.mxu0 %v2146
  %3084 = vmatprep.subr.bf16.mxu0 0
  %3085 = vmatpush1.bf16.msra.mxu0 %v2147
  %3086 = vmatprep.subr.bf16.mxu0 0
  %3087 = vmatpush1.bf16.msra.mxu0 %v2148
  %3088 = vmatprep.subr.bf16.mxu0 0
  %3089 = vmatpush1.bf16.msra.mxu0 %v2149
  %3090 = vmatprep.subr.bf16.mxu0 0
  %3091 = vmatpush1.bf16.msra.mxu0 %v2150
  %3092 = vmatprep.subr.bf16.mxu0 0
  %3093 = vmatpush1.bf16.msra.mxu0 %v2151
  %3094 = vmatprep.subr.bf16.mxu0 0
  %3095 = vmatpush1.bf16.msra.mxu0 %v2152
  %3096 = vmatprep.subr.bf16.mxu0 0
  %3097 = vmatpush1.bf16.msra.mxu0 %v2153
  %3098 = vmatprep.subr.bf16.mxu0 0
  %3099 = vmatpush1.bf16.msra.mxu0 %v2154
  %3100 = vmatprep.subr.bf16.mxu0 0
  %3101 = vmatpush1.bf16.msra.mxu0 %v2155
  %3102 = vmatprep.subr.bf16.mxu0 0
  %3103 = vmatpush1.bf16.msra.mxu0 %v2156
  %3104 = vmatprep.subr.bf16.mxu0 0
  %3105 = vmatpush1.bf16.msra.mxu0 %v2157
  %3106 = vmatprep.subr.bf16.mxu0 0
  %3107 = vmatpush1.bf16.msra.mxu0 %v2158
  %3108 = vmatprep.subr.bf16.mxu0 0
  %3109 = vmatpush1.bf16.msra.mxu0 %v2159
  %3110 = vmatprep.subr.bf16.mxu0 0
  %3111 = vmatpush1.bf16.msra.mxu0 %v2160
  %3112 = vmatprep.subr.bf16.mxu0 0
  %3113 = vmatpush1.bf16.msra.mxu0 %v2161
  %3114 = vmatprep.mubr.bf16.mxu0 %v713
  %3115 = vmatmul.mubr.bf16.gmra.mrb[0].mxu0 %v712
  %v3116 = vpop.f32.mrb[0].mxu0
  %v3117 = vadd.f32 %v3077, %v3116
  %v3118 = vpop.f32.mrb[0].mxu0
  %v3119 = vpop.f32.mrb[0].mxu0
  %v3120 = vpop.f32.mrb[0].mxu0
  %3121 = vdwg.mxu0
  %3122 = vmatprep.subr.bf16.mxu0 0
  %3123 = vmatpush1.bf16.msra.mxu0 %v2162
  %3124 = vmatprep.subr.bf16.mxu0 0
  %3125 = vmatpush1.bf16.msra.mxu0 %v2163
  %3126 = vmatprep.subr.bf16.mxu0 0
  %3127 = vmatpush1.bf16.msra.mxu0 %v2164
  %3128 = vmatprep.subr.bf16.mxu0 0
  %3129 = vmatpush1.bf16.msra.mxu0 %v2165
  %3130 = vmatprep.subr.bf16.mxu0 0
  %3131 = vmatpush1.bf16.msra.mxu0 %v2166
  %3132 = vmatprep.subr.bf16.mxu0 0
  %3133 = vmatpush1.bf16.msra.mxu0 %v2167
  %3134 = vmatprep.subr.bf16.mxu0 0
  %3135 = vmatpush1.bf16.msra.mxu0 %v2168
  %3136 = vmatprep.subr.bf16.mxu0 0
  %3137 = vmatpush1.bf16.msra.mxu0 %v2169
  %3138 = vmatprep.subr.bf16.mxu0 0
  %3139 = vmatpush1.bf16.msra.mxu0 %v2170
  %3140 = vmatprep.subr.bf16.mxu0 0
  %3141 = vmatpush1.bf16.msra.mxu0 %v2171
  %3142 = vmatprep.subr.bf16.mxu0 0
  %3143 = vmatpush1.bf16.msra.mxu0 %v2172
  %3144 = vmatprep.subr.bf16.mxu0 0
  %3145 = vmatpush1.bf16.msra.mxu0 %v2173
  %3146 = vmatprep.subr.bf16.mxu0 0
  %3147 = vmatpush1.bf16.msra.mxu0 %v2174
  %3148 = vmatprep.subr.bf16.mxu0 0
  %3149 = vmatpush1.bf16.msra.mxu0 %v2175
  %3150 = vmatprep.subr.bf16.mxu0 0
  %3151 = vmatpush1.bf16.msra.mxu0 %v2176
  %3152 = vmatprep.subr.bf16.mxu0 0
  %3153 = vmatpush1.bf16.msra.mxu0 %v2177
  %3154 = vmatprep.mubr.bf16.mxu0 %v715
  %3155 = vmatmul.mubr.bf16.gmra.mrb[0].mxu0 %v714
  %v3156 = vpop.f32.mrb[0].mxu0
  %v3157 = vadd.f32 %v3117, %v3156
  %v3158 = vpop.f32.mrb[0].mxu0
  %v3159 = vpop.f32.mrb[0].mxu0
  %v3160 = vpop.f32.mrb[0].mxu0
  %3161 = vdwg.mxu0
  %3162 = vmatprep.subr.bf16.mxu0 0
  %3163 = vmatpush1.bf16.msra.mxu0 %v2178
  %3164 = vmatprep.subr.bf16.mxu0 0
  %3165 = vmatpush1.bf16.msra.mxu0 %v2179
  %3166 = vmatprep.subr.bf16.mxu0 0
  %3167 = vmatpush1.bf16.msra.mxu0 %v2180
  %3168 = vmatprep.subr.bf16.mxu0 0
  %3169 = vmatpush1.bf16.msra.mxu0 %v2181
  %3170 = vmatprep.subr.bf16.mxu0 0
  %3171 = vmatpush1.bf16.msra.mxu0 %v2182
  %3172 = vmatprep.subr.bf16.mxu0 0
  %3173 = vmatpush1.bf16.msra.mxu0 %v2183
  %3174 = vmatprep.subr.bf16.mxu0 0
  %3175 = vmatpush1.bf16.msra.mxu0 %v2184
  %3176 = vmatprep.subr.bf16.mxu0 0
  %3177 = vmatpush1.bf16.msra.mxu0 %v2185
  %3178 = vmatprep.subr.bf16.mxu0 0
  %3179 = vmatpush1.bf16.msra.mxu0 %v2186
  %3180 = vmatprep.subr.bf16.mxu0 0
  %3181 = vmatpush1.bf16.msra.mxu0 %v2187
  %3182 = vmatprep.subr.bf16.mxu0 0
  %3183 = vmatpush1.bf16.msra.mxu0 %v2188
  %3184 = vmatprep.subr.bf16.mxu0 0
  %3185 = vmatpush1.bf16.msra.mxu0 %v2189
  %3186 = vmatprep.subr.bf16.mxu0 0
  %3187 = vmatpush1.bf16.msra.mxu0 %v2190
  %3188 = vmatprep.subr.bf16.mxu0 0
  %3189 = vmatpush1.bf16.msra.mxu0 %v2191
  %3190 = vmatprep.subr.bf16.mxu0 0
  %3191 = vmatpush1.bf16.msra.mxu0 %v2192
  %3192 = vmatprep.subr.bf16.mxu0 0
  %3193 = vmatpush1.bf16.msra.mxu0 %v2193
  %3194 = vmatprep.mubr.bf16.mxu0 %v717
  %3195 = vmatmul.mubr.bf16.gmra.mrb[0].mxu0 %v716
  %v3196 = vpop.f32.mrb[0].mxu0
  %v3197 = vadd.f32 %v3157, %v3196
  %v3198 = vpop.f32.mrb[0].mxu0
  %v3199 = vpop.f32.mrb[0].mxu0
  %v3200 = vpop.f32.mrb[0].mxu0
  %3201 = vdwg.mxu0
  %v3202 = vpack.c.bf16 %v3197, %v3197
  %v3203 = vld [vmem:[%s4] sm:$0xff]
  %v3204 = vld [vmem:[%s4 + $0x8] sm:$0xff]
  %v3205 = vld [vmem:[%s4 + $0x10] sm:$0xff]
  %v3206 = vld [vmem:[%s4 + $0x18] sm:$0xff]
  %v3207 = vld [vmem:[%s4 + $0x20] sm:$0xff]
  %v3208 = vld [vmem:[%s4 + $0x28] sm:$0xff]
  %v3209 = vld [vmem:[%s4 + $0x30] sm:$0xff]
  %v3210 = vld [vmem:[%s4 + $0x38] sm:$0xff]
  %v3211 = vld [vmem:[%s4 + $0x40] sm:$0xff]
  %v3212 = vld [vmem:[%s4 + $0x48] sm:$0xff]
  %v3213 = vld [vmem:[%s4 + $0x50] sm:$0xff]
  %v3214 = vld [vmem:[%s4 + $0x58] sm:$0xff]
  %v3215 = vld [vmem:[%s4 + $0x60] sm:$0xff]
  %v3216 = vld [vmem:[%s4 + $0x68] sm:$0xff]
  %v3217 = vld [vmem:[%s4 + $0x70] sm:$0xff]
  %v3218 = vld [vmem:[%s4 + $0x78] sm:$0xff]
  %v3219 = vld [vmem:[%s4 + $0x80] sm:$0xff]
  %v3220 = vld [vmem:[%s4 + $0x88] sm:$0xff]
  %v3221 = vld [vmem:[%s4 + $0x90] sm:$0xff]
  %v3222 = vld [vmem:[%s4 + $0x98] sm:$0xff]
  %v3223 = vld [vmem:[%s4 + $0xa0] sm:$0xff]
  %v3224 = vld [vmem:[%s4 + $0xa8] sm:$0xff]
  %v3225 = vld [vmem:[%s4 + $0xb0] sm:$0xff]
  %v3226 = vld [vmem:[%s4 + $0xb8] sm:$0xff]
  %v3227 = vld [vmem:[%s4 + $0xc0] sm:$0xff]
  %v3228 = vld [vmem:[%s4 + $0xc8] sm:$0xff]
  %v3229 = vld [vmem:[%s4 + $0xd0] sm:$0xff]
  %v3230 = vld [vmem:[%s4 + $0xd8] sm:$0xff]
  %v3231 = vld [vmem:[%s4 + $0xe0] sm:$0xff]
  %v3232 = vld [vmem:[%s4 + $0xe8] sm:$0xff]
  %v3233 = vld [vmem:[%s4 + $0xf0] sm:$0xff]
  %v3234 = vld [vmem:[%s4 + $0xf8] sm:$0xff]
  %v3235 = vld [vmem:[%s4 + $0x100] sm:$0xff]
  %v3236 = vld [vmem:[%s4 + $0x108] sm:$0xff]
  %v3237 = vld [vmem:[%s4 + $0x110] sm:$0xff]
  %v3238 = vld [vmem:[%s4 + $0x118] sm:$0xff]
  %v3239 = vld [vmem:[%s4 + $0x120] sm:$0xff]
  %v3240 = vld [vmem:[%s4 + $0x128] sm:$0xff]
  %v3241 = vld [vmem:[%s4 + $0x130] sm:$0xff]
  %v3242 = vld [vmem:[%s4 + $0x138] sm:$0xff]
  %v3243 = vld [vmem:[%s4 + $0x140] sm:$0xff]
  %v3244 = vld [vmem:[%s4 + $0x148] sm:$0xff]
  %v3245 = vld [vmem:[%s4 + $0x150] sm:$0xff]
  %v3246 = vld [vmem:[%s4 + $0x158] sm:$0xff]
  %v3247 = vld [vmem:[%s4 + $0x160] sm:$0xff]
  %v3248 = vld [vmem:[%s4 + $0x168] sm:$0xff]
  %v3249 = vld [vmem:[%s4 + $0x170] sm:$0xff]
  %v3250 = vld [vmem:[%s4 + $0x178] sm:$0xff]
  %v3251 = vld [vmem:[%s4 + $0x180] sm:$0xff]
  %v3252 = vld [vmem:[%s4 + $0x188] sm:$0xff]
  %v3253 = vld [vmem:[%s4 + $0x190] sm:$0xff]
  %v3254 = vld [vmem:[%s4 + $0x198] sm:$0xff]
  %v3255 = vld [vmem:[%s4 + $0x1a0] sm:$0xff]
  %v3256 = vld [vmem:[%s4 + $0x1a8] sm:$0xff]
  %v3257 = vld [vmem:[%s4 + $0x1b0] sm:$0xff]
  %v3258 = vld [vmem:[%s4 + $0x1b8] sm:$0xff]
  %v3259 = vld [vmem:[%s4 + $0x1c0] sm:$0xff]
  %v3260 = vld [vmem:[%s4 + $0x1c8] sm:$0xff]
  %v3261 = vld [vmem:[%s4 + $0x1d0] sm:$0xff]
  %v3262 = vld [vmem:[%s4 + $0x1d8] sm:$0xff]
  %v3263 = vld [vmem:[%s4 + $0x1e0] sm:$0xff]
  %v3264 = vld [vmem:[%s4 + $0x1e8] sm:$0xff]
  %v3265 = vld [vmem:[%s4 + $0x1f0] sm:$0xff]
  %v3266 = vld [vmem:[%s4 + $0x1f8] sm:$0xff]
  %v3267 = vld [vmem:[%s1] sm:$0xff]
  %v3268 = vld [vmem:[%s5] sm:$0xff]
  %3270 = vset.pattern.permute.xlu0 0
  %3271 = vperm.xlu0 %3270, %v3267
  %v3272 = vpop.permute.xlu0 %3271
  %v3275 = vlaneseq
  %v3276 = vshrl.u32 %v3275, 7
  %v3277 = vsub.s32 0, %v3276
  %v3278 = vrot.slane %v3268, %v3277
  %v3279 = vlaneseq
  %v3280 = vshrl.u32 %v3279, 7
  %v3281 = vsub.s32 1, %v3280
  %v3282 = vrot.slane %v3268, %v3281
  %v3283 = vlaneseq
  %v3284 = vshrl.u32 %v3283, 7
  %v3285 = vsub.s32 2, %v3284
  %v3286 = vrot.slane %v3268, %v3285
  %v3287 = vlaneseq
  %v3288 = vshrl.u32 %v3287, 7
  %v3289 = vsub.s32 3, %v3288
  %v3290 = vrot.slane %v3268, %v3289
  %v3291 = vlaneseq
  %v3292 = vshrl.u32 %v3291, 7
  %v3293 = vsub.s32 4, %v3292
  %v3294 = vrot.slane %v3268, %v3293
  %v3295 = vlaneseq
  %v3296 = vshrl.u32 %v3295, 7
  %v3297 = vsub.s32 5, %v3296
  %v3298 = vrot.slane %v3268, %v3297
  %v3299 = vlaneseq
  %v3300 = vshrl.u32 %v3299, 7
  %v3301 = vsub.s32 6, %v3300
  %v3302 = vrot.slane %v3268, %v3301
  %v3303 = vlaneseq
  %v3304 = vshrl.u32 %v3303, 7
  %v3305 = vsub.s32 7, %v3304
  %v3306 = vrot.slane %v3268, %v3305
  %v3315 = vmul.f32 %v3272, %v3278
  %v3316 = vmul.f32 %v3272, %v3282
  %v3317 = vmul.f32 %v3272, %v3286
  %v3318 = vmul.f32 %v3272, %v3290
  %v3319 = vmul.f32 %v3272, %v3294
  %v3320 = vmul.f32 %v3272, %v3298
  %v3321 = vmul.f32 %v3272, %v3302
  %v3322 = vmul.f32 %v3272, %v3306
  %v3387 = vunpack.c.l.b16 %v3203
  %v3388 = vunpack.c.h.b16 %v3203
  %v3389 = vunpack.c.l.b16 %v3204
  %v3390 = vunpack.c.h.b16 %v3204
  %v3391 = vunpack.c.l.b16 %v3205
  %v3392 = vunpack.c.h.b16 %v3205
  %v3393 = vunpack.c.l.b16 %v3206
  %v3394 = vunpack.c.h.b16 %v3206
  %v3395 = vunpack.c.l.b16 %v3207
  %v3396 = vunpack.c.h.b16 %v3207
  %v3397 = vunpack.c.l.b16 %v3208
  %v3398 = vunpack.c.h.b16 %v3208
  %v3399 = vunpack.c.l.b16 %v3209
  %v3400 = vunpack.c.h.b16 %v3209
  %v3401 = vunpack.c.l.b16 %v3210
  %v3402 = vunpack.c.h.b16 %v3210
  %v3403 = vunpack.c.l.b16 %v3211
  %v3404 = vunpack.c.h.b16 %v3211
  %v3405 = vunpack.c.l.b16 %v3212
  %v3406 = vunpack.c.h.b16 %v3212
  %v3407 = vunpack.c.l.b16 %v3213
  %v3408 = vunpack.c.h.b16 %v3213
  %v3409 = vunpack.c.l.b16 %v3214
  %v3410 = vunpack.c.h.b16 %v3214
  %v3411 = vunpack.c.l.b16 %v3215
  %v3412 = vunpack.c.h.b16 %v3215
  %v3413 = vunpack.c.l.b16 %v3216
  %v3414 = vunpack.c.h.b16 %v3216
  %v3415 = vunpack.c.l.b16 %v3217
  %v3416 = vunpack.c.h.b16 %v3217
  %v3417 = vunpack.c.l.b16 %v3218
  %v3418 = vunpack.c.h.b16 %v3218
  %v3419 = vunpack.c.l.b16 %v3219
  %v3420 = vunpack.c.h.b16 %v3219
  %v3421 = vunpack.c.l.b16 %v3220
  %v3422 = vunpack.c.h.b16 %v3220
  %v3423 = vunpack.c.l.b16 %v3221
  %v3424 = vunpack.c.h.b16 %v3221
  %v3425 = vunpack.c.l.b16 %v3222
  %v3426 = vunpack.c.h.b16 %v3222
  %v3427 = vunpack.c.l.b16 %v3223
  %v3428 = vunpack.c.h.b16 %v3223
  %v3429 = vunpack.c.l.b16 %v3224
  %v3430 = vunpack.c.h.b16 %v3224
  %v3431 = vunpack.c.l.b16 %v3225
  %v3432 = vunpack.c.h.b16 %v3225
  %v3433 = vunpack.c.l.b16 %v3226
  %v3434 = vunpack.c.h.b16 %v3226
  %v3435 = vunpack.c.l.b16 %v3227
  %v3436 = vunpack.c.h.b16 %v3227
  %v3437 = vunpack.c.l.b16 %v3228
  %v3438 = vunpack.c.h.b16 %v3228
  %v3439 = vunpack.c.l.b16 %v3229
  %v3440 = vunpack.c.h.b16 %v3229
  %v3441 = vunpack.c.l.b16 %v3230
  %v3442 = vunpack.c.h.b16 %v3230
  %v3443 = vunpack.c.l.b16 %v3231
  %v3444 = vunpack.c.h.b16 %v3231
  %v3445 = vunpack.c.l.b16 %v3232
  %v3446 = vunpack.c.h.b16 %v3232
  %v3447 = vunpack.c.l.b16 %v3233
  %v3448 = vunpack.c.h.b16 %v3233
  %v3449 = vunpack.c.l.b16 %v3234
  %v3450 = vunpack.c.h.b16 %v3234
  %v3451 = vunpack.c.l.b16 %v3235
  %v3452 = vunpack.c.h.b16 %v3235
  %v3453 = vunpack.c.l.b16 %v3236
  %v3454 = vunpack.c.h.b16 %v3236
  %v3455 = vunpack.c.l.b16 %v3237
  %v3456 = vunpack.c.h.b16 %v3237
  %v3457 = vunpack.c.l.b16 %v3238
  %v3458 = vunpack.c.h.b16 %v3238
  %v3459 = vunpack.c.l.b16 %v3239
  %v3460 = vunpack.c.h.b16 %v3239
  %v3461 = vunpack.c.l.b16 %v3240
  %v3462 = vunpack.c.h.b16 %v3240
  %v3463 = vunpack.c.l.b16 %v3241
  %v3464 = vunpack.c.h.b16 %v3241
  %v3465 = vunpack.c.l.b16 %v3242
  %v3466 = vunpack.c.h.b16 %v3242
  %v3467 = vunpack.c.l.b16 %v3243
  %v3468 = vunpack.c.h.b16 %v3243
  %v3469 = vunpack.c.l.b16 %v3244
  %v3470 = vunpack.c.h.b16 %v3244
  %v3471 = vunpack.c.l.b16 %v3245
  %v3472 = vunpack.c.h.b16 %v3245
  %v3473 = vunpack.c.l.b16 %v3246
  %v3474 = vunpack.c.h.b16 %v3246
  %v3475 = vunpack.c.l.b16 %v3247
  %v3476 = vunpack.c.h.b16 %v3247
  %v3477 = vunpack.c.l.b16 %v3248
  %v3478 = vunpack.c.h.b16 %v3248
  %v3479 = vunpack.c.l.b16 %v3249
  %v3480 = vunpack.c.h.b16 %v3249
  %v3481 = vunpack.c.l.b16 %v3250
  %v3482 = vunpack.c.h.b16 %v3250
  %v3483 = vunpack.c.l.b16 %v3251
  %v3484 = vunpack.c.h.b16 %v3251
  %v3485 = vunpack.c.l.b16 %v3252
  %v3486 = vunpack.c.h.b16 %v3252
  %v3487 = vunpack.c.l.b16 %v3253
  %v3488 = vunpack.c.h.b16 %v3253
  %v3489 = vunpack.c.l.b16 %v3254
  %v3490 = vunpack.c.h.b16 %v3254
  %v3491 = vunpack.c.l.b16 %v3255
  %v3492 = vunpack.c.h.b16 %v3255
  %v3493 = vunpack.c.l.b16 %v3256
  %v3494 = vunpack.c.h.b16 %v3256
  %v3495 = vunpack.c.l.b16 %v3257
  %v3496 = vunpack.c.h.b16 %v3257
  %v3497 = vunpack.c.l.b16 %v3258
  %v3498 = vunpack.c.h.b16 %v3258
  %v3499 = vunpack.c.l.b16 %v3259
  %v3500 = vunpack.c.h.b16 %v3259
  %v3501 = vunpack.c.l.b16 %v3260
  %v3502 = vunpack.c.h.b16 %v3260
  %v3503 = vunpack.c.l.b16 %v3261
  %v3504 = vunpack.c.h.b16 %v3261
  %v3505 = vunpack.c.l.b16 %v3262
  %v3506 = vunpack.c.h.b16 %v3262
  %v3507 = vunpack.c.l.b16 %v3263
  %v3508 = vunpack.c.h.b16 %v3263
  %v3509 = vunpack.c.l.b16 %v3264
  %v3510 = vunpack.c.h.b16 %v3264
  %v3511 = vunpack.c.l.b16 %v3265
  %v3512 = vunpack.c.h.b16 %v3265
  %v3513 = vunpack.c.l.b16 %v3266
  %v3514 = vunpack.c.h.b16 %v3266
  %v3515 = vpack.c.b16 %v3395, %v3387
  %v3516 = vpack.c.b16 %v3396, %v3388
  %v3517 = vpack.c.b16 %v3397, %v3389
  %v3518 = vpack.c.b16 %v3398, %v3390
  %v3519 = vpack.c.b16 %v3399, %v3391
  %v3520 = vpack.c.b16 %v3400, %v3392
  %v3521 = vpack.c.b16 %v3401, %v3393
  %v3522 = vpack.c.b16 %v3402, %v3394
  %v3523 = vpack.c.b16 %v3411, %v3403
  %v3524 = vpack.c.b16 %v3412, %v3404
  %v3525 = vpack.c.b16 %v3413, %v3405
  %v3526 = vpack.c.b16 %v3414, %v3406
  %v3527 = vpack.c.b16 %v3415, %v3407
  %v3528 = vpack.c.b16 %v3416, %v3408
  %v3529 = vpack.c.b16 %v3417, %v3409
  %v3530 = vpack.c.b16 %v3418, %v3410
  %v3531 = vpack.c.b16 %v3427, %v3419
  %v3532 = vpack.c.b16 %v3428, %v3420
  %v3533 = vpack.c.b16 %v3429, %v3421
  %v3534 = vpack.c.b16 %v3430, %v3422
  %v3535 = vpack.c.b16 %v3431, %v3423
  %v3536 = vpack.c.b16 %v3432, %v3424
  %v3537 = vpack.c.b16 %v3433, %v3425
  %v3538 = vpack.c.b16 %v3434, %v3426
  %v3539 = vpack.c.b16 %v3443, %v3435
  %v3540 = vpack.c.b16 %v3444, %v3436
  %v3541 = vpack.c.b16 %v3445, %v3437
  %v3542 = vpack.c.b16 %v3446, %v3438
  %v3543 = vpack.c.b16 %v3447, %v3439
  %v3544 = vpack.c.b16 %v3448, %v3440
  %v3545 = vpack.c.b16 %v3449, %v3441
  %v3546 = vpack.c.b16 %v3450, %v3442
  %v3547 = vpack.c.b16 %v3459, %v3451
  %v3548 = vpack.c.b16 %v3460, %v3452
  %v3549 = vpack.c.b16 %v3461, %v3453
  %v3550 = vpack.c.b16 %v3462, %v3454
  %v3551 = vpack.c.b16 %v3463, %v3455
  %v3552 = vpack.c.b16 %v3464, %v3456
  %v3553 = vpack.c.b16 %v3465, %v3457
  %v3554 = vpack.c.b16 %v3466, %v3458
  %v3555 = vpack.c.b16 %v3475, %v3467
  %v3556 = vpack.c.b16 %v3476, %v3468
  %v3557 = vpack.c.b16 %v3477, %v3469
  %v3558 = vpack.c.b16 %v3478, %v3470
  %v3559 = vpack.c.b16 %v3479, %v3471
  %v3560 = vpack.c.b16 %v3480, %v3472
  %v3561 = vpack.c.b16 %v3481, %v3473
  %v3562 = vpack.c.b16 %v3482, %v3474
  %v3563 = vpack.c.b16 %v3491, %v3483
  %v3564 = vpack.c.b16 %v3492, %v3484
  %v3565 = vpack.c.b16 %v3493, %v3485
  %v3566 = vpack.c.b16 %v3494, %v3486
  %v3567 = vpack.c.b16 %v3495, %v3487
  %v3568 = vpack.c.b16 %v3496, %v3488
  %v3569 = vpack.c.b16 %v3497, %v3489
  %v3570 = vpack.c.b16 %v3498, %v3490
  %v3571 = vpack.c.b16 %v3507, %v3499
  %v3572 = vpack.c.b16 %v3508, %v3500
  %v3573 = vpack.c.b16 %v3509, %v3501
  %v3574 = vpack.c.b16 %v3510, %v3502
  %v3575 = vpack.c.b16 %v3511, %v3503
  %v3576 = vpack.c.b16 %v3512, %v3504
  %v3577 = vpack.c.b16 %v3513, %v3505
  %v3578 = vpack.c.b16 %v3514, %v3506
  %3643 = vmatprep.subr.bf16.mxu0 %v3516
  %3644 = vmatpush1.bf16.msra.mxu0 %v3515
  %3645 = vmatprep.subr.bf16.mxu0 %v3524
  %3646 = vmatpush1.bf16.msra.mxu0 %v3523
  %3647 = vmatprep.subr.bf16.mxu0 %v3532
  %3648 = vmatpush1.bf16.msra.mxu0 %v3531
  %3649 = vmatprep.subr.bf16.mxu0 %v3540
  %3650 = vmatpush1.bf16.msra.mxu0 %v3539
  %3651 = vmatprep.subr.bf16.mxu0 %v3548
  %3652 = vmatpush1.bf16.msra.mxu0 %v3547
  %3653 = vmatprep.subr.bf16.mxu0 %v3556
  %3654 = vmatpush1.bf16.msra.mxu0 %v3555
  %3655 = vmatprep.subr.bf16.mxu0 %v3564
  %3656 = vmatpush1.bf16.msra.mxu0 %v3563
  %3657 = vmatprep.subr.bf16.mxu0 %v3572
  %3658 = vmatpush1.bf16.msra.mxu0 %v3571
  %3659 = vmatprep.subr.bf16.mxu0 0
  %3660 = vmatpush1.bf16.msra.mxu0 0
  %3661 = vmatprep.subr.bf16.mxu0 0
  %3662 = vmatpush1.bf16.msra.mxu0 0
  %3663 = vmatprep.subr.bf16.mxu0 0
  %3664 = vmatpush1.bf16.msra.mxu0 0
  %3665 = vmatprep.subr.bf16.mxu0 0
  %3666 = vmatpush1.bf16.msra.mxu0 0
  %3667 = vmatprep.subr.bf16.mxu0 0
  %3668 = vmatpush1.bf16.msra.mxu0 0
  %3669 = vmatprep.subr.bf16.mxu0 0
  %3670 = vmatpush1.bf16.msra.mxu0 0
  %3671 = vmatprep.subr.bf16.mxu0 0
  %3672 = vmatpush1.bf16.msra.mxu0 0
  %3673 = vmatprep.subr.bf16.mxu0 0
  %3674 = vmatpush1.bf16.msra.mxu0 0
  %3675 = vmatprep.mubr.bf16.mxu0 0
  %3676 = vmatmul.mubr.bf16.gmra.mrb[0].mxu0 %v3202
  %v3677 = vpop.f32.mrb[0].mxu0
  %v3678 = vadd.f32 %v3315, %v3677
  %v3679 = vpop.f32.mrb[0].mxu0
  %v3680 = vadd.f32 %v3316, %v3679
  %v3681 = vpop.f32.mrb[0].mxu0
  %v3682 = vpop.f32.mrb[0].mxu0
  %3683 = vdwg.mxu0
  %3684 = vmatprep.subr.bf16.mxu0 %v3518
  %3685 = vmatpush1.bf16.msra.mxu0 %v3517
  %3686 = vmatprep.subr.bf16.mxu0 %v3526
  %3687 = vmatpush1.bf16.msra.mxu0 %v3525
  %3688 = vmatprep.subr.bf16.mxu0 %v3534
  %3689 = vmatpush1.bf16.msra.mxu0 %v3533
  %3690 = vmatprep.subr.bf16.mxu0 %v3542
  %3691 = vmatpush1.bf16.msra.mxu0 %v3541
  %3692 = vmatprep.subr.bf16.mxu0 %v3550
  %3693 = vmatpush1.bf16.msra.mxu0 %v3549
  %3694 = vmatprep.subr.bf16.mxu0 %v3558
  %3695 = vmatpush1.bf16.msra.mxu0 %v3557
  %3696 = vmatprep.subr.bf16.mxu0 %v3566
  %3697 = vmatpush1.bf16.msra.mxu0 %v3565
  %3698 = vmatprep.subr.bf16.mxu0 %v3574
  %3699 = vmatpush1.bf16.msra.mxu0 %v3573
  %3700 = vmatprep.subr.bf16.mxu0 0
  %3701 = vmatpush1.bf16.msra.mxu0 0
  %3702 = vmatprep.subr.bf16.mxu0 0
  %3703 = vmatpush1.bf16.msra.mxu0 0
  %3704 = vmatprep.subr.bf16.mxu0 0
  %3705 = vmatpush1.bf16.msra.mxu0 0
  %3706 = vmatprep.subr.bf16.mxu0 0
  %3707 = vmatpush1.bf16.msra.mxu0 0
  %3708 = vmatprep.subr.bf16.mxu0 0
  %3709 = vmatpush1.bf16.msra.mxu0 0
  %3710 = vmatprep.subr.bf16.mxu0 0
  %3711 = vmatpush1.bf16.msra.mxu0 0
  %3712 = vmatprep.subr.bf16.mxu0 0
  %3713 = vmatpush1.bf16.msra.mxu0 0
  %3714 = vmatprep.subr.bf16.mxu0 0
  %3715 = vmatpush1.bf16.msra.mxu0 0
  %3716 = vmatprep.mubr.bf16.mxu0 0
  %3717 = vmatmul.mubr.bf16.gmra.mrb[0].mxu0 %v3202
  %v3718 = vpop.f32.mrb[0].mxu0
  %v3719 = vadd.f32 %v3317, %v3718
  %v3720 = vpop.f32.mrb[0].mxu0
  %v3721 = vadd.f32 %v3318, %v3720
  %v3722 = vpop.f32.mrb[0].mxu0
  %v3723 = vpop.f32.mrb[0].mxu0
  %3724 = vdwg.mxu0
  %3725 = vmatprep.subr.bf16.mxu0 %v3520
  %3726 = vmatpush1.bf16.msra.mxu0 %v3519
  %3727 = vmatprep.subr.bf16.mxu0 %v3528
  %3728 = vmatpush1.bf16.msra.mxu0 %v3527
  %3729 = vmatprep.subr.bf16.mxu0 %v3536
  %3730 = vmatpush1.bf16.msra.mxu0 %v3535
  %3731 = vmatprep.subr.bf16.mxu0 %v3544
  %3732 = vmatpush1.bf16.msra.mxu0 %v3543
  %3733 = vmatprep.subr.bf16.mxu0 %v3552
  %3734 = vmatpush1.bf16.msra.mxu0 %v3551
  %3735 = vmatprep.subr.bf16.mxu0 %v3560
  %3736 = vmatpush1.bf16.msra.mxu0 %v3559
  %3737 = vmatprep.subr.bf16.mxu0 %v3568
  %3738 = vmatpush1.bf16.msra.mxu0 %v3567
  %3739 = vmatprep.subr.bf16.mxu0 %v3576
  %3740 = vmatpush1.bf16.msra.mxu0 %v3575
  %3741 = vmatprep.subr.bf16.mxu0 0
  %3742 = vmatpush1.bf16.msra.mxu0 0
  %3743 = vmatprep.subr.bf16.mxu0 0
  %3744 = vmatpush1.bf16.msra.mxu0 0
  %3745 = vmatprep.subr.bf16.mxu0 0
  %3746 = vmatpush1.bf16.msra.mxu0 0
  %3747 = vmatprep.subr.bf16.mxu0 0
  %3748 = vmatpush1.bf16.msra.mxu0 0
  %3749 = vmatprep.subr.bf16.mxu0 0
  %3750 = vmatpush1.bf16.msra.mxu0 0
  %3751 = vmatprep.subr.bf16.mxu0 0
  %3752 = vmatpush1.bf16.msra.mxu0 0
  %3753 = vmatprep.subr.bf16.mxu0 0
  %3754 = vmatpush1.bf16.msra.mxu0 0
  %3755 = vmatprep.subr.bf16.mxu0 0
  %3756 = vmatpush1.bf16.msra.mxu0 0
  %3757 = vmatprep.mubr.bf16.mxu0 0
  %3758 = vmatmul.mubr.bf16.gmra.mrb[0].mxu0 %v3202
  %v3759 = vpop.f32.mrb[0].mxu0
  %v3760 = vadd.f32 %v3319, %v3759
  %v3761 = vpop.f32.mrb[0].mxu0
  %v3762 = vadd.f32 %v3320, %v3761
  %v3763 = vpop.f32.mrb[0].mxu0
  %v3764 = vpop.f32.mrb[0].mxu0
  %3765 = vdwg.mxu0
  %3766 = vmatprep.subr.bf16.mxu0 %v3522
  %3767 = vmatpush1.bf16.msra.mxu0 %v3521
  %3768 = vmatprep.subr.bf16.mxu0 %v3530
  %3769 = vmatpush1.bf16.msra.mxu0 %v3529
  %3770 = vmatprep.subr.bf16.mxu0 %v3538
  %3771 = vmatpush1.bf16.msra.mxu0 %v3537
  %3772 = vmatprep.subr.bf16.mxu0 %v3546
  %3773 = vmatpush1.bf16.msra.mxu0 %v3545
  %3774 = vmatprep.subr.bf16.mxu0 %v3554
  %3775 = vmatpush1.bf16.msra.mxu0 %v3553
  %3776 = vmatprep.subr.bf16.mxu0 %v3562
  %3777 = vmatpush1.bf16.msra.mxu0 %v3561
  %3778 = vmatprep.subr.bf16.mxu0 %v3570
  %3779 = vmatpush1.bf16.msra.mxu0 %v3569
  %3780 = vmatprep.subr.bf16.mxu0 %v3578
  %3781 = vmatpush1.bf16.msra.mxu0 %v3577
  %3782 = vmatprep.subr.bf16.mxu0 0
  %3783 = vmatpush1.bf16.msra.mxu0 0
  %3784 = vmatprep.subr.bf16.mxu0 0
  %3785 = vmatpush1.bf16.msra.mxu0 0
  %3786 = vmatprep.subr.bf16.mxu0 0
  %3787 = vmatpush1.bf16.msra.mxu0 0
  %3788 = vmatprep.subr.bf16.mxu0 0
  %3789 = vmatpush1.bf16.msra.mxu0 0
  %3790 = vmatprep.subr.bf16.mxu0 0
  %3791 = vmatpush1.bf16.msra.mxu0 0
  %3792 = vmatprep.subr.bf16.mxu0 0
  %3793 = vmatpush1.bf16.msra.mxu0 0
  %3794 = vmatprep.subr.bf16.mxu0 0
  %3795 = vmatpush1.bf16.msra.mxu0 0
  %3796 = vmatprep.subr.bf16.mxu0 0
  %3797 = vmatpush1.bf16.msra.mxu0 0
  %3798 = vmatprep.mubr.bf16.mxu0 0
  %3799 = vmatmul.mubr.bf16.gmra.mrb[0].mxu0 %v3202
  %v3800 = vpop.f32.mrb[0].mxu0
  %v3801 = vadd.f32 %v3321, %v3800
  %v3802 = vpop.f32.mrb[0].mxu0
  %v3803 = vadd.f32 %v3322, %v3802
  %v3804 = vpop.f32.mrb[0].mxu0
  %v3805 = vpop.f32.mrb[0].mxu0
  %3806 = vdwg.mxu0
  %v3807 = vld [vmem:[%s6] sm:$0xff]
  %v3809 = vlaneseq
  %v3810 = vshrl.u32 %v3809, 7
  %v3811 = vsub.s32 0, %v3810
  %v3812 = vrot.slane %v3807, %v3811
  %v3813 = vlaneseq
  %v3814 = vshrl.u32 %v3813, 7
  %v3815 = vsub.s32 1, %v3814
  %v3816 = vrot.slane %v3807, %v3815
  %v3817 = vlaneseq
  %v3818 = vshrl.u32 %v3817, 7
  %v3819 = vsub.s32 2, %v3818
  %v3820 = vrot.slane %v3807, %v3819
  %v3821 = vlaneseq
  %v3822 = vshrl.u32 %v3821, 7
  %v3823 = vsub.s32 3, %v3822
  %v3824 = vrot.slane %v3807, %v3823
  %v3825 = vlaneseq
  %v3826 = vshrl.u32 %v3825, 7
  %v3827 = vsub.s32 4, %v3826
  %v3828 = vrot.slane %v3807, %v3827
  %v3829 = vlaneseq
  %v3830 = vshrl.u32 %v3829, 7
  %v3831 = vsub.s32 5, %v3830
  %v3832 = vrot.slane %v3807, %v3831
  %v3833 = vlaneseq
  %v3834 = vshrl.u32 %v3833, 7
  %v3835 = vsub.s32 6, %v3834
  %v3836 = vrot.slane %v3807, %v3835
  %v3837 = vlaneseq
  %v3838 = vshrl.u32 %v3837, 7
  %v3839 = vsub.s32 7, %v3838
  %v3840 = vrot.slane %v3807, %v3839
  %v3849 = vadd.f32 %v3678, %v3812
  %v3850 = vadd.f32 %v3680, %v3816
  %v3851 = vadd.f32 %v3719, %v3820
  %v3852 = vadd.f32 %v3721, %v3824
  %v3853 = vadd.f32 %v3760, %v3828
  %v3854 = vadd.f32 %v3762, %v3832
  %v3855 = vadd.f32 %v3801, %v3836
  %v3856 = vadd.f32 %v3803, %v3840
  %v3857 = vpack.c.bf16 %v3849, %v3849
  %v3858 = vpack.c.bf16 %v3850, %v3850
  %v3859 = vpack.c.bf16 %v3851, %v3851
  %v3860 = vpack.c.bf16 %v3852, %v3852
  %v3861 = vpack.c.bf16 %v3853, %v3853
  %v3862 = vpack.c.bf16 %v3854, %v3854
  %v3863 = vpack.c.bf16 %v3855, %v3855
  %v3864 = vpack.c.bf16 %v3856, %v3856
  %v3873 = vunpack.c.l.b16 %v3857
  %v3874 = vunpack.c.l.b16 %v3858
  %v3875 = vunpack.c.l.b16 %v3859
  %v3876 = vunpack.c.l.b16 %v3860
  %v3877 = vunpack.c.l.b16 %v3861
  %v3878 = vunpack.c.l.b16 %v3862
  %v3879 = vunpack.c.l.b16 %v3863
  %v3880 = vunpack.c.l.b16 %v3864
  %v3881 = vpack.c.b16 %v3874, %v3873
  %v3882 = vpack.c.b16 %v3876, %v3875
  %v3883 = vpack.c.b16 %v3878, %v3877
  %v3884 = vpack.c.b16 %v3880, %v3879
  %3889 = vst [vmem:[%s7] sm:$0xff] %v3881
  %3890 = vst [vmem:[%s7 + $0x8] sm:$0xff] %v3882
  %3891 = vst [vmem:[%s7 + $0x10] sm:$0xff] %v3883
  %3892 = vst [vmem:[%s7 + $0x18] sm:$0xff] %v3884
  // Predicated region
  $region30: #{dqn_forward.8} parent=0 // pred_check
    _
  $region31: #{dqn_forward.8} parent=0 // pred_check_branch
    %3894 = sbr.rel (0) target = $region33
  $region32: #{dqn_forward.8} parent=0 // pred_region
    _
  $region33: #{dqn_forward.8} parent=0 // pred_fallthru
    _
  // Predicated region
  $region34: #{dqn_forward.8} parent=0 // pred_check
    _
  $region35: #{dqn_forward.8} parent=0 // pred_check_branch
    %3896 = sbr.rel (0) target = $region37
  $region36: #{dqn_forward.8} parent=0 // pred_region
    _
  $region37: #{dqn_forward.8} parent=0 // pred_fallthru
    _

</llo_original>
